<compile_context>
chip_gen: v7x
topology: tpu7x:2x2x1
jax: 0.10.0
libtpu: 0.0.40
codegen_flags: <defaults>
</compile_context>

<pallas_src>
import jax
import jax.numpy as jnp
from jax import lax
from jax.experimental import pallas as pl
from jax.experimental.pallas import tpu as pltpu


_IN_FEATURES = 9216   # 256 * 6 * 6 after AlexNet avgpool + flatten
_BTL = 32             # lin0 output (bottleneck)
_HID = 512            # lin_exp / lin_id / lin1 output
_VA = 2               # va_regressor output
_TB_MAX = 128         # max batch tile (f32 outputs + bf16 x tile fit 16 MiB VMEM)


# ----------------------------- Pallas kernel -----------------------------

def _regressor_kernel(x_ref, w0_ref, b0_ref, wei_ref, bei_ref,
                      w1_ref, b1_ref, wva_ref, bva_ref,
                      va_ref, exp_ref, id_ref):
    # x_ref: (TB, 9216) bf16.  Weights bf16, biases f32, accumulation f32.
    cdt = w0_ref.dtype

    # lin0 + relu0   (dropout0 == identity in eval mode)
    h0 = jnp.dot(x_ref[...], w0_ref[...],
                 preferred_element_type=jnp.float32) + b0_ref[...]
    h0 = jnp.maximum(h0, 0.0)                                    # (TB, 32) f32

    # fused lin_exp | lin_id : one (32, 1024) matmul, split at lane-aligned 512
    ei = jnp.dot(h0.astype(cdt), wei_ref[...],
                 preferred_element_type=jnp.float32) + bei_ref[...]
    x_exp = ei[:, :_HID]                                         # (TB, 512) f32
    x_id = ei[:, _HID:]                                          # (TB, 512) f32

    # lin1 + relu1   (dropout1 == identity)
    h1 = jnp.dot(x_exp.astype(cdt), w1_ref[...],
                 preferred_element_type=jnp.float32) + b1_ref[...]
    h1 = jnp.maximum(h1, 0.0)                                    # (TB, 512) f32

    # va_regressor
    x_va = jnp.dot(h1.astype(cdt), wva_ref[...],
                   preferred_element_type=jnp.float32) + bva_ref[...]

    va_ref[...] = x_va
    exp_ref[...] = x_exp
    id_ref[...] = x_id


# ----------------------------- param prep (one-time) -----------------------------

def prepare_params(params, compute_dtype=jnp.bfloat16):
    """One-time transform of raw params into the kernel's layout.

    Fuses w_exp|w_id into a single (32, 1024) weight, reshapes biases to (1, N),
    and casts weights to bf16 (halves weight DMA; f32 accumulation in-kernel).
    Run once, outside the per-call jit.
    """
    w_ei = jnp.concatenate([params["w_exp"], params["w_id"]], axis=1)   # (32, 1024)
    b_ei = jnp.concatenate([params["b_exp"], params["b_id"]], axis=0)   # (1024,)
    return {
        "w0": params["w0"].astype(compute_dtype),                       # (9216, 32)
        "b0": params["b0"].reshape(1, -1).astype(jnp.float32),          # (1, 32)
        "w_ei": w_ei.astype(compute_dtype),                             # (32, 1024)
        "b_ei": b_ei.reshape(1, -1).astype(jnp.float32),                # (1, 1024)
        "w1": params["w1"].astype(compute_dtype),                       # (512, 512)
        "b1": params["b1"].reshape(1, -1).astype(jnp.float32),          # (1, 512)
        "w_va": params["w_va"].astype(compute_dtype),                   # (512, 2)
        "b_va": params["b_va"].reshape(1, -1).astype(jnp.float32),      # (1, 2)
    }


# ----------------------------- wrapper -----------------------------

def _round_up(x, m):
    return (x + m - 1) // m * m


@jax.jit
def regressor_alex_corr(x_nchw, prepped):
    """x_nchw: (B, 256, H, W) AlexNet feature map with H, W multiples of 6."""
    B, C, H, W = x_nchw.shape
    cdt = prepped["w0"].dtype

    # AdaptiveAvgPool2d((6,6)) (divisible case) + torch.flatten -- tiny JAX glue,
    # fused by XLA with the bf16 cast.
    xp = x_nchw.reshape(B, C, 6, H // 6, 6, W // 6).mean(axis=(3, 5))
    xf = xp.reshape(B, C * 36).astype(cdt)                       # (B, 9216) bf16

    # Batch tiling: pad B to a multiple of 8 sublanes, tile at <= _TB_MAX rows.
    padded_b = _round_up(max(B, 8), 8)
    tb = min(_TB_MAX, padded_b)
    padded_b = _round_up(padded_b, tb)
    if padded_b != B:
        xf = jnp.pad(xf, ((0, padded_b - B), (0, 0)))

    const = lambda i: (0, 0)
    batch = lambda i: (i, 0)
    in_specs = [
        pl.BlockSpec((tb, _IN_FEATURES), batch),      # x tile (double-buffered)
        pl.BlockSpec((_IN_FEATURES, _BTL), const),    # w0   (resident)
        pl.BlockSpec((1, _BTL), const),               # b0
        pl.BlockSpec((_BTL, 2 * _HID), const),        # w_exp|w_id fused
        pl.BlockSpec((1, 2 * _HID), const),           # b_exp|b_id
        pl.BlockSpec((_HID, _HID), const),            # w1
        pl.BlockSpec((1, _HID), const),               # b1
        pl.BlockSpec((_HID, _VA), const),             # w_va (no lane padding)
        pl.BlockSpec((1, _VA), const),                # b_va
    ]
    out_specs = (
        pl.BlockSpec((tb, _VA), batch),
        pl.BlockSpec((tb, _HID), batch),
        pl.BlockSpec((tb, _HID), batch),
    )

    x_va, x_exp, x_id = pl.pallas_call(
        _regressor_kernel,
        grid=(padded_b // tb,),
        in_specs=in_specs,
        out_specs=out_specs,
        out_shape=(
            jax.ShapeDtypeStruct((padded_b, _VA), jnp.float32),
            jax.ShapeDtypeStruct((padded_b, _HID), jnp.float32),
            jax.ShapeDtypeStruct((padded_b, _HID), jnp.float32),
        ),
        compiler_params=pltpu.CompilerParams(
            dimension_semantics=("parallel",)),       # v7x: shard batch over 2 TCs
    )(xf, prepped["w0"], prepped["b0"], prepped["w_ei"], prepped["b_ei"],
      prepped["w1"], prepped["b1"], prepped["w_va"], prepped["b_va"])

    return x_va[:B], x_exp[:B], x_id[:B]


# ----------------------------- params -----------------------------

def init_params(key):
    shapes = {
        "w0": (_IN_FEATURES, _BTL), "b0": (_BTL,),
        "w_exp": (_BTL, _HID), "b_exp": (_HID,),
        "w_id": (_BTL, _HID), "b_id": (_HID,),
        "w1": (_HID, _HID), "b1": (_HID,),
        "w_va": (_HID, _VA), "b_va": (_VA,),
    }
    scales = {"w0": 0.01, "b0": 0.01, "w_exp": 0.1, "b_exp": 0.01,
              "w_id": 0.1, "b_id": 0.01, "w1": 0.05, "b1": 0.01,
              "w_va": 0.05, "b_va": 0.01}
    keys = jax.random.split(key, len(shapes))
    return {name: scales[name] * jax.random.normal(k, shape, jnp.float32)
            for (name, shape), k in zip(shapes.items(), keys)}


# ----------------------------- pure-JAX reference -----------------------------

def _linear_ref(x, w, b):
    return jnp.dot(x, w, precision=lax.Precision.HIGHEST) + b


@jax.jit
def reference_forward(x_nchw, params):
    B, C, H, W = x_nchw.shape
    xp = x_nchw.reshape(B, C, 6, H // 6, 6, W // 6).mean(axis=(3, 5))
    xf = xp.reshape(B, C * 36)
    h0 = jax.nn.relu(_linear_ref(xf, params["w0"], params["b0"]))
    x_exp = _linear_ref(h0, params["w_exp"], params["b_exp"])
    x_id = _linear_ref(h0, params["w_id"], params["b_id"])
    h1 = jax.nn.relu(_linear_ref(x_exp, params["w1"], params["b1"]))
    x_va = _linear_ref(h1, params["w_va"], params["b_va"])
    return x_va, x_exp, x_id


# ----------------------------- main -----------------------------

if __name__ == "__main__":
    key = jax.random.PRNGKey(0)
    kx, kp = jax.random.split(key)
    params = init_params(kp)
    prepped = prepare_params(params)          # one-time layout/dtype prep

    # AlexNet feature map: (B, 256, 12, 12) -> adaptive-avgpool to 6x6 -> 9216 features.
    x = jax.random.normal(kx, (2, 256, 12, 12), dtype=jnp.float32)

    out = jax.block_until_ready(regressor_alex_corr(x, prepped))
    ref = jax.block_until_ready(reference_forward(x, params))

    assert out[0].shape == (2, _VA), out[0].shape
    assert out[1].shape == (2, _HID), out[1].shape
    assert out[2].shape == (2, _HID), out[2].shape

    max_diff = max(float(jnp.max(jnp.abs(o - r))) for o, r in zip(out, ref))
    assert max_diff < 5e-2, f"max abs diff vs reference: {max_diff}"
    print("KERNEL_OK")
</pallas_src>

<mosaic_0001>
module attributes {stable_mosaic.version = 11 : i64} {
  func.func @_regressor_kernel(%arg0: i32, %arg1: memref<8x9216xbf16, #tpu.memory_space<vmem>>, %arg2: memref<9216x32xbf16, #tpu.memory_space<vmem>>, %arg3: memref<1x32xf32, #tpu.memory_space<vmem>>, %arg4: memref<32x1024xbf16, #tpu.memory_space<vmem>>, %arg5: memref<1x1024xf32, #tpu.memory_space<vmem>>, %arg6: memref<512x512xbf16, #tpu.memory_space<vmem>>, %arg7: memref<1x512xf32, #tpu.memory_space<vmem>>, %arg8: memref<512x2xbf16, #tpu.memory_space<vmem>>, %arg9: memref<1x2xf32, #tpu.memory_space<vmem>>, %arg10: memref<8x2xf32, #tpu.memory_space<vmem>>, %arg11: memref<8x512xf32, #tpu.memory_space<vmem>>, %arg12: memref<8x512xf32, #tpu.memory_space<vmem>>) attributes {dimension_semantics = [#tpu.dimension_semantics<parallel>], iteration_bounds = array<i64: 1>, scalar_prefetch = 0 : i64, scratch_operands = 0 : i64, tpu.core_type = #tpu.core_type<tc>, window_params = [{transform_indices = @transform_0, window_bounds = array<i64: 8, 9216>}, {pipeline_mode = #tpu.pipeline_mode<synchronous>, transform_indices = @transform_1, window_bounds = array<i64: 9216, 32>}, {pipeline_mode = #tpu.pipeline_mode<synchronous>, transform_indices = @transform_2, window_bounds = array<i64: 1, 32>}, {pipeline_mode = #tpu.pipeline_mode<synchronous>, transform_indices = @transform_3, window_bounds = array<i64: 32, 1024>}, {pipeline_mode = #tpu.pipeline_mode<synchronous>, transform_indices = @transform_4, window_bounds = array<i64: 1, 1024>}, {pipeline_mode = #tpu.pipeline_mode<synchronous>, transform_indices = @transform_5, window_bounds = array<i64: 512, 512>}, {pipeline_mode = #tpu.pipeline_mode<synchronous>, transform_indices = @transform_6, window_bounds = array<i64: 1, 512>}, {pipeline_mode = #tpu.pipeline_mode<synchronous>, transform_indices = @transform_7, window_bounds = array<i64: 512, 2>}, {pipeline_mode = #tpu.pipeline_mode<synchronous>, transform_indices = @transform_8, window_bounds = array<i64: 1, 2>}, {transform_indices = @transform_9, window_bounds = array<i64: 8, 2>}, {transform_indices = @transform_10, window_bounds = array<i64: 8, 512>}, {transform_indices = @transform_11, window_bounds = array<i64: 8, 512>}]} {
    %c0 = arith.constant 0 : index
    %c0_0 = arith.constant 0 : index
    %0 = vector.load %arg1[%c0, %c0_0] : memref<8x9216xbf16, #tpu.memory_space<vmem>>, vector<8x9216xbf16>
    %c0_1 = arith.constant 0 : index
    %c0_2 = arith.constant 0 : index
    %1 = vector.load %arg2[%c0_1, %c0_2] : memref<9216x32xbf16, #tpu.memory_space<vmem>>, vector<9216x32xbf16>
    %cst = arith.constant dense<0.000000e+00> : vector<8x32xf32>
    %2 = tpu.matmul %0, %1, %cst {dimension_numbers = #tpu.dot_dimension_numbers<[1], [0], [0], [1], [0, 0, 1, 1], [], []>} : vector<8x9216xbf16>, vector<9216x32xbf16>, vector<8x32xf32> -> vector<8x32xf32>
    %c0_3 = arith.constant 0 : index
    %c0_4 = arith.constant 0 : index
    %3 = vector.load %arg3[%c0_3, %c0_4] : memref<1x32xf32, #tpu.memory_space<vmem>>, vector<1x32xf32>
    %4 = vector.broadcast %3 : vector<1x32xf32> to vector<8x32xf32>
    %5 = arith.addf %2, %4 : vector<8x32xf32>
    %cst_5 = arith.constant 0.000000e+00 : f32
    %6 = vector.broadcast %cst_5 : f32 to vector<8x32xf32>
    %7 = arith.maximumf %5, %6 : vector<8x32xf32>
    %8 = arith.truncf %7 : vector<8x32xf32> to vector<8x32xbf16>
    %c0_6 = arith.constant 0 : index
    %c0_7 = arith.constant 0 : index
    %9 = vector.load %arg4[%c0_6, %c0_7] : memref<32x1024xbf16, #tpu.memory_space<vmem>>, vector<32x1024xbf16>
    %cst_8 = arith.constant dense<0.000000e+00> : vector<8x1024xf32>
    %10 = tpu.matmul %8, %9, %cst_8 {dimension_numbers = #tpu.dot_dimension_numbers<[1], [0], [0], [1], [0, 0, 1, 1], [], []>} : vector<8x32xbf16>, vector<32x1024xbf16>, vector<8x1024xf32> -> vector<8x1024xf32>
    %c0_9 = arith.constant 0 : index
    %c0_10 = arith.constant 0 : index
    %11 = vector.load %arg5[%c0_9, %c0_10] : memref<1x1024xf32, #tpu.memory_space<vmem>>, vector<1x1024xf32>
    %12 = vector.broadcast %11 : vector<1x1024xf32> to vector<8x1024xf32>
    %13 = arith.addf %10, %12 : vector<8x1024xf32>
    %14 = vector.extract_strided_slice %13 {offsets = [0, 0], sizes = [8, 512], strides = [1, 1]} : vector<8x1024xf32> to vector<8x512xf32>
    %15 = vector.extract_strided_slice %13 {offsets = [0, 512], sizes = [8, 512], strides = [1, 1]} : vector<8x1024xf32> to vector<8x512xf32>
    %16 = arith.truncf %14 : vector<8x512xf32> to vector<8x512xbf16>
    %c0_11 = arith.constant 0 : index
    %c0_12 = arith.constant 0 : index
    %17 = vector.load %arg6[%c0_11, %c0_12] : memref<512x512xbf16, #tpu.memory_space<vmem>>, vector<512x512xbf16>
    %cst_13 = arith.constant dense<0.000000e+00> : vector<8x512xf32>
    %18 = tpu.matmul %16, %17, %cst_13 {dimension_numbers = #tpu.dot_dimension_numbers<[1], [0], [0], [1], [0, 0, 1, 1], [], []>} : vector<8x512xbf16>, vector<512x512xbf16>, vector<8x512xf32> -> vector<8x512xf32>
    %c0_14 = arith.constant 0 : index
    %c0_15 = arith.constant 0 : index
    %19 = vector.load %arg7[%c0_14, %c0_15] : memref<1x512xf32, #tpu.memory_space<vmem>>, vector<1x512xf32>
    %20 = vector.broadcast %19 : vector<1x512xf32> to vector<8x512xf32>
    %21 = arith.addf %18, %20 : vector<8x512xf32>
    %cst_16 = arith.constant 0.000000e+00 : f32
    %22 = vector.broadcast %cst_16 : f32 to vector<8x512xf32>
    %23 = arith.maximumf %21, %22 : vector<8x512xf32>
    %24 = arith.truncf %23 : vector<8x512xf32> to vector<8x512xbf16>
    %c0_17 = arith.constant 0 : index
    %c0_18 = arith.constant 0 : index
    %25 = vector.load %arg8[%c0_17, %c0_18] : memref<512x2xbf16, #tpu.memory_space<vmem>>, vector<512x2xbf16>
    %cst_19 = arith.constant dense<0.000000e+00> : vector<8x2xf32>
    %26 = tpu.matmul %24, %25, %cst_19 {dimension_numbers = #tpu.dot_dimension_numbers<[1], [0], [0], [1], [0, 0, 1, 1], [], []>} : vector<8x512xbf16>, vector<512x2xbf16>, vector<8x2xf32> -> vector<8x2xf32>
    %c0_20 = arith.constant 0 : index
    %c0_21 = arith.constant 0 : index
    %27 = vector.load %arg9[%c0_20, %c0_21] : memref<1x2xf32, #tpu.memory_space<vmem>>, vector<1x2xf32>
    %28 = vector.broadcast %27 : vector<1x2xf32> to vector<8x2xf32>
    %29 = arith.addf %26, %28 : vector<8x2xf32>
    %c0_22 = arith.constant 0 : index
    %c0_23 = arith.constant 0 : index
    %30 = vector.load %arg10[%c0_22, %c0_23] : memref<8x2xf32, #tpu.memory_space<vmem>>, vector<8x2xf32>
    tpu.vector_store %arg10[%c0_22, %c0_23], %29 {strides = array<i32>} : memref<8x2xf32, #tpu.memory_space<vmem>>, vector<8x2xf32>,
    %c0_24 = arith.constant 0 : index
    %c0_25 = arith.constant 0 : index
    %31 = vector.load %arg11[%c0_24, %c0_25] : memref<8x512xf32, #tpu.memory_space<vmem>>, vector<8x512xf32>
    tpu.vector_store %arg11[%c0_24, %c0_25], %14 {strides = array<i32>} : memref<8x512xf32, #tpu.memory_space<vmem>>, vector<8x512xf32>,
    %c0_26 = arith.constant 0 : index
    %c0_27 = arith.constant 0 : index
    %32 = vector.load %arg12[%c0_26, %c0_27] : memref<8x512xf32, #tpu.memory_space<vmem>>, vector<8x512xf32>
    tpu.vector_store %arg12[%c0_26, %c0_27], %15 {strides = array<i32>} : memref<8x512xf32, #tpu.memory_space<vmem>>, vector<8x512xf32>,
    return
  }
  func.func @transform_0(%arg0: i32) -> (i32, i32) {
    %c0_i32 = arith.constant 0 : i32
    %c0_i32_0 = arith.constant 0 : i32
    return %arg0, %c0_i32 : i32, i32
  }
  func.func @transform_1(%arg0: i32) -> (i32, i32) {
    %c0_i32 = arith.constant 0 : i32
    %c0_i32_0 = arith.constant 0 : i32
    %c0_i32_1 = arith.constant 0 : i32
    return %c0_i32, %c0_i32_0 : i32, i32
  }
  func.func @transform_2(%arg0: i32) -> (i32, i32) {
    %c0_i32 = arith.constant 0 : i32
    %c0_i32_0 = arith.constant 0 : i32
    %c0_i32_1 = arith.constant 0 : i32
    return %c0_i32, %c0_i32_0 : i32, i32
  }
  func.func @transform_3(%arg0: i32) -> (i32, i32) {
    %c0_i32 = arith.constant 0 : i32
    %c0_i32_0 = arith.constant 0 : i32
    %c0_i32_1 = arith.constant 0 : i32
    return %c0_i32, %c0_i32_0 : i32, i32
  }
  func.func @transform_4(%arg0: i32) -> (i32, i32) {
    %c0_i32 = arith.constant 0 : i32
    %c0_i32_0 = arith.constant 0 : i32
    %c0_i32_1 = arith.constant 0 : i32
    return %c0_i32, %c0_i32_0 : i32, i32
  }
  func.func @transform_5(%arg0: i32) -> (i32, i32) {
    %c0_i32 = arith.constant 0 : i32
    %c0_i32_0 = arith.constant 0 : i32
    %c0_i32_1 = arith.constant 0 : i32
    return %c0_i32, %c0_i32_0 : i32, i32
  }
  func.func @transform_6(%arg0: i32) -> (i32, i32) {
    %c0_i32 = arith.constant 0 : i32
    %c0_i32_0 = arith.constant 0 : i32
    %c0_i32_1 = arith.constant 0 : i32
    return %c0_i32, %c0_i32_0 : i32, i32
  }
  func.func @transform_7(%arg0: i32) -> (i32, i32) {
    %c0_i32 = arith.constant 0 : i32
    %c0_i32_0 = arith.constant 0 : i32
    %c0_i32_1 = arith.constant 0 : i32
    return %c0_i32, %c0_i32_0 : i32, i32
  }
  func.func @transform_8(%arg0: i32) -> (i32, i32) {
    %c0_i32 = arith.constant 0 : i32
    %c0_i32_0 = arith.constant 0 : i32
    %c0_i32_1 = arith.constant 0 : i32
    return %c0_i32, %c0_i32_0 : i32, i32
  }
  func.func @transform_9(%arg0: i32) -> (i32, i32) {
    %c0_i32 = arith.constant 0 : i32
    %c0_i32_0 = arith.constant 0 : i32
    return %arg0, %c0_i32 : i32, i32
  }
  func.func @transform_10(%arg0: i32) -> (i32, i32) {
    %c0_i32 = arith.constant 0 : i32
    %c0_i32_0 = arith.constant 0 : i32
    return %arg0, %c0_i32 : i32, i32
  }
  func.func @transform_11(%arg0: i32) -> (i32, i32) {
    %c0_i32 = arith.constant 0 : i32
    %c0_i32_0 = arith.constant 0 : i32
    return %arg0, %c0_i32 : i32, i32
  }
}

</mosaic_0001>

<llo_original>
// kernel: regressor_alex_corr.1
$region0: #{regressor_alex_corr.1}
  #allocation0 [shape = 'u32[]', space=smem, size = 0x4, offset = 0x4, fixed_abs, tag = 'smem constant byte address 0x4 - core index']
  #allocation1 [shape = 'u32[144,128]{1,0:T(1,128)}', space=vmem, size = 0x12000, scoped, tag = 'internal scratch']
  %s0 = inlined_call_operand.vmem [shape: bf16[8,9216], index: 0, kind: input, shape index: {}]
  %s1 = inlined_call_operand.vmem [shape: bf16[9216,32], index: 1, kind: input, shape index: {}]
  %s2 = inlined_call_operand.vmem [shape: f32[1,32], index: 2, kind: input, shape index: {}]
  %s3 = inlined_call_operand.vmem [shape: bf16[32,1024], index: 3, kind: input, shape index: {}]
  %s4 = inlined_call_operand.vmem [shape: f32[1,1024], index: 4, kind: input, shape index: {}]
  %s5 = inlined_call_operand.vmem [shape: bf16[512,512], index: 5, kind: input, shape index: {}]
  %s6 = inlined_call_operand.vmem [shape: f32[1,512], index: 6, kind: input, shape index: {}]
  %s7 = inlined_call_operand.vmem [shape: bf16[512,2], index: 7, kind: input, shape index: {}]
  %s8 = inlined_call_operand.vmem [shape: f32[1,2], index: 8, kind: input, shape index: {}]
  %s9 = inlined_call_operand.vmem [shape: f32[8,2], index: 9, kind: output, shape index: {0}]
  %s10 = inlined_call_operand.vmem [shape: f32[8,512], index: 10, kind: output, shape index: {1}]
  %s11 = inlined_call_operand.vmem [shape: f32[8,512], index: 11, kind: output, shape index: {2}]
  %12 = xla_tuple %s9, %s10, %s11
  %s13 = sld [smem:[#allocation0]]
  $region62: #{regressor_alex_corr.1} parent=0
    _
  %s15 = ssub.s32 1, %s13
  %s16 = scalar_select 0, %s15, %s13
  // Predicated region
  $region2: #{regressor_alex_corr.1} parent=0 // pred_check
    _
  $region3: #{regressor_alex_corr.1} parent=0 // pred_check_branch
    %18 = sbr.rel (0) target = $region5
  $region4: #{regressor_alex_corr.1} parent=0 // pred_region
    _
  $region5: #{regressor_alex_corr.1} parent=0 // pred_fallthru
    _
  // Predicated region
  $region6: #{regressor_alex_corr.1} parent=0 // pred_check
    _
  $region7: #{regressor_alex_corr.1} parent=0 // pred_check_branch
    %20 = sbr.rel (0) target = $region9
  $region8: #{regressor_alex_corr.1} parent=0 // pred_region
    _
  $region9: #{regressor_alex_corr.1} parent=0 // pred_fallthru
    _
  // Predicated region
  $region10: #{regressor_alex_corr.1} parent=0 // pred_check
    _
  $region11: #{regressor_alex_corr.1} parent=0 // pred_check_branch
    %22 = sbr.rel (0) target = $region13
  $region12: #{regressor_alex_corr.1} parent=0 // pred_region
    _
  $region13: #{regressor_alex_corr.1} parent=0 // pred_fallthru
    _
  // Predicated region
  $region14: #{regressor_alex_corr.1} parent=0 // pred_check
    _
  $region15: #{regressor_alex_corr.1} parent=0 // pred_check_branch
    %24 = sbr.rel (0) target = $region17
  $region16: #{regressor_alex_corr.1} parent=0 // pred_region
    _
  $region17: #{regressor_alex_corr.1} parent=0 // pred_fallthru
    _
  // Predicated region
  $region18: #{regressor_alex_corr.1} parent=0 // pred_check
    _
  $region19: #{regressor_alex_corr.1} parent=0 // pred_check_branch
    %26 = sbr.rel (0) target = $region21
  $region20: #{regressor_alex_corr.1} parent=0 // pred_region
    _
  $region21: #{regressor_alex_corr.1} parent=0 // pred_fallthru
    _
  // Predicated region
  $region22: #{regressor_alex_corr.1} parent=0 // pred_check
    _
  $region23: #{regressor_alex_corr.1} parent=0 // pred_check_branch
    %28 = sbr.rel (0) target = $region25
  $region24: #{regressor_alex_corr.1} parent=0 // pred_region
    _
  $region25: #{regressor_alex_corr.1} parent=0 // pred_fallthru
    _
  // Predicated region
  $region26: #{regressor_alex_corr.1} parent=0 // pred_check
    _
  $region27: #{regressor_alex_corr.1} parent=0 // pred_check_branch
    %30 = sbr.rel (0) target = $region29
  $region28: #{regressor_alex_corr.1} parent=0 // pred_region
    _
  $region29: #{regressor_alex_corr.1} parent=0 // pred_fallthru
    _
  // Predicated region
  $region30: #{regressor_alex_corr.1} parent=0 // pred_check
    _
  $region31: #{regressor_alex_corr.1} parent=0 // pred_check_branch
    %32 = sbr.rel (0) target = $region33
  $region32: #{regressor_alex_corr.1} parent=0 // pred_region
    _
  $region33: #{regressor_alex_corr.1} parent=0 // pred_fallthru
    _
  // Predicated region
  $region34: #{regressor_alex_corr.1} parent=0 // pred_check
    _
  $region35: #{regressor_alex_corr.1} parent=0 // pred_check_branch
    %34 = sbr.rel (0) target = $region37
  $region36: #{regressor_alex_corr.1} parent=0 // pred_region
    _
  $region37: #{regressor_alex_corr.1} parent=0 // pred_fallthru
    _
  %v36 = vld [vmem:[%s0] sm:$0xff]
  %v37 = vld [vmem:[%s0 + $0x8] sm:$0xff]
  %v38 = vld [vmem:[%s0 + $0x10] sm:$0xff]
  %v39 = vld [vmem:[%s0 + $0x18] sm:$0xff]
  %v40 = vld [vmem:[%s0 + $0x20] sm:$0xff]
  %v41 = vld [vmem:[%s0 + $0x28] sm:$0xff]
  %v42 = vld [vmem:[%s0 + $0x30] sm:$0xff]
  %v43 = vld [vmem:[%s0 + $0x38] sm:$0xff]
  %v44 = vld [vmem:[%s0 + $0x40] sm:$0xff]
  %v45 = vld [vmem:[%s0 + $0x48] sm:$0xff]
  %v46 = vld [vmem:[%s0 + $0x50] sm:$0xff]
  %v47 = vld [vmem:[%s0 + $0x58] sm:$0xff]
  %v48 = vld [vmem:[%s0 + $0x60] sm:$0xff]
  %v49 = vld [vmem:[%s0 + $0x68] sm:$0xff]
  %v50 = vld [vmem:[%s0 + $0x70] sm:$0xff]
  %v51 = vld [vmem:[%s0 + $0x78] sm:$0xff]
  %v52 = vld [vmem:[%s0 + $0x80] sm:$0xff]
  %v53 = vld [vmem:[%s0 + $0x88] sm:$0xff]
  %v54 = vld [vmem:[%s0 + $0x90] sm:$0xff]
  %v55 = vld [vmem:[%s0 + $0x98] sm:$0xff]
  %v56 = vld [vmem:[%s0 + $0xa0] sm:$0xff]
  %v57 = vld [vmem:[%s0 + $0xa8] sm:$0xff]
  %v58 = vld [vmem:[%s0 + $0xb0] sm:$0xff]
  %v59 = vld [vmem:[%s0 + $0xb8] sm:$0xff]
  %v60 = vld [vmem:[%s0 + $0xc0] sm:$0xff]
  %v61 = vld [vmem:[%s0 + $0xc8] sm:$0xff]
  %v62 = vld [vmem:[%s0 + $0xd0] sm:$0xff]
  %v63 = vld [vmem:[%s0 + $0xd8] sm:$0xff]
  %v64 = vld [vmem:[%s0 + $0xe0] sm:$0xff]
  %v65 = vld [vmem:[%s0 + $0xe8] sm:$0xff]
  %v66 = vld [vmem:[%s0 + $0xf0] sm:$0xff]
  %v67 = vld [vmem:[%s0 + $0xf8] sm:$0xff]
  %v68 = vld [vmem:[%s0 + $0x100] sm:$0xff]
  %v69 = vld [vmem:[%s0 + $0x108] sm:$0xff]
  %v70 = vld [vmem:[%s0 + $0x110] sm:$0xff]
  %v71 = vld [vmem:[%s0 + $0x118] sm:$0xff]
  %v72 = vld [vmem:[%s1] sm:$0xf]
  %v73 = vld [vmem:[%s1 + $0x4] sm:$0xf]
  %v74 = vld [vmem:[%s1 + $0x8] sm:$0xf]
  %v75 = vld [vmem:[%s1 + $0xc] sm:$0xf]
  %v76 = vld [vmem:[%s1 + $0x10] sm:$0xf]
  %v77 = vld [vmem:[%s1 + $0x14] sm:$0xf]
  %v78 = vld [vmem:[%s1 + $0x18] sm:$0xf]
  %v79 = vld [vmem:[%s1 + $0x1c] sm:$0xf]
  %v80 = vld [vmem:[%s1 + $0x20] sm:$0xf]
  %v81 = vld [vmem:[%s1 + $0x24] sm:$0xf]
  %v82 = vld [vmem:[%s1 + $0x28] sm:$0xf]
  %v83 = vld [vmem:[%s1 + $0x2c] sm:$0xf]
  %v84 = vld [vmem:[%s1 + $0x30] sm:$0xf]
  %v85 = vld [vmem:[%s1 + $0x34] sm:$0xf]
  %v86 = vld [vmem:[%s1 + $0x38] sm:$0xf]
  %v87 = vld [vmem:[%s1 + $0x3c] sm:$0xf]
  %v88 = vld [vmem:[%s1 + $0x40] sm:$0xf]
  %v89 = vld [vmem:[%s1 + $0x44] sm:$0xf]
  %v90 = vld [vmem:[%s1 + $0x48] sm:$0xf]
  %v91 = vld [vmem:[%s1 + $0x4c] sm:$0xf]
  %v92 = vld [vmem:[%s1 + $0x50] sm:$0xf]
  %v93 = vld [vmem:[%s1 + $0x54] sm:$0xf]
  %v94 = vld [vmem:[%s1 + $0x58] sm:$0xf]
  %v95 = vld [vmem:[%s1 + $0x5c] sm:$0xf]
  %v96 = vld [vmem:[%s1 + $0x60] sm:$0xf]
  %v97 = vld [vmem:[%s1 + $0x64] sm:$0xf]
  %v98 = vld [vmem:[%s1 + $0x68] sm:$0xf]
  %v99 = vld [vmem:[%s1 + $0x6c] sm:$0xf]
  %v100 = vld [vmem:[%s1 + $0x70] sm:$0xf]
  %v101 = vld [vmem:[%s1 + $0x74] sm:$0xf]
  %v102 = vld [vmem:[%s1 + $0x78] sm:$0xf]
  %v103 = vld [vmem:[%s1 + $0x7c] sm:$0xf]
  %v104 = vld [vmem:[%s1 + $0x80] sm:$0xf]
  %v105 = vld [vmem:[%s1 + $0x84] sm:$0xf]
  %v106 = vld [vmem:[%s1 + $0x88] sm:$0xf]
  %v107 = vld [vmem:[%s1 + $0x8c] sm:$0xf]
  %v108 = vld [vmem:[%s1 + $0x90] sm:$0xf]
  %v109 = vld [vmem:[%s1 + $0x94] sm:$0xf]
  %v110 = vld [vmem:[%s1 + $0x98] sm:$0xf]
  %v111 = vld [vmem:[%s1 + $0x9c] sm:$0xf]
  %v112 = vld [vmem:[%s1 + $0xa0] sm:$0xf]
  %v113 = vld [vmem:[%s1 + $0xa4] sm:$0xf]
  %v114 = vld [vmem:[%s1 + $0xa8] sm:$0xf]
  %v115 = vld [vmem:[%s1 + $0xac] sm:$0xf]
  %v116 = vld [vmem:[%s1 + $0xb0] sm:$0xf]
  %v117 = vld [vmem:[%s1 + $0xb4] sm:$0xf]
  %v118 = vld [vmem:[%s1 + $0xb8] sm:$0xf]
  %v119 = vld [vmem:[%s1 + $0xbc] sm:$0xf]
  %v120 = vld [vmem:[%s1 + $0xc0] sm:$0xf]
  %v121 = vld [vmem:[%s1 + $0xc4] sm:$0xf]
  %v122 = vld [vmem:[%s1 + $0xc8] sm:$0xf]
  %v123 = vld [vmem:[%s1 + $0xcc] sm:$0xf]
  %v124 = vld [vmem:[%s1 + $0xd0] sm:$0xf]
  %v125 = vld [vmem:[%s1 + $0xd4] sm:$0xf]
  %v126 = vld [vmem:[%s1 + $0xd8] sm:$0xf]
  %v127 = vld [vmem:[%s1 + $0xdc] sm:$0xf]
  %v128 = vld [vmem:[%s1 + $0xe0] sm:$0xf]
  %v129 = vld [vmem:[%s1 + $0xe4] sm:$0xf]
  %v130 = vld [vmem:[%s1 + $0xe8] sm:$0xf]
  %v131 = vld [vmem:[%s1 + $0xec] sm:$0xf]
  %v132 = vld [vmem:[%s1 + $0xf0] sm:$0xf]
  %v133 = vld [vmem:[%s1 + $0xf4] sm:$0xf]
  %v134 = vld [vmem:[%s1 + $0xf8] sm:$0xf]
  %v135 = vld [vmem:[%s1 + $0xfc] sm:$0xf]
  %v136 = vld [vmem:[%s1 + $0x100] sm:$0xf]
  %v137 = vld [vmem:[%s1 + $0x104] sm:$0xf]
  %v138 = vld [vmem:[%s1 + $0x108] sm:$0xf]
  %v139 = vld [vmem:[%s1 + $0x10c] sm:$0xf]
  %v140 = vld [vmem:[%s1 + $0x110] sm:$0xf]
  %v141 = vld [vmem:[%s1 + $0x114] sm:$0xf]
  %v142 = vld [vmem:[%s1 + $0x118] sm:$0xf]
  %v143 = vld [vmem:[%s1 + $0x11c] sm:$0xf]
  %v144 = vld [vmem:[%s1 + $0x120] sm:$0xf]
  %v145 = vld [vmem:[%s1 + $0x124] sm:$0xf]
  %v146 = vld [vmem:[%s1 + $0x128] sm:$0xf]
  %v147 = vld [vmem:[%s1 + $0x12c] sm:$0xf]
  %v148 = vld [vmem:[%s1 + $0x130] sm:$0xf]
  %v149 = vld [vmem:[%s1 + $0x134] sm:$0xf]
  %v150 = vld [vmem:[%s1 + $0x138] sm:$0xf]
  %v151 = vld [vmem:[%s1 + $0x13c] sm:$0xf]
  %v152 = vld [vmem:[%s1 + $0x140] sm:$0xf]
  %v153 = vld [vmem:[%s1 + $0x144] sm:$0xf]
  %v154 = vld [vmem:[%s1 + $0x148] sm:$0xf]
  %v155 = vld [vmem:[%s1 + $0x14c] sm:$0xf]
  %v156 = vld [vmem:[%s1 + $0x150] sm:$0xf]
  %v157 = vld [vmem:[%s1 + $0x154] sm:$0xf]
  %v158 = vld [vmem:[%s1 + $0x158] sm:$0xf]
  %v159 = vld [vmem:[%s1 + $0x15c] sm:$0xf]
  %v160 = vld [vmem:[%s1 + $0x160] sm:$0xf]
  %v161 = vld [vmem:[%s1 + $0x164] sm:$0xf]
  %v162 = vld [vmem:[%s1 + $0x168] sm:$0xf]
  %v163 = vld [vmem:[%s1 + $0x16c] sm:$0xf]
  %v164 = vld [vmem:[%s1 + $0x170] sm:$0xf]
  %v165 = vld [vmem:[%s1 + $0x174] sm:$0xf]
  %v166 = vld [vmem:[%s1 + $0x178] sm:$0xf]
  %v167 = vld [vmem:[%s1 + $0x17c] sm:$0xf]
  %v168 = vld [vmem:[%s1 + $0x180] sm:$0xf]
  %v169 = vld [vmem:[%s1 + $0x184] sm:$0xf]
  %v170 = vld [vmem:[%s1 + $0x188] sm:$0xf]
  %v171 = vld [vmem:[%s1 + $0x18c] sm:$0xf]
  %v172 = vld [vmem:[%s1 + $0x190] sm:$0xf]
  %v173 = vld [vmem:[%s1 + $0x194] sm:$0xf]
  %v174 = vld [vmem:[%s1 + $0x198] sm:$0xf]
  %v175 = vld [vmem:[%s1 + $0x19c] sm:$0xf]
  %v176 = vld [vmem:[%s1 + $0x1a0] sm:$0xf]
  %v177 = vld [vmem:[%s1 + $0x1a4] sm:$0xf]
  %v178 = vld [vmem:[%s1 + $0x1a8] sm:$0xf]
  %v179 = vld [vmem:[%s1 + $0x1ac] sm:$0xf]
  %v180 = vld [vmem:[%s1 + $0x1b0] sm:$0xf]
  %v181 = vld [vmem:[%s1 + $0x1b4] sm:$0xf]
  %v182 = vld [vmem:[%s1 + $0x1b8] sm:$0xf]
  %v183 = vld [vmem:[%s1 + $0x1bc] sm:$0xf]
  %v184 = vld [vmem:[%s1 + $0x1c0] sm:$0xf]
  %v185 = vld [vmem:[%s1 + $0x1c4] sm:$0xf]
  %v186 = vld [vmem:[%s1 + $0x1c8] sm:$0xf]
  %v187 = vld [vmem:[%s1 + $0x1cc] sm:$0xf]
  %v188 = vld [vmem:[%s1 + $0x1d0] sm:$0xf]
  %v189 = vld [vmem:[%s1 + $0x1d4] sm:$0xf]
  %v190 = vld [vmem:[%s1 + $0x1d8] sm:$0xf]
  %v191 = vld [vmem:[%s1 + $0x1dc] sm:$0xf]
  %v192 = vld [vmem:[%s1 + $0x1e0] sm:$0xf]
  %v193 = vld [vmem:[%s1 + $0x1e4] sm:$0xf]
  %v194 = vld [vmem:[%s1 + $0x1e8] sm:$0xf]
  %v195 = vld [vmem:[%s1 + $0x1ec] sm:$0xf]
  %v196 = vld [vmem:[%s1 + $0x1f0] sm:$0xf]
  %v197 = vld [vmem:[%s1 + $0x1f4] sm:$0xf]
  %v198 = vld [vmem:[%s1 + $0x1f8] sm:$0xf]
  %v199 = vld [vmem:[%s1 + $0x1fc] sm:$0xf]
  %v200 = vld [vmem:[%s1 + $0x200] sm:$0xf]
  %v201 = vld [vmem:[%s1 + $0x204] sm:$0xf]
  %v202 = vld [vmem:[%s1 + $0x208] sm:$0xf]
  %v203 = vld [vmem:[%s1 + $0x20c] sm:$0xf]
  %v204 = vld [vmem:[%s1 + $0x210] sm:$0xf]
  %v205 = vld [vmem:[%s1 + $0x214] sm:$0xf]
  %v206 = vld [vmem:[%s1 + $0x218] sm:$0xf]
  %v207 = vld [vmem:[%s1 + $0x21c] sm:$0xf]
  %v208 = vld [vmem:[%s1 + $0x220] sm:$0xf]
  %v209 = vld [vmem:[%s1 + $0x224] sm:$0xf]
  %v210 = vld [vmem:[%s1 + $0x228] sm:$0xf]
  %v211 = vld [vmem:[%s1 + $0x22c] sm:$0xf]
  %v212 = vld [vmem:[%s1 + $0x230] sm:$0xf]
  %v213 = vld [vmem:[%s1 + $0x234] sm:$0xf]
  %v214 = vld [vmem:[%s1 + $0x238] sm:$0xf]
  %v215 = vld [vmem:[%s1 + $0x23c] sm:$0xf]
  %v216 = vld [vmem:[%s1 + $0x240] sm:$0xf]
  %v217 = vld [vmem:[%s1 + $0x244] sm:$0xf]
  %v218 = vld [vmem:[%s1 + $0x248] sm:$0xf]
  %v219 = vld [vmem:[%s1 + $0x24c] sm:$0xf]
  %v220 = vld [vmem:[%s1 + $0x250] sm:$0xf]
  %v221 = vld [vmem:[%s1 + $0x254] sm:$0xf]
  %v222 = vld [vmem:[%s1 + $0x258] sm:$0xf]
  %v223 = vld [vmem:[%s1 + $0x25c] sm:$0xf]
  %v224 = vld [vmem:[%s1 + $0x260] sm:$0xf]
  %v225 = vld [vmem:[%s1 + $0x264] sm:$0xf]
  %v226 = vld [vmem:[%s1 + $0x268] sm:$0xf]
  %v227 = vld [vmem:[%s1 + $0x26c] sm:$0xf]
  %v228 = vld [vmem:[%s1 + $0x270] sm:$0xf]
  %v229 = vld [vmem:[%s1 + $0x274] sm:$0xf]
  %v230 = vld [vmem:[%s1 + $0x278] sm:$0xf]
  %v231 = vld [vmem:[%s1 + $0x27c] sm:$0xf]
  %v232 = vld [vmem:[%s1 + $0x280] sm:$0xf]
  %v233 = vld [vmem:[%s1 + $0x284] sm:$0xf]
  %v234 = vld [vmem:[%s1 + $0x288] sm:$0xf]
  %v235 = vld [vmem:[%s1 + $0x28c] sm:$0xf]
  %v236 = vld [vmem:[%s1 + $0x290] sm:$0xf]
  %v237 = vld [vmem:[%s1 + $0x294] sm:$0xf]
  %v238 = vld [vmem:[%s1 + $0x298] sm:$0xf]
  %v239 = vld [vmem:[%s1 + $0x29c] sm:$0xf]
  %v240 = vld [vmem:[%s1 + $0x2a0] sm:$0xf]
  %v241 = vld [vmem:[%s1 + $0x2a4] sm:$0xf]
  %v242 = vld [vmem:[%s1 + $0x2a8] sm:$0xf]
  %v243 = vld [vmem:[%s1 + $0x2ac] sm:$0xf]
  %v244 = vld [vmem:[%s1 + $0x2b0] sm:$0xf]
  %v245 = vld [vmem:[%s1 + $0x2b4] sm:$0xf]
  %v246 = vld [vmem:[%s1 + $0x2b8] sm:$0xf]
  %v247 = vld [vmem:[%s1 + $0x2bc] sm:$0xf]
  %v248 = vld [vmem:[%s1 + $0x2c0] sm:$0xf]
  %v249 = vld [vmem:[%s1 + $0x2c4] sm:$0xf]
  %v250 = vld [vmem:[%s1 + $0x2c8] sm:$0xf]
  %v251 = vld [vmem:[%s1 + $0x2cc] sm:$0xf]
  %v252 = vld [vmem:[%s1 + $0x2d0] sm:$0xf]
  %v253 = vld [vmem:[%s1 + $0x2d4] sm:$0xf]
  %v254 = vld [vmem:[%s1 + $0x2d8] sm:$0xf]
  %v255 = vld [vmem:[%s1 + $0x2dc] sm:$0xf]
  %v256 = vld [vmem:[%s1 + $0x2e0] sm:$0xf]
  %v257 = vld [vmem:[%s1 + $0x2e4] sm:$0xf]
  %v258 = vld [vmem:[%s1 + $0x2e8] sm:$0xf]
  %v259 = vld [vmem:[%s1 + $0x2ec] sm:$0xf]
  %v260 = vld [vmem:[%s1 + $0x2f0] sm:$0xf]
  %v261 = vld [vmem:[%s1 + $0x2f4] sm:$0xf]
  %v262 = vld [vmem:[%s1 + $0x2f8] sm:$0xf]
  %v263 = vld [vmem:[%s1 + $0x2fc] sm:$0xf]
  %v264 = vld [vmem:[%s1 + $0x300] sm:$0xf]
  %v265 = vld [vmem:[%s1 + $0x304] sm:$0xf]
  %v266 = vld [vmem:[%s1 + $0x308] sm:$0xf]
  %v267 = vld [vmem:[%s1 + $0x30c] sm:$0xf]
  %v268 = vld [vmem:[%s1 + $0x310] sm:$0xf]
  %v269 = vld [vmem:[%s1 + $0x314] sm:$0xf]
  %v270 = vld [vmem:[%s1 + $0x318] sm:$0xf]
  %v271 = vld [vmem:[%s1 + $0x31c] sm:$0xf]
  %v272 = vld [vmem:[%s1 + $0x320] sm:$0xf]
  %v273 = vld [vmem:[%s1 + $0x324] sm:$0xf]
  %v274 = vld [vmem:[%s1 + $0x328] sm:$0xf]
  %v275 = vld [vmem:[%s1 + $0x32c] sm:$0xf]
  %v276 = vld [vmem:[%s1 + $0x330] sm:$0xf]
  %v277 = vld [vmem:[%s1 + $0x334] sm:$0xf]
  %v278 = vld [vmem:[%s1 + $0x338] sm:$0xf]
  %v279 = vld [vmem:[%s1 + $0x33c] sm:$0xf]
  %v280 = vld [vmem:[%s1 + $0x340] sm:$0xf]
  %v281 = vld [vmem:[%s1 + $0x344] sm:$0xf]
  %v282 = vld [vmem:[%s1 + $0x348] sm:$0xf]
  %v283 = vld [vmem:[%s1 + $0x34c] sm:$0xf]
  %v284 = vld [vmem:[%s1 + $0x350] sm:$0xf]
  %v285 = vld [vmem:[%s1 + $0x354] sm:$0xf]
  %v286 = vld [vmem:[%s1 + $0x358] sm:$0xf]
  %v287 = vld [vmem:[%s1 + $0x35c] sm:$0xf]
  %v288 = vld [vmem:[%s1 + $0x360] sm:$0xf]
  %v289 = vld [vmem:[%s1 + $0x364] sm:$0xf]
  %v290 = vld [vmem:[%s1 + $0x368] sm:$0xf]
  %v291 = vld [vmem:[%s1 + $0x36c] sm:$0xf]
  %v292 = vld [vmem:[%s1 + $0x370] sm:$0xf]
  %v293 = vld [vmem:[%s1 + $0x374] sm:$0xf]
  %v294 = vld [vmem:[%s1 + $0x378] sm:$0xf]
  %v295 = vld [vmem:[%s1 + $0x37c] sm:$0xf]
  %v296 = vld [vmem:[%s1 + $0x380] sm:$0xf]
  %v297 = vld [vmem:[%s1 + $0x384] sm:$0xf]
  %v298 = vld [vmem:[%s1 + $0x388] sm:$0xf]
  %v299 = vld [vmem:[%s1 + $0x38c] sm:$0xf]
  %v300 = vld [vmem:[%s1 + $0x390] sm:$0xf]
  %v301 = vld [vmem:[%s1 + $0x394] sm:$0xf]
  %v302 = vld [vmem:[%s1 + $0x398] sm:$0xf]
  %v303 = vld [vmem:[%s1 + $0x39c] sm:$0xf]
  %v304 = vld [vmem:[%s1 + $0x3a0] sm:$0xf]
  %v305 = vld [vmem:[%s1 + $0x3a4] sm:$0xf]
  %v306 = vld [vmem:[%s1 + $0x3a8] sm:$0xf]
  %v307 = vld [vmem:[%s1 + $0x3ac] sm:$0xf]
  %v308 = vld [vmem:[%s1 + $0x3b0] sm:$0xf]
  %v309 = vld [vmem:[%s1 + $0x3b4] sm:$0xf]
  %v310 = vld [vmem:[%s1 + $0x3b8] sm:$0xf]
  %v311 = vld [vmem:[%s1 + $0x3bc] sm:$0xf]
  %v312 = vld [vmem:[%s1 + $0x3c0] sm:$0xf]
  %v313 = vld [vmem:[%s1 + $0x3c4] sm:$0xf]
  %v314 = vld [vmem:[%s1 + $0x3c8] sm:$0xf]
  %v315 = vld [vmem:[%s1 + $0x3cc] sm:$0xf]
  %v316 = vld [vmem:[%s1 + $0x3d0] sm:$0xf]
  %v317 = vld [vmem:[%s1 + $0x3d4] sm:$0xf]
  %v318 = vld [vmem:[%s1 + $0x3d8] sm:$0xf]
  %v319 = vld [vmem:[%s1 + $0x3dc] sm:$0xf]
  %v320 = vld [vmem:[%s1 + $0x3e0] sm:$0xf]
  %v321 = vld [vmem:[%s1 + $0x3e4] sm:$0xf]
  %v322 = vld [vmem:[%s1 + $0x3e8] sm:$0xf]
  %v323 = vld [vmem:[%s1 + $0x3ec] sm:$0xf]
  %v324 = vld [vmem:[%s1 + $0x3f0] sm:$0xf]
  %v325 = vld [vmem:[%s1 + $0x3f4] sm:$0xf]
  %v326 = vld [vmem:[%s1 + $0x3f8] sm:$0xf]
  %v327 = vld [vmem:[%s1 + $0x3fc] sm:$0xf]
  %v328 = vld [vmem:[%s1 + $0x400] sm:$0xf]
  %v329 = vld [vmem:[%s1 + $0x404] sm:$0xf]
  %v330 = vld [vmem:[%s1 + $0x408] sm:$0xf]
  %v331 = vld [vmem:[%s1 + $0x40c] sm:$0xf]
  %v332 = vld [vmem:[%s1 + $0x410] sm:$0xf]
  %v333 = vld [vmem:[%s1 + $0x414] sm:$0xf]
  %v334 = vld [vmem:[%s1 + $0x418] sm:$0xf]
  %v335 = vld [vmem:[%s1 + $0x41c] sm:$0xf]
  %v336 = vld [vmem:[%s1 + $0x420] sm:$0xf]
  %v337 = vld [vmem:[%s1 + $0x424] sm:$0xf]
  %v338 = vld [vmem:[%s1 + $0x428] sm:$0xf]
  %v339 = vld [vmem:[%s1 + $0x42c] sm:$0xf]
  %v340 = vld [vmem:[%s1 + $0x430] sm:$0xf]
  %v341 = vld [vmem:[%s1 + $0x434] sm:$0xf]
  %v342 = vld [vmem:[%s1 + $0x438] sm:$0xf]
  %v343 = vld [vmem:[%s1 + $0x43c] sm:$0xf]
  %v344 = vld [vmem:[%s1 + $0x440] sm:$0xf]
  %v345 = vld [vmem:[%s1 + $0x444] sm:$0xf]
  %v346 = vld [vmem:[%s1 + $0x448] sm:$0xf]
  %v347 = vld [vmem:[%s1 + $0x44c] sm:$0xf]
  %v348 = vld [vmem:[%s1 + $0x450] sm:$0xf]
  %v349 = vld [vmem:[%s1 + $0x454] sm:$0xf]
  %v350 = vld [vmem:[%s1 + $0x458] sm:$0xf]
  %v351 = vld [vmem:[%s1 + $0x45c] sm:$0xf]
  %v352 = vld [vmem:[%s1 + $0x460] sm:$0xf]
  %v353 = vld [vmem:[%s1 + $0x464] sm:$0xf]
  %v354 = vld [vmem:[%s1 + $0x468] sm:$0xf]
  %v355 = vld [vmem:[%s1 + $0x46c] sm:$0xf]
  %v356 = vld [vmem:[%s1 + $0x470] sm:$0xf]
  %v357 = vld [vmem:[%s1 + $0x474] sm:$0xf]
  %v358 = vld [vmem:[%s1 + $0x478] sm:$0xf]
  %v359 = vld [vmem:[%s1 + $0x47c] sm:$0xf]
  %v360 = vld [vmem:[%s1 + $0x480] sm:$0xf]
  %v361 = vld [vmem:[%s1 + $0x484] sm:$0xf]
  %v362 = vld [vmem:[%s1 + $0x488] sm:$0xf]
  %v363 = vld [vmem:[%s1 + $0x48c] sm:$0xf]
  %v364 = vld [vmem:[%s1 + $0x490] sm:$0xf]
  %v365 = vld [vmem:[%s1 + $0x494] sm:$0xf]
  %v366 = vld [vmem:[%s1 + $0x498] sm:$0xf]
  %v367 = vld [vmem:[%s1 + $0x49c] sm:$0xf]
  %v368 = vld [vmem:[%s1 + $0x4a0] sm:$0xf]
  %v369 = vld [vmem:[%s1 + $0x4a4] sm:$0xf]
  %v370 = vld [vmem:[%s1 + $0x4a8] sm:$0xf]
  %v371 = vld [vmem:[%s1 + $0x4ac] sm:$0xf]
  %v372 = vld [vmem:[%s1 + $0x4b0] sm:$0xf]
  %v373 = vld [vmem:[%s1 + $0x4b4] sm:$0xf]
  %v374 = vld [vmem:[%s1 + $0x4b8] sm:$0xf]
  %v375 = vld [vmem:[%s1 + $0x4bc] sm:$0xf]
  %v376 = vld [vmem:[%s1 + $0x4c0] sm:$0xf]
  %v377 = vld [vmem:[%s1 + $0x4c4] sm:$0xf]
  %v378 = vld [vmem:[%s1 + $0x4c8] sm:$0xf]
  %v379 = vld [vmem:[%s1 + $0x4cc] sm:$0xf]
  %v380 = vld [vmem:[%s1 + $0x4d0] sm:$0xf]
  %v381 = vld [vmem:[%s1 + $0x4d4] sm:$0xf]
  %v382 = vld [vmem:[%s1 + $0x4d8] sm:$0xf]
  %v383 = vld [vmem:[%s1 + $0x4dc] sm:$0xf]
  %v384 = vld [vmem:[%s1 + $0x4e0] sm:$0xf]
  %v385 = vld [vmem:[%s1 + $0x4e4] sm:$0xf]
  %v386 = vld [vmem:[%s1 + $0x4e8] sm:$0xf]
  %v387 = vld [vmem:[%s1 + $0x4ec] sm:$0xf]
  %v388 = vld [vmem:[%s1 + $0x4f0] sm:$0xf]
  %v389 = vld [vmem:[%s1 + $0x4f4] sm:$0xf]
  %v390 = vld [vmem:[%s1 + $0x4f8] sm:$0xf]
  %v391 = vld [vmem:[%s1 + $0x4fc] sm:$0xf]
  %v392 = vld [vmem:[%s1 + $0x500] sm:$0xf]
  %v393 = vld [vmem:[%s1 + $0x504] sm:$0xf]
  %v394 = vld [vmem:[%s1 + $0x508] sm:$0xf]
  %v395 = vld [vmem:[%s1 + $0x50c] sm:$0xf]
  %v396 = vld [vmem:[%s1 + $0x510] sm:$0xf]
  %v397 = vld [vmem:[%s1 + $0x514] sm:$0xf]
  %v398 = vld [vmem:[%s1 + $0x518] sm:$0xf]
  %v399 = vld [vmem:[%s1 + $0x51c] sm:$0xf]
  %v400 = vld [vmem:[%s1 + $0x520] sm:$0xf]
  %v401 = vld [vmem:[%s1 + $0x524] sm:$0xf]
  %v402 = vld [vmem:[%s1 + $0x528] sm:$0xf]
  %v403 = vld [vmem:[%s1 + $0x52c] sm:$0xf]
  %v404 = vld [vmem:[%s1 + $0x530] sm:$0xf]
  %v405 = vld [vmem:[%s1 + $0x534] sm:$0xf]
  %v406 = vld [vmem:[%s1 + $0x538] sm:$0xf]
  %v407 = vld [vmem:[%s1 + $0x53c] sm:$0xf]
  %v408 = vld [vmem:[%s1 + $0x540] sm:$0xf]
  %v409 = vld [vmem:[%s1 + $0x544] sm:$0xf]
  %v410 = vld [vmem:[%s1 + $0x548] sm:$0xf]
  %v411 = vld [vmem:[%s1 + $0x54c] sm:$0xf]
  %v412 = vld [vmem:[%s1 + $0x550] sm:$0xf]
  %v413 = vld [vmem:[%s1 + $0x554] sm:$0xf]
  %v414 = vld [vmem:[%s1 + $0x558] sm:$0xf]
  %v415 = vld [vmem:[%s1 + $0x55c] sm:$0xf]
  %v416 = vld [vmem:[%s1 + $0x560] sm:$0xf]
  %v417 = vld [vmem:[%s1 + $0x564] sm:$0xf]
  %v418 = vld [vmem:[%s1 + $0x568] sm:$0xf]
  %v419 = vld [vmem:[%s1 + $0x56c] sm:$0xf]
  %v420 = vld [vmem:[%s1 + $0x570] sm:$0xf]
  %v421 = vld [vmem:[%s1 + $0x574] sm:$0xf]
  %v422 = vld [vmem:[%s1 + $0x578] sm:$0xf]
  %v423 = vld [vmem:[%s1 + $0x57c] sm:$0xf]
  %v424 = vld [vmem:[%s1 + $0x580] sm:$0xf]
  %v425 = vld [vmem:[%s1 + $0x584] sm:$0xf]
  %v426 = vld [vmem:[%s1 + $0x588] sm:$0xf]
  %v427 = vld [vmem:[%s1 + $0x58c] sm:$0xf]
  %v428 = vld [vmem:[%s1 + $0x590] sm:$0xf]
  %v429 = vld [vmem:[%s1 + $0x594] sm:$0xf]
  %v430 = vld [vmem:[%s1 + $0x598] sm:$0xf]
  %v431 = vld [vmem:[%s1 + $0x59c] sm:$0xf]
  %v432 = vld [vmem:[%s1 + $0x5a0] sm:$0xf]
  %v433 = vld [vmem:[%s1 + $0x5a4] sm:$0xf]
  %v434 = vld [vmem:[%s1 + $0x5a8] sm:$0xf]
  %v435 = vld [vmem:[%s1 + $0x5ac] sm:$0xf]
  %v436 = vld [vmem:[%s1 + $0x5b0] sm:$0xf]
  %v437 = vld [vmem:[%s1 + $0x5b4] sm:$0xf]
  %v438 = vld [vmem:[%s1 + $0x5b8] sm:$0xf]
  %v439 = vld [vmem:[%s1 + $0x5bc] sm:$0xf]
  %v440 = vld [vmem:[%s1 + $0x5c0] sm:$0xf]
  %v441 = vld [vmem:[%s1 + $0x5c4] sm:$0xf]
  %v442 = vld [vmem:[%s1 + $0x5c8] sm:$0xf]
  %v443 = vld [vmem:[%s1 + $0x5cc] sm:$0xf]
  %v444 = vld [vmem:[%s1 + $0x5d0] sm:$0xf]
  %v445 = vld [vmem:[%s1 + $0x5d4] sm:$0xf]
  %v446 = vld [vmem:[%s1 + $0x5d8] sm:$0xf]
  %v447 = vld [vmem:[%s1 + $0x5dc] sm:$0xf]
  %v448 = vld [vmem:[%s1 + $0x5e0] sm:$0xf]
  %v449 = vld [vmem:[%s1 + $0x5e4] sm:$0xf]
  %v450 = vld [vmem:[%s1 + $0x5e8] sm:$0xf]
  %v451 = vld [vmem:[%s1 + $0x5ec] sm:$0xf]
  %v452 = vld [vmem:[%s1 + $0x5f0] sm:$0xf]
  %v453 = vld [vmem:[%s1 + $0x5f4] sm:$0xf]
  %v454 = vld [vmem:[%s1 + $0x5f8] sm:$0xf]
  %v455 = vld [vmem:[%s1 + $0x5fc] sm:$0xf]
  %v456 = vld [vmem:[%s1 + $0x600] sm:$0xf]
  %v457 = vld [vmem:[%s1 + $0x604] sm:$0xf]
  %v458 = vld [vmem:[%s1 + $0x608] sm:$0xf]
  %v459 = vld [vmem:[%s1 + $0x60c] sm:$0xf]
  %v460 = vld [vmem:[%s1 + $0x610] sm:$0xf]
  %v461 = vld [vmem:[%s1 + $0x614] sm:$0xf]
  %v462 = vld [vmem:[%s1 + $0x618] sm:$0xf]
  %v463 = vld [vmem:[%s1 + $0x61c] sm:$0xf]
  %v464 = vld [vmem:[%s1 + $0x620] sm:$0xf]
  %v465 = vld [vmem:[%s1 + $0x624] sm:$0xf]
  %v466 = vld [vmem:[%s1 + $0x628] sm:$0xf]
  %v467 = vld [vmem:[%s1 + $0x62c] sm:$0xf]
  %v468 = vld [vmem:[%s1 + $0x630] sm:$0xf]
  %v469 = vld [vmem:[%s1 + $0x634] sm:$0xf]
  %v470 = vld [vmem:[%s1 + $0x638] sm:$0xf]
  %v471 = vld [vmem:[%s1 + $0x63c] sm:$0xf]
  %v472 = vld [vmem:[%s1 + $0x640] sm:$0xf]
  %v473 = vld [vmem:[%s1 + $0x644] sm:$0xf]
  %v474 = vld [vmem:[%s1 + $0x648] sm:$0xf]
  %v475 = vld [vmem:[%s1 + $0x64c] sm:$0xf]
  %v476 = vld [vmem:[%s1 + $0x650] sm:$0xf]
  %v477 = vld [vmem:[%s1 + $0x654] sm:$0xf]
  %v478 = vld [vmem:[%s1 + $0x658] sm:$0xf]
  %v479 = vld [vmem:[%s1 + $0x65c] sm:$0xf]
  %v480 = vld [vmem:[%s1 + $0x660] sm:$0xf]
  %v481 = vld [vmem:[%s1 + $0x664] sm:$0xf]
  %v482 = vld [vmem:[%s1 + $0x668] sm:$0xf]
  %v483 = vld [vmem:[%s1 + $0x66c] sm:$0xf]
  %v484 = vld [vmem:[%s1 + $0x670] sm:$0xf]
  %v485 = vld [vmem:[%s1 + $0x674] sm:$0xf]
  %v486 = vld [vmem:[%s1 + $0x678] sm:$0xf]
  %v487 = vld [vmem:[%s1 + $0x67c] sm:$0xf]
  %v488 = vld [vmem:[%s1 + $0x680] sm:$0xf]
  %v489 = vld [vmem:[%s1 + $0x684] sm:$0xf]
  %v490 = vld [vmem:[%s1 + $0x688] sm:$0xf]
  %v491 = vld [vmem:[%s1 + $0x68c] sm:$0xf]
  %v492 = vld [vmem:[%s1 + $0x690] sm:$0xf]
  %v493 = vld [vmem:[%s1 + $0x694] sm:$0xf]
  %v494 = vld [vmem:[%s1 + $0x698] sm:$0xf]
  %v495 = vld [vmem:[%s1 + $0x69c] sm:$0xf]
  %v496 = vld [vmem:[%s1 + $0x6a0] sm:$0xf]
  %v497 = vld [vmem:[%s1 + $0x6a4] sm:$0xf]
  %v498 = vld [vmem:[%s1 + $0x6a8] sm:$0xf]
  %v499 = vld [vmem:[%s1 + $0x6ac] sm:$0xf]
  %v500 = vld [vmem:[%s1 + $0x6b0] sm:$0xf]
  %v501 = vld [vmem:[%s1 + $0x6b4] sm:$0xf]
  %v502 = vld [vmem:[%s1 + $0x6b8] sm:$0xf]
  %v503 = vld [vmem:[%s1 + $0x6bc] sm:$0xf]
  %v504 = vld [vmem:[%s1 + $0x6c0] sm:$0xf]
  %v505 = vld [vmem:[%s1 + $0x6c4] sm:$0xf]
  %v506 = vld [vmem:[%s1 + $0x6c8] sm:$0xf]
  %v507 = vld [vmem:[%s1 + $0x6cc] sm:$0xf]
  %v508 = vld [vmem:[%s1 + $0x6d0] sm:$0xf]
  %v509 = vld [vmem:[%s1 + $0x6d4] sm:$0xf]
  %v510 = vld [vmem:[%s1 + $0x6d8] sm:$0xf]
  %v511 = vld [vmem:[%s1 + $0x6dc] sm:$0xf]
  %v512 = vld [vmem:[%s1 + $0x6e0] sm:$0xf]
  %v513 = vld [vmem:[%s1 + $0x6e4] sm:$0xf]
  %v514 = vld [vmem:[%s1 + $0x6e8] sm:$0xf]
  %v515 = vld [vmem:[%s1 + $0x6ec] sm:$0xf]
  %v516 = vld [vmem:[%s1 + $0x6f0] sm:$0xf]
  %v517 = vld [vmem:[%s1 + $0x6f4] sm:$0xf]
  %v518 = vld [vmem:[%s1 + $0x6f8] sm:$0xf]
  %v519 = vld [vmem:[%s1 + $0x6fc] sm:$0xf]
  %v520 = vld [vmem:[%s1 + $0x700] sm:$0xf]
  %v521 = vld [vmem:[%s1 + $0x704] sm:$0xf]
  %v522 = vld [vmem:[%s1 + $0x708] sm:$0xf]
  %v523 = vld [vmem:[%s1 + $0x70c] sm:$0xf]
  %v524 = vld [vmem:[%s1 + $0x710] sm:$0xf]
  %v525 = vld [vmem:[%s1 + $0x714] sm:$0xf]
  %v526 = vld [vmem:[%s1 + $0x718] sm:$0xf]
  %v527 = vld [vmem:[%s1 + $0x71c] sm:$0xf]
  %v528 = vld [vmem:[%s1 + $0x720] sm:$0xf]
  %v529 = vld [vmem:[%s1 + $0x724] sm:$0xf]
  %v530 = vld [vmem:[%s1 + $0x728] sm:$0xf]
  %v531 = vld [vmem:[%s1 + $0x72c] sm:$0xf]
  %v532 = vld [vmem:[%s1 + $0x730] sm:$0xf]
  %v533 = vld [vmem:[%s1 + $0x734] sm:$0xf]
  %v534 = vld [vmem:[%s1 + $0x738] sm:$0xf]
  %v535 = vld [vmem:[%s1 + $0x73c] sm:$0xf]
  %v536 = vld [vmem:[%s1 + $0x740] sm:$0xf]
  %v537 = vld [vmem:[%s1 + $0x744] sm:$0xf]
  %v538 = vld [vmem:[%s1 + $0x748] sm:$0xf]
  %v539 = vld [vmem:[%s1 + $0x74c] sm:$0xf]
  %v540 = vld [vmem:[%s1 + $0x750] sm:$0xf]
  %v541 = vld [vmem:[%s1 + $0x754] sm:$0xf]
  %v542 = vld [vmem:[%s1 + $0x758] sm:$0xf]
  %v543 = vld [vmem:[%s1 + $0x75c] sm:$0xf]
  %v544 = vld [vmem:[%s1 + $0x760] sm:$0xf]
  %v545 = vld [vmem:[%s1 + $0x764] sm:$0xf]
  %v546 = vld [vmem:[%s1 + $0x768] sm:$0xf]
  %v547 = vld [vmem:[%s1 + $0x76c] sm:$0xf]
  %v548 = vld [vmem:[%s1 + $0x770] sm:$0xf]
  %v549 = vld [vmem:[%s1 + $0x774] sm:$0xf]
  %v550 = vld [vmem:[%s1 + $0x778] sm:$0xf]
  %v551 = vld [vmem:[%s1 + $0x77c] sm:$0xf]
  %v552 = vld [vmem:[%s1 + $0x780] sm:$0xf]
  %v553 = vld [vmem:[%s1 + $0x784] sm:$0xf]
  %v554 = vld [vmem:[%s1 + $0x788] sm:$0xf]
  %v555 = vld [vmem:[%s1 + $0x78c] sm:$0xf]
  %v556 = vld [vmem:[%s1 + $0x790] sm:$0xf]
  %v557 = vld [vmem:[%s1 + $0x794] sm:$0xf]
  %v558 = vld [vmem:[%s1 + $0x798] sm:$0xf]
  %v559 = vld [vmem:[%s1 + $0x79c] sm:$0xf]
  %v560 = vld [vmem:[%s1 + $0x7a0] sm:$0xf]
  %v561 = vld [vmem:[%s1 + $0x7a4] sm:$0xf]
  %v562 = vld [vmem:[%s1 + $0x7a8] sm:$0xf]
  %v563 = vld [vmem:[%s1 + $0x7ac] sm:$0xf]
  %v564 = vld [vmem:[%s1 + $0x7b0] sm:$0xf]
  %v565 = vld [vmem:[%s1 + $0x7b4] sm:$0xf]
  %v566 = vld [vmem:[%s1 + $0x7b8] sm:$0xf]
  %v567 = vld [vmem:[%s1 + $0x7bc] sm:$0xf]
  %v568 = vld [vmem:[%s1 + $0x7c0] sm:$0xf]
  %v569 = vld [vmem:[%s1 + $0x7c4] sm:$0xf]
  %v570 = vld [vmem:[%s1 + $0x7c8] sm:$0xf]
  %v571 = vld [vmem:[%s1 + $0x7cc] sm:$0xf]
  %v572 = vld [vmem:[%s1 + $0x7d0] sm:$0xf]
  %v573 = vld [vmem:[%s1 + $0x7d4] sm:$0xf]
  %v574 = vld [vmem:[%s1 + $0x7d8] sm:$0xf]
  %v575 = vld [vmem:[%s1 + $0x7dc] sm:$0xf]
  %v576 = vld [vmem:[%s1 + $0x7e0] sm:$0xf]
  %v577 = vld [vmem:[%s1 + $0x7e4] sm:$0xf]
  %v578 = vld [vmem:[%s1 + $0x7e8] sm:$0xf]
  %v579 = vld [vmem:[%s1 + $0x7ec] sm:$0xf]
  %v580 = vld [vmem:[%s1 + $0x7f0] sm:$0xf]
  %v581 = vld [vmem:[%s1 + $0x7f4] sm:$0xf]
  %v582 = vld [vmem:[%s1 + $0x7f8] sm:$0xf]
  %v583 = vld [vmem:[%s1 + $0x7fc] sm:$0xf]
  %v584 = vld [vmem:[%s1 + $0x800] sm:$0xf]
  %v585 = vld [vmem:[%s1 + $0x804] sm:$0xf]
  %v586 = vld [vmem:[%s1 + $0x808] sm:$0xf]
  %v587 = vld [vmem:[%s1 + $0x80c] sm:$0xf]
  %v588 = vld [vmem:[%s1 + $0x810] sm:$0xf]
  %v589 = vld [vmem:[%s1 + $0x814] sm:$0xf]
  %v590 = vld [vmem:[%s1 + $0x818] sm:$0xf]
  %v591 = vld [vmem:[%s1 + $0x81c] sm:$0xf]
  %v592 = vld [vmem:[%s1 + $0x820] sm:$0xf]
  %v593 = vld [vmem:[%s1 + $0x824] sm:$0xf]
  %v594 = vld [vmem:[%s1 + $0x828] sm:$0xf]
  %v595 = vld [vmem:[%s1 + $0x82c] sm:$0xf]
  %v596 = vld [vmem:[%s1 + $0x830] sm:$0xf]
  %v597 = vld [vmem:[%s1 + $0x834] sm:$0xf]
  %v598 = vld [vmem:[%s1 + $0x838] sm:$0xf]
  %v599 = vld [vmem:[%s1 + $0x83c] sm:$0xf]
  %v600 = vld [vmem:[%s1 + $0x840] sm:$0xf]
  %v601 = vld [vmem:[%s1 + $0x844] sm:$0xf]
  %v602 = vld [vmem:[%s1 + $0x848] sm:$0xf]
  %v603 = vld [vmem:[%s1 + $0x84c] sm:$0xf]
  %v604 = vld [vmem:[%s1 + $0x850] sm:$0xf]
  %v605 = vld [vmem:[%s1 + $0x854] sm:$0xf]
  %v606 = vld [vmem:[%s1 + $0x858] sm:$0xf]
  %v607 = vld [vmem:[%s1 + $0x85c] sm:$0xf]
  %v608 = vld [vmem:[%s1 + $0x860] sm:$0xf]
  %v609 = vld [vmem:[%s1 + $0x864] sm:$0xf]
  %v610 = vld [vmem:[%s1 + $0x868] sm:$0xf]
  %v611 = vld [vmem:[%s1 + $0x86c] sm:$0xf]
  %v612 = vld [vmem:[%s1 + $0x870] sm:$0xf]
  %v613 = vld [vmem:[%s1 + $0x874] sm:$0xf]
  %v614 = vld [vmem:[%s1 + $0x878] sm:$0xf]
  %v615 = vld [vmem:[%s1 + $0x87c] sm:$0xf]
  %v616 = vld [vmem:[%s1 + $0x880] sm:$0xf]
  %v617 = vld [vmem:[%s1 + $0x884] sm:$0xf]
  %v618 = vld [vmem:[%s1 + $0x888] sm:$0xf]
  %v619 = vld [vmem:[%s1 + $0x88c] sm:$0xf]
  %v620 = vld [vmem:[%s1 + $0x890] sm:$0xf]
  %v621 = vld [vmem:[%s1 + $0x894] sm:$0xf]
  %v622 = vld [vmem:[%s1 + $0x898] sm:$0xf]
  %v623 = vld [vmem:[%s1 + $0x89c] sm:$0xf]
  %v624 = vld [vmem:[%s1 + $0x8a0] sm:$0xf]
  %v625 = vld [vmem:[%s1 + $0x8a4] sm:$0xf]
  %v626 = vld [vmem:[%s1 + $0x8a8] sm:$0xf]
  %v627 = vld [vmem:[%s1 + $0x8ac] sm:$0xf]
  %v628 = vld [vmem:[%s1 + $0x8b0] sm:$0xf]
  %v629 = vld [vmem:[%s1 + $0x8b4] sm:$0xf]
  %v630 = vld [vmem:[%s1 + $0x8b8] sm:$0xf]
  %v631 = vld [vmem:[%s1 + $0x8bc] sm:$0xf]
  %v632 = vld [vmem:[%s1 + $0x8c0] sm:$0xf]
  %v633 = vld [vmem:[%s1 + $0x8c4] sm:$0xf]
  %v634 = vld [vmem:[%s1 + $0x8c8] sm:$0xf]
  %v635 = vld [vmem:[%s1 + $0x8cc] sm:$0xf]
  %v636 = vld [vmem:[%s1 + $0x8d0] sm:$0xf]
  %v637 = vld [vmem:[%s1 + $0x8d4] sm:$0xf]
  %v638 = vld [vmem:[%s1 + $0x8d8] sm:$0xf]
  %v639 = vld [vmem:[%s1 + $0x8dc] sm:$0xf]
  %v640 = vld [vmem:[%s1 + $0x8e0] sm:$0xf]
  %v641 = vld [vmem:[%s1 + $0x8e4] sm:$0xf]
  %v642 = vld [vmem:[%s1 + $0x8e8] sm:$0xf]
  %v643 = vld [vmem:[%s1 + $0x8ec] sm:$0xf]
  %v644 = vld [vmem:[%s1 + $0x8f0] sm:$0xf]
  %v645 = vld [vmem:[%s1 + $0x8f4] sm:$0xf]
  %v646 = vld [vmem:[%s1 + $0x8f8] sm:$0xf]
  %v647 = vld [vmem:[%s1 + $0x8fc] sm:$0xf]
  %v648 = vld [vmem:[%s1 + $0x900] sm:$0xf]
  %v649 = vld [vmem:[%s1 + $0x904] sm:$0xf]
  %v650 = vld [vmem:[%s1 + $0x908] sm:$0xf]
  %v651 = vld [vmem:[%s1 + $0x90c] sm:$0xf]
  %v652 = vld [vmem:[%s1 + $0x910] sm:$0xf]
  %v653 = vld [vmem:[%s1 + $0x914] sm:$0xf]
  %v654 = vld [vmem:[%s1 + $0x918] sm:$0xf]
  %v655 = vld [vmem:[%s1 + $0x91c] sm:$0xf]
  %v656 = vld [vmem:[%s1 + $0x920] sm:$0xf]
  %v657 = vld [vmem:[%s1 + $0x924] sm:$0xf]
  %v658 = vld [vmem:[%s1 + $0x928] sm:$0xf]
  %v659 = vld [vmem:[%s1 + $0x92c] sm:$0xf]
  %v660 = vld [vmem:[%s1 + $0x930] sm:$0xf]
  %v661 = vld [vmem:[%s1 + $0x934] sm:$0xf]
  %v662 = vld [vmem:[%s1 + $0x938] sm:$0xf]
  %v663 = vld [vmem:[%s1 + $0x93c] sm:$0xf]
  %v664 = vld [vmem:[%s1 + $0x940] sm:$0xf]
  %v665 = vld [vmem:[%s1 + $0x944] sm:$0xf]
  %v666 = vld [vmem:[%s1 + $0x948] sm:$0xf]
  %v667 = vld [vmem:[%s1 + $0x94c] sm:$0xf]
  %v668 = vld [vmem:[%s1 + $0x950] sm:$0xf]
  %v669 = vld [vmem:[%s1 + $0x954] sm:$0xf]
  %v670 = vld [vmem:[%s1 + $0x958] sm:$0xf]
  %v671 = vld [vmem:[%s1 + $0x95c] sm:$0xf]
  %v672 = vld [vmem:[%s1 + $0x960] sm:$0xf]
  %v673 = vld [vmem:[%s1 + $0x964] sm:$0xf]
  %v674 = vld [vmem:[%s1 + $0x968] sm:$0xf]
  %v675 = vld [vmem:[%s1 + $0x96c] sm:$0xf]
  %v676 = vld [vmem:[%s1 + $0x970] sm:$0xf]
  %v677 = vld [vmem:[%s1 + $0x974] sm:$0xf]
  %v678 = vld [vmem:[%s1 + $0x978] sm:$0xf]
  %v679 = vld [vmem:[%s1 + $0x97c] sm:$0xf]
  %v680 = vld [vmem:[%s1 + $0x980] sm:$0xf]
  %v681 = vld [vmem:[%s1 + $0x984] sm:$0xf]
  %v682 = vld [vmem:[%s1 + $0x988] sm:$0xf]
  %v683 = vld [vmem:[%s1 + $0x98c] sm:$0xf]
  %v684 = vld [vmem:[%s1 + $0x990] sm:$0xf]
  %v685 = vld [vmem:[%s1 + $0x994] sm:$0xf]
  %v686 = vld [vmem:[%s1 + $0x998] sm:$0xf]
  %v687 = vld [vmem:[%s1 + $0x99c] sm:$0xf]
  %v688 = vld [vmem:[%s1 + $0x9a0] sm:$0xf]
  %v689 = vld [vmem:[%s1 + $0x9a4] sm:$0xf]
  %v690 = vld [vmem:[%s1 + $0x9a8] sm:$0xf]
  %v691 = vld [vmem:[%s1 + $0x9ac] sm:$0xf]
  %v692 = vld [vmem:[%s1 + $0x9b0] sm:$0xf]
  %v693 = vld [vmem:[%s1 + $0x9b4] sm:$0xf]
  %v694 = vld [vmem:[%s1 + $0x9b8] sm:$0xf]
  %v695 = vld [vmem:[%s1 + $0x9bc] sm:$0xf]
  %v696 = vld [vmem:[%s1 + $0x9c0] sm:$0xf]
  %v697 = vld [vmem:[%s1 + $0x9c4] sm:$0xf]
  %v698 = vld [vmem:[%s1 + $0x9c8] sm:$0xf]
  %v699 = vld [vmem:[%s1 + $0x9cc] sm:$0xf]
  %v700 = vld [vmem:[%s1 + $0x9d0] sm:$0xf]
  %v701 = vld [vmem:[%s1 + $0x9d4] sm:$0xf]
  %v702 = vld [vmem:[%s1 + $0x9d8] sm:$0xf]
  %v703 = vld [vmem:[%s1 + $0x9dc] sm:$0xf]
  %v704 = vld [vmem:[%s1 + $0x9e0] sm:$0xf]
  %v705 = vld [vmem:[%s1 + $0x9e4] sm:$0xf]
  %v706 = vld [vmem:[%s1 + $0x9e8] sm:$0xf]
  %v707 = vld [vmem:[%s1 + $0x9ec] sm:$0xf]
  %v708 = vld [vmem:[%s1 + $0x9f0] sm:$0xf]
  %v709 = vld [vmem:[%s1 + $0x9f4] sm:$0xf]
  %v710 = vld [vmem:[%s1 + $0x9f8] sm:$0xf]
  %v711 = vld [vmem:[%s1 + $0x9fc] sm:$0xf]
  %v712 = vld [vmem:[%s1 + $0xa00] sm:$0xf]
  %v713 = vld [vmem:[%s1 + $0xa04] sm:$0xf]
  %v714 = vld [vmem:[%s1 + $0xa08] sm:$0xf]
  %v715 = vld [vmem:[%s1 + $0xa0c] sm:$0xf]
  %v716 = vld [vmem:[%s1 + $0xa10] sm:$0xf]
  %v717 = vld [vmem:[%s1 + $0xa14] sm:$0xf]
  %v718 = vld [vmem:[%s1 + $0xa18] sm:$0xf]
  %v719 = vld [vmem:[%s1 + $0xa1c] sm:$0xf]
  %v720 = vld [vmem:[%s1 + $0xa20] sm:$0xf]
  %v721 = vld [vmem:[%s1 + $0xa24] sm:$0xf]
  %v722 = vld [vmem:[%s1 + $0xa28] sm:$0xf]
  %v723 = vld [vmem:[%s1 + $0xa2c] sm:$0xf]
  %v724 = vld [vmem:[%s1 + $0xa30] sm:$0xf]
  %v725 = vld [vmem:[%s1 + $0xa34] sm:$0xf]
  %v726 = vld [vmem:[%s1 + $0xa38] sm:$0xf]
  %v727 = vld [vmem:[%s1 + $0xa3c] sm:$0xf]
  %v728 = vld [vmem:[%s1 + $0xa40] sm:$0xf]
  %v729 = vld [vmem:[%s1 + $0xa44] sm:$0xf]
  %v730 = vld [vmem:[%s1 + $0xa48] sm:$0xf]
  %v731 = vld [vmem:[%s1 + $0xa4c] sm:$0xf]
  %v732 = vld [vmem:[%s1 + $0xa50] sm:$0xf]
  %v733 = vld [vmem:[%s1 + $0xa54] sm:$0xf]
  %v734 = vld [vmem:[%s1 + $0xa58] sm:$0xf]
  %v735 = vld [vmem:[%s1 + $0xa5c] sm:$0xf]
  %v736 = vld [vmem:[%s1 + $0xa60] sm:$0xf]
  %v737 = vld [vmem:[%s1 + $0xa64] sm:$0xf]
  %v738 = vld [vmem:[%s1 + $0xa68] sm:$0xf]
  %v739 = vld [vmem:[%s1 + $0xa6c] sm:$0xf]
  %v740 = vld [vmem:[%s1 + $0xa70] sm:$0xf]
  %v741 = vld [vmem:[%s1 + $0xa74] sm:$0xf]
  %v742 = vld [vmem:[%s1 + $0xa78] sm:$0xf]
  %v743 = vld [vmem:[%s1 + $0xa7c] sm:$0xf]
  %v744 = vld [vmem:[%s1 + $0xa80] sm:$0xf]
  %v745 = vld [vmem:[%s1 + $0xa84] sm:$0xf]
  %v746 = vld [vmem:[%s1 + $0xa88] sm:$0xf]
  %v747 = vld [vmem:[%s1 + $0xa8c] sm:$0xf]
  %v748 = vld [vmem:[%s1 + $0xa90] sm:$0xf]
  %v749 = vld [vmem:[%s1 + $0xa94] sm:$0xf]
  %v750 = vld [vmem:[%s1 + $0xa98] sm:$0xf]
  %v751 = vld [vmem:[%s1 + $0xa9c] sm:$0xf]
  %v752 = vld [vmem:[%s1 + $0xaa0] sm:$0xf]
  %v753 = vld [vmem:[%s1 + $0xaa4] sm:$0xf]
  %v754 = vld [vmem:[%s1 + $0xaa8] sm:$0xf]
  %v755 = vld [vmem:[%s1 + $0xaac] sm:$0xf]
  %v756 = vld [vmem:[%s1 + $0xab0] sm:$0xf]
  %v757 = vld [vmem:[%s1 + $0xab4] sm:$0xf]
  %v758 = vld [vmem:[%s1 + $0xab8] sm:$0xf]
  %v759 = vld [vmem:[%s1 + $0xabc] sm:$0xf]
  %v760 = vld [vmem:[%s1 + $0xac0] sm:$0xf]
  %v761 = vld [vmem:[%s1 + $0xac4] sm:$0xf]
  %v762 = vld [vmem:[%s1 + $0xac8] sm:$0xf]
  %v763 = vld [vmem:[%s1 + $0xacc] sm:$0xf]
  %v764 = vld [vmem:[%s1 + $0xad0] sm:$0xf]
  %v765 = vld [vmem:[%s1 + $0xad4] sm:$0xf]
  %v766 = vld [vmem:[%s1 + $0xad8] sm:$0xf]
  %v767 = vld [vmem:[%s1 + $0xadc] sm:$0xf]
  %v768 = vld [vmem:[%s1 + $0xae0] sm:$0xf]
  %v769 = vld [vmem:[%s1 + $0xae4] sm:$0xf]
  %v770 = vld [vmem:[%s1 + $0xae8] sm:$0xf]
  %v771 = vld [vmem:[%s1 + $0xaec] sm:$0xf]
  %v772 = vld [vmem:[%s1 + $0xaf0] sm:$0xf]
  %v773 = vld [vmem:[%s1 + $0xaf4] sm:$0xf]
  %v774 = vld [vmem:[%s1 + $0xaf8] sm:$0xf]
  %v775 = vld [vmem:[%s1 + $0xafc] sm:$0xf]
  %v776 = vld [vmem:[%s1 + $0xb00] sm:$0xf]
  %v777 = vld [vmem:[%s1 + $0xb04] sm:$0xf]
  %v778 = vld [vmem:[%s1 + $0xb08] sm:$0xf]
  %v779 = vld [vmem:[%s1 + $0xb0c] sm:$0xf]
  %v780 = vld [vmem:[%s1 + $0xb10] sm:$0xf]
  %v781 = vld [vmem:[%s1 + $0xb14] sm:$0xf]
  %v782 = vld [vmem:[%s1 + $0xb18] sm:$0xf]
  %v783 = vld [vmem:[%s1 + $0xb1c] sm:$0xf]
  %v784 = vld [vmem:[%s1 + $0xb20] sm:$0xf]
  %v785 = vld [vmem:[%s1 + $0xb24] sm:$0xf]
  %v786 = vld [vmem:[%s1 + $0xb28] sm:$0xf]
  %v787 = vld [vmem:[%s1 + $0xb2c] sm:$0xf]
  %v788 = vld [vmem:[%s1 + $0xb30] sm:$0xf]
  %v789 = vld [vmem:[%s1 + $0xb34] sm:$0xf]
  %v790 = vld [vmem:[%s1 + $0xb38] sm:$0xf]
  %v791 = vld [vmem:[%s1 + $0xb3c] sm:$0xf]
  %v792 = vld [vmem:[%s1 + $0xb40] sm:$0xf]
  %v793 = vld [vmem:[%s1 + $0xb44] sm:$0xf]
  %v794 = vld [vmem:[%s1 + $0xb48] sm:$0xf]
  %v795 = vld [vmem:[%s1 + $0xb4c] sm:$0xf]
  %v796 = vld [vmem:[%s1 + $0xb50] sm:$0xf]
  %v797 = vld [vmem:[%s1 + $0xb54] sm:$0xf]
  %v798 = vld [vmem:[%s1 + $0xb58] sm:$0xf]
  %v799 = vld [vmem:[%s1 + $0xb5c] sm:$0xf]
  %v800 = vld [vmem:[%s1 + $0xb60] sm:$0xf]
  %v801 = vld [vmem:[%s1 + $0xb64] sm:$0xf]
  %v802 = vld [vmem:[%s1 + $0xb68] sm:$0xf]
  %v803 = vld [vmem:[%s1 + $0xb6c] sm:$0xf]
  %v804 = vld [vmem:[%s1 + $0xb70] sm:$0xf]
  %v805 = vld [vmem:[%s1 + $0xb74] sm:$0xf]
  %v806 = vld [vmem:[%s1 + $0xb78] sm:$0xf]
  %v807 = vld [vmem:[%s1 + $0xb7c] sm:$0xf]
  %v808 = vld [vmem:[%s1 + $0xb80] sm:$0xf]
  %v809 = vld [vmem:[%s1 + $0xb84] sm:$0xf]
  %v810 = vld [vmem:[%s1 + $0xb88] sm:$0xf]
  %v811 = vld [vmem:[%s1 + $0xb8c] sm:$0xf]
  %v812 = vld [vmem:[%s1 + $0xb90] sm:$0xf]
  %v813 = vld [vmem:[%s1 + $0xb94] sm:$0xf]
  %v814 = vld [vmem:[%s1 + $0xb98] sm:$0xf]
  %v815 = vld [vmem:[%s1 + $0xb9c] sm:$0xf]
  %v816 = vld [vmem:[%s1 + $0xba0] sm:$0xf]
  %v817 = vld [vmem:[%s1 + $0xba4] sm:$0xf]
  %v818 = vld [vmem:[%s1 + $0xba8] sm:$0xf]
  %v819 = vld [vmem:[%s1 + $0xbac] sm:$0xf]
  %v820 = vld [vmem:[%s1 + $0xbb0] sm:$0xf]
  %v821 = vld [vmem:[%s1 + $0xbb4] sm:$0xf]
  %v822 = vld [vmem:[%s1 + $0xbb8] sm:$0xf]
  %v823 = vld [vmem:[%s1 + $0xbbc] sm:$0xf]
  %v824 = vld [vmem:[%s1 + $0xbc0] sm:$0xf]
  %v825 = vld [vmem:[%s1 + $0xbc4] sm:$0xf]
  %v826 = vld [vmem:[%s1 + $0xbc8] sm:$0xf]
  %v827 = vld [vmem:[%s1 + $0xbcc] sm:$0xf]
  %v828 = vld [vmem:[%s1 + $0xbd0] sm:$0xf]
  %v829 = vld [vmem:[%s1 + $0xbd4] sm:$0xf]
  %v830 = vld [vmem:[%s1 + $0xbd8] sm:$0xf]
  %v831 = vld [vmem:[%s1 + $0xbdc] sm:$0xf]
  %v832 = vld [vmem:[%s1 + $0xbe0] sm:$0xf]
  %v833 = vld [vmem:[%s1 + $0xbe4] sm:$0xf]
  %v834 = vld [vmem:[%s1 + $0xbe8] sm:$0xf]
  %v835 = vld [vmem:[%s1 + $0xbec] sm:$0xf]
  %v836 = vld [vmem:[%s1 + $0xbf0] sm:$0xf]
  %v837 = vld [vmem:[%s1 + $0xbf4] sm:$0xf]
  %v838 = vld [vmem:[%s1 + $0xbf8] sm:$0xf]
  %v839 = vld [vmem:[%s1 + $0xbfc] sm:$0xf]
  %v840 = vld [vmem:[%s1 + $0xc00] sm:$0xf]
  %v841 = vld [vmem:[%s1 + $0xc04] sm:$0xf]
  %v842 = vld [vmem:[%s1 + $0xc08] sm:$0xf]
  %v843 = vld [vmem:[%s1 + $0xc0c] sm:$0xf]
  %v844 = vld [vmem:[%s1 + $0xc10] sm:$0xf]
  %v845 = vld [vmem:[%s1 + $0xc14] sm:$0xf]
  %v846 = vld [vmem:[%s1 + $0xc18] sm:$0xf]
  %v847 = vld [vmem:[%s1 + $0xc1c] sm:$0xf]
  %v848 = vld [vmem:[%s1 + $0xc20] sm:$0xf]
  %v849 = vld [vmem:[%s1 + $0xc24] sm:$0xf]
  %v850 = vld [vmem:[%s1 + $0xc28] sm:$0xf]
  %v851 = vld [vmem:[%s1 + $0xc2c] sm:$0xf]
  %v852 = vld [vmem:[%s1 + $0xc30] sm:$0xf]
  %v853 = vld [vmem:[%s1 + $0xc34] sm:$0xf]
  %v854 = vld [vmem:[%s1 + $0xc38] sm:$0xf]
  %v855 = vld [vmem:[%s1 + $0xc3c] sm:$0xf]
  %v856 = vld [vmem:[%s1 + $0xc40] sm:$0xf]
  %v857 = vld [vmem:[%s1 + $0xc44] sm:$0xf]
  %v858 = vld [vmem:[%s1 + $0xc48] sm:$0xf]
  %v859 = vld [vmem:[%s1 + $0xc4c] sm:$0xf]
  %v860 = vld [vmem:[%s1 + $0xc50] sm:$0xf]
  %v861 = vld [vmem:[%s1 + $0xc54] sm:$0xf]
  %v862 = vld [vmem:[%s1 + $0xc58] sm:$0xf]
  %v863 = vld [vmem:[%s1 + $0xc5c] sm:$0xf]
  %v864 = vld [vmem:[%s1 + $0xc60] sm:$0xf]
  %v865 = vld [vmem:[%s1 + $0xc64] sm:$0xf]
  %v866 = vld [vmem:[%s1 + $0xc68] sm:$0xf]
  %v867 = vld [vmem:[%s1 + $0xc6c] sm:$0xf]
  %v868 = vld [vmem:[%s1 + $0xc70] sm:$0xf]
  %v869 = vld [vmem:[%s1 + $0xc74] sm:$0xf]
  %v870 = vld [vmem:[%s1 + $0xc78] sm:$0xf]
  %v871 = vld [vmem:[%s1 + $0xc7c] sm:$0xf]
  %v872 = vld [vmem:[%s1 + $0xc80] sm:$0xf]
  %v873 = vld [vmem:[%s1 + $0xc84] sm:$0xf]
  %v874 = vld [vmem:[%s1 + $0xc88] sm:$0xf]
  %v875 = vld [vmem:[%s1 + $0xc8c] sm:$0xf]
  %v876 = vld [vmem:[%s1 + $0xc90] sm:$0xf]
  %v877 = vld [vmem:[%s1 + $0xc94] sm:$0xf]
  %v878 = vld [vmem:[%s1 + $0xc98] sm:$0xf]
  %v879 = vld [vmem:[%s1 + $0xc9c] sm:$0xf]
  %v880 = vld [vmem:[%s1 + $0xca0] sm:$0xf]
  %v881 = vld [vmem:[%s1 + $0xca4] sm:$0xf]
  %v882 = vld [vmem:[%s1 + $0xca8] sm:$0xf]
  %v883 = vld [vmem:[%s1 + $0xcac] sm:$0xf]
  %v884 = vld [vmem:[%s1 + $0xcb0] sm:$0xf]
  %v885 = vld [vmem:[%s1 + $0xcb4] sm:$0xf]
  %v886 = vld [vmem:[%s1 + $0xcb8] sm:$0xf]
  %v887 = vld [vmem:[%s1 + $0xcbc] sm:$0xf]
  %v888 = vld [vmem:[%s1 + $0xcc0] sm:$0xf]
  %v889 = vld [vmem:[%s1 + $0xcc4] sm:$0xf]
  %v890 = vld [vmem:[%s1 + $0xcc8] sm:$0xf]
  %v891 = vld [vmem:[%s1 + $0xccc] sm:$0xf]
  %v892 = vld [vmem:[%s1 + $0xcd0] sm:$0xf]
  %v893 = vld [vmem:[%s1 + $0xcd4] sm:$0xf]
  %v894 = vld [vmem:[%s1 + $0xcd8] sm:$0xf]
  %v895 = vld [vmem:[%s1 + $0xcdc] sm:$0xf]
  %v896 = vld [vmem:[%s1 + $0xce0] sm:$0xf]
  %v897 = vld [vmem:[%s1 + $0xce4] sm:$0xf]
  %v898 = vld [vmem:[%s1 + $0xce8] sm:$0xf]
  %v899 = vld [vmem:[%s1 + $0xcec] sm:$0xf]
  %v900 = vld [vmem:[%s1 + $0xcf0] sm:$0xf]
  %v901 = vld [vmem:[%s1 + $0xcf4] sm:$0xf]
  %v902 = vld [vmem:[%s1 + $0xcf8] sm:$0xf]
  %v903 = vld [vmem:[%s1 + $0xcfc] sm:$0xf]
  %v904 = vld [vmem:[%s1 + $0xd00] sm:$0xf]
  %v905 = vld [vmem:[%s1 + $0xd04] sm:$0xf]
  %v906 = vld [vmem:[%s1 + $0xd08] sm:$0xf]
  %v907 = vld [vmem:[%s1 + $0xd0c] sm:$0xf]
  %v908 = vld [vmem:[%s1 + $0xd10] sm:$0xf]
  %v909 = vld [vmem:[%s1 + $0xd14] sm:$0xf]
  %v910 = vld [vmem:[%s1 + $0xd18] sm:$0xf]
  %v911 = vld [vmem:[%s1 + $0xd1c] sm:$0xf]
  %v912 = vld [vmem:[%s1 + $0xd20] sm:$0xf]
  %v913 = vld [vmem:[%s1 + $0xd24] sm:$0xf]
  %v914 = vld [vmem:[%s1 + $0xd28] sm:$0xf]
  %v915 = vld [vmem:[%s1 + $0xd2c] sm:$0xf]
  %v916 = vld [vmem:[%s1 + $0xd30] sm:$0xf]
  %v917 = vld [vmem:[%s1 + $0xd34] sm:$0xf]
  %v918 = vld [vmem:[%s1 + $0xd38] sm:$0xf]
  %v919 = vld [vmem:[%s1 + $0xd3c] sm:$0xf]
  %v920 = vld [vmem:[%s1 + $0xd40] sm:$0xf]
  %v921 = vld [vmem:[%s1 + $0xd44] sm:$0xf]
  %v922 = vld [vmem:[%s1 + $0xd48] sm:$0xf]
  %v923 = vld [vmem:[%s1 + $0xd4c] sm:$0xf]
  %v924 = vld [vmem:[%s1 + $0xd50] sm:$0xf]
  %v925 = vld [vmem:[%s1 + $0xd54] sm:$0xf]
  %v926 = vld [vmem:[%s1 + $0xd58] sm:$0xf]
  %v927 = vld [vmem:[%s1 + $0xd5c] sm:$0xf]
  %v928 = vld [vmem:[%s1 + $0xd60] sm:$0xf]
  %v929 = vld [vmem:[%s1 + $0xd64] sm:$0xf]
  %v930 = vld [vmem:[%s1 + $0xd68] sm:$0xf]
  %v931 = vld [vmem:[%s1 + $0xd6c] sm:$0xf]
  %v932 = vld [vmem:[%s1 + $0xd70] sm:$0xf]
  %v933 = vld [vmem:[%s1 + $0xd74] sm:$0xf]
  %v934 = vld [vmem:[%s1 + $0xd78] sm:$0xf]
  %v935 = vld [vmem:[%s1 + $0xd7c] sm:$0xf]
  %v936 = vld [vmem:[%s1 + $0xd80] sm:$0xf]
  %v937 = vld [vmem:[%s1 + $0xd84] sm:$0xf]
  %v938 = vld [vmem:[%s1 + $0xd88] sm:$0xf]
  %v939 = vld [vmem:[%s1 + $0xd8c] sm:$0xf]
  %v940 = vld [vmem:[%s1 + $0xd90] sm:$0xf]
  %v941 = vld [vmem:[%s1 + $0xd94] sm:$0xf]
  %v942 = vld [vmem:[%s1 + $0xd98] sm:$0xf]
  %v943 = vld [vmem:[%s1 + $0xd9c] sm:$0xf]
  %v944 = vld [vmem:[%s1 + $0xda0] sm:$0xf]
  %v945 = vld [vmem:[%s1 + $0xda4] sm:$0xf]
  %v946 = vld [vmem:[%s1 + $0xda8] sm:$0xf]
  %v947 = vld [vmem:[%s1 + $0xdac] sm:$0xf]
  %v948 = vld [vmem:[%s1 + $0xdb0] sm:$0xf]
  %v949 = vld [vmem:[%s1 + $0xdb4] sm:$0xf]
  %v950 = vld [vmem:[%s1 + $0xdb8] sm:$0xf]
  %v951 = vld [vmem:[%s1 + $0xdbc] sm:$0xf]
  %v952 = vld [vmem:[%s1 + $0xdc0] sm:$0xf]
  %v953 = vld [vmem:[%s1 + $0xdc4] sm:$0xf]
  %v954 = vld [vmem:[%s1 + $0xdc8] sm:$0xf]
  %v955 = vld [vmem:[%s1 + $0xdcc] sm:$0xf]
  %v956 = vld [vmem:[%s1 + $0xdd0] sm:$0xf]
  %v957 = vld [vmem:[%s1 + $0xdd4] sm:$0xf]
  %v958 = vld [vmem:[%s1 + $0xdd8] sm:$0xf]
  %v959 = vld [vmem:[%s1 + $0xddc] sm:$0xf]
  %v960 = vld [vmem:[%s1 + $0xde0] sm:$0xf]
  %v961 = vld [vmem:[%s1 + $0xde4] sm:$0xf]
  %v962 = vld [vmem:[%s1 + $0xde8] sm:$0xf]
  %v963 = vld [vmem:[%s1 + $0xdec] sm:$0xf]
  %v964 = vld [vmem:[%s1 + $0xdf0] sm:$0xf]
  %v965 = vld [vmem:[%s1 + $0xdf4] sm:$0xf]
  %v966 = vld [vmem:[%s1 + $0xdf8] sm:$0xf]
  %v967 = vld [vmem:[%s1 + $0xdfc] sm:$0xf]
  %v968 = vld [vmem:[%s1 + $0xe00] sm:$0xf]
  %v969 = vld [vmem:[%s1 + $0xe04] sm:$0xf]
  %v970 = vld [vmem:[%s1 + $0xe08] sm:$0xf]
  %v971 = vld [vmem:[%s1 + $0xe0c] sm:$0xf]
  %v972 = vld [vmem:[%s1 + $0xe10] sm:$0xf]
  %v973 = vld [vmem:[%s1 + $0xe14] sm:$0xf]
  %v974 = vld [vmem:[%s1 + $0xe18] sm:$0xf]
  %v975 = vld [vmem:[%s1 + $0xe1c] sm:$0xf]
  %v976 = vld [vmem:[%s1 + $0xe20] sm:$0xf]
  %v977 = vld [vmem:[%s1 + $0xe24] sm:$0xf]
  %v978 = vld [vmem:[%s1 + $0xe28] sm:$0xf]
  %v979 = vld [vmem:[%s1 + $0xe2c] sm:$0xf]
  %v980 = vld [vmem:[%s1 + $0xe30] sm:$0xf]
  %v981 = vld [vmem:[%s1 + $0xe34] sm:$0xf]
  %v982 = vld [vmem:[%s1 + $0xe38] sm:$0xf]
  %v983 = vld [vmem:[%s1 + $0xe3c] sm:$0xf]
  %v984 = vld [vmem:[%s1 + $0xe40] sm:$0xf]
  %v985 = vld [vmem:[%s1 + $0xe44] sm:$0xf]
  %v986 = vld [vmem:[%s1 + $0xe48] sm:$0xf]
  %v987 = vld [vmem:[%s1 + $0xe4c] sm:$0xf]
  %v988 = vld [vmem:[%s1 + $0xe50] sm:$0xf]
  %v989 = vld [vmem:[%s1 + $0xe54] sm:$0xf]
  %v990 = vld [vmem:[%s1 + $0xe58] sm:$0xf]
  %v991 = vld [vmem:[%s1 + $0xe5c] sm:$0xf]
  %v992 = vld [vmem:[%s1 + $0xe60] sm:$0xf]
  %v993 = vld [vmem:[%s1 + $0xe64] sm:$0xf]
  %v994 = vld [vmem:[%s1 + $0xe68] sm:$0xf]
  %v995 = vld [vmem:[%s1 + $0xe6c] sm:$0xf]
  %v996 = vld [vmem:[%s1 + $0xe70] sm:$0xf]
  %v997 = vld [vmem:[%s1 + $0xe74] sm:$0xf]
  %v998 = vld [vmem:[%s1 + $0xe78] sm:$0xf]
  %v999 = vld [vmem:[%s1 + $0xe7c] sm:$0xf]
  %v1000 = vld [vmem:[%s1 + $0xe80] sm:$0xf]
  %v1001 = vld [vmem:[%s1 + $0xe84] sm:$0xf]
  %v1002 = vld [vmem:[%s1 + $0xe88] sm:$0xf]
  %v1003 = vld [vmem:[%s1 + $0xe8c] sm:$0xf]
  %v1004 = vld [vmem:[%s1 + $0xe90] sm:$0xf]
  %v1005 = vld [vmem:[%s1 + $0xe94] sm:$0xf]
  %v1006 = vld [vmem:[%s1 + $0xe98] sm:$0xf]
  %v1007 = vld [vmem:[%s1 + $0xe9c] sm:$0xf]
  %v1008 = vld [vmem:[%s1 + $0xea0] sm:$0xf]
  %v1009 = vld [vmem:[%s1 + $0xea4] sm:$0xf]
  %v1010 = vld [vmem:[%s1 + $0xea8] sm:$0xf]
  %v1011 = vld [vmem:[%s1 + $0xeac] sm:$0xf]
  %v1012 = vld [vmem:[%s1 + $0xeb0] sm:$0xf]
  %v1013 = vld [vmem:[%s1 + $0xeb4] sm:$0xf]
  %v1014 = vld [vmem:[%s1 + $0xeb8] sm:$0xf]
  %v1015 = vld [vmem:[%s1 + $0xebc] sm:$0xf]
  %v1016 = vld [vmem:[%s1 + $0xec0] sm:$0xf]
  %v1017 = vld [vmem:[%s1 + $0xec4] sm:$0xf]
  %v1018 = vld [vmem:[%s1 + $0xec8] sm:$0xf]
  %v1019 = vld [vmem:[%s1 + $0xecc] sm:$0xf]
  %v1020 = vld [vmem:[%s1 + $0xed0] sm:$0xf]
  %v1021 = vld [vmem:[%s1 + $0xed4] sm:$0xf]
  %v1022 = vld [vmem:[%s1 + $0xed8] sm:$0xf]
  %v1023 = vld [vmem:[%s1 + $0xedc] sm:$0xf]
  %v1024 = vld [vmem:[%s1 + $0xee0] sm:$0xf]
  %v1025 = vld [vmem:[%s1 + $0xee4] sm:$0xf]
  %v1026 = vld [vmem:[%s1 + $0xee8] sm:$0xf]
  %v1027 = vld [vmem:[%s1 + $0xeec] sm:$0xf]
  %v1028 = vld [vmem:[%s1 + $0xef0] sm:$0xf]
  %v1029 = vld [vmem:[%s1 + $0xef4] sm:$0xf]
  %v1030 = vld [vmem:[%s1 + $0xef8] sm:$0xf]
  %v1031 = vld [vmem:[%s1 + $0xefc] sm:$0xf]
  %v1032 = vld [vmem:[%s1 + $0xf00] sm:$0xf]
  %v1033 = vld [vmem:[%s1 + $0xf04] sm:$0xf]
  %v1034 = vld [vmem:[%s1 + $0xf08] sm:$0xf]
  %v1035 = vld [vmem:[%s1 + $0xf0c] sm:$0xf]
  %v1036 = vld [vmem:[%s1 + $0xf10] sm:$0xf]
  %v1037 = vld [vmem:[%s1 + $0xf14] sm:$0xf]
  %v1038 = vld [vmem:[%s1 + $0xf18] sm:$0xf]
  %v1039 = vld [vmem:[%s1 + $0xf1c] sm:$0xf]
  %v1040 = vld [vmem:[%s1 + $0xf20] sm:$0xf]
  %v1041 = vld [vmem:[%s1 + $0xf24] sm:$0xf]
  %v1042 = vld [vmem:[%s1 + $0xf28] sm:$0xf]
  %v1043 = vld [vmem:[%s1 + $0xf2c] sm:$0xf]
  %v1044 = vld [vmem:[%s1 + $0xf30] sm:$0xf]
  %v1045 = vld [vmem:[%s1 + $0xf34] sm:$0xf]
  %v1046 = vld [vmem:[%s1 + $0xf38] sm:$0xf]
  %v1047 = vld [vmem:[%s1 + $0xf3c] sm:$0xf]
  %v1048 = vld [vmem:[%s1 + $0xf40] sm:$0xf]
  %v1049 = vld [vmem:[%s1 + $0xf44] sm:$0xf]
  %v1050 = vld [vmem:[%s1 + $0xf48] sm:$0xf]
  %v1051 = vld [vmem:[%s1 + $0xf4c] sm:$0xf]
  %v1052 = vld [vmem:[%s1 + $0xf50] sm:$0xf]
  %v1053 = vld [vmem:[%s1 + $0xf54] sm:$0xf]
  %v1054 = vld [vmem:[%s1 + $0xf58] sm:$0xf]
  %v1055 = vld [vmem:[%s1 + $0xf5c] sm:$0xf]
  %v1056 = vld [vmem:[%s1 + $0xf60] sm:$0xf]
  %v1057 = vld [vmem:[%s1 + $0xf64] sm:$0xf]
  %v1058 = vld [vmem:[%s1 + $0xf68] sm:$0xf]
  %v1059 = vld [vmem:[%s1 + $0xf6c] sm:$0xf]
  %v1060 = vld [vmem:[%s1 + $0xf70] sm:$0xf]
  %v1061 = vld [vmem:[%s1 + $0xf74] sm:$0xf]
  %v1062 = vld [vmem:[%s1 + $0xf78] sm:$0xf]
  %v1063 = vld [vmem:[%s1 + $0xf7c] sm:$0xf]
  %v1064 = vld [vmem:[%s1 + $0xf80] sm:$0xf]
  %v1065 = vld [vmem:[%s1 + $0xf84] sm:$0xf]
  %v1066 = vld [vmem:[%s1 + $0xf88] sm:$0xf]
  %v1067 = vld [vmem:[%s1 + $0xf8c] sm:$0xf]
  %v1068 = vld [vmem:[%s1 + $0xf90] sm:$0xf]
  %v1069 = vld [vmem:[%s1 + $0xf94] sm:$0xf]
  %v1070 = vld [vmem:[%s1 + $0xf98] sm:$0xf]
  %v1071 = vld [vmem:[%s1 + $0xf9c] sm:$0xf]
  %v1072 = vld [vmem:[%s1 + $0xfa0] sm:$0xf]
  %v1073 = vld [vmem:[%s1 + $0xfa4] sm:$0xf]
  %v1074 = vld [vmem:[%s1 + $0xfa8] sm:$0xf]
  %v1075 = vld [vmem:[%s1 + $0xfac] sm:$0xf]
  %v1076 = vld [vmem:[%s1 + $0xfb0] sm:$0xf]
  %v1077 = vld [vmem:[%s1 + $0xfb4] sm:$0xf]
  %v1078 = vld [vmem:[%s1 + $0xfb8] sm:$0xf]
  %v1079 = vld [vmem:[%s1 + $0xfbc] sm:$0xf]
  %v1080 = vld [vmem:[%s1 + $0xfc0] sm:$0xf]
  %v1081 = vld [vmem:[%s1 + $0xfc4] sm:$0xf]
  %v1082 = vld [vmem:[%s1 + $0xfc8] sm:$0xf]
  %v1083 = vld [vmem:[%s1 + $0xfcc] sm:$0xf]
  %v1084 = vld [vmem:[%s1 + $0xfd0] sm:$0xf]
  %v1085 = vld [vmem:[%s1 + $0xfd4] sm:$0xf]
  %v1086 = vld [vmem:[%s1 + $0xfd8] sm:$0xf]
  %v1087 = vld [vmem:[%s1 + $0xfdc] sm:$0xf]
  %v1088 = vld [vmem:[%s1 + $0xfe0] sm:$0xf]
  %v1089 = vld [vmem:[%s1 + $0xfe4] sm:$0xf]
  %v1090 = vld [vmem:[%s1 + $0xfe8] sm:$0xf]
  %v1091 = vld [vmem:[%s1 + $0xfec] sm:$0xf]
  %v1092 = vld [vmem:[%s1 + $0xff0] sm:$0xf]
  %v1093 = vld [vmem:[%s1 + $0xff4] sm:$0xf]
  %v1094 = vld [vmem:[%s1 + $0xff8] sm:$0xf]
  %v1095 = vld [vmem:[%s1 + $0xffc] sm:$0xf]
  %v1096 = vld [vmem:[%s1 + $0x1000] sm:$0xf]
  %v1097 = vld [vmem:[%s1 + $0x1004] sm:$0xf]
  %v1098 = vld [vmem:[%s1 + $0x1008] sm:$0xf]
  %v1099 = vld [vmem:[%s1 + $0x100c] sm:$0xf]
  %v1100 = vld [vmem:[%s1 + $0x1010] sm:$0xf]
  %v1101 = vld [vmem:[%s1 + $0x1014] sm:$0xf]
  %v1102 = vld [vmem:[%s1 + $0x1018] sm:$0xf]
  %v1103 = vld [vmem:[%s1 + $0x101c] sm:$0xf]
  %v1104 = vld [vmem:[%s1 + $0x1020] sm:$0xf]
  %v1105 = vld [vmem:[%s1 + $0x1024] sm:$0xf]
  %v1106 = vld [vmem:[%s1 + $0x1028] sm:$0xf]
  %v1107 = vld [vmem:[%s1 + $0x102c] sm:$0xf]
  %v1108 = vld [vmem:[%s1 + $0x1030] sm:$0xf]
  %v1109 = vld [vmem:[%s1 + $0x1034] sm:$0xf]
  %v1110 = vld [vmem:[%s1 + $0x1038] sm:$0xf]
  %v1111 = vld [vmem:[%s1 + $0x103c] sm:$0xf]
  %v1112 = vld [vmem:[%s1 + $0x1040] sm:$0xf]
  %v1113 = vld [vmem:[%s1 + $0x1044] sm:$0xf]
  %v1114 = vld [vmem:[%s1 + $0x1048] sm:$0xf]
  %v1115 = vld [vmem:[%s1 + $0x104c] sm:$0xf]
  %v1116 = vld [vmem:[%s1 + $0x1050] sm:$0xf]
  %v1117 = vld [vmem:[%s1 + $0x1054] sm:$0xf]
  %v1118 = vld [vmem:[%s1 + $0x1058] sm:$0xf]
  %v1119 = vld [vmem:[%s1 + $0x105c] sm:$0xf]
  %v1120 = vld [vmem:[%s1 + $0x1060] sm:$0xf]
  %v1121 = vld [vmem:[%s1 + $0x1064] sm:$0xf]
  %v1122 = vld [vmem:[%s1 + $0x1068] sm:$0xf]
  %v1123 = vld [vmem:[%s1 + $0x106c] sm:$0xf]
  %v1124 = vld [vmem:[%s1 + $0x1070] sm:$0xf]
  %v1125 = vld [vmem:[%s1 + $0x1074] sm:$0xf]
  %v1126 = vld [vmem:[%s1 + $0x1078] sm:$0xf]
  %v1127 = vld [vmem:[%s1 + $0x107c] sm:$0xf]
  %v1128 = vld [vmem:[%s1 + $0x1080] sm:$0xf]
  %v1129 = vld [vmem:[%s1 + $0x1084] sm:$0xf]
  %v1130 = vld [vmem:[%s1 + $0x1088] sm:$0xf]
  %v1131 = vld [vmem:[%s1 + $0x108c] sm:$0xf]
  %v1132 = vld [vmem:[%s1 + $0x1090] sm:$0xf]
  %v1133 = vld [vmem:[%s1 + $0x1094] sm:$0xf]
  %v1134 = vld [vmem:[%s1 + $0x1098] sm:$0xf]
  %v1135 = vld [vmem:[%s1 + $0x109c] sm:$0xf]
  %v1136 = vld [vmem:[%s1 + $0x10a0] sm:$0xf]
  %v1137 = vld [vmem:[%s1 + $0x10a4] sm:$0xf]
  %v1138 = vld [vmem:[%s1 + $0x10a8] sm:$0xf]
  %v1139 = vld [vmem:[%s1 + $0x10ac] sm:$0xf]
  %v1140 = vld [vmem:[%s1 + $0x10b0] sm:$0xf]
  %v1141 = vld [vmem:[%s1 + $0x10b4] sm:$0xf]
  %v1142 = vld [vmem:[%s1 + $0x10b8] sm:$0xf]
  %v1143 = vld [vmem:[%s1 + $0x10bc] sm:$0xf]
  %v1144 = vld [vmem:[%s1 + $0x10c0] sm:$0xf]
  %v1145 = vld [vmem:[%s1 + $0x10c4] sm:$0xf]
  %v1146 = vld [vmem:[%s1 + $0x10c8] sm:$0xf]
  %v1147 = vld [vmem:[%s1 + $0x10cc] sm:$0xf]
  %v1148 = vld [vmem:[%s1 + $0x10d0] sm:$0xf]
  %v1149 = vld [vmem:[%s1 + $0x10d4] sm:$0xf]
  %v1150 = vld [vmem:[%s1 + $0x10d8] sm:$0xf]
  %v1151 = vld [vmem:[%s1 + $0x10dc] sm:$0xf]
  %v1152 = vld [vmem:[%s1 + $0x10e0] sm:$0xf]
  %v1153 = vld [vmem:[%s1 + $0x10e4] sm:$0xf]
  %v1154 = vld [vmem:[%s1 + $0x10e8] sm:$0xf]
  %v1155 = vld [vmem:[%s1 + $0x10ec] sm:$0xf]
  %v1156 = vld [vmem:[%s1 + $0x10f0] sm:$0xf]
  %v1157 = vld [vmem:[%s1 + $0x10f4] sm:$0xf]
  %v1158 = vld [vmem:[%s1 + $0x10f8] sm:$0xf]
  %v1159 = vld [vmem:[%s1 + $0x10fc] sm:$0xf]
  %v1160 = vld [vmem:[%s1 + $0x1100] sm:$0xf]
  %v1161 = vld [vmem:[%s1 + $0x1104] sm:$0xf]
  %v1162 = vld [vmem:[%s1 + $0x1108] sm:$0xf]
  %v1163 = vld [vmem:[%s1 + $0x110c] sm:$0xf]
  %v1164 = vld [vmem:[%s1 + $0x1110] sm:$0xf]
  %v1165 = vld [vmem:[%s1 + $0x1114] sm:$0xf]
  %v1166 = vld [vmem:[%s1 + $0x1118] sm:$0xf]
  %v1167 = vld [vmem:[%s1 + $0x111c] sm:$0xf]
  %v1168 = vld [vmem:[%s1 + $0x1120] sm:$0xf]
  %v1169 = vld [vmem:[%s1 + $0x1124] sm:$0xf]
  %v1170 = vld [vmem:[%s1 + $0x1128] sm:$0xf]
  %v1171 = vld [vmem:[%s1 + $0x112c] sm:$0xf]
  %v1172 = vld [vmem:[%s1 + $0x1130] sm:$0xf]
  %v1173 = vld [vmem:[%s1 + $0x1134] sm:$0xf]
  %v1174 = vld [vmem:[%s1 + $0x1138] sm:$0xf]
  %v1175 = vld [vmem:[%s1 + $0x113c] sm:$0xf]
  %v1176 = vld [vmem:[%s1 + $0x1140] sm:$0xf]
  %v1177 = vld [vmem:[%s1 + $0x1144] sm:$0xf]
  %v1178 = vld [vmem:[%s1 + $0x1148] sm:$0xf]
  %v1179 = vld [vmem:[%s1 + $0x114c] sm:$0xf]
  %v1180 = vld [vmem:[%s1 + $0x1150] sm:$0xf]
  %v1181 = vld [vmem:[%s1 + $0x1154] sm:$0xf]
  %v1182 = vld [vmem:[%s1 + $0x1158] sm:$0xf]
  %v1183 = vld [vmem:[%s1 + $0x115c] sm:$0xf]
  %v1184 = vld [vmem:[%s1 + $0x1160] sm:$0xf]
  %v1185 = vld [vmem:[%s1 + $0x1164] sm:$0xf]
  %v1186 = vld [vmem:[%s1 + $0x1168] sm:$0xf]
  %v1187 = vld [vmem:[%s1 + $0x116c] sm:$0xf]
  %v1188 = vld [vmem:[%s1 + $0x1170] sm:$0xf]
  %v1189 = vld [vmem:[%s1 + $0x1174] sm:$0xf]
  %v1190 = vld [vmem:[%s1 + $0x1178] sm:$0xf]
  %v1191 = vld [vmem:[%s1 + $0x117c] sm:$0xf]
  %v1192 = vld [vmem:[%s1 + $0x1180] sm:$0xf]
  %v1193 = vld [vmem:[%s1 + $0x1184] sm:$0xf]
  %v1194 = vld [vmem:[%s1 + $0x1188] sm:$0xf]
  %v1195 = vld [vmem:[%s1 + $0x118c] sm:$0xf]
  %v1196 = vld [vmem:[%s1 + $0x1190] sm:$0xf]
  %v1197 = vld [vmem:[%s1 + $0x1194] sm:$0xf]
  %v1198 = vld [vmem:[%s1 + $0x1198] sm:$0xf]
  %v1199 = vld [vmem:[%s1 + $0x119c] sm:$0xf]
  %v1200 = vld [vmem:[%s1 + $0x11a0] sm:$0xf]
  %v1201 = vld [vmem:[%s1 + $0x11a4] sm:$0xf]
  %v1202 = vld [vmem:[%s1 + $0x11a8] sm:$0xf]
  %v1203 = vld [vmem:[%s1 + $0x11ac] sm:$0xf]
  %v1204 = vld [vmem:[%s1 + $0x11b0] sm:$0xf]
  %v1205 = vld [vmem:[%s1 + $0x11b4] sm:$0xf]
  %v1206 = vld [vmem:[%s1 + $0x11b8] sm:$0xf]
  %v1207 = vld [vmem:[%s1 + $0x11bc] sm:$0xf]
  %v1208 = vld [vmem:[%s1 + $0x11c0] sm:$0xf]
  %v1209 = vld [vmem:[%s1 + $0x11c4] sm:$0xf]
  %v1210 = vld [vmem:[%s1 + $0x11c8] sm:$0xf]
  %v1211 = vld [vmem:[%s1 + $0x11cc] sm:$0xf]
  %v1212 = vld [vmem:[%s1 + $0x11d0] sm:$0xf]
  %v1213 = vld [vmem:[%s1 + $0x11d4] sm:$0xf]
  %v1214 = vld [vmem:[%s1 + $0x11d8] sm:$0xf]
  %v1215 = vld [vmem:[%s1 + $0x11dc] sm:$0xf]
  %v1216 = vld [vmem:[%s1 + $0x11e0] sm:$0xf]
  %v1217 = vld [vmem:[%s1 + $0x11e4] sm:$0xf]
  %v1218 = vld [vmem:[%s1 + $0x11e8] sm:$0xf]
  %v1219 = vld [vmem:[%s1 + $0x11ec] sm:$0xf]
  %v1220 = vld [vmem:[%s1 + $0x11f0] sm:$0xf]
  %v1221 = vld [vmem:[%s1 + $0x11f4] sm:$0xf]
  %v1222 = vld [vmem:[%s1 + $0x11f8] sm:$0xf]
  %v1223 = vld [vmem:[%s1 + $0x11fc] sm:$0xf]
  %v1224 = vld [vmem:[%s2] sm:$0x1]
  %v1226 = vlaneseq
  %v1227 = vshrl.u32 %v1226, 7
  %v1228 = vsub.s32 0, %v1227
  %v1229 = vrot.slane %v1224, %v1228
  %v1267 = vunpack.c.l.b16 %v36
  %v1268 = vunpack.c.h.b16 %v36
  %v1269 = vunpack.c.l.b16 %v37
  %v1270 = vunpack.c.h.b16 %v37
  %v1271 = vunpack.c.l.b16 %v38
  %v1272 = vunpack.c.h.b16 %v38
  %v1273 = vunpack.c.l.b16 %v39
  %v1274 = vunpack.c.h.b16 %v39
  %v1275 = vunpack.c.l.b16 %v40
  %v1276 = vunpack.c.h.b16 %v40
  %v1277 = vunpack.c.l.b16 %v41
  %v1278 = vunpack.c.h.b16 %v41
  %v1279 = vunpack.c.l.b16 %v42
  %v1280 = vunpack.c.h.b16 %v42
  %v1281 = vunpack.c.l.b16 %v43
  %v1282 = vunpack.c.h.b16 %v43
  %v1283 = vunpack.c.l.b16 %v44
  %v1284 = vunpack.c.h.b16 %v44
  %v1285 = vunpack.c.l.b16 %v45
  %v1286 = vunpack.c.h.b16 %v45
  %v1287 = vunpack.c.l.b16 %v46
  %v1288 = vunpack.c.h.b16 %v46
  %v1289 = vunpack.c.l.b16 %v47
  %v1290 = vunpack.c.h.b16 %v47
  %v1291 = vunpack.c.l.b16 %v48
  %v1292 = vunpack.c.h.b16 %v48
  %v1293 = vunpack.c.l.b16 %v49
  %v1294 = vunpack.c.h.b16 %v49
  %v1295 = vunpack.c.l.b16 %v50
  %v1296 = vunpack.c.h.b16 %v50
  %v1297 = vunpack.c.l.b16 %v51
  %v1298 = vunpack.c.h.b16 %v51
  %v1299 = vunpack.c.l.b16 %v52
  %v1300 = vunpack.c.h.b16 %v52
  %v1301 = vunpack.c.l.b16 %v53
  %v1302 = vunpack.c.h.b16 %v53
  %v1303 = vunpack.c.l.b16 %v54
  %v1304 = vunpack.c.h.b16 %v54
  %v1305 = vunpack.c.l.b16 %v55
  %v1306 = vunpack.c.h.b16 %v55
  %v1307 = vunpack.c.l.b16 %v56
  %v1308 = vunpack.c.h.b16 %v56
  %v1309 = vunpack.c.l.b16 %v57
  %v1310 = vunpack.c.h.b16 %v57
  %v1311 = vunpack.c.l.b16 %v58
  %v1312 = vunpack.c.h.b16 %v58
  %v1313 = vunpack.c.l.b16 %v59
  %v1314 = vunpack.c.h.b16 %v59
  %v1315 = vunpack.c.l.b16 %v60
  %v1316 = vunpack.c.h.b16 %v60
  %v1317 = vunpack.c.l.b16 %v61
  %v1318 = vunpack.c.h.b16 %v61
  %v1319 = vunpack.c.l.b16 %v62
  %v1320 = vunpack.c.h.b16 %v62
  %v1321 = vunpack.c.l.b16 %v63
  %v1322 = vunpack.c.h.b16 %v63
  %v1323 = vunpack.c.l.b16 %v64
  %v1324 = vunpack.c.h.b16 %v64
  %v1325 = vunpack.c.l.b16 %v65
  %v1326 = vunpack.c.h.b16 %v65
  %v1327 = vunpack.c.l.b16 %v66
  %v1328 = vunpack.c.h.b16 %v66
  %v1329 = vunpack.c.l.b16 %v67
  %v1330 = vunpack.c.h.b16 %v67
  %v1331 = vunpack.c.l.b16 %v68
  %v1332 = vunpack.c.h.b16 %v68
  %v1333 = vunpack.c.l.b16 %v69
  %v1334 = vunpack.c.h.b16 %v69
  %v1335 = vunpack.c.l.b16 %v70
  %v1336 = vunpack.c.h.b16 %v70
  %v1337 = vunpack.c.l.b16 %v71
  %v1338 = vunpack.c.h.b16 %v71
  %v1339 = vpack.c.b16 %v1267, %v1267
  %v1340 = vpack.c.b16 %v1268, %v1268
  %v1341 = vpack.c.b16 %v1269, %v1269
  %v1342 = vpack.c.b16 %v1270, %v1270
  %v1343 = vpack.c.b16 %v1271, %v1271
  %v1344 = vpack.c.b16 %v1272, %v1272
  %v1345 = vpack.c.b16 %v1273, %v1273
  %v1346 = vpack.c.b16 %v1274, %v1274
  %v1347 = vpack.c.b16 %v1275, %v1275
  %v1348 = vpack.c.b16 %v1276, %v1276
  %v1349 = vpack.c.b16 %v1277, %v1277
  %v1350 = vpack.c.b16 %v1278, %v1278
  %v1351 = vpack.c.b16 %v1279, %v1279
  %v1352 = vpack.c.b16 %v1280, %v1280
  %v1353 = vpack.c.b16 %v1281, %v1281
  %v1354 = vpack.c.b16 %v1282, %v1282
  %v1355 = vpack.c.b16 %v1283, %v1283
  %v1356 = vpack.c.b16 %v1284, %v1284
  %v1357 = vpack.c.b16 %v1285, %v1285
  %v1358 = vpack.c.b16 %v1286, %v1286
  %v1359 = vpack.c.b16 %v1287, %v1287
  %v1360 = vpack.c.b16 %v1288, %v1288
  %v1361 = vpack.c.b16 %v1289, %v1289
  %v1362 = vpack.c.b16 %v1290, %v1290
  %v1363 = vpack.c.b16 %v1291, %v1291
  %v1364 = vpack.c.b16 %v1292, %v1292
  %v1365 = vpack.c.b16 %v1293, %v1293
  %v1366 = vpack.c.b16 %v1294, %v1294
  %v1367 = vpack.c.b16 %v1295, %v1295
  %v1368 = vpack.c.b16 %v1296, %v1296
  %v1369 = vpack.c.b16 %v1297, %v1297
  %v1370 = vpack.c.b16 %v1298, %v1298
  %v1371 = vpack.c.b16 %v1299, %v1299
  %v1372 = vpack.c.b16 %v1300, %v1300
  %v1373 = vpack.c.b16 %v1301, %v1301
  %v1374 = vpack.c.b16 %v1302, %v1302
  %v1375 = vpack.c.b16 %v1303, %v1303
  %v1376 = vpack.c.b16 %v1304, %v1304
  %v1377 = vpack.c.b16 %v1305, %v1305
  %v1378 = vpack.c.b16 %v1306, %v1306
  %v1379 = vpack.c.b16 %v1307, %v1307
  %v1380 = vpack.c.b16 %v1308, %v1308
  %v1381 = vpack.c.b16 %v1309, %v1309
  %v1382 = vpack.c.b16 %v1310, %v1310
  %v1383 = vpack.c.b16 %v1311, %v1311
  %v1384 = vpack.c.b16 %v1312, %v1312
  %v1385 = vpack.c.b16 %v1313, %v1313
  %v1386 = vpack.c.b16 %v1314, %v1314
  %v1387 = vpack.c.b16 %v1315, %v1315
  %v1388 = vpack.c.b16 %v1316, %v1316
  %v1389 = vpack.c.b16 %v1317, %v1317
  %v1390 = vpack.c.b16 %v1318, %v1318
  %v1391 = vpack.c.b16 %v1319, %v1319
  %v1392 = vpack.c.b16 %v1320, %v1320
  %v1393 = vpack.c.b16 %v1321, %v1321
  %v1394 = vpack.c.b16 %v1322, %v1322
  %v1395 = vpack.c.b16 %v1323, %v1323
  %v1396 = vpack.c.b16 %v1324, %v1324
  %v1397 = vpack.c.b16 %v1325, %v1325
  %v1398 = vpack.c.b16 %v1326, %v1326
  %v1399 = vpack.c.b16 %v1327, %v1327
  %v1400 = vpack.c.b16 %v1328, %v1328
  %v1401 = vpack.c.b16 %v1329, %v1329
  %v1402 = vpack.c.b16 %v1330, %v1330
  %v1403 = vpack.c.b16 %v1331, %v1331
  %v1404 = vpack.c.b16 %v1332, %v1332
  %v1405 = vpack.c.b16 %v1333, %v1333
  %v1406 = vpack.c.b16 %v1334, %v1334
  %v1407 = vpack.c.b16 %v1335, %v1335
  %v1408 = vpack.c.b16 %v1336, %v1336
  %v1409 = vpack.c.b16 %v1337, %v1337
  %v1410 = vpack.c.b16 %v1338, %v1338
  %v2635 = vunpack.c.l.b16 %v72
  %v2636 = vunpack.c.l.b16 %v73
  %v2637 = vunpack.c.l.b16 %v74
  %v2638 = vunpack.c.l.b16 %v75
  %v2639 = vunpack.c.l.b16 %v76
  %v2640 = vunpack.c.l.b16 %v77
  %v2641 = vunpack.c.l.b16 %v78
  %v2642 = vunpack.c.l.b16 %v79
  %v2643 = vunpack.c.l.b16 %v80
  %v2644 = vunpack.c.l.b16 %v81
  %v2645 = vunpack.c.l.b16 %v82
  %v2646 = vunpack.c.l.b16 %v83
  %v2647 = vunpack.c.l.b16 %v84
  %v2648 = vunpack.c.l.b16 %v85
  %v2649 = vunpack.c.l.b16 %v86
  %v2650 = vunpack.c.l.b16 %v87
  %v2651 = vunpack.c.l.b16 %v88
  %v2652 = vunpack.c.l.b16 %v89
  %v2653 = vunpack.c.l.b16 %v90
  %v2654 = vunpack.c.l.b16 %v91
  %v2655 = vunpack.c.l.b16 %v92
  %v2656 = vunpack.c.l.b16 %v93
  %v2657 = vunpack.c.l.b16 %v94
  %v2658 = vunpack.c.l.b16 %v95
  %v2659 = vunpack.c.l.b16 %v96
  %v2660 = vunpack.c.l.b16 %v97
  %v2661 = vunpack.c.l.b16 %v98
  %v2662 = vunpack.c.l.b16 %v99
  %v2663 = vunpack.c.l.b16 %v100
  %v2664 = vunpack.c.l.b16 %v101
  %v2665 = vunpack.c.l.b16 %v102
  %v2666 = vunpack.c.l.b16 %v103
  %v2667 = vunpack.c.l.b16 %v104
  %v2668 = vunpack.c.l.b16 %v105
  %v2669 = vunpack.c.l.b16 %v106
  %v2670 = vunpack.c.l.b16 %v107
  %v2671 = vunpack.c.l.b16 %v108
  %v2672 = vunpack.c.l.b16 %v109
  %v2673 = vunpack.c.l.b16 %v110
  %v2674 = vunpack.c.l.b16 %v111
  %v2675 = vunpack.c.l.b16 %v112
  %v2676 = vunpack.c.l.b16 %v113
  %v2677 = vunpack.c.l.b16 %v114
  %v2678 = vunpack.c.l.b16 %v115
  %v2679 = vunpack.c.l.b16 %v116
  %v2680 = vunpack.c.l.b16 %v117
  %v2681 = vunpack.c.l.b16 %v118
  %v2682 = vunpack.c.l.b16 %v119
  %v2683 = vunpack.c.l.b16 %v120
  %v2684 = vunpack.c.l.b16 %v121
  %v2685 = vunpack.c.l.b16 %v122
  %v2686 = vunpack.c.l.b16 %v123
  %v2687 = vunpack.c.l.b16 %v124
  %v2688 = vunpack.c.l.b16 %v125
  %v2689 = vunpack.c.l.b16 %v126
  %v2690 = vunpack.c.l.b16 %v127
  %v2691 = vunpack.c.l.b16 %v128
  %v2692 = vunpack.c.l.b16 %v129
  %v2693 = vunpack.c.l.b16 %v130
  %v2694 = vunpack.c.l.b16 %v131
  %v2695 = vunpack.c.l.b16 %v132
  %v2696 = vunpack.c.l.b16 %v133
  %v2697 = vunpack.c.l.b16 %v134
  %v2698 = vunpack.c.l.b16 %v135
  %v2699 = vunpack.c.l.b16 %v136
  %v2700 = vunpack.c.l.b16 %v137
  %v2701 = vunpack.c.l.b16 %v138
  %v2702 = vunpack.c.l.b16 %v139
  %v2703 = vunpack.c.l.b16 %v140
  %v2704 = vunpack.c.l.b16 %v141
  %v2705 = vunpack.c.l.b16 %v142
  %v2706 = vunpack.c.l.b16 %v143
  %v2707 = vunpack.c.l.b16 %v144
  %v2708 = vunpack.c.l.b16 %v145
  %v2709 = vunpack.c.l.b16 %v146
  %v2710 = vunpack.c.l.b16 %v147
  %v2711 = vunpack.c.l.b16 %v148
  %v2712 = vunpack.c.l.b16 %v149
  %v2713 = vunpack.c.l.b16 %v150
  %v2714 = vunpack.c.l.b16 %v151
  %v2715 = vunpack.c.l.b16 %v152
  %v2716 = vunpack.c.l.b16 %v153
  %v2717 = vunpack.c.l.b16 %v154
  %v2718 = vunpack.c.l.b16 %v155
  %v2719 = vunpack.c.l.b16 %v156
  %v2720 = vunpack.c.l.b16 %v157
  %v2721 = vunpack.c.l.b16 %v158
  %v2722 = vunpack.c.l.b16 %v159
  %v2723 = vunpack.c.l.b16 %v160
  %v2724 = vunpack.c.l.b16 %v161
  %v2725 = vunpack.c.l.b16 %v162
  %v2726 = vunpack.c.l.b16 %v163
  %v2727 = vunpack.c.l.b16 %v164
  %v2728 = vunpack.c.l.b16 %v165
  %v2729 = vunpack.c.l.b16 %v166
  %v2730 = vunpack.c.l.b16 %v167
  %v2731 = vunpack.c.l.b16 %v168
  %v2732 = vunpack.c.l.b16 %v169
  %v2733 = vunpack.c.l.b16 %v170
  %v2734 = vunpack.c.l.b16 %v171
  %v2735 = vunpack.c.l.b16 %v172
  %v2736 = vunpack.c.l.b16 %v173
  %v2737 = vunpack.c.l.b16 %v174
  %v2738 = vunpack.c.l.b16 %v175
  %v2739 = vunpack.c.l.b16 %v176
  %v2740 = vunpack.c.l.b16 %v177
  %v2741 = vunpack.c.l.b16 %v178
  %v2742 = vunpack.c.l.b16 %v179
  %v2743 = vunpack.c.l.b16 %v180
  %v2744 = vunpack.c.l.b16 %v181
  %v2745 = vunpack.c.l.b16 %v182
  %v2746 = vunpack.c.l.b16 %v183
  %v2747 = vunpack.c.l.b16 %v184
  %v2748 = vunpack.c.l.b16 %v185
  %v2749 = vunpack.c.l.b16 %v186
  %v2750 = vunpack.c.l.b16 %v187
  %v2751 = vunpack.c.l.b16 %v188
  %v2752 = vunpack.c.l.b16 %v189
  %v2753 = vunpack.c.l.b16 %v190
  %v2754 = vunpack.c.l.b16 %v191
  %v2755 = vunpack.c.l.b16 %v192
  %v2756 = vunpack.c.l.b16 %v193
  %v2757 = vunpack.c.l.b16 %v194
  %v2758 = vunpack.c.l.b16 %v195
  %v2759 = vunpack.c.l.b16 %v196
  %v2760 = vunpack.c.l.b16 %v197
  %v2761 = vunpack.c.l.b16 %v198
  %v2762 = vunpack.c.l.b16 %v199
  %v2763 = vunpack.c.l.b16 %v200
  %v2764 = vunpack.c.l.b16 %v201
  %v2765 = vunpack.c.l.b16 %v202
  %v2766 = vunpack.c.l.b16 %v203
  %v2767 = vunpack.c.l.b16 %v204
  %v2768 = vunpack.c.l.b16 %v205
  %v2769 = vunpack.c.l.b16 %v206
  %v2770 = vunpack.c.l.b16 %v207
  %v2771 = vunpack.c.l.b16 %v208
  %v2772 = vunpack.c.l.b16 %v209
  %v2773 = vunpack.c.l.b16 %v210
  %v2774 = vunpack.c.l.b16 %v211
  %v2775 = vunpack.c.l.b16 %v212
  %v2776 = vunpack.c.l.b16 %v213
  %v2777 = vunpack.c.l.b16 %v214
  %v2778 = vunpack.c.l.b16 %v215
  %v2779 = vunpack.c.l.b16 %v216
  %v2780 = vunpack.c.l.b16 %v217
  %v2781 = vunpack.c.l.b16 %v218
  %v2782 = vunpack.c.l.b16 %v219
  %v2783 = vunpack.c.l.b16 %v220
  %v2784 = vunpack.c.l.b16 %v221
  %v2785 = vunpack.c.l.b16 %v222
  %v2786 = vunpack.c.l.b16 %v223
  %v2787 = vunpack.c.l.b16 %v224
  %v2788 = vunpack.c.l.b16 %v225
  %v2789 = vunpack.c.l.b16 %v226
  %v2790 = vunpack.c.l.b16 %v227
  %v2791 = vunpack.c.l.b16 %v228
  %v2792 = vunpack.c.l.b16 %v229
  %v2793 = vunpack.c.l.b16 %v230
  %v2794 = vunpack.c.l.b16 %v231
  %v2795 = vunpack.c.l.b16 %v232
  %v2796 = vunpack.c.l.b16 %v233
  %v2797 = vunpack.c.l.b16 %v234
  %v2798 = vunpack.c.l.b16 %v235
  %v2799 = vunpack.c.l.b16 %v236
  %v2800 = vunpack.c.l.b16 %v237
  %v2801 = vunpack.c.l.b16 %v238
  %v2802 = vunpack.c.l.b16 %v239
  %v2803 = vunpack.c.l.b16 %v240
  %v2804 = vunpack.c.l.b16 %v241
  %v2805 = vunpack.c.l.b16 %v242
  %v2806 = vunpack.c.l.b16 %v243
  %v2807 = vunpack.c.l.b16 %v244
  %v2808 = vunpack.c.l.b16 %v245
  %v2809 = vunpack.c.l.b16 %v246
  %v2810 = vunpack.c.l.b16 %v247
  %v2811 = vunpack.c.l.b16 %v248
  %v2812 = vunpack.c.l.b16 %v249
  %v2813 = vunpack.c.l.b16 %v250
  %v2814 = vunpack.c.l.b16 %v251
  %v2815 = vunpack.c.l.b16 %v252
  %v2816 = vunpack.c.l.b16 %v253
  %v2817 = vunpack.c.l.b16 %v254
  %v2818 = vunpack.c.l.b16 %v255
  %v2819 = vunpack.c.l.b16 %v256
  %v2820 = vunpack.c.l.b16 %v257
  %v2821 = vunpack.c.l.b16 %v258
  %v2822 = vunpack.c.l.b16 %v259
  %v2823 = vunpack.c.l.b16 %v260
  %v2824 = vunpack.c.l.b16 %v261
  %v2825 = vunpack.c.l.b16 %v262
  %v2826 = vunpack.c.l.b16 %v263
  %v2827 = vunpack.c.l.b16 %v264
  %v2828 = vunpack.c.l.b16 %v265
  %v2829 = vunpack.c.l.b16 %v266
  %v2830 = vunpack.c.l.b16 %v267
  %v2831 = vunpack.c.l.b16 %v268
  %v2832 = vunpack.c.l.b16 %v269
  %v2833 = vunpack.c.l.b16 %v270
  %v2834 = vunpack.c.l.b16 %v271
  %v2835 = vunpack.c.l.b16 %v272
  %v2836 = vunpack.c.l.b16 %v273
  %v2837 = vunpack.c.l.b16 %v274
  %v2838 = vunpack.c.l.b16 %v275
  %v2839 = vunpack.c.l.b16 %v276
  %v2840 = vunpack.c.l.b16 %v277
  %v2841 = vunpack.c.l.b16 %v278
  %v2842 = vunpack.c.l.b16 %v279
  %v2843 = vunpack.c.l.b16 %v280
  %v2844 = vunpack.c.l.b16 %v281
  %v2845 = vunpack.c.l.b16 %v282
  %v2846 = vunpack.c.l.b16 %v283
  %v2847 = vunpack.c.l.b16 %v284
  %v2848 = vunpack.c.l.b16 %v285
  %v2849 = vunpack.c.l.b16 %v286
  %v2850 = vunpack.c.l.b16 %v287
  %v2851 = vunpack.c.l.b16 %v288
  %v2852 = vunpack.c.l.b16 %v289
  %v2853 = vunpack.c.l.b16 %v290
  %v2854 = vunpack.c.l.b16 %v291
  %v2855 = vunpack.c.l.b16 %v292
  %v2856 = vunpack.c.l.b16 %v293
  %v2857 = vunpack.c.l.b16 %v294
  %v2858 = vunpack.c.l.b16 %v295
  %v2859 = vunpack.c.l.b16 %v296
  %v2860 = vunpack.c.l.b16 %v297
  %v2861 = vunpack.c.l.b16 %v298
  %v2862 = vunpack.c.l.b16 %v299
  %v2863 = vunpack.c.l.b16 %v300
  %v2864 = vunpack.c.l.b16 %v301
  %v2865 = vunpack.c.l.b16 %v302
  %v2866 = vunpack.c.l.b16 %v303
  %v2867 = vunpack.c.l.b16 %v304
  %v2868 = vunpack.c.l.b16 %v305
  %v2869 = vunpack.c.l.b16 %v306
  %v2870 = vunpack.c.l.b16 %v307
  %v2871 = vunpack.c.l.b16 %v308
  %v2872 = vunpack.c.l.b16 %v309
  %v2873 = vunpack.c.l.b16 %v310
  %v2874 = vunpack.c.l.b16 %v311
  %v2875 = vunpack.c.l.b16 %v312
  %v2876 = vunpack.c.l.b16 %v313
  %v2877 = vunpack.c.l.b16 %v314
  %v2878 = vunpack.c.l.b16 %v315
  %v2879 = vunpack.c.l.b16 %v316
  %v2880 = vunpack.c.l.b16 %v317
  %v2881 = vunpack.c.l.b16 %v318
  %v2882 = vunpack.c.l.b16 %v319
  %v2883 = vunpack.c.l.b16 %v320
  %v2884 = vunpack.c.l.b16 %v321
  %v2885 = vunpack.c.l.b16 %v322
  %v2886 = vunpack.c.l.b16 %v323
  %v2887 = vunpack.c.l.b16 %v324
  %v2888 = vunpack.c.l.b16 %v325
  %v2889 = vunpack.c.l.b16 %v326
  %v2890 = vunpack.c.l.b16 %v327
  %v2891 = vunpack.c.l.b16 %v328
  %v2892 = vunpack.c.l.b16 %v329
  %v2893 = vunpack.c.l.b16 %v330
  %v2894 = vunpack.c.l.b16 %v331
  %v2895 = vunpack.c.l.b16 %v332
  %v2896 = vunpack.c.l.b16 %v333
  %v2897 = vunpack.c.l.b16 %v334
  %v2898 = vunpack.c.l.b16 %v335
  %v2899 = vunpack.c.l.b16 %v336
  %v2900 = vunpack.c.l.b16 %v337
  %v2901 = vunpack.c.l.b16 %v338
  %v2902 = vunpack.c.l.b16 %v339
  %v2903 = vunpack.c.l.b16 %v340
  %v2904 = vunpack.c.l.b16 %v341
  %v2905 = vunpack.c.l.b16 %v342
  %v2906 = vunpack.c.l.b16 %v343
  %v2907 = vunpack.c.l.b16 %v344
  %v2908 = vunpack.c.l.b16 %v345
  %v2909 = vunpack.c.l.b16 %v346
  %v2910 = vunpack.c.l.b16 %v347
  %v2911 = vunpack.c.l.b16 %v348
  %v2912 = vunpack.c.l.b16 %v349
  %v2913 = vunpack.c.l.b16 %v350
  %v2914 = vunpack.c.l.b16 %v351
  %v2915 = vunpack.c.l.b16 %v352
  %v2916 = vunpack.c.l.b16 %v353
  %v2917 = vunpack.c.l.b16 %v354
  %v2918 = vunpack.c.l.b16 %v355
  %v2919 = vunpack.c.l.b16 %v356
  %v2920 = vunpack.c.l.b16 %v357
  %v2921 = vunpack.c.l.b16 %v358
  %v2922 = vunpack.c.l.b16 %v359
  %v2923 = vunpack.c.l.b16 %v360
  %v2924 = vunpack.c.l.b16 %v361
  %v2925 = vunpack.c.l.b16 %v362
  %v2926 = vunpack.c.l.b16 %v363
  %v2927 = vunpack.c.l.b16 %v364
  %v2928 = vunpack.c.l.b16 %v365
  %v2929 = vunpack.c.l.b16 %v366
  %v2930 = vunpack.c.l.b16 %v367
  %v2931 = vunpack.c.l.b16 %v368
  %v2932 = vunpack.c.l.b16 %v369
  %v2933 = vunpack.c.l.b16 %v370
  %v2934 = vunpack.c.l.b16 %v371
  %v2935 = vunpack.c.l.b16 %v372
  %v2936 = vunpack.c.l.b16 %v373
  %v2937 = vunpack.c.l.b16 %v374
  %v2938 = vunpack.c.l.b16 %v375
  %v2939 = vunpack.c.l.b16 %v376
  %v2940 = vunpack.c.l.b16 %v377
  %v2941 = vunpack.c.l.b16 %v378
  %v2942 = vunpack.c.l.b16 %v379
  %v2943 = vunpack.c.l.b16 %v380
  %v2944 = vunpack.c.l.b16 %v381
  %v2945 = vunpack.c.l.b16 %v382
  %v2946 = vunpack.c.l.b16 %v383
  %v2947 = vunpack.c.l.b16 %v384
  %v2948 = vunpack.c.l.b16 %v385
  %v2949 = vunpack.c.l.b16 %v386
  %v2950 = vunpack.c.l.b16 %v387
  %v2951 = vunpack.c.l.b16 %v388
  %v2952 = vunpack.c.l.b16 %v389
  %v2953 = vunpack.c.l.b16 %v390
  %v2954 = vunpack.c.l.b16 %v391
  %v2955 = vunpack.c.l.b16 %v392
  %v2956 = vunpack.c.l.b16 %v393
  %v2957 = vunpack.c.l.b16 %v394
  %v2958 = vunpack.c.l.b16 %v395
  %v2959 = vunpack.c.l.b16 %v396
  %v2960 = vunpack.c.l.b16 %v397
  %v2961 = vunpack.c.l.b16 %v398
  %v2962 = vunpack.c.l.b16 %v399
  %v2963 = vunpack.c.l.b16 %v400
  %v2964 = vunpack.c.l.b16 %v401
  %v2965 = vunpack.c.l.b16 %v402
  %v2966 = vunpack.c.l.b16 %v403
  %v2967 = vunpack.c.l.b16 %v404
  %v2968 = vunpack.c.l.b16 %v405
  %v2969 = vunpack.c.l.b16 %v406
  %v2970 = vunpack.c.l.b16 %v407
  %v2971 = vunpack.c.l.b16 %v408
  %v2972 = vunpack.c.l.b16 %v409
  %v2973 = vunpack.c.l.b16 %v410
  %v2974 = vunpack.c.l.b16 %v411
  %v2975 = vunpack.c.l.b16 %v412
  %v2976 = vunpack.c.l.b16 %v413
  %v2977 = vunpack.c.l.b16 %v414
  %v2978 = vunpack.c.l.b16 %v415
  %v2979 = vunpack.c.l.b16 %v416
  %v2980 = vunpack.c.l.b16 %v417
  %v2981 = vunpack.c.l.b16 %v418
  %v2982 = vunpack.c.l.b16 %v419
  %v2983 = vunpack.c.l.b16 %v420
  %v2984 = vunpack.c.l.b16 %v421
  %v2985 = vunpack.c.l.b16 %v422
  %v2986 = vunpack.c.l.b16 %v423
  %v2987 = vunpack.c.l.b16 %v424
  %v2988 = vunpack.c.l.b16 %v425
  %v2989 = vunpack.c.l.b16 %v426
  %v2990 = vunpack.c.l.b16 %v427
  %v2991 = vunpack.c.l.b16 %v428
  %v2992 = vunpack.c.l.b16 %v429
  %v2993 = vunpack.c.l.b16 %v430
  %v2994 = vunpack.c.l.b16 %v431
  %v2995 = vunpack.c.l.b16 %v432
  %v2996 = vunpack.c.l.b16 %v433
  %v2997 = vunpack.c.l.b16 %v434
  %v2998 = vunpack.c.l.b16 %v435
  %v2999 = vunpack.c.l.b16 %v436
  %v3000 = vunpack.c.l.b16 %v437
  %v3001 = vunpack.c.l.b16 %v438
  %v3002 = vunpack.c.l.b16 %v439
  %v3003 = vunpack.c.l.b16 %v440
  %v3004 = vunpack.c.l.b16 %v441
  %v3005 = vunpack.c.l.b16 %v442
  %v3006 = vunpack.c.l.b16 %v443
  %v3007 = vunpack.c.l.b16 %v444
  %v3008 = vunpack.c.l.b16 %v445
  %v3009 = vunpack.c.l.b16 %v446
  %v3010 = vunpack.c.l.b16 %v447
  %v3011 = vunpack.c.l.b16 %v448
  %v3012 = vunpack.c.l.b16 %v449
  %v3013 = vunpack.c.l.b16 %v450
  %v3014 = vunpack.c.l.b16 %v451
  %v3015 = vunpack.c.l.b16 %v452
  %v3016 = vunpack.c.l.b16 %v453
  %v3017 = vunpack.c.l.b16 %v454
  %v3018 = vunpack.c.l.b16 %v455
  %v3019 = vunpack.c.l.b16 %v456
  %v3020 = vunpack.c.l.b16 %v457
  %v3021 = vunpack.c.l.b16 %v458
  %v3022 = vunpack.c.l.b16 %v459
  %v3023 = vunpack.c.l.b16 %v460
  %v3024 = vunpack.c.l.b16 %v461
  %v3025 = vunpack.c.l.b16 %v462
  %v3026 = vunpack.c.l.b16 %v463
  %v3027 = vunpack.c.l.b16 %v464
  %v3028 = vunpack.c.l.b16 %v465
  %v3029 = vunpack.c.l.b16 %v466
  %v3030 = vunpack.c.l.b16 %v467
  %v3031 = vunpack.c.l.b16 %v468
  %v3032 = vunpack.c.l.b16 %v469
  %v3033 = vunpack.c.l.b16 %v470
  %v3034 = vunpack.c.l.b16 %v471
  %v3035 = vunpack.c.l.b16 %v472
  %v3036 = vunpack.c.l.b16 %v473
  %v3037 = vunpack.c.l.b16 %v474
  %v3038 = vunpack.c.l.b16 %v475
  %v3039 = vunpack.c.l.b16 %v476
  %v3040 = vunpack.c.l.b16 %v477
  %v3041 = vunpack.c.l.b16 %v478
  %v3042 = vunpack.c.l.b16 %v479
  %v3043 = vunpack.c.l.b16 %v480
  %v3044 = vunpack.c.l.b16 %v481
  %v3045 = vunpack.c.l.b16 %v482
  %v3046 = vunpack.c.l.b16 %v483
  %v3047 = vunpack.c.l.b16 %v484
  %v3048 = vunpack.c.l.b16 %v485
  %v3049 = vunpack.c.l.b16 %v486
  %v3050 = vunpack.c.l.b16 %v487
  %v3051 = vunpack.c.l.b16 %v488
  %v3052 = vunpack.c.l.b16 %v489
  %v3053 = vunpack.c.l.b16 %v490
  %v3054 = vunpack.c.l.b16 %v491
  %v3055 = vunpack.c.l.b16 %v492
  %v3056 = vunpack.c.l.b16 %v493
  %v3057 = vunpack.c.l.b16 %v494
  %v3058 = vunpack.c.l.b16 %v495
  %v3059 = vunpack.c.l.b16 %v496
  %v3060 = vunpack.c.l.b16 %v497
  %v3061 = vunpack.c.l.b16 %v498
  %v3062 = vunpack.c.l.b16 %v499
  %v3063 = vunpack.c.l.b16 %v500
  %v3064 = vunpack.c.l.b16 %v501
  %v3065 = vunpack.c.l.b16 %v502
  %v3066 = vunpack.c.l.b16 %v503
  %v3067 = vunpack.c.l.b16 %v504
  %v3068 = vunpack.c.l.b16 %v505
  %v3069 = vunpack.c.l.b16 %v506
  %v3070 = vunpack.c.l.b16 %v507
  %v3071 = vunpack.c.l.b16 %v508
  %v3072 = vunpack.c.l.b16 %v509
  %v3073 = vunpack.c.l.b16 %v510
  %v3074 = vunpack.c.l.b16 %v511
  %v3075 = vunpack.c.l.b16 %v512
  %v3076 = vunpack.c.l.b16 %v513
  %v3077 = vunpack.c.l.b16 %v514
  %v3078 = vunpack.c.l.b16 %v515
  %v3079 = vunpack.c.l.b16 %v516
  %v3080 = vunpack.c.l.b16 %v517
  %v3081 = vunpack.c.l.b16 %v518
  %v3082 = vunpack.c.l.b16 %v519
  %v3083 = vunpack.c.l.b16 %v520
  %v3084 = vunpack.c.l.b16 %v521
  %v3085 = vunpack.c.l.b16 %v522
  %v3086 = vunpack.c.l.b16 %v523
  %v3087 = vunpack.c.l.b16 %v524
  %v3088 = vunpack.c.l.b16 %v525
  %v3089 = vunpack.c.l.b16 %v526
  %v3090 = vunpack.c.l.b16 %v527
  %v3091 = vunpack.c.l.b16 %v528
  %v3092 = vunpack.c.l.b16 %v529
  %v3093 = vunpack.c.l.b16 %v530
  %v3094 = vunpack.c.l.b16 %v531
  %v3095 = vunpack.c.l.b16 %v532
  %v3096 = vunpack.c.l.b16 %v533
  %v3097 = vunpack.c.l.b16 %v534
  %v3098 = vunpack.c.l.b16 %v535
  %v3099 = vunpack.c.l.b16 %v536
  %v3100 = vunpack.c.l.b16 %v537
  %v3101 = vunpack.c.l.b16 %v538
  %v3102 = vunpack.c.l.b16 %v539
  %v3103 = vunpack.c.l.b16 %v540
  %v3104 = vunpack.c.l.b16 %v541
  %v3105 = vunpack.c.l.b16 %v542
  %v3106 = vunpack.c.l.b16 %v543
  %v3107 = vunpack.c.l.b16 %v544
  %v3108 = vunpack.c.l.b16 %v545
  %v3109 = vunpack.c.l.b16 %v546
  %v3110 = vunpack.c.l.b16 %v547
  %v3111 = vunpack.c.l.b16 %v548
  %v3112 = vunpack.c.l.b16 %v549
  %v3113 = vunpack.c.l.b16 %v550
  %v3114 = vunpack.c.l.b16 %v551
  %v3115 = vunpack.c.l.b16 %v552
  %v3116 = vunpack.c.l.b16 %v553
  %v3117 = vunpack.c.l.b16 %v554
  %v3118 = vunpack.c.l.b16 %v555
  %v3119 = vunpack.c.l.b16 %v556
  %v3120 = vunpack.c.l.b16 %v557
  %v3121 = vunpack.c.l.b16 %v558
  %v3122 = vunpack.c.l.b16 %v559
  %v3123 = vunpack.c.l.b16 %v560
  %v3124 = vunpack.c.l.b16 %v561
  %v3125 = vunpack.c.l.b16 %v562
  %v3126 = vunpack.c.l.b16 %v563
  %v3127 = vunpack.c.l.b16 %v564
  %v3128 = vunpack.c.l.b16 %v565
  %v3129 = vunpack.c.l.b16 %v566
  %v3130 = vunpack.c.l.b16 %v567
  %v3131 = vunpack.c.l.b16 %v568
  %v3132 = vunpack.c.l.b16 %v569
  %v3133 = vunpack.c.l.b16 %v570
  %v3134 = vunpack.c.l.b16 %v571
  %v3135 = vunpack.c.l.b16 %v572
  %v3136 = vunpack.c.l.b16 %v573
  %v3137 = vunpack.c.l.b16 %v574
  %v3138 = vunpack.c.l.b16 %v575
  %v3139 = vunpack.c.l.b16 %v576
  %v3140 = vunpack.c.l.b16 %v577
  %v3141 = vunpack.c.l.b16 %v578
  %v3142 = vunpack.c.l.b16 %v579
  %v3143 = vunpack.c.l.b16 %v580
  %v3144 = vunpack.c.l.b16 %v581
  %v3145 = vunpack.c.l.b16 %v582
  %v3146 = vunpack.c.l.b16 %v583
  %v3147 = vunpack.c.l.b16 %v584
  %v3148 = vunpack.c.l.b16 %v585
  %v3149 = vunpack.c.l.b16 %v586
  %v3150 = vunpack.c.l.b16 %v587
  %v3151 = vunpack.c.l.b16 %v588
  %v3152 = vunpack.c.l.b16 %v589
  %v3153 = vunpack.c.l.b16 %v590
  %v3154 = vunpack.c.l.b16 %v591
  %v3155 = vunpack.c.l.b16 %v592
  %v3156 = vunpack.c.l.b16 %v593
  %v3157 = vunpack.c.l.b16 %v594
  %v3158 = vunpack.c.l.b16 %v595
  %v3159 = vunpack.c.l.b16 %v596
  %v3160 = vunpack.c.l.b16 %v597
  %v3161 = vunpack.c.l.b16 %v598
  %v3162 = vunpack.c.l.b16 %v599
  %v3163 = vunpack.c.l.b16 %v600
  %v3164 = vunpack.c.l.b16 %v601
  %v3165 = vunpack.c.l.b16 %v602
  %v3166 = vunpack.c.l.b16 %v603
  %v3167 = vunpack.c.l.b16 %v604
  %v3168 = vunpack.c.l.b16 %v605
  %v3169 = vunpack.c.l.b16 %v606
  %v3170 = vunpack.c.l.b16 %v607
  %v3171 = vunpack.c.l.b16 %v608
  %v3172 = vunpack.c.l.b16 %v609
  %v3173 = vunpack.c.l.b16 %v610
  %v3174 = vunpack.c.l.b16 %v611
  %v3175 = vunpack.c.l.b16 %v612
  %v3176 = vunpack.c.l.b16 %v613
  %v3177 = vunpack.c.l.b16 %v614
  %v3178 = vunpack.c.l.b16 %v615
  %v3179 = vunpack.c.l.b16 %v616
  %v3180 = vunpack.c.l.b16 %v617
  %v3181 = vunpack.c.l.b16 %v618
  %v3182 = vunpack.c.l.b16 %v619
  %v3183 = vunpack.c.l.b16 %v620
  %v3184 = vunpack.c.l.b16 %v621
  %v3185 = vunpack.c.l.b16 %v622
  %v3186 = vunpack.c.l.b16 %v623
  %v3187 = vunpack.c.l.b16 %v624
  %v3188 = vunpack.c.l.b16 %v625
  %v3189 = vunpack.c.l.b16 %v626
  %v3190 = vunpack.c.l.b16 %v627
  %v3191 = vunpack.c.l.b16 %v628
  %v3192 = vunpack.c.l.b16 %v629
  %v3193 = vunpack.c.l.b16 %v630
  %v3194 = vunpack.c.l.b16 %v631
  %v3195 = vunpack.c.l.b16 %v632
  %v3196 = vunpack.c.l.b16 %v633
  %v3197 = vunpack.c.l.b16 %v634
  %v3198 = vunpack.c.l.b16 %v635
  %v3199 = vunpack.c.l.b16 %v636
  %v3200 = vunpack.c.l.b16 %v637
  %v3201 = vunpack.c.l.b16 %v638
  %v3202 = vunpack.c.l.b16 %v639
  %v3203 = vunpack.c.l.b16 %v640
  %v3204 = vunpack.c.l.b16 %v641
  %v3205 = vunpack.c.l.b16 %v642
  %v3206 = vunpack.c.l.b16 %v643
  %v3207 = vunpack.c.l.b16 %v644
  %v3208 = vunpack.c.l.b16 %v645
  %v3209 = vunpack.c.l.b16 %v646
  %v3210 = vunpack.c.l.b16 %v647
  %v3211 = vunpack.c.l.b16 %v648
  %v3212 = vunpack.c.l.b16 %v649
  %v3213 = vunpack.c.l.b16 %v650
  %v3214 = vunpack.c.l.b16 %v651
  %v3215 = vunpack.c.l.b16 %v652
  %v3216 = vunpack.c.l.b16 %v653
  %v3217 = vunpack.c.l.b16 %v654
  %v3218 = vunpack.c.l.b16 %v655
  %v3219 = vunpack.c.l.b16 %v656
  %v3220 = vunpack.c.l.b16 %v657
  %v3221 = vunpack.c.l.b16 %v658
  %v3222 = vunpack.c.l.b16 %v659
  %v3223 = vunpack.c.l.b16 %v660
  %v3224 = vunpack.c.l.b16 %v661
  %v3225 = vunpack.c.l.b16 %v662
  %v3226 = vunpack.c.l.b16 %v663
  %v3227 = vunpack.c.l.b16 %v664
  %v3228 = vunpack.c.l.b16 %v665
  %v3229 = vunpack.c.l.b16 %v666
  %v3230 = vunpack.c.l.b16 %v667
  %v3231 = vunpack.c.l.b16 %v668
  %v3232 = vunpack.c.l.b16 %v669
  %v3233 = vunpack.c.l.b16 %v670
  %v3234 = vunpack.c.l.b16 %v671
  %v3235 = vunpack.c.l.b16 %v672
  %v3236 = vunpack.c.l.b16 %v673
  %v3237 = vunpack.c.l.b16 %v674
  %v3238 = vunpack.c.l.b16 %v675
  %v3239 = vunpack.c.l.b16 %v676
  %v3240 = vunpack.c.l.b16 %v677
  %v3241 = vunpack.c.l.b16 %v678
  %v3242 = vunpack.c.l.b16 %v679
  %v3243 = vunpack.c.l.b16 %v680
  %v3244 = vunpack.c.l.b16 %v681
  %v3245 = vunpack.c.l.b16 %v682
  %v3246 = vunpack.c.l.b16 %v683
  %v3247 = vunpack.c.l.b16 %v684
  %v3248 = vunpack.c.l.b16 %v685
  %v3249 = vunpack.c.l.b16 %v686
  %v3250 = vunpack.c.l.b16 %v687
  %v3251 = vunpack.c.l.b16 %v688
  %v3252 = vunpack.c.l.b16 %v689
  %v3253 = vunpack.c.l.b16 %v690
  %v3254 = vunpack.c.l.b16 %v691
  %v3255 = vunpack.c.l.b16 %v692
  %v3256 = vunpack.c.l.b16 %v693
  %v3257 = vunpack.c.l.b16 %v694
  %v3258 = vunpack.c.l.b16 %v695
  %v3259 = vunpack.c.l.b16 %v696
  %v3260 = vunpack.c.l.b16 %v697
  %v3261 = vunpack.c.l.b16 %v698
  %v3262 = vunpack.c.l.b16 %v699
  %v3263 = vunpack.c.l.b16 %v700
  %v3264 = vunpack.c.l.b16 %v701
  %v3265 = vunpack.c.l.b16 %v702
  %v3266 = vunpack.c.l.b16 %v703
  %v3267 = vunpack.c.l.b16 %v704
  %v3268 = vunpack.c.l.b16 %v705
  %v3269 = vunpack.c.l.b16 %v706
  %v3270 = vunpack.c.l.b16 %v707
  %v3271 = vunpack.c.l.b16 %v708
  %v3272 = vunpack.c.l.b16 %v709
  %v3273 = vunpack.c.l.b16 %v710
  %v3274 = vunpack.c.l.b16 %v711
  %v3275 = vunpack.c.l.b16 %v712
  %v3276 = vunpack.c.l.b16 %v713
  %v3277 = vunpack.c.l.b16 %v714
  %v3278 = vunpack.c.l.b16 %v715
  %v3279 = vunpack.c.l.b16 %v716
  %v3280 = vunpack.c.l.b16 %v717
  %v3281 = vunpack.c.l.b16 %v718
  %v3282 = vunpack.c.l.b16 %v719
  %v3283 = vunpack.c.l.b16 %v720
  %v3284 = vunpack.c.l.b16 %v721
  %v3285 = vunpack.c.l.b16 %v722
  %v3286 = vunpack.c.l.b16 %v723
  %v3287 = vunpack.c.l.b16 %v724
  %v3288 = vunpack.c.l.b16 %v725
  %v3289 = vunpack.c.l.b16 %v726
  %v3290 = vunpack.c.l.b16 %v727
  %v3291 = vunpack.c.l.b16 %v728
  %v3292 = vunpack.c.l.b16 %v729
  %v3293 = vunpack.c.l.b16 %v730
  %v3294 = vunpack.c.l.b16 %v731
  %v3295 = vunpack.c.l.b16 %v732
  %v3296 = vunpack.c.l.b16 %v733
  %v3297 = vunpack.c.l.b16 %v734
  %v3298 = vunpack.c.l.b16 %v735
  %v3299 = vunpack.c.l.b16 %v736
  %v3300 = vunpack.c.l.b16 %v737
  %v3301 = vunpack.c.l.b16 %v738
  %v3302 = vunpack.c.l.b16 %v739
  %v3303 = vunpack.c.l.b16 %v740
  %v3304 = vunpack.c.l.b16 %v741
  %v3305 = vunpack.c.l.b16 %v742
  %v3306 = vunpack.c.l.b16 %v743
  %v3307 = vunpack.c.l.b16 %v744
  %v3308 = vunpack.c.l.b16 %v745
  %v3309 = vunpack.c.l.b16 %v746
  %v3310 = vunpack.c.l.b16 %v747
  %v3311 = vunpack.c.l.b16 %v748
  %v3312 = vunpack.c.l.b16 %v749
  %v3313 = vunpack.c.l.b16 %v750
  %v3314 = vunpack.c.l.b16 %v751
  %v3315 = vunpack.c.l.b16 %v752
  %v3316 = vunpack.c.l.b16 %v753
  %v3317 = vunpack.c.l.b16 %v754
  %v3318 = vunpack.c.l.b16 %v755
  %v3319 = vunpack.c.l.b16 %v756
  %v3320 = vunpack.c.l.b16 %v757
  %v3321 = vunpack.c.l.b16 %v758
  %v3322 = vunpack.c.l.b16 %v759
  %v3323 = vunpack.c.l.b16 %v760
  %v3324 = vunpack.c.l.b16 %v761
  %v3325 = vunpack.c.l.b16 %v762
  %v3326 = vunpack.c.l.b16 %v763
  %v3327 = vunpack.c.l.b16 %v764
  %v3328 = vunpack.c.l.b16 %v765
  %v3329 = vunpack.c.l.b16 %v766
  %v3330 = vunpack.c.l.b16 %v767
  %v3331 = vunpack.c.l.b16 %v768
  %v3332 = vunpack.c.l.b16 %v769
  %v3333 = vunpack.c.l.b16 %v770
  %v3334 = vunpack.c.l.b16 %v771
  %v3335 = vunpack.c.l.b16 %v772
  %v3336 = vunpack.c.l.b16 %v773
  %v3337 = vunpack.c.l.b16 %v774
  %v3338 = vunpack.c.l.b16 %v775
  %v3339 = vunpack.c.l.b16 %v776
  %v3340 = vunpack.c.l.b16 %v777
  %v3341 = vunpack.c.l.b16 %v778
  %v3342 = vunpack.c.l.b16 %v779
  %v3343 = vunpack.c.l.b16 %v780
  %v3344 = vunpack.c.l.b16 %v781
  %v3345 = vunpack.c.l.b16 %v782
  %v3346 = vunpack.c.l.b16 %v783
  %v3347 = vunpack.c.l.b16 %v784
  %v3348 = vunpack.c.l.b16 %v785
  %v3349 = vunpack.c.l.b16 %v786
  %v3350 = vunpack.c.l.b16 %v787
  %v3351 = vunpack.c.l.b16 %v788
  %v3352 = vunpack.c.l.b16 %v789
  %v3353 = vunpack.c.l.b16 %v790
  %v3354 = vunpack.c.l.b16 %v791
  %v3355 = vunpack.c.l.b16 %v792
  %v3356 = vunpack.c.l.b16 %v793
  %v3357 = vunpack.c.l.b16 %v794
  %v3358 = vunpack.c.l.b16 %v795
  %v3359 = vunpack.c.l.b16 %v796
  %v3360 = vunpack.c.l.b16 %v797
  %v3361 = vunpack.c.l.b16 %v798
  %v3362 = vunpack.c.l.b16 %v799
  %v3363 = vunpack.c.l.b16 %v800
  %v3364 = vunpack.c.l.b16 %v801
  %v3365 = vunpack.c.l.b16 %v802
  %v3366 = vunpack.c.l.b16 %v803
  %v3367 = vunpack.c.l.b16 %v804
  %v3368 = vunpack.c.l.b16 %v805
  %v3369 = vunpack.c.l.b16 %v806
  %v3370 = vunpack.c.l.b16 %v807
  %v3371 = vunpack.c.l.b16 %v808
  %v3372 = vunpack.c.l.b16 %v809
  %v3373 = vunpack.c.l.b16 %v810
  %v3374 = vunpack.c.l.b16 %v811
  %v3375 = vunpack.c.l.b16 %v812
  %v3376 = vunpack.c.l.b16 %v813
  %v3377 = vunpack.c.l.b16 %v814
  %v3378 = vunpack.c.l.b16 %v815
  %v3379 = vunpack.c.l.b16 %v816
  %v3380 = vunpack.c.l.b16 %v817
  %v3381 = vunpack.c.l.b16 %v818
  %v3382 = vunpack.c.l.b16 %v819
  %v3383 = vunpack.c.l.b16 %v820
  %v3384 = vunpack.c.l.b16 %v821
  %v3385 = vunpack.c.l.b16 %v822
  %v3386 = vunpack.c.l.b16 %v823
  %v3387 = vunpack.c.l.b16 %v824
  %v3388 = vunpack.c.l.b16 %v825
  %v3389 = vunpack.c.l.b16 %v826
  %v3390 = vunpack.c.l.b16 %v827
  %v3391 = vunpack.c.l.b16 %v828
  %v3392 = vunpack.c.l.b16 %v829
  %v3393 = vunpack.c.l.b16 %v830
  %v3394 = vunpack.c.l.b16 %v831
  %v3395 = vunpack.c.l.b16 %v832
  %v3396 = vunpack.c.l.b16 %v833
  %v3397 = vunpack.c.l.b16 %v834
  %v3398 = vunpack.c.l.b16 %v835
  %v3399 = vunpack.c.l.b16 %v836
  %v3400 = vunpack.c.l.b16 %v837
  %v3401 = vunpack.c.l.b16 %v838
  %v3402 = vunpack.c.l.b16 %v839
  %v3403 = vunpack.c.l.b16 %v840
  %v3404 = vunpack.c.l.b16 %v841
  %v3405 = vunpack.c.l.b16 %v842
  %v3406 = vunpack.c.l.b16 %v843
  %v3407 = vunpack.c.l.b16 %v844
  %v3408 = vunpack.c.l.b16 %v845
  %v3409 = vunpack.c.l.b16 %v846
  %v3410 = vunpack.c.l.b16 %v847
  %v3411 = vunpack.c.l.b16 %v848
  %v3412 = vunpack.c.l.b16 %v849
  %v3413 = vunpack.c.l.b16 %v850
  %v3414 = vunpack.c.l.b16 %v851
  %v3415 = vunpack.c.l.b16 %v852
  %v3416 = vunpack.c.l.b16 %v853
  %v3417 = vunpack.c.l.b16 %v854
  %v3418 = vunpack.c.l.b16 %v855
  %v3419 = vunpack.c.l.b16 %v856
  %v3420 = vunpack.c.l.b16 %v857
  %v3421 = vunpack.c.l.b16 %v858
  %v3422 = vunpack.c.l.b16 %v859
  %v3423 = vunpack.c.l.b16 %v860
  %v3424 = vunpack.c.l.b16 %v861
  %v3425 = vunpack.c.l.b16 %v862
  %v3426 = vunpack.c.l.b16 %v863
  %v3427 = vunpack.c.l.b16 %v864
  %v3428 = vunpack.c.l.b16 %v865
  %v3429 = vunpack.c.l.b16 %v866
  %v3430 = vunpack.c.l.b16 %v867
  %v3431 = vunpack.c.l.b16 %v868
  %v3432 = vunpack.c.l.b16 %v869
  %v3433 = vunpack.c.l.b16 %v870
  %v3434 = vunpack.c.l.b16 %v871
  %v3435 = vunpack.c.l.b16 %v872
  %v3436 = vunpack.c.l.b16 %v873
  %v3437 = vunpack.c.l.b16 %v874
  %v3438 = vunpack.c.l.b16 %v875
  %v3439 = vunpack.c.l.b16 %v876
  %v3440 = vunpack.c.l.b16 %v877
  %v3441 = vunpack.c.l.b16 %v878
  %v3442 = vunpack.c.l.b16 %v879
  %v3443 = vunpack.c.l.b16 %v880
  %v3444 = vunpack.c.l.b16 %v881
  %v3445 = vunpack.c.l.b16 %v882
  %v3446 = vunpack.c.l.b16 %v883
  %v3447 = vunpack.c.l.b16 %v884
  %v3448 = vunpack.c.l.b16 %v885
  %v3449 = vunpack.c.l.b16 %v886
  %v3450 = vunpack.c.l.b16 %v887
  %v3451 = vunpack.c.l.b16 %v888
  %v3452 = vunpack.c.l.b16 %v889
  %v3453 = vunpack.c.l.b16 %v890
  %v3454 = vunpack.c.l.b16 %v891
  %v3455 = vunpack.c.l.b16 %v892
  %v3456 = vunpack.c.l.b16 %v893
  %v3457 = vunpack.c.l.b16 %v894
  %v3458 = vunpack.c.l.b16 %v895
  %v3459 = vunpack.c.l.b16 %v896
  %v3460 = vunpack.c.l.b16 %v897
  %v3461 = vunpack.c.l.b16 %v898
  %v3462 = vunpack.c.l.b16 %v899
  %v3463 = vunpack.c.l.b16 %v900
  %v3464 = vunpack.c.l.b16 %v901
  %v3465 = vunpack.c.l.b16 %v902
  %v3466 = vunpack.c.l.b16 %v903
  %v3467 = vunpack.c.l.b16 %v904
  %v3468 = vunpack.c.l.b16 %v905
  %v3469 = vunpack.c.l.b16 %v906
  %v3470 = vunpack.c.l.b16 %v907
  %v3471 = vunpack.c.l.b16 %v908
  %v3472 = vunpack.c.l.b16 %v909
  %v3473 = vunpack.c.l.b16 %v910
  %v3474 = vunpack.c.l.b16 %v911
  %v3475 = vunpack.c.l.b16 %v912
  %v3476 = vunpack.c.l.b16 %v913
  %v3477 = vunpack.c.l.b16 %v914
  %v3478 = vunpack.c.l.b16 %v915
  %v3479 = vunpack.c.l.b16 %v916
  %v3480 = vunpack.c.l.b16 %v917
  %v3481 = vunpack.c.l.b16 %v918
  %v3482 = vunpack.c.l.b16 %v919
  %v3483 = vunpack.c.l.b16 %v920
  %v3484 = vunpack.c.l.b16 %v921
  %v3485 = vunpack.c.l.b16 %v922
  %v3486 = vunpack.c.l.b16 %v923
  %v3487 = vunpack.c.l.b16 %v924
  %v3488 = vunpack.c.l.b16 %v925
  %v3489 = vunpack.c.l.b16 %v926
  %v3490 = vunpack.c.l.b16 %v927
  %v3491 = vunpack.c.l.b16 %v928
  %v3492 = vunpack.c.l.b16 %v929
  %v3493 = vunpack.c.l.b16 %v930
  %v3494 = vunpack.c.l.b16 %v931
  %v3495 = vunpack.c.l.b16 %v932
  %v3496 = vunpack.c.l.b16 %v933
  %v3497 = vunpack.c.l.b16 %v934
  %v3498 = vunpack.c.l.b16 %v935
  %v3499 = vunpack.c.l.b16 %v936
  %v3500 = vunpack.c.l.b16 %v937
  %v3501 = vunpack.c.l.b16 %v938
  %v3502 = vunpack.c.l.b16 %v939
  %v3503 = vunpack.c.l.b16 %v940
  %v3504 = vunpack.c.l.b16 %v941
  %v3505 = vunpack.c.l.b16 %v942
  %v3506 = vunpack.c.l.b16 %v943
  %v3507 = vunpack.c.l.b16 %v944
  %v3508 = vunpack.c.l.b16 %v945
  %v3509 = vunpack.c.l.b16 %v946
  %v3510 = vunpack.c.l.b16 %v947
  %v3511 = vunpack.c.l.b16 %v948
  %v3512 = vunpack.c.l.b16 %v949
  %v3513 = vunpack.c.l.b16 %v950
  %v3514 = vunpack.c.l.b16 %v951
  %v3515 = vunpack.c.l.b16 %v952
  %v3516 = vunpack.c.l.b16 %v953
  %v3517 = vunpack.c.l.b16 %v954
  %v3518 = vunpack.c.l.b16 %v955
  %v3519 = vunpack.c.l.b16 %v956
  %v3520 = vunpack.c.l.b16 %v957
  %v3521 = vunpack.c.l.b16 %v958
  %v3522 = vunpack.c.l.b16 %v959
  %v3523 = vunpack.c.l.b16 %v960
  %v3524 = vunpack.c.l.b16 %v961
  %v3525 = vunpack.c.l.b16 %v962
  %v3526 = vunpack.c.l.b16 %v963
  %v3527 = vunpack.c.l.b16 %v964
  %v3528 = vunpack.c.l.b16 %v965
  %v3529 = vunpack.c.l.b16 %v966
  %v3530 = vunpack.c.l.b16 %v967
  %v3531 = vunpack.c.l.b16 %v968
  %v3532 = vunpack.c.l.b16 %v969
  %v3533 = vunpack.c.l.b16 %v970
  %v3534 = vunpack.c.l.b16 %v971
  %v3535 = vunpack.c.l.b16 %v972
  %v3536 = vunpack.c.l.b16 %v973
  %v3537 = vunpack.c.l.b16 %v974
  %v3538 = vunpack.c.l.b16 %v975
  %v3539 = vunpack.c.l.b16 %v976
  %v3540 = vunpack.c.l.b16 %v977
  %v3541 = vunpack.c.l.b16 %v978
  %v3542 = vunpack.c.l.b16 %v979
  %v3543 = vunpack.c.l.b16 %v980
  %v3544 = vunpack.c.l.b16 %v981
  %v3545 = vunpack.c.l.b16 %v982
  %v3546 = vunpack.c.l.b16 %v983
  %v3547 = vunpack.c.l.b16 %v984
  %v3548 = vunpack.c.l.b16 %v985
  %v3549 = vunpack.c.l.b16 %v986
  %v3550 = vunpack.c.l.b16 %v987
  %v3551 = vunpack.c.l.b16 %v988
  %v3552 = vunpack.c.l.b16 %v989
  %v3553 = vunpack.c.l.b16 %v990
  %v3554 = vunpack.c.l.b16 %v991
  %v3555 = vunpack.c.l.b16 %v992
  %v3556 = vunpack.c.l.b16 %v993
  %v3557 = vunpack.c.l.b16 %v994
  %v3558 = vunpack.c.l.b16 %v995
  %v3559 = vunpack.c.l.b16 %v996
  %v3560 = vunpack.c.l.b16 %v997
  %v3561 = vunpack.c.l.b16 %v998
  %v3562 = vunpack.c.l.b16 %v999
  %v3563 = vunpack.c.l.b16 %v1000
  %v3564 = vunpack.c.l.b16 %v1001
  %v3565 = vunpack.c.l.b16 %v1002
  %v3566 = vunpack.c.l.b16 %v1003
  %v3567 = vunpack.c.l.b16 %v1004
  %v3568 = vunpack.c.l.b16 %v1005
  %v3569 = vunpack.c.l.b16 %v1006
  %v3570 = vunpack.c.l.b16 %v1007
  %v3571 = vunpack.c.l.b16 %v1008
  %v3572 = vunpack.c.l.b16 %v1009
  %v3573 = vunpack.c.l.b16 %v1010
  %v3574 = vunpack.c.l.b16 %v1011
  %v3575 = vunpack.c.l.b16 %v1012
  %v3576 = vunpack.c.l.b16 %v1013
  %v3577 = vunpack.c.l.b16 %v1014
  %v3578 = vunpack.c.l.b16 %v1015
  %v3579 = vunpack.c.l.b16 %v1016
  %v3580 = vunpack.c.l.b16 %v1017
  %v3581 = vunpack.c.l.b16 %v1018
  %v3582 = vunpack.c.l.b16 %v1019
  %v3583 = vunpack.c.l.b16 %v1020
  %v3584 = vunpack.c.l.b16 %v1021
  %v3585 = vunpack.c.l.b16 %v1022
  %v3586 = vunpack.c.l.b16 %v1023
  %v3587 = vunpack.c.l.b16 %v1024
  %v3588 = vunpack.c.l.b16 %v1025
  %v3589 = vunpack.c.l.b16 %v1026
  %v3590 = vunpack.c.l.b16 %v1027
  %v3591 = vunpack.c.l.b16 %v1028
  %v3592 = vunpack.c.l.b16 %v1029
  %v3593 = vunpack.c.l.b16 %v1030
  %v3594 = vunpack.c.l.b16 %v1031
  %v3595 = vunpack.c.l.b16 %v1032
  %v3596 = vunpack.c.l.b16 %v1033
  %v3597 = vunpack.c.l.b16 %v1034
  %v3598 = vunpack.c.l.b16 %v1035
  %v3599 = vunpack.c.l.b16 %v1036
  %v3600 = vunpack.c.l.b16 %v1037
  %v3601 = vunpack.c.l.b16 %v1038
  %v3602 = vunpack.c.l.b16 %v1039
  %v3603 = vunpack.c.l.b16 %v1040
  %v3604 = vunpack.c.l.b16 %v1041
  %v3605 = vunpack.c.l.b16 %v1042
  %v3606 = vunpack.c.l.b16 %v1043
  %v3607 = vunpack.c.l.b16 %v1044
  %v3608 = vunpack.c.l.b16 %v1045
  %v3609 = vunpack.c.l.b16 %v1046
  %v3610 = vunpack.c.l.b16 %v1047
  %v3611 = vunpack.c.l.b16 %v1048
  %v3612 = vunpack.c.l.b16 %v1049
  %v3613 = vunpack.c.l.b16 %v1050
  %v3614 = vunpack.c.l.b16 %v1051
  %v3615 = vunpack.c.l.b16 %v1052
  %v3616 = vunpack.c.l.b16 %v1053
  %v3617 = vunpack.c.l.b16 %v1054
  %v3618 = vunpack.c.l.b16 %v1055
  %v3619 = vunpack.c.l.b16 %v1056
  %v3620 = vunpack.c.l.b16 %v1057
  %v3621 = vunpack.c.l.b16 %v1058
  %v3622 = vunpack.c.l.b16 %v1059
  %v3623 = vunpack.c.l.b16 %v1060
  %v3624 = vunpack.c.l.b16 %v1061
  %v3625 = vunpack.c.l.b16 %v1062
  %v3626 = vunpack.c.l.b16 %v1063
  %v3627 = vunpack.c.l.b16 %v1064
  %v3628 = vunpack.c.l.b16 %v1065
  %v3629 = vunpack.c.l.b16 %v1066
  %v3630 = vunpack.c.l.b16 %v1067
  %v3631 = vunpack.c.l.b16 %v1068
  %v3632 = vunpack.c.l.b16 %v1069
  %v3633 = vunpack.c.l.b16 %v1070
  %v3634 = vunpack.c.l.b16 %v1071
  %v3635 = vunpack.c.l.b16 %v1072
  %v3636 = vunpack.c.l.b16 %v1073
  %v3637 = vunpack.c.l.b16 %v1074
  %v3638 = vunpack.c.l.b16 %v1075
  %v3639 = vunpack.c.l.b16 %v1076
  %v3640 = vunpack.c.l.b16 %v1077
  %v3641 = vunpack.c.l.b16 %v1078
  %v3642 = vunpack.c.l.b16 %v1079
  %v3643 = vunpack.c.l.b16 %v1080
  %v3644 = vunpack.c.l.b16 %v1081
  %v3645 = vunpack.c.l.b16 %v1082
  %v3646 = vunpack.c.l.b16 %v1083
  %v3647 = vunpack.c.l.b16 %v1084
  %v3648 = vunpack.c.l.b16 %v1085
  %v3649 = vunpack.c.l.b16 %v1086
  %v3650 = vunpack.c.l.b16 %v1087
  %v3651 = vunpack.c.l.b16 %v1088
  %v3652 = vunpack.c.l.b16 %v1089
  %v3653 = vunpack.c.l.b16 %v1090
  %v3654 = vunpack.c.l.b16 %v1091
  %v3655 = vunpack.c.l.b16 %v1092
  %v3656 = vunpack.c.l.b16 %v1093
  %v3657 = vunpack.c.l.b16 %v1094
  %v3658 = vunpack.c.l.b16 %v1095
  %v3659 = vunpack.c.l.b16 %v1096
  %v3660 = vunpack.c.l.b16 %v1097
  %v3661 = vunpack.c.l.b16 %v1098
  %v3662 = vunpack.c.l.b16 %v1099
  %v3663 = vunpack.c.l.b16 %v1100
  %v3664 = vunpack.c.l.b16 %v1101
  %v3665 = vunpack.c.l.b16 %v1102
  %v3666 = vunpack.c.l.b16 %v1103
  %v3667 = vunpack.c.l.b16 %v1104
  %v3668 = vunpack.c.l.b16 %v1105
  %v3669 = vunpack.c.l.b16 %v1106
  %v3670 = vunpack.c.l.b16 %v1107
  %v3671 = vunpack.c.l.b16 %v1108
  %v3672 = vunpack.c.l.b16 %v1109
  %v3673 = vunpack.c.l.b16 %v1110
  %v3674 = vunpack.c.l.b16 %v1111
  %v3675 = vunpack.c.l.b16 %v1112
  %v3676 = vunpack.c.l.b16 %v1113
  %v3677 = vunpack.c.l.b16 %v1114
  %v3678 = vunpack.c.l.b16 %v1115
  %v3679 = vunpack.c.l.b16 %v1116
  %v3680 = vunpack.c.l.b16 %v1117
  %v3681 = vunpack.c.l.b16 %v1118
  %v3682 = vunpack.c.l.b16 %v1119
  %v3683 = vunpack.c.l.b16 %v1120
  %v3684 = vunpack.c.l.b16 %v1121
  %v3685 = vunpack.c.l.b16 %v1122
  %v3686 = vunpack.c.l.b16 %v1123
  %v3687 = vunpack.c.l.b16 %v1124
  %v3688 = vunpack.c.l.b16 %v1125
  %v3689 = vunpack.c.l.b16 %v1126
  %v3690 = vunpack.c.l.b16 %v1127
  %v3691 = vunpack.c.l.b16 %v1128
  %v3692 = vunpack.c.l.b16 %v1129
  %v3693 = vunpack.c.l.b16 %v1130
  %v3694 = vunpack.c.l.b16 %v1131
  %v3695 = vunpack.c.l.b16 %v1132
  %v3696 = vunpack.c.l.b16 %v1133
  %v3697 = vunpack.c.l.b16 %v1134
  %v3698 = vunpack.c.l.b16 %v1135
  %v3699 = vunpack.c.l.b16 %v1136
  %v3700 = vunpack.c.l.b16 %v1137
  %v3701 = vunpack.c.l.b16 %v1138
  %v3702 = vunpack.c.l.b16 %v1139
  %v3703 = vunpack.c.l.b16 %v1140
  %v3704 = vunpack.c.l.b16 %v1141
  %v3705 = vunpack.c.l.b16 %v1142
  %v3706 = vunpack.c.l.b16 %v1143
  %v3707 = vunpack.c.l.b16 %v1144
  %v3708 = vunpack.c.l.b16 %v1145
  %v3709 = vunpack.c.l.b16 %v1146
  %v3710 = vunpack.c.l.b16 %v1147
  %v3711 = vunpack.c.l.b16 %v1148
  %v3712 = vunpack.c.l.b16 %v1149
  %v3713 = vunpack.c.l.b16 %v1150
  %v3714 = vunpack.c.l.b16 %v1151
  %v3715 = vunpack.c.l.b16 %v1152
  %v3716 = vunpack.c.l.b16 %v1153
  %v3717 = vunpack.c.l.b16 %v1154
  %v3718 = vunpack.c.l.b16 %v1155
  %v3719 = vunpack.c.l.b16 %v1156
  %v3720 = vunpack.c.l.b16 %v1157
  %v3721 = vunpack.c.l.b16 %v1158
  %v3722 = vunpack.c.l.b16 %v1159
  %v3723 = vunpack.c.l.b16 %v1160
  %v3724 = vunpack.c.l.b16 %v1161
  %v3725 = vunpack.c.l.b16 %v1162
  %v3726 = vunpack.c.l.b16 %v1163
  %v3727 = vunpack.c.l.b16 %v1164
  %v3728 = vunpack.c.l.b16 %v1165
  %v3729 = vunpack.c.l.b16 %v1166
  %v3730 = vunpack.c.l.b16 %v1167
  %v3731 = vunpack.c.l.b16 %v1168
  %v3732 = vunpack.c.l.b16 %v1169
  %v3733 = vunpack.c.l.b16 %v1170
  %v3734 = vunpack.c.l.b16 %v1171
  %v3735 = vunpack.c.l.b16 %v1172
  %v3736 = vunpack.c.l.b16 %v1173
  %v3737 = vunpack.c.l.b16 %v1174
  %v3738 = vunpack.c.l.b16 %v1175
  %v3739 = vunpack.c.l.b16 %v1176
  %v3740 = vunpack.c.l.b16 %v1177
  %v3741 = vunpack.c.l.b16 %v1178
  %v3742 = vunpack.c.l.b16 %v1179
  %v3743 = vunpack.c.l.b16 %v1180
  %v3744 = vunpack.c.l.b16 %v1181
  %v3745 = vunpack.c.l.b16 %v1182
  %v3746 = vunpack.c.l.b16 %v1183
  %v3747 = vunpack.c.l.b16 %v1184
  %v3748 = vunpack.c.l.b16 %v1185
  %v3749 = vunpack.c.l.b16 %v1186
  %v3750 = vunpack.c.l.b16 %v1187
  %v3751 = vunpack.c.l.b16 %v1188
  %v3752 = vunpack.c.l.b16 %v1189
  %v3753 = vunpack.c.l.b16 %v1190
  %v3754 = vunpack.c.l.b16 %v1191
  %v3755 = vunpack.c.l.b16 %v1192
  %v3756 = vunpack.c.l.b16 %v1193
  %v3757 = vunpack.c.l.b16 %v1194
  %v3758 = vunpack.c.l.b16 %v1195
  %v3759 = vunpack.c.l.b16 %v1196
  %v3760 = vunpack.c.l.b16 %v1197
  %v3761 = vunpack.c.l.b16 %v1198
  %v3762 = vunpack.c.l.b16 %v1199
  %v3763 = vunpack.c.l.b16 %v1200
  %v3764 = vunpack.c.l.b16 %v1201
  %v3765 = vunpack.c.l.b16 %v1202
  %v3766 = vunpack.c.l.b16 %v1203
  %v3767 = vunpack.c.l.b16 %v1204
  %v3768 = vunpack.c.l.b16 %v1205
  %v3769 = vunpack.c.l.b16 %v1206
  %v3770 = vunpack.c.l.b16 %v1207
  %v3771 = vunpack.c.l.b16 %v1208
  %v3772 = vunpack.c.l.b16 %v1209
  %v3773 = vunpack.c.l.b16 %v1210
  %v3774 = vunpack.c.l.b16 %v1211
  %v3775 = vunpack.c.l.b16 %v1212
  %v3776 = vunpack.c.l.b16 %v1213
  %v3777 = vunpack.c.l.b16 %v1214
  %v3778 = vunpack.c.l.b16 %v1215
  %v3779 = vunpack.c.l.b16 %v1216
  %v3780 = vunpack.c.l.b16 %v1217
  %v3781 = vunpack.c.l.b16 %v1218
  %v3782 = vunpack.c.l.b16 %v1219
  %v3783 = vunpack.c.l.b16 %v1220
  %v3784 = vunpack.c.l.b16 %v1221
  %v3785 = vunpack.c.l.b16 %v1222
  %v3786 = vunpack.c.l.b16 %v1223
  %v3787 = vpack.c.b16 %v2636, %v2635
  %v3788 = vpack.c.b16 %v2638, %v2637
  %v3789 = vpack.c.b16 %v2640, %v2639
  %v3790 = vpack.c.b16 %v2642, %v2641
  %v3791 = vpack.c.b16 %v2644, %v2643
  %v3792 = vpack.c.b16 %v2646, %v2645
  %v3793 = vpack.c.b16 %v2648, %v2647
  %v3794 = vpack.c.b16 %v2650, %v2649
  %v3795 = vpack.c.b16 %v2652, %v2651
  %v3796 = vpack.c.b16 %v2654, %v2653
  %v3797 = vpack.c.b16 %v2656, %v2655
  %v3798 = vpack.c.b16 %v2658, %v2657
  %v3799 = vpack.c.b16 %v2660, %v2659
  %v3800 = vpack.c.b16 %v2662, %v2661
  %v3801 = vpack.c.b16 %v2664, %v2663
  %v3802 = vpack.c.b16 %v2666, %v2665
  %v3803 = vpack.c.b16 %v2668, %v2667
  %v3804 = vpack.c.b16 %v2670, %v2669
  %v3805 = vpack.c.b16 %v2672, %v2671
  %v3806 = vpack.c.b16 %v2674, %v2673
  %v3807 = vpack.c.b16 %v2676, %v2675
  %v3808 = vpack.c.b16 %v2678, %v2677
  %v3809 = vpack.c.b16 %v2680, %v2679
  %v3810 = vpack.c.b16 %v2682, %v2681
  %v3811 = vpack.c.b16 %v2684, %v2683
  %v3812 = vpack.c.b16 %v2686, %v2685
  %v3813 = vpack.c.b16 %v2688, %v2687
  %v3814 = vpack.c.b16 %v2690, %v2689
  %v3815 = vpack.c.b16 %v2692, %v2691
  %v3816 = vpack.c.b16 %v2694, %v2693
  %v3817 = vpack.c.b16 %v2696, %v2695
  %v3818 = vpack.c.b16 %v2698, %v2697
  %v3819 = vpack.c.b16 %v2700, %v2699
  %v3820 = vpack.c.b16 %v2702, %v2701
  %v3821 = vpack.c.b16 %v2704, %v2703
  %v3822 = vpack.c.b16 %v2706, %v2705
  %v3823 = vpack.c.b16 %v2708, %v2707
  %v3824 = vpack.c.b16 %v2710, %v2709
  %v3825 = vpack.c.b16 %v2712, %v2711
  %v3826 = vpack.c.b16 %v2714, %v2713
  %v3827 = vpack.c.b16 %v2716, %v2715
  %v3828 = vpack.c.b16 %v2718, %v2717
  %v3829 = vpack.c.b16 %v2720, %v2719
  %v3830 = vpack.c.b16 %v2722, %v2721
  %v3831 = vpack.c.b16 %v2724, %v2723
  %v3832 = vpack.c.b16 %v2726, %v2725
  %v3833 = vpack.c.b16 %v2728, %v2727
  %v3834 = vpack.c.b16 %v2730, %v2729
  %v3835 = vpack.c.b16 %v2732, %v2731
  %v3836 = vpack.c.b16 %v2734, %v2733
  %v3837 = vpack.c.b16 %v2736, %v2735
  %v3838 = vpack.c.b16 %v2738, %v2737
  %v3839 = vpack.c.b16 %v2740, %v2739
  %v3840 = vpack.c.b16 %v2742, %v2741
  %v3841 = vpack.c.b16 %v2744, %v2743
  %v3842 = vpack.c.b16 %v2746, %v2745
  %v3843 = vpack.c.b16 %v2748, %v2747
  %v3844 = vpack.c.b16 %v2750, %v2749
  %v3845 = vpack.c.b16 %v2752, %v2751
  %v3846 = vpack.c.b16 %v2754, %v2753
  %v3847 = vpack.c.b16 %v2756, %v2755
  %v3848 = vpack.c.b16 %v2758, %v2757
  %v3849 = vpack.c.b16 %v2760, %v2759
  %v3850 = vpack.c.b16 %v2762, %v2761
  %v3851 = vpack.c.b16 %v2764, %v2763
  %v3852 = vpack.c.b16 %v2766, %v2765
  %v3853 = vpack.c.b16 %v2768, %v2767
  %v3854 = vpack.c.b16 %v2770, %v2769
  %v3855 = vpack.c.b16 %v2772, %v2771
  %v3856 = vpack.c.b16 %v2774, %v2773
  %v3857 = vpack.c.b16 %v2776, %v2775
  %v3858 = vpack.c.b16 %v2778, %v2777
  %v3859 = vpack.c.b16 %v2780, %v2779
  %v3860 = vpack.c.b16 %v2782, %v2781
  %v3861 = vpack.c.b16 %v2784, %v2783
  %v3862 = vpack.c.b16 %v2786, %v2785
  %v3863 = vpack.c.b16 %v2788, %v2787
  %v3864 = vpack.c.b16 %v2790, %v2789
  %v3865 = vpack.c.b16 %v2792, %v2791
  %v3866 = vpack.c.b16 %v2794, %v2793
  %v3867 = vpack.c.b16 %v2796, %v2795
  %v3868 = vpack.c.b16 %v2798, %v2797
  %v3869 = vpack.c.b16 %v2800, %v2799
  %v3870 = vpack.c.b16 %v2802, %v2801
  %v3871 = vpack.c.b16 %v2804, %v2803
  %v3872 = vpack.c.b16 %v2806, %v2805
  %v3873 = vpack.c.b16 %v2808, %v2807
  %v3874 = vpack.c.b16 %v2810, %v2809
  %v3875 = vpack.c.b16 %v2812, %v2811
  %v3876 = vpack.c.b16 %v2814, %v2813
  %v3877 = vpack.c.b16 %v2816, %v2815
  %v3878 = vpack.c.b16 %v2818, %v2817
  %v3879 = vpack.c.b16 %v2820, %v2819
  %v3880 = vpack.c.b16 %v2822, %v2821
  %v3881 = vpack.c.b16 %v2824, %v2823
  %v3882 = vpack.c.b16 %v2826, %v2825
  %v3883 = vpack.c.b16 %v2828, %v2827
  %v3884 = vpack.c.b16 %v2830, %v2829
  %v3885 = vpack.c.b16 %v2832, %v2831
  %v3886 = vpack.c.b16 %v2834, %v2833
  %v3887 = vpack.c.b16 %v2836, %v2835
  %v3888 = vpack.c.b16 %v2838, %v2837
  %v3889 = vpack.c.b16 %v2840, %v2839
  %v3890 = vpack.c.b16 %v2842, %v2841
  %v3891 = vpack.c.b16 %v2844, %v2843
  %v3892 = vpack.c.b16 %v2846, %v2845
  %v3893 = vpack.c.b16 %v2848, %v2847
  %v3894 = vpack.c.b16 %v2850, %v2849
  %v3895 = vpack.c.b16 %v2852, %v2851
  %v3896 = vpack.c.b16 %v2854, %v2853
  %v3897 = vpack.c.b16 %v2856, %v2855
  %v3898 = vpack.c.b16 %v2858, %v2857
  %v3899 = vpack.c.b16 %v2860, %v2859
  %v3900 = vpack.c.b16 %v2862, %v2861
  %v3901 = vpack.c.b16 %v2864, %v2863
  %v3902 = vpack.c.b16 %v2866, %v2865
  %v3903 = vpack.c.b16 %v2868, %v2867
  %v3904 = vpack.c.b16 %v2870, %v2869
  %v3905 = vpack.c.b16 %v2872, %v2871
  %v3906 = vpack.c.b16 %v2874, %v2873
  %v3907 = vpack.c.b16 %v2876, %v2875
  %v3908 = vpack.c.b16 %v2878, %v2877
  %v3909 = vpack.c.b16 %v2880, %v2879
  %v3910 = vpack.c.b16 %v2882, %v2881
  %v3911 = vpack.c.b16 %v2884, %v2883
  %v3912 = vpack.c.b16 %v2886, %v2885
  %v3913 = vpack.c.b16 %v2888, %v2887
  %v3914 = vpack.c.b16 %v2890, %v2889
  %v3915 = vpack.c.b16 %v2892, %v2891
  %v3916 = vpack.c.b16 %v2894, %v2893
  %v3917 = vpack.c.b16 %v2896, %v2895
  %v3918 = vpack.c.b16 %v2898, %v2897
  %v3919 = vpack.c.b16 %v2900, %v2899
  %v3920 = vpack.c.b16 %v2902, %v2901
  %v3921 = vpack.c.b16 %v2904, %v2903
  %v3922 = vpack.c.b16 %v2906, %v2905
  %v3923 = vpack.c.b16 %v2908, %v2907
  %v3924 = vpack.c.b16 %v2910, %v2909
  %v3925 = vpack.c.b16 %v2912, %v2911
  %v3926 = vpack.c.b16 %v2914, %v2913
  %v3927 = vpack.c.b16 %v2916, %v2915
  %v3928 = vpack.c.b16 %v2918, %v2917
  %v3929 = vpack.c.b16 %v2920, %v2919
  %v3930 = vpack.c.b16 %v2922, %v2921
  %v3931 = vpack.c.b16 %v2924, %v2923
  %v3932 = vpack.c.b16 %v2926, %v2925
  %v3933 = vpack.c.b16 %v2928, %v2927
  %v3934 = vpack.c.b16 %v2930, %v2929
  %v3935 = vpack.c.b16 %v2932, %v2931
  %v3936 = vpack.c.b16 %v2934, %v2933
  %v3937 = vpack.c.b16 %v2936, %v2935
  %v3938 = vpack.c.b16 %v2938, %v2937
  %v3939 = vpack.c.b16 %v2940, %v2939
  %v3940 = vpack.c.b16 %v2942, %v2941
  %v3941 = vpack.c.b16 %v2944, %v2943
  %v3942 = vpack.c.b16 %v2946, %v2945
  %v3943 = vpack.c.b16 %v2948, %v2947
  %v3944 = vpack.c.b16 %v2950, %v2949
  %v3945 = vpack.c.b16 %v2952, %v2951
  %v3946 = vpack.c.b16 %v2954, %v2953
  %v3947 = vpack.c.b16 %v2956, %v2955
  %v3948 = vpack.c.b16 %v2958, %v2957
  %v3949 = vpack.c.b16 %v2960, %v2959
  %v3950 = vpack.c.b16 %v2962, %v2961
  %v3951 = vpack.c.b16 %v2964, %v2963
  %v3952 = vpack.c.b16 %v2966, %v2965
  %v3953 = vpack.c.b16 %v2968, %v2967
  %v3954 = vpack.c.b16 %v2970, %v2969
  %v3955 = vpack.c.b16 %v2972, %v2971
  %v3956 = vpack.c.b16 %v2974, %v2973
  %v3957 = vpack.c.b16 %v2976, %v2975
  %v3958 = vpack.c.b16 %v2978, %v2977
  %v3959 = vpack.c.b16 %v2980, %v2979
  %v3960 = vpack.c.b16 %v2982, %v2981
  %v3961 = vpack.c.b16 %v2984, %v2983
  %v3962 = vpack.c.b16 %v2986, %v2985
  %v3963 = vpack.c.b16 %v2988, %v2987
  %v3964 = vpack.c.b16 %v2990, %v2989
  %v3965 = vpack.c.b16 %v2992, %v2991
  %v3966 = vpack.c.b16 %v2994, %v2993
  %v3967 = vpack.c.b16 %v2996, %v2995
  %v3968 = vpack.c.b16 %v2998, %v2997
  %v3969 = vpack.c.b16 %v3000, %v2999
  %v3970 = vpack.c.b16 %v3002, %v3001
  %v3971 = vpack.c.b16 %v3004, %v3003
  %v3972 = vpack.c.b16 %v3006, %v3005
  %v3973 = vpack.c.b16 %v3008, %v3007
  %v3974 = vpack.c.b16 %v3010, %v3009
  %v3975 = vpack.c.b16 %v3012, %v3011
  %v3976 = vpack.c.b16 %v3014, %v3013
  %v3977 = vpack.c.b16 %v3016, %v3015
  %v3978 = vpack.c.b16 %v3018, %v3017
  %v3979 = vpack.c.b16 %v3020, %v3019
  %v3980 = vpack.c.b16 %v3022, %v3021
  %v3981 = vpack.c.b16 %v3024, %v3023
  %v3982 = vpack.c.b16 %v3026, %v3025
  %v3983 = vpack.c.b16 %v3028, %v3027
  %v3984 = vpack.c.b16 %v3030, %v3029
  %v3985 = vpack.c.b16 %v3032, %v3031
  %v3986 = vpack.c.b16 %v3034, %v3033
  %v3987 = vpack.c.b16 %v3036, %v3035
  %v3988 = vpack.c.b16 %v3038, %v3037
  %v3989 = vpack.c.b16 %v3040, %v3039
  %v3990 = vpack.c.b16 %v3042, %v3041
  %v3991 = vpack.c.b16 %v3044, %v3043
  %v3992 = vpack.c.b16 %v3046, %v3045
  %v3993 = vpack.c.b16 %v3048, %v3047
  %v3994 = vpack.c.b16 %v3050, %v3049
  %v3995 = vpack.c.b16 %v3052, %v3051
  %v3996 = vpack.c.b16 %v3054, %v3053
  %v3997 = vpack.c.b16 %v3056, %v3055
  %v3998 = vpack.c.b16 %v3058, %v3057
  %v3999 = vpack.c.b16 %v3060, %v3059
  %v4000 = vpack.c.b16 %v3062, %v3061
  %v4001 = vpack.c.b16 %v3064, %v3063
  %v4002 = vpack.c.b16 %v3066, %v3065
  %v4003 = vpack.c.b16 %v3068, %v3067
  %v4004 = vpack.c.b16 %v3070, %v3069
  %v4005 = vpack.c.b16 %v3072, %v3071
  %v4006 = vpack.c.b16 %v3074, %v3073
  %v4007 = vpack.c.b16 %v3076, %v3075
  %v4008 = vpack.c.b16 %v3078, %v3077
  %v4009 = vpack.c.b16 %v3080, %v3079
  %v4010 = vpack.c.b16 %v3082, %v3081
  %v4011 = vpack.c.b16 %v3084, %v3083
  %v4012 = vpack.c.b16 %v3086, %v3085
  %v4013 = vpack.c.b16 %v3088, %v3087
  %v4014 = vpack.c.b16 %v3090, %v3089
  %v4015 = vpack.c.b16 %v3092, %v3091
  %v4016 = vpack.c.b16 %v3094, %v3093
  %v4017 = vpack.c.b16 %v3096, %v3095
  %v4018 = vpack.c.b16 %v3098, %v3097
  %v4019 = vpack.c.b16 %v3100, %v3099
  %v4020 = vpack.c.b16 %v3102, %v3101
  %v4021 = vpack.c.b16 %v3104, %v3103
  %v4022 = vpack.c.b16 %v3106, %v3105
  %v4023 = vpack.c.b16 %v3108, %v3107
  %v4024 = vpack.c.b16 %v3110, %v3109
  %v4025 = vpack.c.b16 %v3112, %v3111
  %v4026 = vpack.c.b16 %v3114, %v3113
  %v4027 = vpack.c.b16 %v3116, %v3115
  %v4028 = vpack.c.b16 %v3118, %v3117
  %v4029 = vpack.c.b16 %v3120, %v3119
  %v4030 = vpack.c.b16 %v3122, %v3121
  %v4031 = vpack.c.b16 %v3124, %v3123
  %v4032 = vpack.c.b16 %v3126, %v3125
  %v4033 = vpack.c.b16 %v3128, %v3127
  %v4034 = vpack.c.b16 %v3130, %v3129
  %v4035 = vpack.c.b16 %v3132, %v3131
  %v4036 = vpack.c.b16 %v3134, %v3133
  %v4037 = vpack.c.b16 %v3136, %v3135
  %v4038 = vpack.c.b16 %v3138, %v3137
  %v4039 = vpack.c.b16 %v3140, %v3139
  %v4040 = vpack.c.b16 %v3142, %v3141
  %v4041 = vpack.c.b16 %v3144, %v3143
  %v4042 = vpack.c.b16 %v3146, %v3145
  %v4043 = vpack.c.b16 %v3148, %v3147
  %v4044 = vpack.c.b16 %v3150, %v3149
  %v4045 = vpack.c.b16 %v3152, %v3151
  %v4046 = vpack.c.b16 %v3154, %v3153
  %v4047 = vpack.c.b16 %v3156, %v3155
  %v4048 = vpack.c.b16 %v3158, %v3157
  %v4049 = vpack.c.b16 %v3160, %v3159
  %v4050 = vpack.c.b16 %v3162, %v3161
  %v4051 = vpack.c.b16 %v3164, %v3163
  %v4052 = vpack.c.b16 %v3166, %v3165
  %v4053 = vpack.c.b16 %v3168, %v3167
  %v4054 = vpack.c.b16 %v3170, %v3169
  %v4055 = vpack.c.b16 %v3172, %v3171
  %v4056 = vpack.c.b16 %v3174, %v3173
  %v4057 = vpack.c.b16 %v3176, %v3175
  %v4058 = vpack.c.b16 %v3178, %v3177
  %v4059 = vpack.c.b16 %v3180, %v3179
  %v4060 = vpack.c.b16 %v3182, %v3181
  %v4061 = vpack.c.b16 %v3184, %v3183
  %v4062 = vpack.c.b16 %v3186, %v3185
  %v4063 = vpack.c.b16 %v3188, %v3187
  %v4064 = vpack.c.b16 %v3190, %v3189
  %v4065 = vpack.c.b16 %v3192, %v3191
  %v4066 = vpack.c.b16 %v3194, %v3193
  %v4067 = vpack.c.b16 %v3196, %v3195
  %v4068 = vpack.c.b16 %v3198, %v3197
  %v4069 = vpack.c.b16 %v3200, %v3199
  %v4070 = vpack.c.b16 %v3202, %v3201
  %v4071 = vpack.c.b16 %v3204, %v3203
  %v4072 = vpack.c.b16 %v3206, %v3205
  %v4073 = vpack.c.b16 %v3208, %v3207
  %v4074 = vpack.c.b16 %v3210, %v3209
  %v4075 = vpack.c.b16 %v3212, %v3211
  %v4076 = vpack.c.b16 %v3214, %v3213
  %v4077 = vpack.c.b16 %v3216, %v3215
  %v4078 = vpack.c.b16 %v3218, %v3217
  %v4079 = vpack.c.b16 %v3220, %v3219
  %v4080 = vpack.c.b16 %v3222, %v3221
  %v4081 = vpack.c.b16 %v3224, %v3223
  %v4082 = vpack.c.b16 %v3226, %v3225
  %v4083 = vpack.c.b16 %v3228, %v3227
  %v4084 = vpack.c.b16 %v3230, %v3229
  %v4085 = vpack.c.b16 %v3232, %v3231
  %v4086 = vpack.c.b16 %v3234, %v3233
  %v4087 = vpack.c.b16 %v3236, %v3235
  %v4088 = vpack.c.b16 %v3238, %v3237
  %v4089 = vpack.c.b16 %v3240, %v3239
  %v4090 = vpack.c.b16 %v3242, %v3241
  %v4091 = vpack.c.b16 %v3244, %v3243
  %v4092 = vpack.c.b16 %v3246, %v3245
  %v4093 = vpack.c.b16 %v3248, %v3247
  %v4094 = vpack.c.b16 %v3250, %v3249
  %v4095 = vpack.c.b16 %v3252, %v3251
  %v4096 = vpack.c.b16 %v3254, %v3253
  %v4097 = vpack.c.b16 %v3256, %v3255
  %v4098 = vpack.c.b16 %v3258, %v3257
  %v4099 = vpack.c.b16 %v3260, %v3259
  %v4100 = vpack.c.b16 %v3262, %v3261
  %v4101 = vpack.c.b16 %v3264, %v3263
  %v4102 = vpack.c.b16 %v3266, %v3265
  %v4103 = vpack.c.b16 %v3268, %v3267
  %v4104 = vpack.c.b16 %v3270, %v3269
  %v4105 = vpack.c.b16 %v3272, %v3271
  %v4106 = vpack.c.b16 %v3274, %v3273
  %v4107 = vpack.c.b16 %v3276, %v3275
  %v4108 = vpack.c.b16 %v3278, %v3277
  %v4109 = vpack.c.b16 %v3280, %v3279
  %v4110 = vpack.c.b16 %v3282, %v3281
  %v4111 = vpack.c.b16 %v3284, %v3283
  %v4112 = vpack.c.b16 %v3286, %v3285
  %v4113 = vpack.c.b16 %v3288, %v3287
  %v4114 = vpack.c.b16 %v3290, %v3289
  %v4115 = vpack.c.b16 %v3292, %v3291
  %v4116 = vpack.c.b16 %v3294, %v3293
  %v4117 = vpack.c.b16 %v3296, %v3295
  %v4118 = vpack.c.b16 %v3298, %v3297
  %v4119 = vpack.c.b16 %v3300, %v3299
  %v4120 = vpack.c.b16 %v3302, %v3301
  %v4121 = vpack.c.b16 %v3304, %v3303
  %v4122 = vpack.c.b16 %v3306, %v3305
  %v4123 = vpack.c.b16 %v3308, %v3307
  %v4124 = vpack.c.b16 %v3310, %v3309
  %v4125 = vpack.c.b16 %v3312, %v3311
  %v4126 = vpack.c.b16 %v3314, %v3313
  %v4127 = vpack.c.b16 %v3316, %v3315
  %v4128 = vpack.c.b16 %v3318, %v3317
  %v4129 = vpack.c.b16 %v3320, %v3319
  %v4130 = vpack.c.b16 %v3322, %v3321
  %v4131 = vpack.c.b16 %v3324, %v3323
  %v4132 = vpack.c.b16 %v3326, %v3325
  %v4133 = vpack.c.b16 %v3328, %v3327
  %v4134 = vpack.c.b16 %v3330, %v3329
  %v4135 = vpack.c.b16 %v3332, %v3331
  %v4136 = vpack.c.b16 %v3334, %v3333
  %v4137 = vpack.c.b16 %v3336, %v3335
  %v4138 = vpack.c.b16 %v3338, %v3337
  %v4139 = vpack.c.b16 %v3340, %v3339
  %v4140 = vpack.c.b16 %v3342, %v3341
  %v4141 = vpack.c.b16 %v3344, %v3343
  %v4142 = vpack.c.b16 %v3346, %v3345
  %v4143 = vpack.c.b16 %v3348, %v3347
  %v4144 = vpack.c.b16 %v3350, %v3349
  %v4145 = vpack.c.b16 %v3352, %v3351
  %v4146 = vpack.c.b16 %v3354, %v3353
  %v4147 = vpack.c.b16 %v3356, %v3355
  %v4148 = vpack.c.b16 %v3358, %v3357
  %v4149 = vpack.c.b16 %v3360, %v3359
  %v4150 = vpack.c.b16 %v3362, %v3361
  %v4151 = vpack.c.b16 %v3364, %v3363
  %v4152 = vpack.c.b16 %v3366, %v3365
  %v4153 = vpack.c.b16 %v3368, %v3367
  %v4154 = vpack.c.b16 %v3370, %v3369
  %v4155 = vpack.c.b16 %v3372, %v3371
  %v4156 = vpack.c.b16 %v3374, %v3373
  %v4157 = vpack.c.b16 %v3376, %v3375
  %v4158 = vpack.c.b16 %v3378, %v3377
  %v4159 = vpack.c.b16 %v3380, %v3379
  %v4160 = vpack.c.b16 %v3382, %v3381
  %v4161 = vpack.c.b16 %v3384, %v3383
  %v4162 = vpack.c.b16 %v3386, %v3385
  %v4163 = vpack.c.b16 %v3388, %v3387
  %v4164 = vpack.c.b16 %v3390, %v3389
  %v4165 = vpack.c.b16 %v3392, %v3391
  %v4166 = vpack.c.b16 %v3394, %v3393
  %v4167 = vpack.c.b16 %v3396, %v3395
  %v4168 = vpack.c.b16 %v3398, %v3397
  %v4169 = vpack.c.b16 %v3400, %v3399
  %v4170 = vpack.c.b16 %v3402, %v3401
  %v4171 = vpack.c.b16 %v3404, %v3403
  %v4172 = vpack.c.b16 %v3406, %v3405
  %v4173 = vpack.c.b16 %v3408, %v3407
  %v4174 = vpack.c.b16 %v3410, %v3409
  %v4175 = vpack.c.b16 %v3412, %v3411
  %v4176 = vpack.c.b16 %v3414, %v3413
  %v4177 = vpack.c.b16 %v3416, %v3415
  %v4178 = vpack.c.b16 %v3418, %v3417
  %v4179 = vpack.c.b16 %v3420, %v3419
  %v4180 = vpack.c.b16 %v3422, %v3421
  %v4181 = vpack.c.b16 %v3424, %v3423
  %v4182 = vpack.c.b16 %v3426, %v3425
  %v4183 = vpack.c.b16 %v3428, %v3427
  %v4184 = vpack.c.b16 %v3430, %v3429
  %v4185 = vpack.c.b16 %v3432, %v3431
  %v4186 = vpack.c.b16 %v3434, %v3433
  %v4187 = vpack.c.b16 %v3436, %v3435
  %v4188 = vpack.c.b16 %v3438, %v3437
  %v4189 = vpack.c.b16 %v3440, %v3439
  %v4190 = vpack.c.b16 %v3442, %v3441
  %v4191 = vpack.c.b16 %v3444, %v3443
  %v4192 = vpack.c.b16 %v3446, %v3445
  %v4193 = vpack.c.b16 %v3448, %v3447
  %v4194 = vpack.c.b16 %v3450, %v3449
  %v4195 = vpack.c.b16 %v3452, %v3451
  %v4196 = vpack.c.b16 %v3454, %v3453
  %v4197 = vpack.c.b16 %v3456, %v3455
  %v4198 = vpack.c.b16 %v3458, %v3457
  %v4199 = vpack.c.b16 %v3460, %v3459
  %v4200 = vpack.c.b16 %v3462, %v3461
  %v4201 = vpack.c.b16 %v3464, %v3463
  %v4202 = vpack.c.b16 %v3466, %v3465
  %v4203 = vpack.c.b16 %v3468, %v3467
  %v4204 = vpack.c.b16 %v3470, %v3469
  %v4205 = vpack.c.b16 %v3472, %v3471
  %v4206 = vpack.c.b16 %v3474, %v3473
  %v4207 = vpack.c.b16 %v3476, %v3475
  %v4208 = vpack.c.b16 %v3478, %v3477
  %v4209 = vpack.c.b16 %v3480, %v3479
  %v4210 = vpack.c.b16 %v3482, %v3481
  %v4211 = vpack.c.b16 %v3484, %v3483
  %v4212 = vpack.c.b16 %v3486, %v3485
  %v4213 = vpack.c.b16 %v3488, %v3487
  %v4214 = vpack.c.b16 %v3490, %v3489
  %v4215 = vpack.c.b16 %v3492, %v3491
  %v4216 = vpack.c.b16 %v3494, %v3493
  %v4217 = vpack.c.b16 %v3496, %v3495
  %v4218 = vpack.c.b16 %v3498, %v3497
  %v4219 = vpack.c.b16 %v3500, %v3499
  %v4220 = vpack.c.b16 %v3502, %v3501
  %v4221 = vpack.c.b16 %v3504, %v3503
  %v4222 = vpack.c.b16 %v3506, %v3505
  %v4223 = vpack.c.b16 %v3508, %v3507
  %v4224 = vpack.c.b16 %v3510, %v3509
  %v4225 = vpack.c.b16 %v3512, %v3511
  %v4226 = vpack.c.b16 %v3514, %v3513
  %v4227 = vpack.c.b16 %v3516, %v3515
  %v4228 = vpack.c.b16 %v3518, %v3517
  %v4229 = vpack.c.b16 %v3520, %v3519
  %v4230 = vpack.c.b16 %v3522, %v3521
  %v4231 = vpack.c.b16 %v3524, %v3523
  %v4232 = vpack.c.b16 %v3526, %v3525
  %v4233 = vpack.c.b16 %v3528, %v3527
  %v4234 = vpack.c.b16 %v3530, %v3529
  %v4235 = vpack.c.b16 %v3532, %v3531
  %v4236 = vpack.c.b16 %v3534, %v3533
  %v4237 = vpack.c.b16 %v3536, %v3535
  %v4238 = vpack.c.b16 %v3538, %v3537
  %v4239 = vpack.c.b16 %v3540, %v3539
  %v4240 = vpack.c.b16 %v3542, %v3541
  %v4241 = vpack.c.b16 %v3544, %v3543
  %v4242 = vpack.c.b16 %v3546, %v3545
  %v4243 = vpack.c.b16 %v3548, %v3547
  %v4244 = vpack.c.b16 %v3550, %v3549
  %v4245 = vpack.c.b16 %v3552, %v3551
  %v4246 = vpack.c.b16 %v3554, %v3553
  %v4247 = vpack.c.b16 %v3556, %v3555
  %v4248 = vpack.c.b16 %v3558, %v3557
  %v4249 = vpack.c.b16 %v3560, %v3559
  %v4250 = vpack.c.b16 %v3562, %v3561
  %v4251 = vpack.c.b16 %v3564, %v3563
  %v4252 = vpack.c.b16 %v3566, %v3565
  %v4253 = vpack.c.b16 %v3568, %v3567
  %v4254 = vpack.c.b16 %v3570, %v3569
  %v4255 = vpack.c.b16 %v3572, %v3571
  %v4256 = vpack.c.b16 %v3574, %v3573
  %v4257 = vpack.c.b16 %v3576, %v3575
  %v4258 = vpack.c.b16 %v3578, %v3577
  %v4259 = vpack.c.b16 %v3580, %v3579
  %v4260 = vpack.c.b16 %v3582, %v3581
  %v4261 = vpack.c.b16 %v3584, %v3583
  %v4262 = vpack.c.b16 %v3586, %v3585
  %v4263 = vpack.c.b16 %v3588, %v3587
  %v4264 = vpack.c.b16 %v3590, %v3589
  %v4265 = vpack.c.b16 %v3592, %v3591
  %v4266 = vpack.c.b16 %v3594, %v3593
  %v4267 = vpack.c.b16 %v3596, %v3595
  %v4268 = vpack.c.b16 %v3598, %v3597
  %v4269 = vpack.c.b16 %v3600, %v3599
  %v4270 = vpack.c.b16 %v3602, %v3601
  %v4271 = vpack.c.b16 %v3604, %v3603
  %v4272 = vpack.c.b16 %v3606, %v3605
  %v4273 = vpack.c.b16 %v3608, %v3607
  %v4274 = vpack.c.b16 %v3610, %v3609
  %v4275 = vpack.c.b16 %v3612, %v3611
  %v4276 = vpack.c.b16 %v3614, %v3613
  %v4277 = vpack.c.b16 %v3616, %v3615
  %v4278 = vpack.c.b16 %v3618, %v3617
  %v4279 = vpack.c.b16 %v3620, %v3619
  %v4280 = vpack.c.b16 %v3622, %v3621
  %v4281 = vpack.c.b16 %v3624, %v3623
  %v4282 = vpack.c.b16 %v3626, %v3625
  %v4283 = vpack.c.b16 %v3628, %v3627
  %v4284 = vpack.c.b16 %v3630, %v3629
  %v4285 = vpack.c.b16 %v3632, %v3631
  %v4286 = vpack.c.b16 %v3634, %v3633
  %v4287 = vpack.c.b16 %v3636, %v3635
  %v4288 = vpack.c.b16 %v3638, %v3637
  %v4289 = vpack.c.b16 %v3640, %v3639
  %v4290 = vpack.c.b16 %v3642, %v3641
  %v4291 = vpack.c.b16 %v3644, %v3643
  %v4292 = vpack.c.b16 %v3646, %v3645
  %v4293 = vpack.c.b16 %v3648, %v3647
  %v4294 = vpack.c.b16 %v3650, %v3649
  %v4295 = vpack.c.b16 %v3652, %v3651
  %v4296 = vpack.c.b16 %v3654, %v3653
  %v4297 = vpack.c.b16 %v3656, %v3655
  %v4298 = vpack.c.b16 %v3658, %v3657
  %v4299 = vpack.c.b16 %v3660, %v3659
  %v4300 = vpack.c.b16 %v3662, %v3661
  %v4301 = vpack.c.b16 %v3664, %v3663
  %v4302 = vpack.c.b16 %v3666, %v3665
  %v4303 = vpack.c.b16 %v3668, %v3667
  %v4304 = vpack.c.b16 %v3670, %v3669
  %v4305 = vpack.c.b16 %v3672, %v3671
  %v4306 = vpack.c.b16 %v3674, %v3673
  %v4307 = vpack.c.b16 %v3676, %v3675
  %v4308 = vpack.c.b16 %v3678, %v3677
  %v4309 = vpack.c.b16 %v3680, %v3679
  %v4310 = vpack.c.b16 %v3682, %v3681
  %v4311 = vpack.c.b16 %v3684, %v3683
  %v4312 = vpack.c.b16 %v3686, %v3685
  %v4313 = vpack.c.b16 %v3688, %v3687
  %v4314 = vpack.c.b16 %v3690, %v3689
  %v4315 = vpack.c.b16 %v3692, %v3691
  %v4316 = vpack.c.b16 %v3694, %v3693
  %v4317 = vpack.c.b16 %v3696, %v3695
  %v4318 = vpack.c.b16 %v3698, %v3697
  %v4319 = vpack.c.b16 %v3700, %v3699
  %v4320 = vpack.c.b16 %v3702, %v3701
  %v4321 = vpack.c.b16 %v3704, %v3703
  %v4322 = vpack.c.b16 %v3706, %v3705
  %v4323 = vpack.c.b16 %v3708, %v3707
  %v4324 = vpack.c.b16 %v3710, %v3709
  %v4325 = vpack.c.b16 %v3712, %v3711
  %v4326 = vpack.c.b16 %v3714, %v3713
  %v4327 = vpack.c.b16 %v3716, %v3715
  %v4328 = vpack.c.b16 %v3718, %v3717
  %v4329 = vpack.c.b16 %v3720, %v3719
  %v4330 = vpack.c.b16 %v3722, %v3721
  %v4331 = vpack.c.b16 %v3724, %v3723
  %v4332 = vpack.c.b16 %v3726, %v3725
  %v4333 = vpack.c.b16 %v3728, %v3727
  %v4334 = vpack.c.b16 %v3730, %v3729
  %v4335 = vpack.c.b16 %v3732, %v3731
  %v4336 = vpack.c.b16 %v3734, %v3733
  %v4337 = vpack.c.b16 %v3736, %v3735
  %v4338 = vpack.c.b16 %v3738, %v3737
  %v4339 = vpack.c.b16 %v3740, %v3739
  %v4340 = vpack.c.b16 %v3742, %v3741
  %v4341 = vpack.c.b16 %v3744, %v3743
  %v4342 = vpack.c.b16 %v3746, %v3745
  %v4343 = vpack.c.b16 %v3748, %v3747
  %v4344 = vpack.c.b16 %v3750, %v3749
  %v4345 = vpack.c.b16 %v3752, %v3751
  %v4346 = vpack.c.b16 %v3754, %v3753
  %v4347 = vpack.c.b16 %v3756, %v3755
  %v4348 = vpack.c.b16 %v3758, %v3757
  %v4349 = vpack.c.b16 %v3760, %v3759
  %v4350 = vpack.c.b16 %v3762, %v3761
  %v4351 = vpack.c.b16 %v3764, %v3763
  %v4352 = vpack.c.b16 %v3766, %v3765
  %v4353 = vpack.c.b16 %v3768, %v3767
  %v4354 = vpack.c.b16 %v3770, %v3769
  %v4355 = vpack.c.b16 %v3772, %v3771
  %v4356 = vpack.c.b16 %v3774, %v3773
  %v4357 = vpack.c.b16 %v3776, %v3775
  %v4358 = vpack.c.b16 %v3778, %v3777
  %v4359 = vpack.c.b16 %v3780, %v3779
  %v4360 = vpack.c.b16 %v3782, %v3781
  %v4361 = vpack.c.b16 %v3784, %v3783
  %v4362 = vpack.c.b16 %v3786, %v3785
  %4939 = vmatprep.subr.bf16.mxu0 0
  %4940 = vmatpush1.bf16.msra.mxu0 %v3787
  %4941 = vmatprep.subr.bf16.mxu0 0
  %4942 = vmatpush1.bf16.msra.mxu0 %v3788
  %4943 = vmatprep.subr.bf16.mxu0 0
  %4944 = vmatpush1.bf16.msra.mxu0 %v3789
  %4945 = vmatprep.subr.bf16.mxu0 0
  %4946 = vmatpush1.bf16.msra.mxu0 %v3790
  %4947 = vmatprep.subr.bf16.mxu0 0
  %4948 = vmatpush1.bf16.msra.mxu0 %v3791
  %4949 = vmatprep.subr.bf16.mxu0 0
  %4950 = vmatpush1.bf16.msra.mxu0 %v3792
  %4951 = vmatprep.subr.bf16.mxu0 0
  %4952 = vmatpush1.bf16.msra.mxu0 %v3793
  %4953 = vmatprep.subr.bf16.mxu0 0
  %4954 = vmatpush1.bf16.msra.mxu0 %v3794
  %4955 = vmatprep.subr.bf16.mxu0 0
  %4956 = vmatpush1.bf16.msra.mxu0 %v3795
  %4957 = vmatprep.subr.bf16.mxu0 0
  %4958 = vmatpush1.bf16.msra.mxu0 %v3796
  %4959 = vmatprep.subr.bf16.mxu0 0
  %4960 = vmatpush1.bf16.msra.mxu0 %v3797
  %4961 = vmatprep.subr.bf16.mxu0 0
  %4962 = vmatpush1.bf16.msra.mxu0 %v3798
  %4963 = vmatprep.subr.bf16.mxu0 0
  %4964 = vmatpush1.bf16.msra.mxu0 %v3799
  %4965 = vmatprep.subr.bf16.mxu0 0
  %4966 = vmatpush1.bf16.msra.mxu0 %v3800
  %4967 = vmatprep.subr.bf16.mxu0 0
  %4968 = vmatpush1.bf16.msra.mxu0 %v3801
  %4969 = vmatprep.subr.bf16.mxu0 0
  %4970 = vmatpush1.bf16.msra.mxu0 %v3802
  %4971 = vmatprep.mubr.bf16.mxu0 %v1340
  %4972 = vmatmul.mubr.bf16.gmra.mrb[0].mxu0 %v1339
  %v4973 = vpop.f32.mrb[0].mxu0
  %v4974 = vadd.f32 %v1229, %v4973
  %v4975 = vpop.f32.mrb[0].mxu0
  %v4976 = vpop.f32.mrb[0].mxu0
  %v4977 = vpop.f32.mrb[0].mxu0
  %4978 = vdwg.mxu0
  %4979 = vmatprep.subr.bf16.mxu0 0
  %4980 = vmatpush1.bf16.msra.mxu0 %v3803
  %4981 = vmatprep.subr.bf16.mxu0 0
  %4982 = vmatpush1.bf16.msra.mxu0 %v3804
  %4983 = vmatprep.subr.bf16.mxu0 0
  %4984 = vmatpush1.bf16.msra.mxu0 %v3805
  %4985 = vmatprep.subr.bf16.mxu0 0
  %4986 = vmatpush1.bf16.msra.mxu0 %v3806
  %4987 = vmatprep.subr.bf16.mxu0 0
  %4988 = vmatpush1.bf16.msra.mxu0 %v3807
  %4989 = vmatprep.subr.bf16.mxu0 0
  %4990 = vmatpush1.bf16.msra.mxu0 %v3808
  %4991 = vmatprep.subr.bf16.mxu0 0
  %4992 = vmatpush1.bf16.msra.mxu0 %v3809
  %4993 = vmatprep.subr.bf16.mxu0 0
  %4994 = vmatpush1.bf16.msra.mxu0 %v3810
  %4995 = vmatprep.subr.bf16.mxu0 0
  %4996 = vmatpush1.bf16.msra.mxu0 %v3811
  %4997 = vmatprep.subr.bf16.mxu0 0
  %4998 = vmatpush1.bf16.msra.mxu0 %v3812
  %4999 = vmatprep.subr.bf16.mxu0 0
  %5000 = vmatpush1.bf16.msra.mxu0 %v3813
  %5001 = vmatprep.subr.bf16.mxu0 0
  %5002 = vmatpush1.bf16.msra.mxu0 %v3814
  %5003 = vmatprep.subr.bf16.mxu0 0
  %5004 = vmatpush1.bf16.msra.mxu0 %v3815
  %5005 = vmatprep.subr.bf16.mxu0 0
  %5006 = vmatpush1.bf16.msra.mxu0 %v3816
  %5007 = vmatprep.subr.bf16.mxu0 0
  %5008 = vmatpush1.bf16.msra.mxu0 %v3817
  %5009 = vmatprep.subr.bf16.mxu0 0
  %5010 = vmatpush1.bf16.msra.mxu0 %v3818
  %5011 = vmatprep.mubr.bf16.mxu0 %v1342
  %5012 = vmatmul.mubr.bf16.gmra.mrb[0].mxu0 %v1341
  %v5013 = vpop.f32.mrb[0].mxu0
  %v5014 = vadd.f32 %v4974, %v5013
  %v5015 = vpop.f32.mrb[0].mxu0
  %v5016 = vpop.f32.mrb[0].mxu0
  %v5017 = vpop.f32.mrb[0].mxu0
  %5018 = vdwg.mxu0
  %5019 = vmatprep.subr.bf16.mxu0 0
  %5020 = vmatpush1.bf16.msra.mxu0 %v3819
  %5021 = vmatprep.subr.bf16.mxu0 0
  %5022 = vmatpush1.bf16.msra.mxu0 %v3820
  %5023 = vmatprep.subr.bf16.mxu0 0
  %5024 = vmatpush1.bf16.msra.mxu0 %v3821
  %5025 = vmatprep.subr.bf16.mxu0 0
  %5026 = vmatpush1.bf16.msra.mxu0 %v3822
  %5027 = vmatprep.subr.bf16.mxu0 0
  %5028 = vmatpush1.bf16.msra.mxu0 %v3823
  %5029 = vmatprep.subr.bf16.mxu0 0
  %5030 = vmatpush1.bf16.msra.mxu0 %v3824
  %5031 = vmatprep.subr.bf16.mxu0 0
  %5032 = vmatpush1.bf16.msra.mxu0 %v3825
  %5033 = vmatprep.subr.bf16.mxu0 0
  %5034 = vmatpush1.bf16.msra.mxu0 %v3826
  %5035 = vmatprep.subr.bf16.mxu0 0
  %5036 = vmatpush1.bf16.msra.mxu0 %v3827
  %5037 = vmatprep.subr.bf16.mxu0 0
  %5038 = vmatpush1.bf16.msra.mxu0 %v3828
  %5039 = vmatprep.subr.bf16.mxu0 0
  %5040 = vmatpush1.bf16.msra.mxu0 %v3829
  %5041 = vmatprep.subr.bf16.mxu0 0
  %5042 = vmatpush1.bf16.msra.mxu0 %v3830
  %5043 = vmatprep.subr.bf16.mxu0 0
  %5044 = vmatpush1.bf16.msra.mxu0 %v3831
  %5045 = vmatprep.subr.bf16.mxu0 0
  %5046 = vmatpush1.bf16.msra.mxu0 %v3832
  %5047 = vmatprep.subr.bf16.mxu0 0
  %5048 = vmatpush1.bf16.msra.mxu0 %v3833
  %5049 = vmatprep.subr.bf16.mxu0 0
  %5050 = vmatpush1.bf16.msra.mxu0 %v3834
  %5051 = vmatprep.mubr.bf16.mxu0 %v1344
  %5052 = vmatmul.mubr.bf16.gmra.mrb[0].mxu0 %v1343
  %v5053 = vpop.f32.mrb[0].mxu0
  %v5054 = vadd.f32 %v5014, %v5053
  %v5055 = vpop.f32.mrb[0].mxu0
  %v5056 = vpop.f32.mrb[0].mxu0
  %v5057 = vpop.f32.mrb[0].mxu0
  %5058 = vdwg.mxu0
  %5059 = vmatprep.subr.bf16.mxu0 0
  %5060 = vmatpush1.bf16.msra.mxu0 %v3835
  %5061 = vmatprep.subr.bf16.mxu0 0
  %5062 = vmatpush1.bf16.msra.mxu0 %v3836
  %5063 = vmatprep.subr.bf16.mxu0 0
  %5064 = vmatpush1.bf16.msra.mxu0 %v3837
  %5065 = vmatprep.subr.bf16.mxu0 0
  %5066 = vmatpush1.bf16.msra.mxu0 %v3838
  %5067 = vmatprep.subr.bf16.mxu0 0
  %5068 = vmatpush1.bf16.msra.mxu0 %v3839
  %5069 = vmatprep.subr.bf16.mxu0 0
  %5070 = vmatpush1.bf16.msra.mxu0 %v3840
  %5071 = vmatprep.subr.bf16.mxu0 0
  %5072 = vmatpush1.bf16.msra.mxu0 %v3841
  %5073 = vmatprep.subr.bf16.mxu0 0
  %5074 = vmatpush1.bf16.msra.mxu0 %v3842
  %5075 = vmatprep.subr.bf16.mxu0 0
  %5076 = vmatpush1.bf16.msra.mxu0 %v3843
  %5077 = vmatprep.subr.bf16.mxu0 0
  %5078 = vmatpush1.bf16.msra.mxu0 %v3844
  %5079 = vmatprep.subr.bf16.mxu0 0
  %5080 = vmatpush1.bf16.msra.mxu0 %v3845
  %5081 = vmatprep.subr.bf16.mxu0 0
  %5082 = vmatpush1.bf16.msra.mxu0 %v3846
  %5083 = vmatprep.subr.bf16.mxu0 0
  %5084 = vmatpush1.bf16.msra.mxu0 %v3847
  %5085 = vmatprep.subr.bf16.mxu0 0
  %5086 = vmatpush1.bf16.msra.mxu0 %v3848
  %5087 = vmatprep.subr.bf16.mxu0 0
  %5088 = vmatpush1.bf16.msra.mxu0 %v3849
  %5089 = vmatprep.subr.bf16.mxu0 0
  %5090 = vmatpush1.bf16.msra.mxu0 %v3850
  %5091 = vmatprep.mubr.bf16.mxu0 %v1346
  %5092 = vmatmul.mubr.bf16.gmra.mrb[0].mxu0 %v1345
  %v5093 = vpop.f32.mrb[0].mxu0
  %v5094 = vadd.f32 %v5054, %v5093
  %v5095 = vpop.f32.mrb[0].mxu0
  %v5096 = vpop.f32.mrb[0].mxu0
  %v5097 = vpop.f32.mrb[0].mxu0
  %5098 = vdwg.mxu0
  %5099 = vmatprep.subr.bf16.mxu0 0
  %5100 = vmatpush1.bf16.msra.mxu0 %v3851
  %5101 = vmatprep.subr.bf16.mxu0 0
  %5102 = vmatpush1.bf16.msra.mxu0 %v3852
  %5103 = vmatprep.subr.bf16.mxu0 0
  %5104 = vmatpush1.bf16.msra.mxu0 %v3853
  %5105 = vmatprep.subr.bf16.mxu0 0
  %5106 = vmatpush1.bf16.msra.mxu0 %v3854
  %5107 = vmatprep.subr.bf16.mxu0 0
  %5108 = vmatpush1.bf16.msra.mxu0 %v3855
  %5109 = vmatprep.subr.bf16.mxu0 0
  %5110 = vmatpush1.bf16.msra.mxu0 %v3856
  %5111 = vmatprep.subr.bf16.mxu0 0
  %5112 = vmatpush1.bf16.msra.mxu0 %v3857
  %5113 = vmatprep.subr.bf16.mxu0 0
  %5114 = vmatpush1.bf16.msra.mxu0 %v3858
  %5115 = vmatprep.subr.bf16.mxu0 0
  %5116 = vmatpush1.bf16.msra.mxu0 %v3859
  %5117 = vmatprep.subr.bf16.mxu0 0
  %5118 = vmatpush1.bf16.msra.mxu0 %v3860
  %5119 = vmatprep.subr.bf16.mxu0 0
  %5120 = vmatpush1.bf16.msra.mxu0 %v3861
  %5121 = vmatprep.subr.bf16.mxu0 0
  %5122 = vmatpush1.bf16.msra.mxu0 %v3862
  %5123 = vmatprep.subr.bf16.mxu0 0
  %5124 = vmatpush1.bf16.msra.mxu0 %v3863
  %5125 = vmatprep.subr.bf16.mxu0 0
  %5126 = vmatpush1.bf16.msra.mxu0 %v3864
  %5127 = vmatprep.subr.bf16.mxu0 0
  %5128 = vmatpush1.bf16.msra.mxu0 %v3865
  %5129 = vmatprep.subr.bf16.mxu0 0
  %5130 = vmatpush1.bf16.msra.mxu0 %v3866
  %5131 = vmatprep.mubr.bf16.mxu0 %v1348
  %5132 = vmatmul.mubr.bf16.gmra.mrb[0].mxu0 %v1347
  %v5133 = vpop.f32.mrb[0].mxu0
  %v5134 = vadd.f32 %v5094, %v5133
  %v5135 = vpop.f32.mrb[0].mxu0
  %v5136 = vpop.f32.mrb[0].mxu0
  %v5137 = vpop.f32.mrb[0].mxu0
  %5138 = vdwg.mxu0
  %5139 = vmatprep.subr.bf16.mxu0 0
  %5140 = vmatpush1.bf16.msra.mxu0 %v3867
  %5141 = vmatprep.subr.bf16.mxu0 0
  %5142 = vmatpush1.bf16.msra.mxu0 %v3868
  %5143 = vmatprep.subr.bf16.mxu0 0
  %5144 = vmatpush1.bf16.msra.mxu0 %v3869
  %5145 = vmatprep.subr.bf16.mxu0 0
  %5146 = vmatpush1.bf16.msra.mxu0 %v3870
  %5147 = vmatprep.subr.bf16.mxu0 0
  %5148 = vmatpush1.bf16.msra.mxu0 %v3871
  %5149 = vmatprep.subr.bf16.mxu0 0
  %5150 = vmatpush1.bf16.msra.mxu0 %v3872
  %5151 = vmatprep.subr.bf16.mxu0 0
  %5152 = vmatpush1.bf16.msra.mxu0 %v3873
  %5153 = vmatprep.subr.bf16.mxu0 0
  %5154 = vmatpush1.bf16.msra.mxu0 %v3874
  %5155 = vmatprep.subr.bf16.mxu0 0
  %5156 = vmatpush1.bf16.msra.mxu0 %v3875
  %5157 = vmatprep.subr.bf16.mxu0 0
  %5158 = vmatpush1.bf16.msra.mxu0 %v3876
  %5159 = vmatprep.subr.bf16.mxu0 0
  %5160 = vmatpush1.bf16.msra.mxu0 %v3877
  %5161 = vmatprep.subr.bf16.mxu0 0
  %5162 = vmatpush1.bf16.msra.mxu0 %v3878
  %5163 = vmatprep.subr.bf16.mxu0 0
  %5164 = vmatpush1.bf16.msra.mxu0 %v3879
  %5165 = vmatprep.subr.bf16.mxu0 0
  %5166 = vmatpush1.bf16.msra.mxu0 %v3880
  %5167 = vmatprep.subr.bf16.mxu0 0
  %5168 = vmatpush1.bf16.msra.mxu0 %v3881
  %5169 = vmatprep.subr.bf16.mxu0 0
  %5170 = vmatpush1.bf16.msra.mxu0 %v3882
  %5171 = vmatprep.mubr.bf16.mxu0 %v1350
  %5172 = vmatmul.mubr.bf16.gmra.mrb[0].mxu0 %v1349
  %v5173 = vpop.f32.mrb[0].mxu0
  %v5174 = vadd.f32 %v5134, %v5173
  %v5175 = vpop.f32.mrb[0].mxu0
  %v5176 = vpop.f32.mrb[0].mxu0
  %v5177 = vpop.f32.mrb[0].mxu0
  %5178 = vdwg.mxu0
  %5179 = vmatprep.subr.bf16.mxu0 0
  %5180 = vmatpush1.bf16.msra.mxu0 %v3883
  %5181 = vmatprep.subr.bf16.mxu0 0
  %5182 = vmatpush1.bf16.msra.mxu0 %v3884
  %5183 = vmatprep.subr.bf16.mxu0 0
  %5184 = vmatpush1.bf16.msra.mxu0 %v3885
  %5185 = vmatprep.subr.bf16.mxu0 0
  %5186 = vmatpush1.bf16.msra.mxu0 %v3886
  %5187 = vmatprep.subr.bf16.mxu0 0
  %5188 = vmatpush1.bf16.msra.mxu0 %v3887
  %5189 = vmatprep.subr.bf16.mxu0 0
  %5190 = vmatpush1.bf16.msra.mxu0 %v3888
  %5191 = vmatprep.subr.bf16.mxu0 0
  %5192 = vmatpush1.bf16.msra.mxu0 %v3889
  %5193 = vmatprep.subr.bf16.mxu0 0
  %5194 = vmatpush1.bf16.msra.mxu0 %v3890
  %5195 = vmatprep.subr.bf16.mxu0 0
  %5196 = vmatpush1.bf16.msra.mxu0 %v3891
  %5197 = vmatprep.subr.bf16.mxu0 0
  %5198 = vmatpush1.bf16.msra.mxu0 %v3892
  %5199 = vmatprep.subr.bf16.mxu0 0
  %5200 = vmatpush1.bf16.msra.mxu0 %v3893
  %5201 = vmatprep.subr.bf16.mxu0 0
  %5202 = vmatpush1.bf16.msra.mxu0 %v3894
  %5203 = vmatprep.subr.bf16.mxu0 0
  %5204 = vmatpush1.bf16.msra.mxu0 %v3895
  %5205 = vmatprep.subr.bf16.mxu0 0
  %5206 = vmatpush1.bf16.msra.mxu0 %v3896
  %5207 = vmatprep.subr.bf16.mxu0 0
  %5208 = vmatpush1.bf16.msra.mxu0 %v3897
  %5209 = vmatprep.subr.bf16.mxu0 0
  %5210 = vmatpush1.bf16.msra.mxu0 %v3898
  %5211 = vmatprep.mubr.bf16.mxu0 %v1352
  %5212 = vmatmul.mubr.bf16.gmra.mrb[0].mxu0 %v1351
  %v5213 = vpop.f32.mrb[0].mxu0
  %v5214 = vadd.f32 %v5174, %v5213
  %v5215 = vpop.f32.mrb[0].mxu0
  %v5216 = vpop.f32.mrb[0].mxu0
  %v5217 = vpop.f32.mrb[0].mxu0
  %5218 = vdwg.mxu0
  %5219 = vmatprep.subr.bf16.mxu0 0
  %5220 = vmatpush1.bf16.msra.mxu0 %v3899
  %5221 = vmatprep.subr.bf16.mxu0 0
  %5222 = vmatpush1.bf16.msra.mxu0 %v3900
  %5223 = vmatprep.subr.bf16.mxu0 0
  %5224 = vmatpush1.bf16.msra.mxu0 %v3901
  %5225 = vmatprep.subr.bf16.mxu0 0
  %5226 = vmatpush1.bf16.msra.mxu0 %v3902
  %5227 = vmatprep.subr.bf16.mxu0 0
  %5228 = vmatpush1.bf16.msra.mxu0 %v3903
  %5229 = vmatprep.subr.bf16.mxu0 0
  %5230 = vmatpush1.bf16.msra.mxu0 %v3904
  %5231 = vmatprep.subr.bf16.mxu0 0
  %5232 = vmatpush1.bf16.msra.mxu0 %v3905
  %5233 = vmatprep.subr.bf16.mxu0 0
  %5234 = vmatpush1.bf16.msra.mxu0 %v3906
  %5235 = vmatprep.subr.bf16.mxu0 0
  %5236 = vmatpush1.bf16.msra.mxu0 %v3907
  %5237 = vmatprep.subr.bf16.mxu0 0
  %5238 = vmatpush1.bf16.msra.mxu0 %v3908
  %5239 = vmatprep.subr.bf16.mxu0 0
  %5240 = vmatpush1.bf16.msra.mxu0 %v3909
  %5241 = vmatprep.subr.bf16.mxu0 0
  %5242 = vmatpush1.bf16.msra.mxu0 %v3910
  %5243 = vmatprep.subr.bf16.mxu0 0
  %5244 = vmatpush1.bf16.msra.mxu0 %v3911
  %5245 = vmatprep.subr.bf16.mxu0 0
  %5246 = vmatpush1.bf16.msra.mxu0 %v3912
  %5247 = vmatprep.subr.bf16.mxu0 0
  %5248 = vmatpush1.bf16.msra.mxu0 %v3913
  %5249 = vmatprep.subr.bf16.mxu0 0
  %5250 = vmatpush1.bf16.msra.mxu0 %v3914
  %5251 = vmatprep.mubr.bf16.mxu0 %v1354
  %5252 = vmatmul.mubr.bf16.gmra.mrb[0].mxu0 %v1353
  %v5253 = vpop.f32.mrb[0].mxu0
  %v5254 = vadd.f32 %v5214, %v5253
  %v5255 = vpop.f32.mrb[0].mxu0
  %v5256 = vpop.f32.mrb[0].mxu0
  %v5257 = vpop.f32.mrb[0].mxu0
  %5258 = vdwg.mxu0
  %5259 = vmatprep.subr.bf16.mxu0 0
  %5260 = vmatpush1.bf16.msra.mxu0 %v3915
  %5261 = vmatprep.subr.bf16.mxu0 0
  %5262 = vmatpush1.bf16.msra.mxu0 %v3916
  %5263 = vmatprep.subr.bf16.mxu0 0
  %5264 = vmatpush1.bf16.msra.mxu0 %v3917
  %5265 = vmatprep.subr.bf16.mxu0 0
  %5266 = vmatpush1.bf16.msra.mxu0 %v3918
  %5267 = vmatprep.subr.bf16.mxu0 0
  %5268 = vmatpush1.bf16.msra.mxu0 %v3919
  %5269 = vmatprep.subr.bf16.mxu0 0
  %5270 = vmatpush1.bf16.msra.mxu0 %v3920
  %5271 = vmatprep.subr.bf16.mxu0 0
  %5272 = vmatpush1.bf16.msra.mxu0 %v3921
  %5273 = vmatprep.subr.bf16.mxu0 0
  %5274 = vmatpush1.bf16.msra.mxu0 %v3922
  %5275 = vmatprep.subr.bf16.mxu0 0
  %5276 = vmatpush1.bf16.msra.mxu0 %v3923
  %5277 = vmatprep.subr.bf16.mxu0 0
  %5278 = vmatpush1.bf16.msra.mxu0 %v3924
  %5279 = vmatprep.subr.bf16.mxu0 0
  %5280 = vmatpush1.bf16.msra.mxu0 %v3925
  %5281 = vmatprep.subr.bf16.mxu0 0
  %5282 = vmatpush1.bf16.msra.mxu0 %v3926
  %5283 = vmatprep.subr.bf16.mxu0 0
  %5284 = vmatpush1.bf16.msra.mxu0 %v3927
  %5285 = vmatprep.subr.bf16.mxu0 0
  %5286 = vmatpush1.bf16.msra.mxu0 %v3928
  %5287 = vmatprep.subr.bf16.mxu0 0
  %5288 = vmatpush1.bf16.msra.mxu0 %v3929
  %5289 = vmatprep.subr.bf16.mxu0 0
  %5290 = vmatpush1.bf16.msra.mxu0 %v3930
  %5291 = vmatprep.mubr.bf16.mxu0 %v1356
  %5292 = vmatmul.mubr.bf16.gmra.mrb[0].mxu0 %v1355
  %v5293 = vpop.f32.mrb[0].mxu0
  %v5294 = vadd.f32 %v5254, %v5293
  %v5295 = vpop.f32.mrb[0].mxu0
  %v5296 = vpop.f32.mrb[0].mxu0
  %v5297 = vpop.f32.mrb[0].mxu0
  %5298 = vdwg.mxu0
  %5299 = vmatprep.subr.bf16.mxu0 0
  %5300 = vmatpush1.bf16.msra.mxu0 %v3931
  %5301 = vmatprep.subr.bf16.mxu0 0
  %5302 = vmatpush1.bf16.msra.mxu0 %v3932
  %5303 = vmatprep.subr.bf16.mxu0 0
  %5304 = vmatpush1.bf16.msra.mxu0 %v3933
  %5305 = vmatprep.subr.bf16.mxu0 0
  %5306 = vmatpush1.bf16.msra.mxu0 %v3934
  %5307 = vmatprep.subr.bf16.mxu0 0
  %5308 = vmatpush1.bf16.msra.mxu0 %v3935
  %5309 = vmatprep.subr.bf16.mxu0 0
  %5310 = vmatpush1.bf16.msra.mxu0 %v3936
  %5311 = vmatprep.subr.bf16.mxu0 0
  %5312 = vmatpush1.bf16.msra.mxu0 %v3937
  %5313 = vmatprep.subr.bf16.mxu0 0
  %5314 = vmatpush1.bf16.msra.mxu0 %v3938
  %5315 = vmatprep.subr.bf16.mxu0 0
  %5316 = vmatpush1.bf16.msra.mxu0 %v3939
  %5317 = vmatprep.subr.bf16.mxu0 0
  %5318 = vmatpush1.bf16.msra.mxu0 %v3940
  %5319 = vmatprep.subr.bf16.mxu0 0
  %5320 = vmatpush1.bf16.msra.mxu0 %v3941
  %5321 = vmatprep.subr.bf16.mxu0 0
  %5322 = vmatpush1.bf16.msra.mxu0 %v3942
  %5323 = vmatprep.subr.bf16.mxu0 0
  %5324 = vmatpush1.bf16.msra.mxu0 %v3943
  %5325 = vmatprep.subr.bf16.mxu0 0
  %5326 = vmatpush1.bf16.msra.mxu0 %v3944
  %5327 = vmatprep.subr.bf16.mxu0 0
  %5328 = vmatpush1.bf16.msra.mxu0 %v3945
  %5329 = vmatprep.subr.bf16.mxu0 0
  %5330 = vmatpush1.bf16.msra.mxu0 %v3946
  %5331 = vmatprep.mubr.bf16.mxu0 %v1358
  %5332 = vmatmul.mubr.bf16.gmra.mrb[0].mxu0 %v1357
  %v5333 = vpop.f32.mrb[0].mxu0
  %v5334 = vadd.f32 %v5294, %v5333
  %v5335 = vpop.f32.mrb[0].mxu0
  %v5336 = vpop.f32.mrb[0].mxu0
  %v5337 = vpop.f32.mrb[0].mxu0
  %5338 = vdwg.mxu0
  %5339 = vmatprep.subr.bf16.mxu0 0
  %5340 = vmatpush1.bf16.msra.mxu0 %v3947
  %5341 = vmatprep.subr.bf16.mxu0 0
  %5342 = vmatpush1.bf16.msra.mxu0 %v3948
  %5343 = vmatprep.subr.bf16.mxu0 0
  %5344 = vmatpush1.bf16.msra.mxu0 %v3949
  %5345 = vmatprep.subr.bf16.mxu0 0
  %5346 = vmatpush1.bf16.msra.mxu0 %v3950
  %5347 = vmatprep.subr.bf16.mxu0 0
  %5348 = vmatpush1.bf16.msra.mxu0 %v3951
  %5349 = vmatprep.subr.bf16.mxu0 0
  %5350 = vmatpush1.bf16.msra.mxu0 %v3952
  %5351 = vmatprep.subr.bf16.mxu0 0
  %5352 = vmatpush1.bf16.msra.mxu0 %v3953
  %5353 = vmatprep.subr.bf16.mxu0 0
  %5354 = vmatpush1.bf16.msra.mxu0 %v3954
  %5355 = vmatprep.subr.bf16.mxu0 0
  %5356 = vmatpush1.bf16.msra.mxu0 %v3955
  %5357 = vmatprep.subr.bf16.mxu0 0
  %5358 = vmatpush1.bf16.msra.mxu0 %v3956
  %5359 = vmatprep.subr.bf16.mxu0 0
  %5360 = vmatpush1.bf16.msra.mxu0 %v3957
  %5361 = vmatprep.subr.bf16.mxu0 0
  %5362 = vmatpush1.bf16.msra.mxu0 %v3958
  %5363 = vmatprep.subr.bf16.mxu0 0
  %5364 = vmatpush1.bf16.msra.mxu0 %v3959
  %5365 = vmatprep.subr.bf16.mxu0 0
  %5366 = vmatpush1.bf16.msra.mxu0 %v3960
  %5367 = vmatprep.subr.bf16.mxu0 0
  %5368 = vmatpush1.bf16.msra.mxu0 %v3961
  %5369 = vmatprep.subr.bf16.mxu0 0
  %5370 = vmatpush1.bf16.msra.mxu0 %v3962
  %5371 = vmatprep.mubr.bf16.mxu0 %v1360
  %5372 = vmatmul.mubr.bf16.gmra.mrb[0].mxu0 %v1359
  %v5373 = vpop.f32.mrb[0].mxu0
  %v5374 = vadd.f32 %v5334, %v5373
  %v5375 = vpop.f32.mrb[0].mxu0
  %v5376 = vpop.f32.mrb[0].mxu0
  %v5377 = vpop.f32.mrb[0].mxu0
  %5378 = vdwg.mxu0
  %5379 = vmatprep.subr.bf16.mxu0 0
  %5380 = vmatpush1.bf16.msra.mxu0 %v3963
  %5381 = vmatprep.subr.bf16.mxu0 0
  %5382 = vmatpush1.bf16.msra.mxu0 %v3964
  %5383 = vmatprep.subr.bf16.mxu0 0
  %5384 = vmatpush1.bf16.msra.mxu0 %v3965
  %5385 = vmatprep.subr.bf16.mxu0 0
  %5386 = vmatpush1.bf16.msra.mxu0 %v3966
  %5387 = vmatprep.subr.bf16.mxu0 0
  %5388 = vmatpush1.bf16.msra.mxu0 %v3967
  %5389 = vmatprep.subr.bf16.mxu0 0
  %5390 = vmatpush1.bf16.msra.mxu0 %v3968
  %5391 = vmatprep.subr.bf16.mxu0 0
  %5392 = vmatpush1.bf16.msra.mxu0 %v3969
  %5393 = vmatprep.subr.bf16.mxu0 0
  %5394 = vmatpush1.bf16.msra.mxu0 %v3970
  %5395 = vmatprep.subr.bf16.mxu0 0
  %5396 = vmatpush1.bf16.msra.mxu0 %v3971
  %5397 = vmatprep.subr.bf16.mxu0 0
  %5398 = vmatpush1.bf16.msra.mxu0 %v3972
  %5399 = vmatprep.subr.bf16.mxu0 0
  %5400 = vmatpush1.bf16.msra.mxu0 %v3973
  %5401 = vmatprep.subr.bf16.mxu0 0
  %5402 = vmatpush1.bf16.msra.mxu0 %v3974
  %5403 = vmatprep.subr.bf16.mxu0 0
  %5404 = vmatpush1.bf16.msra.mxu0 %v3975
  %5405 = vmatprep.subr.bf16.mxu0 0
  %5406 = vmatpush1.bf16.msra.mxu0 %v3976
  %5407 = vmatprep.subr.bf16.mxu0 0
  %5408 = vmatpush1.bf16.msra.mxu0 %v3977
  %5409 = vmatprep.subr.bf16.mxu0 0
  %5410 = vmatpush1.bf16.msra.mxu0 %v3978
  %5411 = vmatprep.mubr.bf16.mxu0 %v1362
  %5412 = vmatmul.mubr.bf16.gmra.mrb[0].mxu0 %v1361
  %v5413 = vpop.f32.mrb[0].mxu0
  %v5414 = vadd.f32 %v5374, %v5413
  %v5415 = vpop.f32.mrb[0].mxu0
  %v5416 = vpop.f32.mrb[0].mxu0
  %v5417 = vpop.f32.mrb[0].mxu0
  %5418 = vdwg.mxu0
  %5419 = vmatprep.subr.bf16.mxu0 0
  %5420 = vmatpush1.bf16.msra.mxu0 %v3979
  %5421 = vmatprep.subr.bf16.mxu0 0
  %5422 = vmatpush1.bf16.msra.mxu0 %v3980
  %5423 = vmatprep.subr.bf16.mxu0 0
  %5424 = vmatpush1.bf16.msra.mxu0 %v3981
  %5425 = vmatprep.subr.bf16.mxu0 0
  %5426 = vmatpush1.bf16.msra.mxu0 %v3982
  %5427 = vmatprep.subr.bf16.mxu0 0
  %5428 = vmatpush1.bf16.msra.mxu0 %v3983
  %5429 = vmatprep.subr.bf16.mxu0 0
  %5430 = vmatpush1.bf16.msra.mxu0 %v3984
  %5431 = vmatprep.subr.bf16.mxu0 0
  %5432 = vmatpush1.bf16.msra.mxu0 %v3985
  %5433 = vmatprep.subr.bf16.mxu0 0
  %5434 = vmatpush1.bf16.msra.mxu0 %v3986
  %5435 = vmatprep.subr.bf16.mxu0 0
  %5436 = vmatpush1.bf16.msra.mxu0 %v3987
  %5437 = vmatprep.subr.bf16.mxu0 0
  %5438 = vmatpush1.bf16.msra.mxu0 %v3988
  %5439 = vmatprep.subr.bf16.mxu0 0
  %5440 = vmatpush1.bf16.msra.mxu0 %v3989
  %5441 = vmatprep.subr.bf16.mxu0 0
  %5442 = vmatpush1.bf16.msra.mxu0 %v3990
  %5443 = vmatprep.subr.bf16.mxu0 0
  %5444 = vmatpush1.bf16.msra.mxu0 %v3991
  %5445 = vmatprep.subr.bf16.mxu0 0
  %5446 = vmatpush1.bf16.msra.mxu0 %v3992
  %5447 = vmatprep.subr.bf16.mxu0 0
  %5448 = vmatpush1.bf16.msra.mxu0 %v3993
  %5449 = vmatprep.subr.bf16.mxu0 0
  %5450 = vmatpush1.bf16.msra.mxu0 %v3994
  %5451 = vmatprep.mubr.bf16.mxu0 %v1364
  %5452 = vmatmul.mubr.bf16.gmra.mrb[0].mxu0 %v1363
  %v5453 = vpop.f32.mrb[0].mxu0
  %v5454 = vadd.f32 %v5414, %v5453
  %v5455 = vpop.f32.mrb[0].mxu0
  %v5456 = vpop.f32.mrb[0].mxu0
  %v5457 = vpop.f32.mrb[0].mxu0
  %5458 = vdwg.mxu0
  %5459 = vmatprep.subr.bf16.mxu0 0
  %5460 = vmatpush1.bf16.msra.mxu0 %v3995
  %5461 = vmatprep.subr.bf16.mxu0 0
  %5462 = vmatpush1.bf16.msra.mxu0 %v3996
  %5463 = vmatprep.subr.bf16.mxu0 0
  %5464 = vmatpush1.bf16.msra.mxu0 %v3997
  %5465 = vmatprep.subr.bf16.mxu0 0
  %5466 = vmatpush1.bf16.msra.mxu0 %v3998
  %5467 = vmatprep.subr.bf16.mxu0 0
  %5468 = vmatpush1.bf16.msra.mxu0 %v3999
  %5469 = vmatprep.subr.bf16.mxu0 0
  %5470 = vmatpush1.bf16.msra.mxu0 %v4000
  %5471 = vmatprep.subr.bf16.mxu0 0
  %5472 = vmatpush1.bf16.msra.mxu0 %v4001
  %5473 = vmatprep.subr.bf16.mxu0 0
  %5474 = vmatpush1.bf16.msra.mxu0 %v4002
  %5475 = vmatprep.subr.bf16.mxu0 0
  %5476 = vmatpush1.bf16.msra.mxu0 %v4003
  %5477 = vmatprep.subr.bf16.mxu0 0
  %5478 = vmatpush1.bf16.msra.mxu0 %v4004
  %5479 = vmatprep.subr.bf16.mxu0 0
  %5480 = vmatpush1.bf16.msra.mxu0 %v4005
  %5481 = vmatprep.subr.bf16.mxu0 0
  %5482 = vmatpush1.bf16.msra.mxu0 %v4006
  %5483 = vmatprep.subr.bf16.mxu0 0
  %5484 = vmatpush1.bf16.msra.mxu0 %v4007
  %5485 = vmatprep.subr.bf16.mxu0 0
  %5486 = vmatpush1.bf16.msra.mxu0 %v4008
  %5487 = vmatprep.subr.bf16.mxu0 0
  %5488 = vmatpush1.bf16.msra.mxu0 %v4009
  %5489 = vmatprep.subr.bf16.mxu0 0
  %5490 = vmatpush1.bf16.msra.mxu0 %v4010
  %5491 = vmatprep.mubr.bf16.mxu0 %v1366
  %5492 = vmatmul.mubr.bf16.gmra.mrb[0].mxu0 %v1365
  %v5493 = vpop.f32.mrb[0].mxu0
  %v5494 = vadd.f32 %v5454, %v5493
  %v5495 = vpop.f32.mrb[0].mxu0
  %v5496 = vpop.f32.mrb[0].mxu0
  %v5497 = vpop.f32.mrb[0].mxu0
  %5498 = vdwg.mxu0
  %5499 = vmatprep.subr.bf16.mxu0 0
  %5500 = vmatpush1.bf16.msra.mxu0 %v4011
  %5501 = vmatprep.subr.bf16.mxu0 0
  %5502 = vmatpush1.bf16.msra.mxu0 %v4012
  %5503 = vmatprep.subr.bf16.mxu0 0
  %5504 = vmatpush1.bf16.msra.mxu0 %v4013
  %5505 = vmatprep.subr.bf16.mxu0 0
  %5506 = vmatpush1.bf16.msra.mxu0 %v4014
  %5507 = vmatprep.subr.bf16.mxu0 0
  %5508 = vmatpush1.bf16.msra.mxu0 %v4015
  %5509 = vmatprep.subr.bf16.mxu0 0
  %5510 = vmatpush1.bf16.msra.mxu0 %v4016
  %5511 = vmatprep.subr.bf16.mxu0 0
  %5512 = vmatpush1.bf16.msra.mxu0 %v4017
  %5513 = vmatprep.subr.bf16.mxu0 0
  %5514 = vmatpush1.bf16.msra.mxu0 %v4018
  %5515 = vmatprep.subr.bf16.mxu0 0
  %5516 = vmatpush1.bf16.msra.mxu0 %v4019
  %5517 = vmatprep.subr.bf16.mxu0 0
  %5518 = vmatpush1.bf16.msra.mxu0 %v4020
  %5519 = vmatprep.subr.bf16.mxu0 0
  %5520 = vmatpush1.bf16.msra.mxu0 %v4021
  %5521 = vmatprep.subr.bf16.mxu0 0
  %5522 = vmatpush1.bf16.msra.mxu0 %v4022
  %5523 = vmatprep.subr.bf16.mxu0 0
  %5524 = vmatpush1.bf16.msra.mxu0 %v4023
  %5525 = vmatprep.subr.bf16.mxu0 0
  %5526 = vmatpush1.bf16.msra.mxu0 %v4024
  %5527 = vmatprep.subr.bf16.mxu0 0
  %5528 = vmatpush1.bf16.msra.mxu0 %v4025
  %5529 = vmatprep.subr.bf16.mxu0 0
  %5530 = vmatpush1.bf16.msra.mxu0 %v4026
  %5531 = vmatprep.mubr.bf16.mxu0 %v1368
  %5532 = vmatmul.mubr.bf16.gmra.mrb[0].mxu0 %v1367
  %v5533 = vpop.f32.mrb[0].mxu0
  %v5534 = vadd.f32 %v5494, %v5533
  %v5535 = vpop.f32.mrb[0].mxu0
  %v5536 = vpop.f32.mrb[0].mxu0
  %v5537 = vpop.f32.mrb[0].mxu0
  %5538 = vdwg.mxu0
  %5539 = vmatprep.subr.bf16.mxu0 0
  %5540 = vmatpush1.bf16.msra.mxu0 %v4027
  %5541 = vmatprep.subr.bf16.mxu0 0
  %5542 = vmatpush1.bf16.msra.mxu0 %v4028
  %5543 = vmatprep.subr.bf16.mxu0 0
  %5544 = vmatpush1.bf16.msra.mxu0 %v4029
  %5545 = vmatprep.subr.bf16.mxu0 0
  %5546 = vmatpush1.bf16.msra.mxu0 %v4030
  %5547 = vmatprep.subr.bf16.mxu0 0
  %5548 = vmatpush1.bf16.msra.mxu0 %v4031
  %5549 = vmatprep.subr.bf16.mxu0 0
  %5550 = vmatpush1.bf16.msra.mxu0 %v4032
  %5551 = vmatprep.subr.bf16.mxu0 0
  %5552 = vmatpush1.bf16.msra.mxu0 %v4033
  %5553 = vmatprep.subr.bf16.mxu0 0
  %5554 = vmatpush1.bf16.msra.mxu0 %v4034
  %5555 = vmatprep.subr.bf16.mxu0 0
  %5556 = vmatpush1.bf16.msra.mxu0 %v4035
  %5557 = vmatprep.subr.bf16.mxu0 0
  %5558 = vmatpush1.bf16.msra.mxu0 %v4036
  %5559 = vmatprep.subr.bf16.mxu0 0
  %5560 = vmatpush1.bf16.msra.mxu0 %v4037
  %5561 = vmatprep.subr.bf16.mxu0 0
  %5562 = vmatpush1.bf16.msra.mxu0 %v4038
  %5563 = vmatprep.subr.bf16.mxu0 0
  %5564 = vmatpush1.bf16.msra.mxu0 %v4039
  %5565 = vmatprep.subr.bf16.mxu0 0
  %5566 = vmatpush1.bf16.msra.mxu0 %v4040
  %5567 = vmatprep.subr.bf16.mxu0 0
  %5568 = vmatpush1.bf16.msra.mxu0 %v4041
  %5569 = vmatprep.subr.bf16.mxu0 0
  %5570 = vmatpush1.bf16.msra.mxu0 %v4042
  %5571 = vmatprep.mubr.bf16.mxu0 %v1370
  %5572 = vmatmul.mubr.bf16.gmra.mrb[0].mxu0 %v1369
  %v5573 = vpop.f32.mrb[0].mxu0
  %v5574 = vadd.f32 %v5534, %v5573
  %v5575 = vpop.f32.mrb[0].mxu0
  %v5576 = vpop.f32.mrb[0].mxu0
  %v5577 = vpop.f32.mrb[0].mxu0
  %5578 = vdwg.mxu0
  %5579 = vmatprep.subr.bf16.mxu0 0
  %5580 = vmatpush1.bf16.msra.mxu0 %v4043
  %5581 = vmatprep.subr.bf16.mxu0 0
  %5582 = vmatpush1.bf16.msra.mxu0 %v4044
  %5583 = vmatprep.subr.bf16.mxu0 0
  %5584 = vmatpush1.bf16.msra.mxu0 %v4045
  %5585 = vmatprep.subr.bf16.mxu0 0
  %5586 = vmatpush1.bf16.msra.mxu0 %v4046
  %5587 = vmatprep.subr.bf16.mxu0 0
  %5588 = vmatpush1.bf16.msra.mxu0 %v4047
  %5589 = vmatprep.subr.bf16.mxu0 0
  %5590 = vmatpush1.bf16.msra.mxu0 %v4048
  %5591 = vmatprep.subr.bf16.mxu0 0
  %5592 = vmatpush1.bf16.msra.mxu0 %v4049
  %5593 = vmatprep.subr.bf16.mxu0 0
  %5594 = vmatpush1.bf16.msra.mxu0 %v4050
  %5595 = vmatprep.subr.bf16.mxu0 0
  %5596 = vmatpush1.bf16.msra.mxu0 %v4051
  %5597 = vmatprep.subr.bf16.mxu0 0
  %5598 = vmatpush1.bf16.msra.mxu0 %v4052
  %5599 = vmatprep.subr.bf16.mxu0 0
  %5600 = vmatpush1.bf16.msra.mxu0 %v4053
  %5601 = vmatprep.subr.bf16.mxu0 0
  %5602 = vmatpush1.bf16.msra.mxu0 %v4054
  %5603 = vmatprep.subr.bf16.mxu0 0
  %5604 = vmatpush1.bf16.msra.mxu0 %v4055
  %5605 = vmatprep.subr.bf16.mxu0 0
  %5606 = vmatpush1.bf16.msra.mxu0 %v4056
  %5607 = vmatprep.subr.bf16.mxu0 0
  %5608 = vmatpush1.bf16.msra.mxu0 %v4057
  %5609 = vmatprep.subr.bf16.mxu0 0
  %5610 = vmatpush1.bf16.msra.mxu0 %v4058
  %5611 = vmatprep.mubr.bf16.mxu0 %v1372
  %5612 = vmatmul.mubr.bf16.gmra.mrb[0].mxu0 %v1371
  %v5613 = vpop.f32.mrb[0].mxu0
  %v5614 = vadd.f32 %v5574, %v5613
  %v5615 = vpop.f32.mrb[0].mxu0
  %v5616 = vpop.f32.mrb[0].mxu0
  %v5617 = vpop.f32.mrb[0].mxu0
  %5618 = vdwg.mxu0
  %5619 = vmatprep.subr.bf16.mxu0 0
  %5620 = vmatpush1.bf16.msra.mxu0 %v4059
  %5621 = vmatprep.subr.bf16.mxu0 0
  %5622 = vmatpush1.bf16.msra.mxu0 %v4060
  %5623 = vmatprep.subr.bf16.mxu0 0
  %5624 = vmatpush1.bf16.msra.mxu0 %v4061
  %5625 = vmatprep.subr.bf16.mxu0 0
  %5626 = vmatpush1.bf16.msra.mxu0 %v4062
  %5627 = vmatprep.subr.bf16.mxu0 0
  %5628 = vmatpush1.bf16.msra.mxu0 %v4063
  %5629 = vmatprep.subr.bf16.mxu0 0
  %5630 = vmatpush1.bf16.msra.mxu0 %v4064
  %5631 = vmatprep.subr.bf16.mxu0 0
  %5632 = vmatpush1.bf16.msra.mxu0 %v4065
  %5633 = vmatprep.subr.bf16.mxu0 0
  %5634 = vmatpush1.bf16.msra.mxu0 %v4066
  %5635 = vmatprep.subr.bf16.mxu0 0
  %5636 = vmatpush1.bf16.msra.mxu0 %v4067
  %5637 = vmatprep.subr.bf16.mxu0 0
  %5638 = vmatpush1.bf16.msra.mxu0 %v4068
  %5639 = vmatprep.subr.bf16.mxu0 0
  %5640 = vmatpush1.bf16.msra.mxu0 %v4069
  %5641 = vmatprep.subr.bf16.mxu0 0
  %5642 = vmatpush1.bf16.msra.mxu0 %v4070
  %5643 = vmatprep.subr.bf16.mxu0 0
  %5644 = vmatpush1.bf16.msra.mxu0 %v4071
  %5645 = vmatprep.subr.bf16.mxu0 0
  %5646 = vmatpush1.bf16.msra.mxu0 %v4072
  %5647 = vmatprep.subr.bf16.mxu0 0
  %5648 = vmatpush1.bf16.msra.mxu0 %v4073
  %5649 = vmatprep.subr.bf16.mxu0 0
  %5650 = vmatpush1.bf16.msra.mxu0 %v4074
  %5651 = vmatprep.mubr.bf16.mxu0 %v1374
  %5652 = vmatmul.mubr.bf16.gmra.mrb[0].mxu0 %v1373
  %v5653 = vpop.f32.mrb[0].mxu0
  %v5654 = vadd.f32 %v5614, %v5653
  %v5655 = vpop.f32.mrb[0].mxu0
  %v5656 = vpop.f32.mrb[0].mxu0
  %v5657 = vpop.f32.mrb[0].mxu0
  %5658 = vdwg.mxu0
  %5659 = vmatprep.subr.bf16.mxu0 0
  %5660 = vmatpush1.bf16.msra.mxu0 %v4075
  %5661 = vmatprep.subr.bf16.mxu0 0
  %5662 = vmatpush1.bf16.msra.mxu0 %v4076
  %5663 = vmatprep.subr.bf16.mxu0 0
  %5664 = vmatpush1.bf16.msra.mxu0 %v4077
  %5665 = vmatprep.subr.bf16.mxu0 0
  %5666 = vmatpush1.bf16.msra.mxu0 %v4078
  %5667 = vmatprep.subr.bf16.mxu0 0
  %5668 = vmatpush1.bf16.msra.mxu0 %v4079
  %5669 = vmatprep.subr.bf16.mxu0 0
  %5670 = vmatpush1.bf16.msra.mxu0 %v4080
  %5671 = vmatprep.subr.bf16.mxu0 0
  %5672 = vmatpush1.bf16.msra.mxu0 %v4081
  %5673 = vmatprep.subr.bf16.mxu0 0
  %5674 = vmatpush1.bf16.msra.mxu0 %v4082
  %5675 = vmatprep.subr.bf16.mxu0 0
  %5676 = vmatpush1.bf16.msra.mxu0 %v4083
  %5677 = vmatprep.subr.bf16.mxu0 0
  %5678 = vmatpush1.bf16.msra.mxu0 %v4084
  %5679 = vmatprep.subr.bf16.mxu0 0
  %5680 = vmatpush1.bf16.msra.mxu0 %v4085
  %5681 = vmatprep.subr.bf16.mxu0 0
  %5682 = vmatpush1.bf16.msra.mxu0 %v4086
  %5683 = vmatprep.subr.bf16.mxu0 0
  %5684 = vmatpush1.bf16.msra.mxu0 %v4087
  %5685 = vmatprep.subr.bf16.mxu0 0
  %5686 = vmatpush1.bf16.msra.mxu0 %v4088
  %5687 = vmatprep.subr.bf16.mxu0 0
  %5688 = vmatpush1.bf16.msra.mxu0 %v4089
  %5689 = vmatprep.subr.bf16.mxu0 0
  %5690 = vmatpush1.bf16.msra.mxu0 %v4090
  %5691 = vmatprep.mubr.bf16.mxu0 %v1376
  %5692 = vmatmul.mubr.bf16.gmra.mrb[0].mxu0 %v1375
  %v5693 = vpop.f32.mrb[0].mxu0
  %v5694 = vadd.f32 %v5654, %v5693
  %v5695 = vpop.f32.mrb[0].mxu0
  %v5696 = vpop.f32.mrb[0].mxu0
  %v5697 = vpop.f32.mrb[0].mxu0
  %5698 = vdwg.mxu0
  %5699 = vmatprep.subr.bf16.mxu0 0
  %5700 = vmatpush1.bf16.msra.mxu0 %v4091
  %5701 = vmatprep.subr.bf16.mxu0 0
  %5702 = vmatpush1.bf16.msra.mxu0 %v4092
  %5703 = vmatprep.subr.bf16.mxu0 0
  %5704 = vmatpush1.bf16.msra.mxu0 %v4093
  %5705 = vmatprep.subr.bf16.mxu0 0
  %5706 = vmatpush1.bf16.msra.mxu0 %v4094
  %5707 = vmatprep.subr.bf16.mxu0 0
  %5708 = vmatpush1.bf16.msra.mxu0 %v4095
  %5709 = vmatprep.subr.bf16.mxu0 0
  %5710 = vmatpush1.bf16.msra.mxu0 %v4096
  %5711 = vmatprep.subr.bf16.mxu0 0
  %5712 = vmatpush1.bf16.msra.mxu0 %v4097
  %5713 = vmatprep.subr.bf16.mxu0 0
  %5714 = vmatpush1.bf16.msra.mxu0 %v4098
  %5715 = vmatprep.subr.bf16.mxu0 0
  %5716 = vmatpush1.bf16.msra.mxu0 %v4099
  %5717 = vmatprep.subr.bf16.mxu0 0
  %5718 = vmatpush1.bf16.msra.mxu0 %v4100
  %5719 = vmatprep.subr.bf16.mxu0 0
  %5720 = vmatpush1.bf16.msra.mxu0 %v4101
  %5721 = vmatprep.subr.bf16.mxu0 0
  %5722 = vmatpush1.bf16.msra.mxu0 %v4102
  %5723 = vmatprep.subr.bf16.mxu0 0
  %5724 = vmatpush1.bf16.msra.mxu0 %v4103
  %5725 = vmatprep.subr.bf16.mxu0 0
  %5726 = vmatpush1.bf16.msra.mxu0 %v4104
  %5727 = vmatprep.subr.bf16.mxu0 0
  %5728 = vmatpush1.bf16.msra.mxu0 %v4105
  %5729 = vmatprep.subr.bf16.mxu0 0
  %5730 = vmatpush1.bf16.msra.mxu0 %v4106
  %5731 = vmatprep.mubr.bf16.mxu0 %v1378
  %5732 = vmatmul.mubr.bf16.gmra.mrb[0].mxu0 %v1377
  %v5733 = vpop.f32.mrb[0].mxu0
  %v5734 = vadd.f32 %v5694, %v5733
  %v5735 = vpop.f32.mrb[0].mxu0
  %v5736 = vpop.f32.mrb[0].mxu0
  %v5737 = vpop.f32.mrb[0].mxu0
  %5738 = vdwg.mxu0
  %5739 = vmatprep.subr.bf16.mxu0 0
  %5740 = vmatpush1.bf16.msra.mxu0 %v4107
  %5741 = vmatprep.subr.bf16.mxu0 0
  %5742 = vmatpush1.bf16.msra.mxu0 %v4108
  %5743 = vmatprep.subr.bf16.mxu0 0
  %5744 = vmatpush1.bf16.msra.mxu0 %v4109
  %5745 = vmatprep.subr.bf16.mxu0 0
  %5746 = vmatpush1.bf16.msra.mxu0 %v4110
  %5747 = vmatprep.subr.bf16.mxu0 0
  %5748 = vmatpush1.bf16.msra.mxu0 %v4111
  %5749 = vmatprep.subr.bf16.mxu0 0
  %5750 = vmatpush1.bf16.msra.mxu0 %v4112
  %5751 = vmatprep.subr.bf16.mxu0 0
  %5752 = vmatpush1.bf16.msra.mxu0 %v4113
  %5753 = vmatprep.subr.bf16.mxu0 0
  %5754 = vmatpush1.bf16.msra.mxu0 %v4114
  %5755 = vmatprep.subr.bf16.mxu0 0
  %5756 = vmatpush1.bf16.msra.mxu0 %v4115
  %5757 = vmatprep.subr.bf16.mxu0 0
  %5758 = vmatpush1.bf16.msra.mxu0 %v4116
  %5759 = vmatprep.subr.bf16.mxu0 0
  %5760 = vmatpush1.bf16.msra.mxu0 %v4117
  %5761 = vmatprep.subr.bf16.mxu0 0
  %5762 = vmatpush1.bf16.msra.mxu0 %v4118
  %5763 = vmatprep.subr.bf16.mxu0 0
  %5764 = vmatpush1.bf16.msra.mxu0 %v4119
  %5765 = vmatprep.subr.bf16.mxu0 0
  %5766 = vmatpush1.bf16.msra.mxu0 %v4120
  %5767 = vmatprep.subr.bf16.mxu0 0
  %5768 = vmatpush1.bf16.msra.mxu0 %v4121
  %5769 = vmatprep.subr.bf16.mxu0 0
  %5770 = vmatpush1.bf16.msra.mxu0 %v4122
  %5771 = vmatprep.mubr.bf16.mxu0 %v1380
  %5772 = vmatmul.mubr.bf16.gmra.mrb[0].mxu0 %v1379
  %v5773 = vpop.f32.mrb[0].mxu0
  %v5774 = vadd.f32 %v5734, %v5773
  %v5775 = vpop.f32.mrb[0].mxu0
  %v5776 = vpop.f32.mrb[0].mxu0
  %v5777 = vpop.f32.mrb[0].mxu0
  %5778 = vdwg.mxu0
  %5779 = vmatprep.subr.bf16.mxu0 0
  %5780 = vmatpush1.bf16.msra.mxu0 %v4123
  %5781 = vmatprep.subr.bf16.mxu0 0
  %5782 = vmatpush1.bf16.msra.mxu0 %v4124
  %5783 = vmatprep.subr.bf16.mxu0 0
  %5784 = vmatpush1.bf16.msra.mxu0 %v4125
  %5785 = vmatprep.subr.bf16.mxu0 0
  %5786 = vmatpush1.bf16.msra.mxu0 %v4126
  %5787 = vmatprep.subr.bf16.mxu0 0
  %5788 = vmatpush1.bf16.msra.mxu0 %v4127
  %5789 = vmatprep.subr.bf16.mxu0 0
  %5790 = vmatpush1.bf16.msra.mxu0 %v4128
  %5791 = vmatprep.subr.bf16.mxu0 0
  %5792 = vmatpush1.bf16.msra.mxu0 %v4129
  %5793 = vmatprep.subr.bf16.mxu0 0
  %5794 = vmatpush1.bf16.msra.mxu0 %v4130
  %5795 = vmatprep.subr.bf16.mxu0 0
  %5796 = vmatpush1.bf16.msra.mxu0 %v4131
  %5797 = vmatprep.subr.bf16.mxu0 0
  %5798 = vmatpush1.bf16.msra.mxu0 %v4132
  %5799 = vmatprep.subr.bf16.mxu0 0
  %5800 = vmatpush1.bf16.msra.mxu0 %v4133
  %5801 = vmatprep.subr.bf16.mxu0 0
  %5802 = vmatpush1.bf16.msra.mxu0 %v4134
  %5803 = vmatprep.subr.bf16.mxu0 0
  %5804 = vmatpush1.bf16.msra.mxu0 %v4135
  %5805 = vmatprep.subr.bf16.mxu0 0
  %5806 = vmatpush1.bf16.msra.mxu0 %v4136
  %5807 = vmatprep.subr.bf16.mxu0 0
  %5808 = vmatpush1.bf16.msra.mxu0 %v4137
  %5809 = vmatprep.subr.bf16.mxu0 0
  %5810 = vmatpush1.bf16.msra.mxu0 %v4138
  %5811 = vmatprep.mubr.bf16.mxu0 %v1382
  %5812 = vmatmul.mubr.bf16.gmra.mrb[0].mxu0 %v1381
  %v5813 = vpop.f32.mrb[0].mxu0
  %v5814 = vadd.f32 %v5774, %v5813
  %v5815 = vpop.f32.mrb[0].mxu0
  %v5816 = vpop.f32.mrb[0].mxu0
  %v5817 = vpop.f32.mrb[0].mxu0
  %5818 = vdwg.mxu0
  %5819 = vmatprep.subr.bf16.mxu0 0
  %5820 = vmatpush1.bf16.msra.mxu0 %v4139
  %5821 = vmatprep.subr.bf16.mxu0 0
  %5822 = vmatpush1.bf16.msra.mxu0 %v4140
  %5823 = vmatprep.subr.bf16.mxu0 0
  %5824 = vmatpush1.bf16.msra.mxu0 %v4141
  %5825 = vmatprep.subr.bf16.mxu0 0
  %5826 = vmatpush1.bf16.msra.mxu0 %v4142
  %5827 = vmatprep.subr.bf16.mxu0 0
  %5828 = vmatpush1.bf16.msra.mxu0 %v4143
  %5829 = vmatprep.subr.bf16.mxu0 0
  %5830 = vmatpush1.bf16.msra.mxu0 %v4144
  %5831 = vmatprep.subr.bf16.mxu0 0
  %5832 = vmatpush1.bf16.msra.mxu0 %v4145
  %5833 = vmatprep.subr.bf16.mxu0 0
  %5834 = vmatpush1.bf16.msra.mxu0 %v4146
  %5835 = vmatprep.subr.bf16.mxu0 0
  %5836 = vmatpush1.bf16.msra.mxu0 %v4147
  %5837 = vmatprep.subr.bf16.mxu0 0
  %5838 = vmatpush1.bf16.msra.mxu0 %v4148
  %5839 = vmatprep.subr.bf16.mxu0 0
  %5840 = vmatpush1.bf16.msra.mxu0 %v4149
  %5841 = vmatprep.subr.bf16.mxu0 0
  %5842 = vmatpush1.bf16.msra.mxu0 %v4150
  %5843 = vmatprep.subr.bf16.mxu0 0
  %5844 = vmatpush1.bf16.msra.mxu0 %v4151
  %5845 = vmatprep.subr.bf16.mxu0 0
  %5846 = vmatpush1.bf16.msra.mxu0 %v4152
  %5847 = vmatprep.subr.bf16.mxu0 0
  %5848 = vmatpush1.bf16.msra.mxu0 %v4153
  %5849 = vmatprep.subr.bf16.mxu0 0
  %5850 = vmatpush1.bf16.msra.mxu0 %v4154
  %5851 = vmatprep.mubr.bf16.mxu0 %v1384
  %5852 = vmatmul.mubr.bf16.gmra.mrb[0].mxu0 %v1383
  %v5853 = vpop.f32.mrb[0].mxu0
  %v5854 = vadd.f32 %v5814, %v5853
  %v5855 = vpop.f32.mrb[0].mxu0
  %v5856 = vpop.f32.mrb[0].mxu0
  %v5857 = vpop.f32.mrb[0].mxu0
  %5858 = vdwg.mxu0
  %5859 = vmatprep.subr.bf16.mxu0 0
  %5860 = vmatpush1.bf16.msra.mxu0 %v4155
  %5861 = vmatprep.subr.bf16.mxu0 0
  %5862 = vmatpush1.bf16.msra.mxu0 %v4156
  %5863 = vmatprep.subr.bf16.mxu0 0
  %5864 = vmatpush1.bf16.msra.mxu0 %v4157
  %5865 = vmatprep.subr.bf16.mxu0 0
  %5866 = vmatpush1.bf16.msra.mxu0 %v4158
  %5867 = vmatprep.subr.bf16.mxu0 0
  %5868 = vmatpush1.bf16.msra.mxu0 %v4159
  %5869 = vmatprep.subr.bf16.mxu0 0
  %5870 = vmatpush1.bf16.msra.mxu0 %v4160
  %5871 = vmatprep.subr.bf16.mxu0 0
  %5872 = vmatpush1.bf16.msra.mxu0 %v4161
  %5873 = vmatprep.subr.bf16.mxu0 0
  %5874 = vmatpush1.bf16.msra.mxu0 %v4162
  %5875 = vmatprep.subr.bf16.mxu0 0
  %5876 = vmatpush1.bf16.msra.mxu0 %v4163
  %5877 = vmatprep.subr.bf16.mxu0 0
  %5878 = vmatpush1.bf16.msra.mxu0 %v4164
  %5879 = vmatprep.subr.bf16.mxu0 0
  %5880 = vmatpush1.bf16.msra.mxu0 %v4165
  %5881 = vmatprep.subr.bf16.mxu0 0
  %5882 = vmatpush1.bf16.msra.mxu0 %v4166
  %5883 = vmatprep.subr.bf16.mxu0 0
  %5884 = vmatpush1.bf16.msra.mxu0 %v4167
  %5885 = vmatprep.subr.bf16.mxu0 0
  %5886 = vmatpush1.bf16.msra.mxu0 %v4168
  %5887 = vmatprep.subr.bf16.mxu0 0
  %5888 = vmatpush1.bf16.msra.mxu0 %v4169
  %5889 = vmatprep.subr.bf16.mxu0 0
  %5890 = vmatpush1.bf16.msra.mxu0 %v4170
  %5891 = vmatprep.mubr.bf16.mxu0 %v1386
  %5892 = vmatmul.mubr.bf16.gmra.mrb[0].mxu0 %v1385
  %v5893 = vpop.f32.mrb[0].mxu0
  %v5894 = vadd.f32 %v5854, %v5893
  %v5895 = vpop.f32.mrb[0].mxu0
  %v5896 = vpop.f32.mrb[0].mxu0
  %v5897 = vpop.f32.mrb[0].mxu0
  %5898 = vdwg.mxu0
  %5899 = vmatprep.subr.bf16.mxu0 0
  %5900 = vmatpush1.bf16.msra.mxu0 %v4171
  %5901 = vmatprep.subr.bf16.mxu0 0
  %5902 = vmatpush1.bf16.msra.mxu0 %v4172
  %5903 = vmatprep.subr.bf16.mxu0 0
  %5904 = vmatpush1.bf16.msra.mxu0 %v4173
  %5905 = vmatprep.subr.bf16.mxu0 0
  %5906 = vmatpush1.bf16.msra.mxu0 %v4174
  %5907 = vmatprep.subr.bf16.mxu0 0
  %5908 = vmatpush1.bf16.msra.mxu0 %v4175
  %5909 = vmatprep.subr.bf16.mxu0 0
  %5910 = vmatpush1.bf16.msra.mxu0 %v4176
  %5911 = vmatprep.subr.bf16.mxu0 0
  %5912 = vmatpush1.bf16.msra.mxu0 %v4177
  %5913 = vmatprep.subr.bf16.mxu0 0
  %5914 = vmatpush1.bf16.msra.mxu0 %v4178
  %5915 = vmatprep.subr.bf16.mxu0 0
  %5916 = vmatpush1.bf16.msra.mxu0 %v4179
  %5917 = vmatprep.subr.bf16.mxu0 0
  %5918 = vmatpush1.bf16.msra.mxu0 %v4180
  %5919 = vmatprep.subr.bf16.mxu0 0
  %5920 = vmatpush1.bf16.msra.mxu0 %v4181
  %5921 = vmatprep.subr.bf16.mxu0 0
  %5922 = vmatpush1.bf16.msra.mxu0 %v4182
  %5923 = vmatprep.subr.bf16.mxu0 0
  %5924 = vmatpush1.bf16.msra.mxu0 %v4183
  %5925 = vmatprep.subr.bf16.mxu0 0
  %5926 = vmatpush1.bf16.msra.mxu0 %v4184
  %5927 = vmatprep.subr.bf16.mxu0 0
  %5928 = vmatpush1.bf16.msra.mxu0 %v4185
  %5929 = vmatprep.subr.bf16.mxu0 0
  %5930 = vmatpush1.bf16.msra.mxu0 %v4186
  %5931 = vmatprep.mubr.bf16.mxu0 %v1388
  %5932 = vmatmul.mubr.bf16.gmra.mrb[0].mxu0 %v1387
  %v5933 = vpop.f32.mrb[0].mxu0
  %v5934 = vadd.f32 %v5894, %v5933
  %v5935 = vpop.f32.mrb[0].mxu0
  %v5936 = vpop.f32.mrb[0].mxu0
  %v5937 = vpop.f32.mrb[0].mxu0
  %5938 = vdwg.mxu0
  %5939 = vmatprep.subr.bf16.mxu0 0
  %5940 = vmatpush1.bf16.msra.mxu0 %v4187
  %5941 = vmatprep.subr.bf16.mxu0 0
  %5942 = vmatpush1.bf16.msra.mxu0 %v4188
  %5943 = vmatprep.subr.bf16.mxu0 0
  %5944 = vmatpush1.bf16.msra.mxu0 %v4189
  %5945 = vmatprep.subr.bf16.mxu0 0
  %5946 = vmatpush1.bf16.msra.mxu0 %v4190
  %5947 = vmatprep.subr.bf16.mxu0 0
  %5948 = vmatpush1.bf16.msra.mxu0 %v4191
  %5949 = vmatprep.subr.bf16.mxu0 0
  %5950 = vmatpush1.bf16.msra.mxu0 %v4192
  %5951 = vmatprep.subr.bf16.mxu0 0
  %5952 = vmatpush1.bf16.msra.mxu0 %v4193
  %5953 = vmatprep.subr.bf16.mxu0 0
  %5954 = vmatpush1.bf16.msra.mxu0 %v4194
  %5955 = vmatprep.subr.bf16.mxu0 0
  %5956 = vmatpush1.bf16.msra.mxu0 %v4195
  %5957 = vmatprep.subr.bf16.mxu0 0
  %5958 = vmatpush1.bf16.msra.mxu0 %v4196
  %5959 = vmatprep.subr.bf16.mxu0 0
  %5960 = vmatpush1.bf16.msra.mxu0 %v4197
  %5961 = vmatprep.subr.bf16.mxu0 0
  %5962 = vmatpush1.bf16.msra.mxu0 %v4198
  %5963 = vmatprep.subr.bf16.mxu0 0
  %5964 = vmatpush1.bf16.msra.mxu0 %v4199
  %5965 = vmatprep.subr.bf16.mxu0 0
  %5966 = vmatpush1.bf16.msra.mxu0 %v4200
  %5967 = vmatprep.subr.bf16.mxu0 0
  %5968 = vmatpush1.bf16.msra.mxu0 %v4201
  %5969 = vmatprep.subr.bf16.mxu0 0
  %5970 = vmatpush1.bf16.msra.mxu0 %v4202
  %5971 = vmatprep.mubr.bf16.mxu0 %v1390
  %5972 = vmatmul.mubr.bf16.gmra.mrb[0].mxu0 %v1389
  %v5973 = vpop.f32.mrb[0].mxu0
  %v5974 = vadd.f32 %v5934, %v5973
  %v5975 = vpop.f32.mrb[0].mxu0
  %v5976 = vpop.f32.mrb[0].mxu0
  %v5977 = vpop.f32.mrb[0].mxu0
  %5978 = vdwg.mxu0
  %5979 = vmatprep.subr.bf16.mxu0 0
  %5980 = vmatpush1.bf16.msra.mxu0 %v4203
  %5981 = vmatprep.subr.bf16.mxu0 0
  %5982 = vmatpush1.bf16.msra.mxu0 %v4204
  %5983 = vmatprep.subr.bf16.mxu0 0
  %5984 = vmatpush1.bf16.msra.mxu0 %v4205
  %5985 = vmatprep.subr.bf16.mxu0 0
  %5986 = vmatpush1.bf16.msra.mxu0 %v4206
  %5987 = vmatprep.subr.bf16.mxu0 0
  %5988 = vmatpush1.bf16.msra.mxu0 %v4207
  %5989 = vmatprep.subr.bf16.mxu0 0
  %5990 = vmatpush1.bf16.msra.mxu0 %v4208
  %5991 = vmatprep.subr.bf16.mxu0 0
  %5992 = vmatpush1.bf16.msra.mxu0 %v4209
  %5993 = vmatprep.subr.bf16.mxu0 0
  %5994 = vmatpush1.bf16.msra.mxu0 %v4210
  %5995 = vmatprep.subr.bf16.mxu0 0
  %5996 = vmatpush1.bf16.msra.mxu0 %v4211
  %5997 = vmatprep.subr.bf16.mxu0 0
  %5998 = vmatpush1.bf16.msra.mxu0 %v4212
  %5999 = vmatprep.subr.bf16.mxu0 0
  %6000 = vmatpush1.bf16.msra.mxu0 %v4213
  %6001 = vmatprep.subr.bf16.mxu0 0
  %6002 = vmatpush1.bf16.msra.mxu0 %v4214
  %6003 = vmatprep.subr.bf16.mxu0 0
  %6004 = vmatpush1.bf16.msra.mxu0 %v4215
  %6005 = vmatprep.subr.bf16.mxu0 0
  %6006 = vmatpush1.bf16.msra.mxu0 %v4216
  %6007 = vmatprep.subr.bf16.mxu0 0
  %6008 = vmatpush1.bf16.msra.mxu0 %v4217
  %6009 = vmatprep.subr.bf16.mxu0 0
  %6010 = vmatpush1.bf16.msra.mxu0 %v4218
  %6011 = vmatprep.mubr.bf16.mxu0 %v1392
  %6012 = vmatmul.mubr.bf16.gmra.mrb[0].mxu0 %v1391
  %v6013 = vpop.f32.mrb[0].mxu0
  %v6014 = vadd.f32 %v5974, %v6013
  %v6015 = vpop.f32.mrb[0].mxu0
  %v6016 = vpop.f32.mrb[0].mxu0
  %v6017 = vpop.f32.mrb[0].mxu0
  %6018 = vdwg.mxu0
  %6019 = vmatprep.subr.bf16.mxu0 0
  %6020 = vmatpush1.bf16.msra.mxu0 %v4219
  %6021 = vmatprep.subr.bf16.mxu0 0
  %6022 = vmatpush1.bf16.msra.mxu0 %v4220
  %6023 = vmatprep.subr.bf16.mxu0 0
  %6024 = vmatpush1.bf16.msra.mxu0 %v4221
  %6025 = vmatprep.subr.bf16.mxu0 0
  %6026 = vmatpush1.bf16.msra.mxu0 %v4222
  %6027 = vmatprep.subr.bf16.mxu0 0
  %6028 = vmatpush1.bf16.msra.mxu0 %v4223
  %6029 = vmatprep.subr.bf16.mxu0 0
  %6030 = vmatpush1.bf16.msra.mxu0 %v4224
  %6031 = vmatprep.subr.bf16.mxu0 0
  %6032 = vmatpush1.bf16.msra.mxu0 %v4225
  %6033 = vmatprep.subr.bf16.mxu0 0
  %6034 = vmatpush1.bf16.msra.mxu0 %v4226
  %6035 = vmatprep.subr.bf16.mxu0 0
  %6036 = vmatpush1.bf16.msra.mxu0 %v4227
  %6037 = vmatprep.subr.bf16.mxu0 0
  %6038 = vmatpush1.bf16.msra.mxu0 %v4228
  %6039 = vmatprep.subr.bf16.mxu0 0
  %6040 = vmatpush1.bf16.msra.mxu0 %v4229
  %6041 = vmatprep.subr.bf16.mxu0 0
  %6042 = vmatpush1.bf16.msra.mxu0 %v4230
  %6043 = vmatprep.subr.bf16.mxu0 0
  %6044 = vmatpush1.bf16.msra.mxu0 %v4231
  %6045 = vmatprep.subr.bf16.mxu0 0
  %6046 = vmatpush1.bf16.msra.mxu0 %v4232
  %6047 = vmatprep.subr.bf16.mxu0 0
  %6048 = vmatpush1.bf16.msra.mxu0 %v4233
  %6049 = vmatprep.subr.bf16.mxu0 0
  %6050 = vmatpush1.bf16.msra.mxu0 %v4234
  %6051 = vmatprep.mubr.bf16.mxu0 %v1394
  %6052 = vmatmul.mubr.bf16.gmra.mrb[0].mxu0 %v1393
  %v6053 = vpop.f32.mrb[0].mxu0
  %v6054 = vadd.f32 %v6014, %v6053
  %v6055 = vpop.f32.mrb[0].mxu0
  %v6056 = vpop.f32.mrb[0].mxu0
  %v6057 = vpop.f32.mrb[0].mxu0
  %6058 = vdwg.mxu0
  %6059 = vmatprep.subr.bf16.mxu0 0
  %6060 = vmatpush1.bf16.msra.mxu0 %v4235
  %6061 = vmatprep.subr.bf16.mxu0 0
  %6062 = vmatpush1.bf16.msra.mxu0 %v4236
  %6063 = vmatprep.subr.bf16.mxu0 0
  %6064 = vmatpush1.bf16.msra.mxu0 %v4237
  %6065 = vmatprep.subr.bf16.mxu0 0
  %6066 = vmatpush1.bf16.msra.mxu0 %v4238
  %6067 = vmatprep.subr.bf16.mxu0 0
  %6068 = vmatpush1.bf16.msra.mxu0 %v4239
  %6069 = vmatprep.subr.bf16.mxu0 0
  %6070 = vmatpush1.bf16.msra.mxu0 %v4240
  %6071 = vmatprep.subr.bf16.mxu0 0
  %6072 = vmatpush1.bf16.msra.mxu0 %v4241
  %6073 = vmatprep.subr.bf16.mxu0 0
  %6074 = vmatpush1.bf16.msra.mxu0 %v4242
  %6075 = vmatprep.subr.bf16.mxu0 0
  %6076 = vmatpush1.bf16.msra.mxu0 %v4243
  %6077 = vmatprep.subr.bf16.mxu0 0
  %6078 = vmatpush1.bf16.msra.mxu0 %v4244
  %6079 = vmatprep.subr.bf16.mxu0 0
  %6080 = vmatpush1.bf16.msra.mxu0 %v4245
  %6081 = vmatprep.subr.bf16.mxu0 0
  %6082 = vmatpush1.bf16.msra.mxu0 %v4246
  %6083 = vmatprep.subr.bf16.mxu0 0
  %6084 = vmatpush1.bf16.msra.mxu0 %v4247
  %6085 = vmatprep.subr.bf16.mxu0 0
  %6086 = vmatpush1.bf16.msra.mxu0 %v4248
  %6087 = vmatprep.subr.bf16.mxu0 0
  %6088 = vmatpush1.bf16.msra.mxu0 %v4249
  %6089 = vmatprep.subr.bf16.mxu0 0
  %6090 = vmatpush1.bf16.msra.mxu0 %v4250
  %6091 = vmatprep.mubr.bf16.mxu0 %v1396
  %6092 = vmatmul.mubr.bf16.gmra.mrb[0].mxu0 %v1395
  %v6093 = vpop.f32.mrb[0].mxu0
  %v6094 = vadd.f32 %v6054, %v6093
  %v6095 = vpop.f32.mrb[0].mxu0
  %v6096 = vpop.f32.mrb[0].mxu0
  %v6097 = vpop.f32.mrb[0].mxu0
  %6098 = vdwg.mxu0
  %6099 = vmatprep.subr.bf16.mxu0 0
  %6100 = vmatpush1.bf16.msra.mxu0 %v4251
  %6101 = vmatprep.subr.bf16.mxu0 0
  %6102 = vmatpush1.bf16.msra.mxu0 %v4252
  %6103 = vmatprep.subr.bf16.mxu0 0
  %6104 = vmatpush1.bf16.msra.mxu0 %v4253
  %6105 = vmatprep.subr.bf16.mxu0 0
  %6106 = vmatpush1.bf16.msra.mxu0 %v4254
  %6107 = vmatprep.subr.bf16.mxu0 0
  %6108 = vmatpush1.bf16.msra.mxu0 %v4255
  %6109 = vmatprep.subr.bf16.mxu0 0
  %6110 = vmatpush1.bf16.msra.mxu0 %v4256
  %6111 = vmatprep.subr.bf16.mxu0 0
  %6112 = vmatpush1.bf16.msra.mxu0 %v4257
  %6113 = vmatprep.subr.bf16.mxu0 0
  %6114 = vmatpush1.bf16.msra.mxu0 %v4258
  %6115 = vmatprep.subr.bf16.mxu0 0
  %6116 = vmatpush1.bf16.msra.mxu0 %v4259
  %6117 = vmatprep.subr.bf16.mxu0 0
  %6118 = vmatpush1.bf16.msra.mxu0 %v4260
  %6119 = vmatprep.subr.bf16.mxu0 0
  %6120 = vmatpush1.bf16.msra.mxu0 %v4261
  %6121 = vmatprep.subr.bf16.mxu0 0
  %6122 = vmatpush1.bf16.msra.mxu0 %v4262
  %6123 = vmatprep.subr.bf16.mxu0 0
  %6124 = vmatpush1.bf16.msra.mxu0 %v4263
  %6125 = vmatprep.subr.bf16.mxu0 0
  %6126 = vmatpush1.bf16.msra.mxu0 %v4264
  %6127 = vmatprep.subr.bf16.mxu0 0
  %6128 = vmatpush1.bf16.msra.mxu0 %v4265
  %6129 = vmatprep.subr.bf16.mxu0 0
  %6130 = vmatpush1.bf16.msra.mxu0 %v4266
  %6131 = vmatprep.mubr.bf16.mxu0 %v1398
  %6132 = vmatmul.mubr.bf16.gmra.mrb[0].mxu0 %v1397
  %v6133 = vpop.f32.mrb[0].mxu0
  %v6134 = vadd.f32 %v6094, %v6133
  %v6135 = vpop.f32.mrb[0].mxu0
  %v6136 = vpop.f32.mrb[0].mxu0
  %v6137 = vpop.f32.mrb[0].mxu0
  %6138 = vdwg.mxu0
  %6139 = vmatprep.subr.bf16.mxu0 0
  %6140 = vmatpush1.bf16.msra.mxu0 %v4267
  %6141 = vmatprep.subr.bf16.mxu0 0
  %6142 = vmatpush1.bf16.msra.mxu0 %v4268
  %6143 = vmatprep.subr.bf16.mxu0 0
  %6144 = vmatpush1.bf16.msra.mxu0 %v4269
  %6145 = vmatprep.subr.bf16.mxu0 0
  %6146 = vmatpush1.bf16.msra.mxu0 %v4270
  %6147 = vmatprep.subr.bf16.mxu0 0
  %6148 = vmatpush1.bf16.msra.mxu0 %v4271
  %6149 = vmatprep.subr.bf16.mxu0 0
  %6150 = vmatpush1.bf16.msra.mxu0 %v4272
  %6151 = vmatprep.subr.bf16.mxu0 0
  %6152 = vmatpush1.bf16.msra.mxu0 %v4273
  %6153 = vmatprep.subr.bf16.mxu0 0
  %6154 = vmatpush1.bf16.msra.mxu0 %v4274
  %6155 = vmatprep.subr.bf16.mxu0 0
  %6156 = vmatpush1.bf16.msra.mxu0 %v4275
  %6157 = vmatprep.subr.bf16.mxu0 0
  %6158 = vmatpush1.bf16.msra.mxu0 %v4276
  %6159 = vmatprep.subr.bf16.mxu0 0
  %6160 = vmatpush1.bf16.msra.mxu0 %v4277
  %6161 = vmatprep.subr.bf16.mxu0 0
  %6162 = vmatpush1.bf16.msra.mxu0 %v4278
  %6163 = vmatprep.subr.bf16.mxu0 0
  %6164 = vmatpush1.bf16.msra.mxu0 %v4279
  %6165 = vmatprep.subr.bf16.mxu0 0
  %6166 = vmatpush1.bf16.msra.mxu0 %v4280
  %6167 = vmatprep.subr.bf16.mxu0 0
  %6168 = vmatpush1.bf16.msra.mxu0 %v4281
  %6169 = vmatprep.subr.bf16.mxu0 0
  %6170 = vmatpush1.bf16.msra.mxu0 %v4282
  %6171 = vmatprep.mubr.bf16.mxu0 %v1400
  %6172 = vmatmul.mubr.bf16.gmra.mrb[0].mxu0 %v1399
  %v6173 = vpop.f32.mrb[0].mxu0
  %v6174 = vadd.f32 %v6134, %v6173
  %v6175 = vpop.f32.mrb[0].mxu0
  %v6176 = vpop.f32.mrb[0].mxu0
  %v6177 = vpop.f32.mrb[0].mxu0
  %6178 = vdwg.mxu0
  %6179 = vmatprep.subr.bf16.mxu0 0
  %6180 = vmatpush1.bf16.msra.mxu0 %v4283
  %6181 = vmatprep.subr.bf16.mxu0 0
  %6182 = vmatpush1.bf16.msra.mxu0 %v4284
  %6183 = vmatprep.subr.bf16.mxu0 0
  %6184 = vmatpush1.bf16.msra.mxu0 %v4285
  %6185 = vmatprep.subr.bf16.mxu0 0
  %6186 = vmatpush1.bf16.msra.mxu0 %v4286
  %6187 = vmatprep.subr.bf16.mxu0 0
  %6188 = vmatpush1.bf16.msra.mxu0 %v4287
  %6189 = vmatprep.subr.bf16.mxu0 0
  %6190 = vmatpush1.bf16.msra.mxu0 %v4288
  %6191 = vmatprep.subr.bf16.mxu0 0
  %6192 = vmatpush1.bf16.msra.mxu0 %v4289
  %6193 = vmatprep.subr.bf16.mxu0 0
  %6194 = vmatpush1.bf16.msra.mxu0 %v4290
  %6195 = vmatprep.subr.bf16.mxu0 0
  %6196 = vmatpush1.bf16.msra.mxu0 %v4291
  %6197 = vmatprep.subr.bf16.mxu0 0
  %6198 = vmatpush1.bf16.msra.mxu0 %v4292
  %6199 = vmatprep.subr.bf16.mxu0 0
  %6200 = vmatpush1.bf16.msra.mxu0 %v4293
  %6201 = vmatprep.subr.bf16.mxu0 0
  %6202 = vmatpush1.bf16.msra.mxu0 %v4294
  %6203 = vmatprep.subr.bf16.mxu0 0
  %6204 = vmatpush1.bf16.msra.mxu0 %v4295
  %6205 = vmatprep.subr.bf16.mxu0 0
  %6206 = vmatpush1.bf16.msra.mxu0 %v4296
  %6207 = vmatprep.subr.bf16.mxu0 0
  %6208 = vmatpush1.bf16.msra.mxu0 %v4297
  %6209 = vmatprep.subr.bf16.mxu0 0
  %6210 = vmatpush1.bf16.msra.mxu0 %v4298
  %6211 = vmatprep.mubr.bf16.mxu0 %v1402
  %6212 = vmatmul.mubr.bf16.gmra.mrb[0].mxu0 %v1401
  %v6213 = vpop.f32.mrb[0].mxu0
  %v6214 = vadd.f32 %v6174, %v6213
  %v6215 = vpop.f32.mrb[0].mxu0
  %v6216 = vpop.f32.mrb[0].mxu0
  %v6217 = vpop.f32.mrb[0].mxu0
  %6218 = vdwg.mxu0
  %6219 = vmatprep.subr.bf16.mxu0 0
  %6220 = vmatpush1.bf16.msra.mxu0 %v4299
  %6221 = vmatprep.subr.bf16.mxu0 0
  %6222 = vmatpush1.bf16.msra.mxu0 %v4300
  %6223 = vmatprep.subr.bf16.mxu0 0
  %6224 = vmatpush1.bf16.msra.mxu0 %v4301
  %6225 = vmatprep.subr.bf16.mxu0 0
  %6226 = vmatpush1.bf16.msra.mxu0 %v4302
  %6227 = vmatprep.subr.bf16.mxu0 0
  %6228 = vmatpush1.bf16.msra.mxu0 %v4303
  %6229 = vmatprep.subr.bf16.mxu0 0
  %6230 = vmatpush1.bf16.msra.mxu0 %v4304
  %6231 = vmatprep.subr.bf16.mxu0 0
  %6232 = vmatpush1.bf16.msra.mxu0 %v4305
  %6233 = vmatprep.subr.bf16.mxu0 0
  %6234 = vmatpush1.bf16.msra.mxu0 %v4306
  %6235 = vmatprep.subr.bf16.mxu0 0
  %6236 = vmatpush1.bf16.msra.mxu0 %v4307
  %6237 = vmatprep.subr.bf16.mxu0 0
  %6238 = vmatpush1.bf16.msra.mxu0 %v4308
  %6239 = vmatprep.subr.bf16.mxu0 0
  %6240 = vmatpush1.bf16.msra.mxu0 %v4309
  %6241 = vmatprep.subr.bf16.mxu0 0
  %6242 = vmatpush1.bf16.msra.mxu0 %v4310
  %6243 = vmatprep.subr.bf16.mxu0 0
  %6244 = vmatpush1.bf16.msra.mxu0 %v4311
  %6245 = vmatprep.subr.bf16.mxu0 0
  %6246 = vmatpush1.bf16.msra.mxu0 %v4312
  %6247 = vmatprep.subr.bf16.mxu0 0
  %6248 = vmatpush1.bf16.msra.mxu0 %v4313
  %6249 = vmatprep.subr.bf16.mxu0 0
  %6250 = vmatpush1.bf16.msra.mxu0 %v4314
  %6251 = vmatprep.mubr.bf16.mxu0 %v1404
  %6252 = vmatmul.mubr.bf16.gmra.mrb[0].mxu0 %v1403
  %v6253 = vpop.f32.mrb[0].mxu0
  %v6254 = vadd.f32 %v6214, %v6253
  %v6255 = vpop.f32.mrb[0].mxu0
  %v6256 = vpop.f32.mrb[0].mxu0
  %v6257 = vpop.f32.mrb[0].mxu0
  %6258 = vdwg.mxu0
  %6259 = vmatprep.subr.bf16.mxu0 0
  %6260 = vmatpush1.bf16.msra.mxu0 %v4315
  %6261 = vmatprep.subr.bf16.mxu0 0
  %6262 = vmatpush1.bf16.msra.mxu0 %v4316
  %6263 = vmatprep.subr.bf16.mxu0 0
  %6264 = vmatpush1.bf16.msra.mxu0 %v4317
  %6265 = vmatprep.subr.bf16.mxu0 0
  %6266 = vmatpush1.bf16.msra.mxu0 %v4318
  %6267 = vmatprep.subr.bf16.mxu0 0
  %6268 = vmatpush1.bf16.msra.mxu0 %v4319
  %6269 = vmatprep.subr.bf16.mxu0 0
  %6270 = vmatpush1.bf16.msra.mxu0 %v4320
  %6271 = vmatprep.subr.bf16.mxu0 0
  %6272 = vmatpush1.bf16.msra.mxu0 %v4321
  %6273 = vmatprep.subr.bf16.mxu0 0
  %6274 = vmatpush1.bf16.msra.mxu0 %v4322
  %6275 = vmatprep.subr.bf16.mxu0 0
  %6276 = vmatpush1.bf16.msra.mxu0 %v4323
  %6277 = vmatprep.subr.bf16.mxu0 0
  %6278 = vmatpush1.bf16.msra.mxu0 %v4324
  %6279 = vmatprep.subr.bf16.mxu0 0
  %6280 = vmatpush1.bf16.msra.mxu0 %v4325
  %6281 = vmatprep.subr.bf16.mxu0 0
  %6282 = vmatpush1.bf16.msra.mxu0 %v4326
  %6283 = vmatprep.subr.bf16.mxu0 0
  %6284 = vmatpush1.bf16.msra.mxu0 %v4327
  %6285 = vmatprep.subr.bf16.mxu0 0
  %6286 = vmatpush1.bf16.msra.mxu0 %v4328
  %6287 = vmatprep.subr.bf16.mxu0 0
  %6288 = vmatpush1.bf16.msra.mxu0 %v4329
  %6289 = vmatprep.subr.bf16.mxu0 0
  %6290 = vmatpush1.bf16.msra.mxu0 %v4330
  %6291 = vmatprep.mubr.bf16.mxu0 %v1406
  %6292 = vmatmul.mubr.bf16.gmra.mrb[0].mxu0 %v1405
  %v6293 = vpop.f32.mrb[0].mxu0
  %v6294 = vadd.f32 %v6254, %v6293
  %v6295 = vpop.f32.mrb[0].mxu0
  %v6296 = vpop.f32.mrb[0].mxu0
  %v6297 = vpop.f32.mrb[0].mxu0
  %6298 = vdwg.mxu0
  %6299 = vmatprep.subr.bf16.mxu0 0
  %6300 = vmatpush1.bf16.msra.mxu0 %v4331
  %6301 = vmatprep.subr.bf16.mxu0 0
  %6302 = vmatpush1.bf16.msra.mxu0 %v4332
  %6303 = vmatprep.subr.bf16.mxu0 0
  %6304 = vmatpush1.bf16.msra.mxu0 %v4333
  %6305 = vmatprep.subr.bf16.mxu0 0
  %6306 = vmatpush1.bf16.msra.mxu0 %v4334
  %6307 = vmatprep.subr.bf16.mxu0 0
  %6308 = vmatpush1.bf16.msra.mxu0 %v4335
  %6309 = vmatprep.subr.bf16.mxu0 0
  %6310 = vmatpush1.bf16.msra.mxu0 %v4336
  %6311 = vmatprep.subr.bf16.mxu0 0
  %6312 = vmatpush1.bf16.msra.mxu0 %v4337
  %6313 = vmatprep.subr.bf16.mxu0 0
  %6314 = vmatpush1.bf16.msra.mxu0 %v4338
  %6315 = vmatprep.subr.bf16.mxu0 0
  %6316 = vmatpush1.bf16.msra.mxu0 %v4339
  %6317 = vmatprep.subr.bf16.mxu0 0
  %6318 = vmatpush1.bf16.msra.mxu0 %v4340
  %6319 = vmatprep.subr.bf16.mxu0 0
  %6320 = vmatpush1.bf16.msra.mxu0 %v4341
  %6321 = vmatprep.subr.bf16.mxu0 0
  %6322 = vmatpush1.bf16.msra.mxu0 %v4342
  %6323 = vmatprep.subr.bf16.mxu0 0
  %6324 = vmatpush1.bf16.msra.mxu0 %v4343
  %6325 = vmatprep.subr.bf16.mxu0 0
  %6326 = vmatpush1.bf16.msra.mxu0 %v4344
  %6327 = vmatprep.subr.bf16.mxu0 0
  %6328 = vmatpush1.bf16.msra.mxu0 %v4345
  %6329 = vmatprep.subr.bf16.mxu0 0
  %6330 = vmatpush1.bf16.msra.mxu0 %v4346
  %6331 = vmatprep.mubr.bf16.mxu0 %v1408
  %6332 = vmatmul.mubr.bf16.gmra.mrb[0].mxu0 %v1407
  %v6333 = vpop.f32.mrb[0].mxu0
  %v6334 = vadd.f32 %v6294, %v6333
  %v6335 = vpop.f32.mrb[0].mxu0
  %v6336 = vpop.f32.mrb[0].mxu0
  %v6337 = vpop.f32.mrb[0].mxu0
  %6338 = vdwg.mxu0
  %6339 = vmatprep.subr.bf16.mxu0 0
  %6340 = vmatpush1.bf16.msra.mxu0 %v4347
  %6341 = vmatprep.subr.bf16.mxu0 0
  %6342 = vmatpush1.bf16.msra.mxu0 %v4348
  %6343 = vmatprep.subr.bf16.mxu0 0
  %6344 = vmatpush1.bf16.msra.mxu0 %v4349
  %6345 = vmatprep.subr.bf16.mxu0 0
  %6346 = vmatpush1.bf16.msra.mxu0 %v4350
  %6347 = vmatprep.subr.bf16.mxu0 0
  %6348 = vmatpush1.bf16.msra.mxu0 %v4351
  %6349 = vmatprep.subr.bf16.mxu0 0
  %6350 = vmatpush1.bf16.msra.mxu0 %v4352
  %6351 = vmatprep.subr.bf16.mxu0 0
  %6352 = vmatpush1.bf16.msra.mxu0 %v4353
  %6353 = vmatprep.subr.bf16.mxu0 0
  %6354 = vmatpush1.bf16.msra.mxu0 %v4354
  %6355 = vmatprep.subr.bf16.mxu0 0
  %6356 = vmatpush1.bf16.msra.mxu0 %v4355
  %6357 = vmatprep.subr.bf16.mxu0 0
  %6358 = vmatpush1.bf16.msra.mxu0 %v4356
  %6359 = vmatprep.subr.bf16.mxu0 0
  %6360 = vmatpush1.bf16.msra.mxu0 %v4357
  %6361 = vmatprep.subr.bf16.mxu0 0
  %6362 = vmatpush1.bf16.msra.mxu0 %v4358
  %6363 = vmatprep.subr.bf16.mxu0 0
  %6364 = vmatpush1.bf16.msra.mxu0 %v4359
  %6365 = vmatprep.subr.bf16.mxu0 0
  %6366 = vmatpush1.bf16.msra.mxu0 %v4360
  %6367 = vmatprep.subr.bf16.mxu0 0
  %6368 = vmatpush1.bf16.msra.mxu0 %v4361
  %6369 = vmatprep.subr.bf16.mxu0 0
  %6370 = vmatpush1.bf16.msra.mxu0 %v4362
  %6371 = vmatprep.mubr.bf16.mxu0 %v1410
  %6372 = vmatmul.mubr.bf16.gmra.mrb[0].mxu0 %v1409
  %v6373 = vpop.f32.mrb[0].mxu0
  %v6374 = vadd.f32 %v6334, %v6373
  %v6375 = vpop.f32.mrb[0].mxu0
  %v6376 = vpop.f32.mrb[0].mxu0
  %v6377 = vpop.f32.mrb[0].mxu0
  %6378 = vdwg.mxu0
  %v6379 = vmax.f32 %v6374, 0.0
  %v6380 = vpack.c.bf16 %v6379, %v6379
  %v6381 = vld [vmem:[%s3] sm:$0xff]
  %v6382 = vld [vmem:[%s3 + $0x8] sm:$0xff]
  %v6383 = vld [vmem:[%s3 + $0x10] sm:$0xff]
  %v6384 = vld [vmem:[%s3 + $0x18] sm:$0xff]
  %v6385 = vld [vmem:[%s3 + $0x20] sm:$0xff]
  %v6386 = vld [vmem:[%s3 + $0x28] sm:$0xff]
  %v6387 = vld [vmem:[%s3 + $0x30] sm:$0xff]
  %v6388 = vld [vmem:[%s3 + $0x38] sm:$0xff]
  %v6389 = vld [vmem:[%s3 + $0x40] sm:$0xff]
  %v6390 = vld [vmem:[%s3 + $0x48] sm:$0xff]
  %v6391 = vld [vmem:[%s3 + $0x50] sm:$0xff]
  %v6392 = vld [vmem:[%s3 + $0x58] sm:$0xff]
  %v6393 = vld [vmem:[%s3 + $0x60] sm:$0xff]
  %v6394 = vld [vmem:[%s3 + $0x68] sm:$0xff]
  %v6395 = vld [vmem:[%s3 + $0x70] sm:$0xff]
  %v6396 = vld [vmem:[%s3 + $0x78] sm:$0xff]
  %v6397 = vld [vmem:[%s4] sm:$0xff]
  %v6399 = vlaneseq
  %v6400 = vshrl.u32 %v6399, 7
  %v6401 = vsub.s32 0, %v6400
  %v6402 = vrot.slane %v6397, %v6401
  %v6403 = vlaneseq
  %v6404 = vshrl.u32 %v6403, 7
  %v6405 = vsub.s32 1, %v6404
  %v6406 = vrot.slane %v6397, %v6405
  %v6407 = vlaneseq
  %v6408 = vshrl.u32 %v6407, 7
  %v6409 = vsub.s32 2, %v6408
  %v6410 = vrot.slane %v6397, %v6409
  %v6411 = vlaneseq
  %v6412 = vshrl.u32 %v6411, 7
  %v6413 = vsub.s32 3, %v6412
  %v6414 = vrot.slane %v6397, %v6413
  %v6415 = vlaneseq
  %v6416 = vshrl.u32 %v6415, 7
  %v6417 = vsub.s32 4, %v6416
  %v6418 = vrot.slane %v6397, %v6417
  %v6419 = vlaneseq
  %v6420 = vshrl.u32 %v6419, 7
  %v6421 = vsub.s32 5, %v6420
  %v6422 = vrot.slane %v6397, %v6421
  %v6423 = vlaneseq
  %v6424 = vshrl.u32 %v6423, 7
  %v6425 = vsub.s32 6, %v6424
  %v6426 = vrot.slane %v6397, %v6425
  %v6427 = vlaneseq
  %v6428 = vshrl.u32 %v6427, 7
  %v6429 = vsub.s32 7, %v6428
  %v6430 = vrot.slane %v6397, %v6429
  %v6455 = vunpack.c.l.b16 %v6381
  %v6456 = vunpack.c.h.b16 %v6381
  %v6457 = vunpack.c.l.b16 %v6382
  %v6458 = vunpack.c.h.b16 %v6382
  %v6459 = vunpack.c.l.b16 %v6383
  %v6460 = vunpack.c.h.b16 %v6383
  %v6461 = vunpack.c.l.b16 %v6384
  %v6462 = vunpack.c.h.b16 %v6384
  %v6463 = vunpack.c.l.b16 %v6385
  %v6464 = vunpack.c.h.b16 %v6385
  %v6465 = vunpack.c.l.b16 %v6386
  %v6466 = vunpack.c.h.b16 %v6386
  %v6467 = vunpack.c.l.b16 %v6387
  %v6468 = vunpack.c.h.b16 %v6387
  %v6469 = vunpack.c.l.b16 %v6388
  %v6470 = vunpack.c.h.b16 %v6388
  %v6471 = vunpack.c.l.b16 %v6389
  %v6472 = vunpack.c.h.b16 %v6389
  %v6473 = vunpack.c.l.b16 %v6390
  %v6474 = vunpack.c.h.b16 %v6390
  %v6475 = vunpack.c.l.b16 %v6391
  %v6476 = vunpack.c.h.b16 %v6391
  %v6477 = vunpack.c.l.b16 %v6392
  %v6478 = vunpack.c.h.b16 %v6392
  %v6479 = vunpack.c.l.b16 %v6393
  %v6480 = vunpack.c.h.b16 %v6393
  %v6481 = vunpack.c.l.b16 %v6394
  %v6482 = vunpack.c.h.b16 %v6394
  %v6483 = vunpack.c.l.b16 %v6395
  %v6484 = vunpack.c.h.b16 %v6395
  %v6485 = vunpack.c.l.b16 %v6396
  %v6486 = vunpack.c.h.b16 %v6396
  %v6487 = vpack.c.b16 %v6463, %v6455
  %v6488 = vpack.c.b16 %v6464, %v6456
  %v6489 = vpack.c.b16 %v6465, %v6457
  %v6490 = vpack.c.b16 %v6466, %v6458
  %v6491 = vpack.c.b16 %v6467, %v6459
  %v6492 = vpack.c.b16 %v6468, %v6460
  %v6493 = vpack.c.b16 %v6469, %v6461
  %v6494 = vpack.c.b16 %v6470, %v6462
  %v6495 = vpack.c.b16 %v6479, %v6471
  %v6496 = vpack.c.b16 %v6480, %v6472
  %v6497 = vpack.c.b16 %v6481, %v6473
  %v6498 = vpack.c.b16 %v6482, %v6474
  %v6499 = vpack.c.b16 %v6483, %v6475
  %v6500 = vpack.c.b16 %v6484, %v6476
  %v6501 = vpack.c.b16 %v6485, %v6477
  %v6502 = vpack.c.b16 %v6486, %v6478
  %vm6519 = vcmask 261120
  %v6521 = vsel %vm6519, %v6380, 0
  %6523 = vmatprep.subr.bf16.mxu0 %v6488
  %6524 = vmatpush1.bf16.msra.mxu0 %v6487
  %6525 = vmatprep.subr.bf16.mxu0 %v6496
  %6526 = vmatpush1.bf16.msra.mxu0 %v6495
  %6527 = vmatprep.subr.bf16.mxu0 0
  %6528 = vmatpush1.bf16.msra.mxu0 0
  %6529 = vmatprep.subr.bf16.mxu0 0
  %6530 = vmatpush1.bf16.msra.mxu0 0
  %6531 = vmatprep.subr.bf16.mxu0 0
  %6532 = vmatpush1.bf16.msra.mxu0 0
  %6533 = vmatprep.subr.bf16.mxu0 0
  %6534 = vmatpush1.bf16.msra.mxu0 0
  %6535 = vmatprep.subr.bf16.mxu0 0
  %6536 = vmatpush1.bf16.msra.mxu0 0
  %6537 = vmatprep.subr.bf16.mxu0 0
  %6538 = vmatpush1.bf16.msra.mxu0 0
  %6539 = vmatprep.subr.bf16.mxu0 0
  %6540 = vmatpush1.bf16.msra.mxu0 0
  %6541 = vmatprep.subr.bf16.mxu0 0
  %6542 = vmatpush1.bf16.msra.mxu0 0
  %6543 = vmatprep.subr.bf16.mxu0 0
  %6544 = vmatpush1.bf16.msra.mxu0 0
  %6545 = vmatprep.subr.bf16.mxu0 0
  %6546 = vmatpush1.bf16.msra.mxu0 0
  %6547 = vmatprep.subr.bf16.mxu0 0
  %6548 = vmatpush1.bf16.msra.mxu0 0
  %6549 = vmatprep.subr.bf16.mxu0 0
  %6550 = vmatpush1.bf16.msra.mxu0 0
  %6551 = vmatprep.subr.bf16.mxu0 0
  %6552 = vmatpush1.bf16.msra.mxu0 0
  %6553 = vmatprep.subr.bf16.mxu0 0
  %6554 = vmatpush1.bf16.msra.mxu0 0
  %6555 = vmatprep.mubr.bf16.mxu0 0
  %6556 = vmatmul.mubr.bf16.gmra.mrb[0].mxu0 %v6521
  %v6557 = vpop.f32.mrb[0].mxu0
  %v6558 = vadd.f32 %v6402, %v6557
  %v6559 = vpop.f32.mrb[0].mxu0
  %v6560 = vadd.f32 %v6406, %v6559
  %v6561 = vpop.f32.mrb[0].mxu0
  %v6562 = vpop.f32.mrb[0].mxu0
  %6563 = vdwg.mxu0
  %6564 = vmatprep.subr.bf16.mxu0 %v6490
  %6565 = vmatpush1.bf16.msra.mxu0 %v6489
  %6566 = vmatprep.subr.bf16.mxu0 %v6498
  %6567 = vmatpush1.bf16.msra.mxu0 %v6497
  %6568 = vmatprep.subr.bf16.mxu0 0
  %6569 = vmatpush1.bf16.msra.mxu0 0
  %6570 = vmatprep.subr.bf16.mxu0 0
  %6571 = vmatpush1.bf16.msra.mxu0 0
  %6572 = vmatprep.subr.bf16.mxu0 0
  %6573 = vmatpush1.bf16.msra.mxu0 0
  %6574 = vmatprep.subr.bf16.mxu0 0
  %6575 = vmatpush1.bf16.msra.mxu0 0
  %6576 = vmatprep.subr.bf16.mxu0 0
  %6577 = vmatpush1.bf16.msra.mxu0 0
  %6578 = vmatprep.subr.bf16.mxu0 0
  %6579 = vmatpush1.bf16.msra.mxu0 0
  %6580 = vmatprep.subr.bf16.mxu0 0
  %6581 = vmatpush1.bf16.msra.mxu0 0
  %6582 = vmatprep.subr.bf16.mxu0 0
  %6583 = vmatpush1.bf16.msra.mxu0 0
  %6584 = vmatprep.subr.bf16.mxu0 0
  %6585 = vmatpush1.bf16.msra.mxu0 0
  %6586 = vmatprep.subr.bf16.mxu0 0
  %6587 = vmatpush1.bf16.msra.mxu0 0
  %6588 = vmatprep.subr.bf16.mxu0 0
  %6589 = vmatpush1.bf16.msra.mxu0 0
  %6590 = vmatprep.subr.bf16.mxu0 0
  %6591 = vmatpush1.bf16.msra.mxu0 0
  %6592 = vmatprep.subr.bf16.mxu0 0
  %6593 = vmatpush1.bf16.msra.mxu0 0
  %6594 = vmatprep.subr.bf16.mxu0 0
  %6595 = vmatpush1.bf16.msra.mxu0 0
  %6596 = vmatprep.mubr.bf16.mxu0 0
  %6597 = vmatmul.mubr.bf16.gmra.mrb[0].mxu0 %v6521
  %v6598 = vpop.f32.mrb[0].mxu0
  %v6599 = vadd.f32 %v6410, %v6598
  %v6600 = vpop.f32.mrb[0].mxu0
  %v6601 = vadd.f32 %v6414, %v6600
  %v6602 = vpop.f32.mrb[0].mxu0
  %v6603 = vpop.f32.mrb[0].mxu0
  %6604 = vdwg.mxu0
  %6605 = vmatprep.subr.bf16.mxu0 %v6492
  %6606 = vmatpush1.bf16.msra.mxu0 %v6491
  %6607 = vmatprep.subr.bf16.mxu0 %v6500
  %6608 = vmatpush1.bf16.msra.mxu0 %v6499
  %6609 = vmatprep.subr.bf16.mxu0 0
  %6610 = vmatpush1.bf16.msra.mxu0 0
  %6611 = vmatprep.subr.bf16.mxu0 0
  %6612 = vmatpush1.bf16.msra.mxu0 0
  %6613 = vmatprep.subr.bf16.mxu0 0
  %6614 = vmatpush1.bf16.msra.mxu0 0
  %6615 = vmatprep.subr.bf16.mxu0 0
  %6616 = vmatpush1.bf16.msra.mxu0 0
  %6617 = vmatprep.subr.bf16.mxu0 0
  %6618 = vmatpush1.bf16.msra.mxu0 0
  %6619 = vmatprep.subr.bf16.mxu0 0
  %6620 = vmatpush1.bf16.msra.mxu0 0
  %6621 = vmatprep.subr.bf16.mxu0 0
  %6622 = vmatpush1.bf16.msra.mxu0 0
  %6623 = vmatprep.subr.bf16.mxu0 0
  %6624 = vmatpush1.bf16.msra.mxu0 0
  %6625 = vmatprep.subr.bf16.mxu0 0
  %6626 = vmatpush1.bf16.msra.mxu0 0
  %6627 = vmatprep.subr.bf16.mxu0 0
  %6628 = vmatpush1.bf16.msra.mxu0 0
  %6629 = vmatprep.subr.bf16.mxu0 0
  %6630 = vmatpush1.bf16.msra.mxu0 0
  %6631 = vmatprep.subr.bf16.mxu0 0
  %6632 = vmatpush1.bf16.msra.mxu0 0
  %6633 = vmatprep.subr.bf16.mxu0 0
  %6634 = vmatpush1.bf16.msra.mxu0 0
  %6635 = vmatprep.subr.bf16.mxu0 0
  %6636 = vmatpush1.bf16.msra.mxu0 0
  %6637 = vmatprep.mubr.bf16.mxu0 0
  %6638 = vmatmul.mubr.bf16.gmra.mrb[0].mxu0 %v6521
  %v6639 = vpop.f32.mrb[0].mxu0
  %v6640 = vadd.f32 %v6418, %v6639
  %v6641 = vpop.f32.mrb[0].mxu0
  %v6642 = vadd.f32 %v6422, %v6641
  %v6643 = vpop.f32.mrb[0].mxu0
  %v6644 = vpop.f32.mrb[0].mxu0
  %6645 = vdwg.mxu0
  %6646 = vmatprep.subr.bf16.mxu0 %v6494
  %6647 = vmatpush1.bf16.msra.mxu0 %v6493
  %6648 = vmatprep.subr.bf16.mxu0 %v6502
  %6649 = vmatpush1.bf16.msra.mxu0 %v6501
  %6650 = vmatprep.subr.bf16.mxu0 0
  %6651 = vmatpush1.bf16.msra.mxu0 0
  %6652 = vmatprep.subr.bf16.mxu0 0
  %6653 = vmatpush1.bf16.msra.mxu0 0
  %6654 = vmatprep.subr.bf16.mxu0 0
  %6655 = vmatpush1.bf16.msra.mxu0 0
  %6656 = vmatprep.subr.bf16.mxu0 0
  %6657 = vmatpush1.bf16.msra.mxu0 0
  %6658 = vmatprep.subr.bf16.mxu0 0
  %6659 = vmatpush1.bf16.msra.mxu0 0
  %6660 = vmatprep.subr.bf16.mxu0 0
  %6661 = vmatpush1.bf16.msra.mxu0 0
  %6662 = vmatprep.subr.bf16.mxu0 0
  %6663 = vmatpush1.bf16.msra.mxu0 0
  %6664 = vmatprep.subr.bf16.mxu0 0
  %6665 = vmatpush1.bf16.msra.mxu0 0
  %6666 = vmatprep.subr.bf16.mxu0 0
  %6667 = vmatpush1.bf16.msra.mxu0 0
  %6668 = vmatprep.subr.bf16.mxu0 0
  %6669 = vmatpush1.bf16.msra.mxu0 0
  %6670 = vmatprep.subr.bf16.mxu0 0
  %6671 = vmatpush1.bf16.msra.mxu0 0
  %6672 = vmatprep.subr.bf16.mxu0 0
  %6673 = vmatpush1.bf16.msra.mxu0 0
  %6674 = vmatprep.subr.bf16.mxu0 0
  %6675 = vmatpush1.bf16.msra.mxu0 0
  %6676 = vmatprep.subr.bf16.mxu0 0
  %6677 = vmatpush1.bf16.msra.mxu0 0
  %6678 = vmatprep.mubr.bf16.mxu0 0
  %6679 = vmatmul.mubr.bf16.gmra.mrb[0].mxu0 %v6521
  %v6680 = vpop.f32.mrb[0].mxu0
  %v6681 = vadd.f32 %v6426, %v6680
  %v6682 = vpop.f32.mrb[0].mxu0
  %v6683 = vadd.f32 %v6430, %v6682
  %v6684 = vpop.f32.mrb[0].mxu0
  %v6685 = vpop.f32.mrb[0].mxu0
  %6686 = vdwg.mxu0
  %v6687 = vpack.c.bf16 %v6558, %v6558
  %v6688 = vpack.c.bf16 %v6560, %v6560
  %v6689 = vpack.c.bf16 %v6599, %v6599
  %v6690 = vpack.c.bf16 %v6601, %v6601
  %v6691 = vld [vmem:[%s5] sm:$0xff]
  %v6692 = vld [vmem:[%s5 + $0x8] sm:$0xff]
  %v6693 = vld [vmem:[%s5 + $0x10] sm:$0xff]
  %v6694 = vld [vmem:[%s5 + $0x18] sm:$0xff]
  %v6695 = vld [vmem:[%s5 + $0x20] sm:$0xff]
  %v6696 = vld [vmem:[%s5 + $0x28] sm:$0xff]
  %v6697 = vld [vmem:[%s5 + $0x30] sm:$0xff]
  %v6698 = vld [vmem:[%s5 + $0x38] sm:$0xff]
  %v6699 = vld [vmem:[%s5 + $0x40] sm:$0xff]
  %v6700 = vld [vmem:[%s5 + $0x48] sm:$0xff]
  %v6701 = vld [vmem:[%s5 + $0x50] sm:$0xff]
  %v6702 = vld [vmem:[%s5 + $0x58] sm:$0xff]
  %v6703 = vld [vmem:[%s5 + $0x60] sm:$0xff]
  %v6704 = vld [vmem:[%s5 + $0x68] sm:$0xff]
  %v6705 = vld [vmem:[%s5 + $0x70] sm:$0xff]
  %v6706 = vld [vmem:[%s5 + $0x78] sm:$0xff]
  %v6707 = vld [vmem:[%s5 + $0x80] sm:$0xff]
  %v6708 = vld [vmem:[%s5 + $0x88] sm:$0xff]
  %v6709 = vld [vmem:[%s5 + $0x90] sm:$0xff]
  %v6710 = vld [vmem:[%s5 + $0x98] sm:$0xff]
  %v6711 = vld [vmem:[%s5 + $0xa0] sm:$0xff]
  %v6712 = vld [vmem:[%s5 + $0xa8] sm:$0xff]
  %v6713 = vld [vmem:[%s5 + $0xb0] sm:$0xff]
  %v6714 = vld [vmem:[%s5 + $0xb8] sm:$0xff]
  %v6715 = vld [vmem:[%s5 + $0xc0] sm:$0xff]
  %v6716 = vld [vmem:[%s5 + $0xc8] sm:$0xff]
  %v6717 = vld [vmem:[%s5 + $0xd0] sm:$0xff]
  %v6718 = vld [vmem:[%s5 + $0xd8] sm:$0xff]
  %v6719 = vld [vmem:[%s5 + $0xe0] sm:$0xff]
  %v6720 = vld [vmem:[%s5 + $0xe8] sm:$0xff]
  %v6721 = vld [vmem:[%s5 + $0xf0] sm:$0xff]
  %v6722 = vld [vmem:[%s5 + $0xf8] sm:$0xff]
  %v6723 = vld [vmem:[%s5 + $0x100] sm:$0xff]
  %v6724 = vld [vmem:[%s5 + $0x108] sm:$0xff]
  %v6725 = vld [vmem:[%s5 + $0x110] sm:$0xff]
  %v6726 = vld [vmem:[%s5 + $0x118] sm:$0xff]
  %v6727 = vld [vmem:[%s5 + $0x120] sm:$0xff]
  %v6728 = vld [vmem:[%s5 + $0x128] sm:$0xff]
  %v6729 = vld [vmem:[%s5 + $0x130] sm:$0xff]
  %v6730 = vld [vmem:[%s5 + $0x138] sm:$0xff]
  %v6731 = vld [vmem:[%s5 + $0x140] sm:$0xff]
  %v6732 = vld [vmem:[%s5 + $0x148] sm:$0xff]
  %v6733 = vld [vmem:[%s5 + $0x150] sm:$0xff]
  %v6734 = vld [vmem:[%s5 + $0x158] sm:$0xff]
  %v6735 = vld [vmem:[%s5 + $0x160] sm:$0xff]
  %v6736 = vld [vmem:[%s5 + $0x168] sm:$0xff]
  %v6737 = vld [vmem:[%s5 + $0x170] sm:$0xff]
  %v6738 = vld [vmem:[%s5 + $0x178] sm:$0xff]
  %v6739 = vld [vmem:[%s5 + $0x180] sm:$0xff]
  %v6740 = vld [vmem:[%s5 + $0x188] sm:$0xff]
  %v6741 = vld [vmem:[%s5 + $0x190] sm:$0xff]
  %v6742 = vld [vmem:[%s5 + $0x198] sm:$0xff]
  %v6743 = vld [vmem:[%s5 + $0x1a0] sm:$0xff]
  %v6744 = vld [vmem:[%s5 + $0x1a8] sm:$0xff]
  %v6745 = vld [vmem:[%s5 + $0x1b0] sm:$0xff]
  %v6746 = vld [vmem:[%s5 + $0x1b8] sm:$0xff]
  %v6747 = vld [vmem:[%s5 + $0x1c0] sm:$0xff]
  %v6748 = vld [vmem:[%s5 + $0x1c8] sm:$0xff]
  %v6749 = vld [vmem:[%s5 + $0x1d0] sm:$0xff]
  %v6750 = vld [vmem:[%s5 + $0x1d8] sm:$0xff]
  %v6751 = vld [vmem:[%s5 + $0x1e0] sm:$0xff]
  %v6752 = vld [vmem:[%s5 + $0x1e8] sm:$0xff]
  %v6753 = vld [vmem:[%s5 + $0x1f0] sm:$0xff]
  %v6754 = vld [vmem:[%s5 + $0x1f8] sm:$0xff]
  %v6755 = vld [vmem:[%s5 + $0x200] sm:$0xff]
  %v6756 = vld [vmem:[%s5 + $0x208] sm:$0xff]
  %v6757 = vld [vmem:[%s5 + $0x210] sm:$0xff]
  %v6758 = vld [vmem:[%s5 + $0x218] sm:$0xff]
  %v6759 = vld [vmem:[%s5 + $0x220] sm:$0xff]
  %v6760 = vld [vmem:[%s5 + $0x228] sm:$0xff]
  %v6761 = vld [vmem:[%s5 + $0x230] sm:$0xff]
  %v6762 = vld [vmem:[%s5 + $0x238] sm:$0xff]
  %v6763 = vld [vmem:[%s5 + $0x240] sm:$0xff]
  %v6764 = vld [vmem:[%s5 + $0x248] sm:$0xff]
  %v6765 = vld [vmem:[%s5 + $0x250] sm:$0xff]
  %v6766 = vld [vmem:[%s5 + $0x258] sm:$0xff]
  %v6767 = vld [vmem:[%s5 + $0x260] sm:$0xff]
  %v6768 = vld [vmem:[%s5 + $0x268] sm:$0xff]
  %v6769 = vld [vmem:[%s5 + $0x270] sm:$0xff]
  %v6770 = vld [vmem:[%s5 + $0x278] sm:$0xff]
  %v6771 = vld [vmem:[%s5 + $0x280] sm:$0xff]
  %v6772 = vld [vmem:[%s5 + $0x288] sm:$0xff]
  %v6773 = vld [vmem:[%s5 + $0x290] sm:$0xff]
  %v6774 = vld [vmem:[%s5 + $0x298] sm:$0xff]
  %v6775 = vld [vmem:[%s5 + $0x2a0] sm:$0xff]
  %v6776 = vld [vmem:[%s5 + $0x2a8] sm:$0xff]
  %v6777 = vld [vmem:[%s5 + $0x2b0] sm:$0xff]
  %v6778 = vld [vmem:[%s5 + $0x2b8] sm:$0xff]
  %v6779 = vld [vmem:[%s5 + $0x2c0] sm:$0xff]
  %v6780 = vld [vmem:[%s5 + $0x2c8] sm:$0xff]
  %v6781 = vld [vmem:[%s5 + $0x2d0] sm:$0xff]
  %v6782 = vld [vmem:[%s5 + $0x2d8] sm:$0xff]
  %v6783 = vld [vmem:[%s5 + $0x2e0] sm:$0xff]
  %v6784 = vld [vmem:[%s5 + $0x2e8] sm:$0xff]
  %v6785 = vld [vmem:[%s5 + $0x2f0] sm:$0xff]
  %v6786 = vld [vmem:[%s5 + $0x2f8] sm:$0xff]
  %v6787 = vld [vmem:[%s5 + $0x300] sm:$0xff]
  %v6788 = vld [vmem:[%s5 + $0x308] sm:$0xff]
  %v6789 = vld [vmem:[%s5 + $0x310] sm:$0xff]
  %v6790 = vld [vmem:[%s5 + $0x318] sm:$0xff]
  %v6791 = vld [vmem:[%s5 + $0x320] sm:$0xff]
  %v6792 = vld [vmem:[%s5 + $0x328] sm:$0xff]
  %v6793 = vld [vmem:[%s5 + $0x330] sm:$0xff]
  %v6794 = vld [vmem:[%s5 + $0x338] sm:$0xff]
  %v6795 = vld [vmem:[%s5 + $0x340] sm:$0xff]
  %v6796 = vld [vmem:[%s5 + $0x348] sm:$0xff]
  %v6797 = vld [vmem:[%s5 + $0x350] sm:$0xff]
  %v6798 = vld [vmem:[%s5 + $0x358] sm:$0xff]
  %v6799 = vld [vmem:[%s5 + $0x360] sm:$0xff]
  %v6800 = vld [vmem:[%s5 + $0x368] sm:$0xff]
  %v6801 = vld [vmem:[%s5 + $0x370] sm:$0xff]
  %v6802 = vld [vmem:[%s5 + $0x378] sm:$0xff]
  %v6803 = vld [vmem:[%s5 + $0x380] sm:$0xff]
  %v6804 = vld [vmem:[%s5 + $0x388] sm:$0xff]
  %v6805 = vld [vmem:[%s5 + $0x390] sm:$0xff]
  %v6806 = vld [vmem:[%s5 + $0x398] sm:$0xff]
  %v6807 = vld [vmem:[%s5 + $0x3a0] sm:$0xff]
  %v6808 = vld [vmem:[%s5 + $0x3a8] sm:$0xff]
  %v6809 = vld [vmem:[%s5 + $0x3b0] sm:$0xff]
  %v6810 = vld [vmem:[%s5 + $0x3b8] sm:$0xff]
  %v6811 = vld [vmem:[%s5 + $0x3c0] sm:$0xff]
  %v6812 = vld [vmem:[%s5 + $0x3c8] sm:$0xff]
  %v6813 = vld [vmem:[%s5 + $0x3d0] sm:$0xff]
  %v6814 = vld [vmem:[%s5 + $0x3d8] sm:$0xff]
  %v6815 = vld [vmem:[%s5 + $0x3e0] sm:$0xff]
  %v6816 = vld [vmem:[%s5 + $0x3e8] sm:$0xff]
  %v6817 = vld [vmem:[%s5 + $0x3f0] sm:$0xff]
  %v6818 = vld [vmem:[%s5 + $0x3f8] sm:$0xff]
  %v6819 = vld [vmem:[%s6] sm:$0xf]
  %v6821 = vlaneseq
  %v6822 = vshrl.u32 %v6821, 7
  %v6823 = vsub.s32 0, %v6822
  %v6824 = vrot.slane %v6819, %v6823
  %v6825 = vlaneseq
  %v6826 = vshrl.u32 %v6825, 7
  %v6827 = vsub.s32 1, %v6826
  %v6828 = vrot.slane %v6819, %v6827
  %v6829 = vlaneseq
  %v6830 = vshrl.u32 %v6829, 7
  %v6831 = vsub.s32 2, %v6830
  %v6832 = vrot.slane %v6819, %v6831
  %v6833 = vlaneseq
  %v6834 = vshrl.u32 %v6833, 7
  %v6835 = vsub.s32 3, %v6834
  %v6836 = vrot.slane %v6819, %v6835
  %v6969 = vunpack.c.l.b16 %v6691
  %v6970 = vunpack.c.h.b16 %v6691
  %v6971 = vunpack.c.l.b16 %v6692
  %v6972 = vunpack.c.h.b16 %v6692
  %v6973 = vunpack.c.l.b16 %v6693
  %v6974 = vunpack.c.h.b16 %v6693
  %v6975 = vunpack.c.l.b16 %v6694
  %v6976 = vunpack.c.h.b16 %v6694
  %v6977 = vunpack.c.l.b16 %v6695
  %v6978 = vunpack.c.h.b16 %v6695
  %v6979 = vunpack.c.l.b16 %v6696
  %v6980 = vunpack.c.h.b16 %v6696
  %v6981 = vunpack.c.l.b16 %v6697
  %v6982 = vunpack.c.h.b16 %v6697
  %v6983 = vunpack.c.l.b16 %v6698
  %v6984 = vunpack.c.h.b16 %v6698
  %v6985 = vunpack.c.l.b16 %v6699
  %v6986 = vunpack.c.h.b16 %v6699
  %v6987 = vunpack.c.l.b16 %v6700
  %v6988 = vunpack.c.h.b16 %v6700
  %v6989 = vunpack.c.l.b16 %v6701
  %v6990 = vunpack.c.h.b16 %v6701
  %v6991 = vunpack.c.l.b16 %v6702
  %v6992 = vunpack.c.h.b16 %v6702
  %v6993 = vunpack.c.l.b16 %v6703
  %v6994 = vunpack.c.h.b16 %v6703
  %v6995 = vunpack.c.l.b16 %v6704
  %v6996 = vunpack.c.h.b16 %v6704
  %v6997 = vunpack.c.l.b16 %v6705
  %v6998 = vunpack.c.h.b16 %v6705
  %v6999 = vunpack.c.l.b16 %v6706
  %v7000 = vunpack.c.h.b16 %v6706
  %v7001 = vunpack.c.l.b16 %v6707
  %v7002 = vunpack.c.h.b16 %v6707
  %v7003 = vunpack.c.l.b16 %v6708
  %v7004 = vunpack.c.h.b16 %v6708
  %v7005 = vunpack.c.l.b16 %v6709
  %v7006 = vunpack.c.h.b16 %v6709
  %v7007 = vunpack.c.l.b16 %v6710
  %v7008 = vunpack.c.h.b16 %v6710
  %v7009 = vunpack.c.l.b16 %v6711
  %v7010 = vunpack.c.h.b16 %v6711
  %v7011 = vunpack.c.l.b16 %v6712
  %v7012 = vunpack.c.h.b16 %v6712
  %v7013 = vunpack.c.l.b16 %v6713
  %v7014 = vunpack.c.h.b16 %v6713
  %v7015 = vunpack.c.l.b16 %v6714
  %v7016 = vunpack.c.h.b16 %v6714
  %v7017 = vunpack.c.l.b16 %v6715
  %v7018 = vunpack.c.h.b16 %v6715
  %v7019 = vunpack.c.l.b16 %v6716
  %v7020 = vunpack.c.h.b16 %v6716
  %v7021 = vunpack.c.l.b16 %v6717
  %v7022 = vunpack.c.h.b16 %v6717
  %v7023 = vunpack.c.l.b16 %v6718
  %v7024 = vunpack.c.h.b16 %v6718
  %v7025 = vunpack.c.l.b16 %v6719
  %v7026 = vunpack.c.h.b16 %v6719
  %v7027 = vunpack.c.l.b16 %v6720
  %v7028 = vunpack.c.h.b16 %v6720
  %v7029 = vunpack.c.l.b16 %v6721
  %v7030 = vunpack.c.h.b16 %v6721
  %v7031 = vunpack.c.l.b16 %v6722
  %v7032 = vunpack.c.h.b16 %v6722
  %v7033 = vunpack.c.l.b16 %v6723
  %v7034 = vunpack.c.h.b16 %v6723
  %v7035 = vunpack.c.l.b16 %v6724
  %v7036 = vunpack.c.h.b16 %v6724
  %v7037 = vunpack.c.l.b16 %v6725
  %v7038 = vunpack.c.h.b16 %v6725
  %v7039 = vunpack.c.l.b16 %v6726
  %v7040 = vunpack.c.h.b16 %v6726
  %v7041 = vunpack.c.l.b16 %v6727
  %v7042 = vunpack.c.h.b16 %v6727
  %v7043 = vunpack.c.l.b16 %v6728
  %v7044 = vunpack.c.h.b16 %v6728
  %v7045 = vunpack.c.l.b16 %v6729
  %v7046 = vunpack.c.h.b16 %v6729
  %v7047 = vunpack.c.l.b16 %v6730
  %v7048 = vunpack.c.h.b16 %v6730
  %v7049 = vunpack.c.l.b16 %v6731
  %v7050 = vunpack.c.h.b16 %v6731
  %v7051 = vunpack.c.l.b16 %v6732
  %v7052 = vunpack.c.h.b16 %v6732
  %v7053 = vunpack.c.l.b16 %v6733
  %v7054 = vunpack.c.h.b16 %v6733
  %v7055 = vunpack.c.l.b16 %v6734
  %v7056 = vunpack.c.h.b16 %v6734
  %v7057 = vunpack.c.l.b16 %v6735
  %v7058 = vunpack.c.h.b16 %v6735
  %v7059 = vunpack.c.l.b16 %v6736
  %v7060 = vunpack.c.h.b16 %v6736
  %v7061 = vunpack.c.l.b16 %v6737
  %v7062 = vunpack.c.h.b16 %v6737
  %v7063 = vunpack.c.l.b16 %v6738
  %v7064 = vunpack.c.h.b16 %v6738
  %v7065 = vunpack.c.l.b16 %v6739
  %v7066 = vunpack.c.h.b16 %v6739
  %v7067 = vunpack.c.l.b16 %v6740
  %v7068 = vunpack.c.h.b16 %v6740
  %v7069 = vunpack.c.l.b16 %v6741
  %v7070 = vunpack.c.h.b16 %v6741
  %v7071 = vunpack.c.l.b16 %v6742
  %v7072 = vunpack.c.h.b16 %v6742
  %v7073 = vunpack.c.l.b16 %v6743
  %v7074 = vunpack.c.h.b16 %v6743
  %v7075 = vunpack.c.l.b16 %v6744
  %v7076 = vunpack.c.h.b16 %v6744
  %v7077 = vunpack.c.l.b16 %v6745
  %v7078 = vunpack.c.h.b16 %v6745
  %v7079 = vunpack.c.l.b16 %v6746
  %v7080 = vunpack.c.h.b16 %v6746
  %v7081 = vunpack.c.l.b16 %v6747
  %v7082 = vunpack.c.h.b16 %v6747
  %v7083 = vunpack.c.l.b16 %v6748
  %v7084 = vunpack.c.h.b16 %v6748
  %v7085 = vunpack.c.l.b16 %v6749
  %v7086 = vunpack.c.h.b16 %v6749
  %v7087 = vunpack.c.l.b16 %v6750
  %v7088 = vunpack.c.h.b16 %v6750
  %v7089 = vunpack.c.l.b16 %v6751
  %v7090 = vunpack.c.h.b16 %v6751
  %v7091 = vunpack.c.l.b16 %v6752
  %v7092 = vunpack.c.h.b16 %v6752
  %v7093 = vunpack.c.l.b16 %v6753
  %v7094 = vunpack.c.h.b16 %v6753
  %v7095 = vunpack.c.l.b16 %v6754
  %v7096 = vunpack.c.h.b16 %v6754
  %v7097 = vunpack.c.l.b16 %v6755
  %v7098 = vunpack.c.h.b16 %v6755
  %v7099 = vunpack.c.l.b16 %v6756
  %v7100 = vunpack.c.h.b16 %v6756
  %v7101 = vunpack.c.l.b16 %v6757
  %v7102 = vunpack.c.h.b16 %v6757
  %v7103 = vunpack.c.l.b16 %v6758
  %v7104 = vunpack.c.h.b16 %v6758
  %v7105 = vunpack.c.l.b16 %v6759
  %v7106 = vunpack.c.h.b16 %v6759
  %v7107 = vunpack.c.l.b16 %v6760
  %v7108 = vunpack.c.h.b16 %v6760
  %v7109 = vunpack.c.l.b16 %v6761
  %v7110 = vunpack.c.h.b16 %v6761
  %v7111 = vunpack.c.l.b16 %v6762
  %v7112 = vunpack.c.h.b16 %v6762
  %v7113 = vunpack.c.l.b16 %v6763
  %v7114 = vunpack.c.h.b16 %v6763
  %v7115 = vunpack.c.l.b16 %v6764
  %v7116 = vunpack.c.h.b16 %v6764
  %v7117 = vunpack.c.l.b16 %v6765
  %v7118 = vunpack.c.h.b16 %v6765
  %v7119 = vunpack.c.l.b16 %v6766
  %v7120 = vunpack.c.h.b16 %v6766
  %v7121 = vunpack.c.l.b16 %v6767
  %v7122 = vunpack.c.h.b16 %v6767
  %v7123 = vunpack.c.l.b16 %v6768
  %v7124 = vunpack.c.h.b16 %v6768
  %v7125 = vunpack.c.l.b16 %v6769
  %v7126 = vunpack.c.h.b16 %v6769
  %v7127 = vunpack.c.l.b16 %v6770
  %v7128 = vunpack.c.h.b16 %v6770
  %v7129 = vunpack.c.l.b16 %v6771
  %v7130 = vunpack.c.h.b16 %v6771
  %v7131 = vunpack.c.l.b16 %v6772
  %v7132 = vunpack.c.h.b16 %v6772
  %v7133 = vunpack.c.l.b16 %v6773
  %v7134 = vunpack.c.h.b16 %v6773
  %v7135 = vunpack.c.l.b16 %v6774
  %v7136 = vunpack.c.h.b16 %v6774
  %v7137 = vunpack.c.l.b16 %v6775
  %v7138 = vunpack.c.h.b16 %v6775
  %v7139 = vunpack.c.l.b16 %v6776
  %v7140 = vunpack.c.h.b16 %v6776
  %v7141 = vunpack.c.l.b16 %v6777
  %v7142 = vunpack.c.h.b16 %v6777
  %v7143 = vunpack.c.l.b16 %v6778
  %v7144 = vunpack.c.h.b16 %v6778
  %v7145 = vunpack.c.l.b16 %v6779
  %v7146 = vunpack.c.h.b16 %v6779
  %v7147 = vunpack.c.l.b16 %v6780
  %v7148 = vunpack.c.h.b16 %v6780
  %v7149 = vunpack.c.l.b16 %v6781
  %v7150 = vunpack.c.h.b16 %v6781
  %v7151 = vunpack.c.l.b16 %v6782
  %v7152 = vunpack.c.h.b16 %v6782
  %v7153 = vunpack.c.l.b16 %v6783
  %v7154 = vunpack.c.h.b16 %v6783
  %v7155 = vunpack.c.l.b16 %v6784
  %v7156 = vunpack.c.h.b16 %v6784
  %v7157 = vunpack.c.l.b16 %v6785
  %v7158 = vunpack.c.h.b16 %v6785
  %v7159 = vunpack.c.l.b16 %v6786
  %v7160 = vunpack.c.h.b16 %v6786
  %v7161 = vunpack.c.l.b16 %v6787
  %v7162 = vunpack.c.h.b16 %v6787
  %v7163 = vunpack.c.l.b16 %v6788
  %v7164 = vunpack.c.h.b16 %v6788
  %v7165 = vunpack.c.l.b16 %v6789
  %v7166 = vunpack.c.h.b16 %v6789
  %v7167 = vunpack.c.l.b16 %v6790
  %v7168 = vunpack.c.h.b16 %v6790
  %v7169 = vunpack.c.l.b16 %v6791
  %v7170 = vunpack.c.h.b16 %v6791
  %v7171 = vunpack.c.l.b16 %v6792
  %v7172 = vunpack.c.h.b16 %v6792
  %v7173 = vunpack.c.l.b16 %v6793
  %v7174 = vunpack.c.h.b16 %v6793
  %v7175 = vunpack.c.l.b16 %v6794
  %v7176 = vunpack.c.h.b16 %v6794
  %v7177 = vunpack.c.l.b16 %v6795
  %v7178 = vunpack.c.h.b16 %v6795
  %v7179 = vunpack.c.l.b16 %v6796
  %v7180 = vunpack.c.h.b16 %v6796
  %v7181 = vunpack.c.l.b16 %v6797
  %v7182 = vunpack.c.h.b16 %v6797
  %v7183 = vunpack.c.l.b16 %v6798
  %v7184 = vunpack.c.h.b16 %v6798
  %v7185 = vunpack.c.l.b16 %v6799
  %v7186 = vunpack.c.h.b16 %v6799
  %v7187 = vunpack.c.l.b16 %v6800
  %v7188 = vunpack.c.h.b16 %v6800
  %v7189 = vunpack.c.l.b16 %v6801
  %v7190 = vunpack.c.h.b16 %v6801
  %v7191 = vunpack.c.l.b16 %v6802
  %v7192 = vunpack.c.h.b16 %v6802
  %v7193 = vunpack.c.l.b16 %v6803
  %v7194 = vunpack.c.h.b16 %v6803
  %v7195 = vunpack.c.l.b16 %v6804
  %v7196 = vunpack.c.h.b16 %v6804
  %v7197 = vunpack.c.l.b16 %v6805
  %v7198 = vunpack.c.h.b16 %v6805
  %v7199 = vunpack.c.l.b16 %v6806
  %v7200 = vunpack.c.h.b16 %v6806
  %v7201 = vunpack.c.l.b16 %v6807
  %v7202 = vunpack.c.h.b16 %v6807
  %v7203 = vunpack.c.l.b16 %v6808
  %v7204 = vunpack.c.h.b16 %v6808
  %v7205 = vunpack.c.l.b16 %v6809
  %v7206 = vunpack.c.h.b16 %v6809
  %v7207 = vunpack.c.l.b16 %v6810
  %v7208 = vunpack.c.h.b16 %v6810
  %v7209 = vunpack.c.l.b16 %v6811
  %v7210 = vunpack.c.h.b16 %v6811
  %v7211 = vunpack.c.l.b16 %v6812
  %v7212 = vunpack.c.h.b16 %v6812
  %v7213 = vunpack.c.l.b16 %v6813
  %v7214 = vunpack.c.h.b16 %v6813
  %v7215 = vunpack.c.l.b16 %v6814
  %v7216 = vunpack.c.h.b16 %v6814
  %v7217 = vunpack.c.l.b16 %v6815
  %v7218 = vunpack.c.h.b16 %v6815
  %v7219 = vunpack.c.l.b16 %v6816
  %v7220 = vunpack.c.h.b16 %v6816
  %v7221 = vunpack.c.l.b16 %v6817
  %v7222 = vunpack.c.h.b16 %v6817
  %v7223 = vunpack.c.l.b16 %v6818
  %v7224 = vunpack.c.h.b16 %v6818
  %v7225 = vpack.c.b16 %v6973, %v6969
  %v7226 = vpack.c.b16 %v6974, %v6970
  %v7227 = vpack.c.b16 %v6975, %v6971
  %v7228 = vpack.c.b16 %v6976, %v6972
  %v7229 = vpack.c.b16 %v6981, %v6977
  %v7230 = vpack.c.b16 %v6982, %v6978
  %v7231 = vpack.c.b16 %v6983, %v6979
  %v7232 = vpack.c.b16 %v6984, %v6980
  %v7233 = vpack.c.b16 %v6989, %v6985
  %v7234 = vpack.c.b16 %v6990, %v6986
  %v7235 = vpack.c.b16 %v6991, %v6987
  %v7236 = vpack.c.b16 %v6992, %v6988
  %v7237 = vpack.c.b16 %v6997, %v6993
  %v7238 = vpack.c.b16 %v6998, %v6994
  %v7239 = vpack.c.b16 %v6999, %v6995
  %v7240 = vpack.c.b16 %v7000, %v6996
  %v7241 = vpack.c.b16 %v7005, %v7001
  %v7242 = vpack.c.b16 %v7006, %v7002
  %v7243 = vpack.c.b16 %v7007, %v7003
  %v7244 = vpack.c.b16 %v7008, %v7004
  %v7245 = vpack.c.b16 %v7013, %v7009
  %v7246 = vpack.c.b16 %v7014, %v7010
  %v7247 = vpack.c.b16 %v7015, %v7011
  %v7248 = vpack.c.b16 %v7016, %v7012
  %v7249 = vpack.c.b16 %v7021, %v7017
  %v7250 = vpack.c.b16 %v7022, %v7018
  %v7251 = vpack.c.b16 %v7023, %v7019
  %v7252 = vpack.c.b16 %v7024, %v7020
  %v7253 = vpack.c.b16 %v7029, %v7025
  %v7254 = vpack.c.b16 %v7030, %v7026
  %v7255 = vpack.c.b16 %v7031, %v7027
  %v7256 = vpack.c.b16 %v7032, %v7028
  %v7257 = vpack.c.b16 %v7037, %v7033
  %v7258 = vpack.c.b16 %v7038, %v7034
  %v7259 = vpack.c.b16 %v7039, %v7035
  %v7260 = vpack.c.b16 %v7040, %v7036
  %v7261 = vpack.c.b16 %v7045, %v7041
  %v7262 = vpack.c.b16 %v7046, %v7042
  %v7263 = vpack.c.b16 %v7047, %v7043
  %v7264 = vpack.c.b16 %v7048, %v7044
  %v7265 = vpack.c.b16 %v7053, %v7049
  %v7266 = vpack.c.b16 %v7054, %v7050
  %v7267 = vpack.c.b16 %v7055, %v7051
  %v7268 = vpack.c.b16 %v7056, %v7052
  %v7269 = vpack.c.b16 %v7061, %v7057
  %v7270 = vpack.c.b16 %v7062, %v7058
  %v7271 = vpack.c.b16 %v7063, %v7059
  %v7272 = vpack.c.b16 %v7064, %v7060
  %v7273 = vpack.c.b16 %v7069, %v7065
  %v7274 = vpack.c.b16 %v7070, %v7066
  %v7275 = vpack.c.b16 %v7071, %v7067
  %v7276 = vpack.c.b16 %v7072, %v7068
  %v7277 = vpack.c.b16 %v7077, %v7073
  %v7278 = vpack.c.b16 %v7078, %v7074
  %v7279 = vpack.c.b16 %v7079, %v7075
  %v7280 = vpack.c.b16 %v7080, %v7076
  %v7281 = vpack.c.b16 %v7085, %v7081
  %v7282 = vpack.c.b16 %v7086, %v7082
  %v7283 = vpack.c.b16 %v7087, %v7083
  %v7284 = vpack.c.b16 %v7088, %v7084
  %v7285 = vpack.c.b16 %v7093, %v7089
  %v7286 = vpack.c.b16 %v7094, %v7090
  %v7287 = vpack.c.b16 %v7095, %v7091
  %v7288 = vpack.c.b16 %v7096, %v7092
  %v7289 = vpack.c.b16 %v7101, %v7097
  %v7290 = vpack.c.b16 %v7102, %v7098
  %v7291 = vpack.c.b16 %v7103, %v7099
  %v7292 = vpack.c.b16 %v7104, %v7100
  %v7293 = vpack.c.b16 %v7109, %v7105
  %v7294 = vpack.c.b16 %v7110, %v7106
  %v7295 = vpack.c.b16 %v7111, %v7107
  %v7296 = vpack.c.b16 %v7112, %v7108
  %v7297 = vpack.c.b16 %v7117, %v7113
  %v7298 = vpack.c.b16 %v7118, %v7114
  %v7299 = vpack.c.b16 %v7119, %v7115
  %v7300 = vpack.c.b16 %v7120, %v7116
  %v7301 = vpack.c.b16 %v7125, %v7121
  %v7302 = vpack.c.b16 %v7126, %v7122
  %v7303 = vpack.c.b16 %v7127, %v7123
  %v7304 = vpack.c.b16 %v7128, %v7124
  %v7305 = vpack.c.b16 %v7133, %v7129
  %v7306 = vpack.c.b16 %v7134, %v7130
  %v7307 = vpack.c.b16 %v7135, %v7131
  %v7308 = vpack.c.b16 %v7136, %v7132
  %v7309 = vpack.c.b16 %v7141, %v7137
  %v7310 = vpack.c.b16 %v7142, %v7138
  %v7311 = vpack.c.b16 %v7143, %v7139
  %v7312 = vpack.c.b16 %v7144, %v7140
  %v7313 = vpack.c.b16 %v7149, %v7145
  %v7314 = vpack.c.b16 %v7150, %v7146
  %v7315 = vpack.c.b16 %v7151, %v7147
  %v7316 = vpack.c.b16 %v7152, %v7148
  %v7317 = vpack.c.b16 %v7157, %v7153
  %v7318 = vpack.c.b16 %v7158, %v7154
  %v7319 = vpack.c.b16 %v7159, %v7155
  %v7320 = vpack.c.b16 %v7160, %v7156
  %v7321 = vpack.c.b16 %v7165, %v7161
  %v7322 = vpack.c.b16 %v7166, %v7162
  %v7323 = vpack.c.b16 %v7167, %v7163
  %v7324 = vpack.c.b16 %v7168, %v7164
  %v7325 = vpack.c.b16 %v7173, %v7169
  %v7326 = vpack.c.b16 %v7174, %v7170
  %v7327 = vpack.c.b16 %v7175, %v7171
  %v7328 = vpack.c.b16 %v7176, %v7172
  %v7329 = vpack.c.b16 %v7181, %v7177
  %v7330 = vpack.c.b16 %v7182, %v7178
  %v7331 = vpack.c.b16 %v7183, %v7179
  %v7332 = vpack.c.b16 %v7184, %v7180
  %v7333 = vpack.c.b16 %v7189, %v7185
  %v7334 = vpack.c.b16 %v7190, %v7186
  %v7335 = vpack.c.b16 %v7191, %v7187
  %v7336 = vpack.c.b16 %v7192, %v7188
  %v7337 = vpack.c.b16 %v7197, %v7193
  %v7338 = vpack.c.b16 %v7198, %v7194
  %v7339 = vpack.c.b16 %v7199, %v7195
  %v7340 = vpack.c.b16 %v7200, %v7196
  %v7341 = vpack.c.b16 %v7205, %v7201
  %v7342 = vpack.c.b16 %v7206, %v7202
  %v7343 = vpack.c.b16 %v7207, %v7203
  %v7344 = vpack.c.b16 %v7208, %v7204
  %v7345 = vpack.c.b16 %v7213, %v7209
  %v7346 = vpack.c.b16 %v7214, %v7210
  %v7347 = vpack.c.b16 %v7215, %v7211
  %v7348 = vpack.c.b16 %v7216, %v7212
  %v7349 = vpack.c.b16 %v7221, %v7217
  %v7350 = vpack.c.b16 %v7222, %v7218
  %v7351 = vpack.c.b16 %v7223, %v7219
  %v7352 = vpack.c.b16 %v7224, %v7220
  %7481 = vmatprep.subr.bf16.mxu0 %v7226
  %7482 = vmatpush1.bf16.msra.mxu0 %v7225
  %7483 = vmatprep.subr.bf16.mxu0 %v7230
  %7484 = vmatpush1.bf16.msra.mxu0 %v7229
  %7485 = vmatprep.subr.bf16.mxu0 %v7234
  %7486 = vmatpush1.bf16.msra.mxu0 %v7233
  %7487 = vmatprep.subr.bf16.mxu0 %v7238
  %7488 = vmatpush1.bf16.msra.mxu0 %v7237
  %7489 = vmatprep.subr.bf16.mxu0 %v7242
  %7490 = vmatpush1.bf16.msra.mxu0 %v7241
  %7491 = vmatprep.subr.bf16.mxu0 %v7246
  %7492 = vmatpush1.bf16.msra.mxu0 %v7245
  %7493 = vmatprep.subr.bf16.mxu0 %v7250
  %7494 = vmatpush1.bf16.msra.mxu0 %v7249
  %7495 = vmatprep.subr.bf16.mxu0 %v7254
  %7496 = vmatpush1.bf16.msra.mxu0 %v7253
  %7497 = vmatprep.subr.bf16.mxu0 %v7258
  %7498 = vmatpush1.bf16.msra.mxu0 %v7257
  %7499 = vmatprep.subr.bf16.mxu0 %v7262
  %7500 = vmatpush1.bf16.msra.mxu0 %v7261
  %7501 = vmatprep.subr.bf16.mxu0 %v7266
  %7502 = vmatpush1.bf16.msra.mxu0 %v7265
  %7503 = vmatprep.subr.bf16.mxu0 %v7270
  %7504 = vmatpush1.bf16.msra.mxu0 %v7269
  %7505 = vmatprep.subr.bf16.mxu0 %v7274
  %7506 = vmatpush1.bf16.msra.mxu0 %v7273
  %7507 = vmatprep.subr.bf16.mxu0 %v7278
  %7508 = vmatpush1.bf16.msra.mxu0 %v7277
  %7509 = vmatprep.subr.bf16.mxu0 %v7282
  %7510 = vmatpush1.bf16.msra.mxu0 %v7281
  %7511 = vmatprep.subr.bf16.mxu0 %v7286
  %7512 = vmatpush1.bf16.msra.mxu0 %v7285
  %7513 = vmatprep.mubr.bf16.mxu0 %v6688
  %7514 = vmatmul.mubr.bf16.gmra.mrb[0].mxu0 %v6687
  %v7515 = vpop.f32.mrb[0].mxu0
  %v7516 = vadd.f32 %v6824, %v7515
  %v7517 = vpop.f32.mrb[0].mxu0
  %v7518 = vadd.f32 %v6828, %v7517
  %v7519 = vpop.f32.mrb[0].mxu0
  %v7520 = vpop.f32.mrb[0].mxu0
  %7521 = vdwg.mxu0
  %7522 = vmatprep.subr.bf16.mxu0 %v7290
  %7523 = vmatpush1.bf16.msra.mxu0 %v7289
  %7524 = vmatprep.subr.bf16.mxu0 %v7294
  %7525 = vmatpush1.bf16.msra.mxu0 %v7293
  %7526 = vmatprep.subr.bf16.mxu0 %v7298
  %7527 = vmatpush1.bf16.msra.mxu0 %v7297
  %7528 = vmatprep.subr.bf16.mxu0 %v7302
  %7529 = vmatpush1.bf16.msra.mxu0 %v7301
  %7530 = vmatprep.subr.bf16.mxu0 %v7306
  %7531 = vmatpush1.bf16.msra.mxu0 %v7305
  %7532 = vmatprep.subr.bf16.mxu0 %v7310
  %7533 = vmatpush1.bf16.msra.mxu0 %v7309
  %7534 = vmatprep.subr.bf16.mxu0 %v7314
  %7535 = vmatpush1.bf16.msra.mxu0 %v7313
  %7536 = vmatprep.subr.bf16.mxu0 %v7318
  %7537 = vmatpush1.bf16.msra.mxu0 %v7317
  %7538 = vmatprep.subr.bf16.mxu0 %v7322
  %7539 = vmatpush1.bf16.msra.mxu0 %v7321
  %7540 = vmatprep.subr.bf16.mxu0 %v7326
  %7541 = vmatpush1.bf16.msra.mxu0 %v7325
  %7542 = vmatprep.subr.bf16.mxu0 %v7330
  %7543 = vmatpush1.bf16.msra.mxu0 %v7329
  %7544 = vmatprep.subr.bf16.mxu0 %v7334
  %7545 = vmatpush1.bf16.msra.mxu0 %v7333
  %7546 = vmatprep.subr.bf16.mxu0 %v7338
  %7547 = vmatpush1.bf16.msra.mxu0 %v7337
  %7548 = vmatprep.subr.bf16.mxu0 %v7342
  %7549 = vmatpush1.bf16.msra.mxu0 %v7341
  %7550 = vmatprep.subr.bf16.mxu0 %v7346
  %7551 = vmatpush1.bf16.msra.mxu0 %v7345
  %7552 = vmatprep.subr.bf16.mxu0 %v7350
  %7553 = vmatpush1.bf16.msra.mxu0 %v7349
  %7554 = vmatprep.mubr.bf16.mxu0 %v6690
  %7555 = vmatmul.mubr.bf16.gmra.mrb[0].mxu0 %v6689
  %v7556 = vpop.f32.mrb[0].mxu0
  %v7557 = vadd.f32 %v7516, %v7556
  %v7558 = vpop.f32.mrb[0].mxu0
  %v7559 = vadd.f32 %v7518, %v7558
  %v7560 = vpop.f32.mrb[0].mxu0
  %v7561 = vpop.f32.mrb[0].mxu0
  %7562 = vdwg.mxu0
  %7563 = vmatprep.subr.bf16.mxu0 %v7228
  %7564 = vmatpush1.bf16.msra.mxu0 %v7227
  %7565 = vmatprep.subr.bf16.mxu0 %v7232
  %7566 = vmatpush1.bf16.msra.mxu0 %v7231
  %7567 = vmatprep.subr.bf16.mxu0 %v7236
  %7568 = vmatpush1.bf16.msra.mxu0 %v7235
  %7569 = vmatprep.subr.bf16.mxu0 %v7240
  %7570 = vmatpush1.bf16.msra.mxu0 %v7239
  %7571 = vmatprep.subr.bf16.mxu0 %v7244
  %7572 = vmatpush1.bf16.msra.mxu0 %v7243
  %7573 = vmatprep.subr.bf16.mxu0 %v7248
  %7574 = vmatpush1.bf16.msra.mxu0 %v7247
  %7575 = vmatprep.subr.bf16.mxu0 %v7252
  %7576 = vmatpush1.bf16.msra.mxu0 %v7251
  %7577 = vmatprep.subr.bf16.mxu0 %v7256
  %7578 = vmatpush1.bf16.msra.mxu0 %v7255
  %7579 = vmatprep.subr.bf16.mxu0 %v7260
  %7580 = vmatpush1.bf16.msra.mxu0 %v7259
  %7581 = vmatprep.subr.bf16.mxu0 %v7264
  %7582 = vmatpush1.bf16.msra.mxu0 %v7263
  %7583 = vmatprep.subr.bf16.mxu0 %v7268
  %7584 = vmatpush1.bf16.msra.mxu0 %v7267
  %7585 = vmatprep.subr.bf16.mxu0 %v7272
  %7586 = vmatpush1.bf16.msra.mxu0 %v7271
  %7587 = vmatprep.subr.bf16.mxu0 %v7276
  %7588 = vmatpush1.bf16.msra.mxu0 %v7275
  %7589 = vmatprep.subr.bf16.mxu0 %v7280
  %7590 = vmatpush1.bf16.msra.mxu0 %v7279
  %7591 = vmatprep.subr.bf16.mxu0 %v7284
  %7592 = vmatpush1.bf16.msra.mxu0 %v7283
  %7593 = vmatprep.subr.bf16.mxu0 %v7288
  %7594 = vmatpush1.bf16.msra.mxu0 %v7287
  %7595 = vmatprep.mubr.bf16.mxu0 %v6688
  %7596 = vmatmul.mubr.bf16.gmra.mrb[0].mxu0 %v6687
  %v7597 = vpop.f32.mrb[0].mxu0
  %v7598 = vadd.f32 %v6832, %v7597
  %v7599 = vpop.f32.mrb[0].mxu0
  %v7600 = vadd.f32 %v6836, %v7599
  %v7601 = vpop.f32.mrb[0].mxu0
  %v7602 = vpop.f32.mrb[0].mxu0
  %7603 = vdwg.mxu0
  %7604 = vmatprep.subr.bf16.mxu0 %v7292
  %7605 = vmatpush1.bf16.msra.mxu0 %v7291
  %7606 = vmatprep.subr.bf16.mxu0 %v7296
  %7607 = vmatpush1.bf16.msra.mxu0 %v7295
  %7608 = vmatprep.subr.bf16.mxu0 %v7300
  %7609 = vmatpush1.bf16.msra.mxu0 %v7299
  %7610 = vmatprep.subr.bf16.mxu0 %v7304
  %7611 = vmatpush1.bf16.msra.mxu0 %v7303
  %7612 = vmatprep.subr.bf16.mxu0 %v7308
  %7613 = vmatpush1.bf16.msra.mxu0 %v7307
  %7614 = vmatprep.subr.bf16.mxu0 %v7312
  %7615 = vmatpush1.bf16.msra.mxu0 %v7311
  %7616 = vmatprep.subr.bf16.mxu0 %v7316
  %7617 = vmatpush1.bf16.msra.mxu0 %v7315
  %7618 = vmatprep.subr.bf16.mxu0 %v7320
  %7619 = vmatpush1.bf16.msra.mxu0 %v7319
  %7620 = vmatprep.subr.bf16.mxu0 %v7324
  %7621 = vmatpush1.bf16.msra.mxu0 %v7323
  %7622 = vmatprep.subr.bf16.mxu0 %v7328
  %7623 = vmatpush1.bf16.msra.mxu0 %v7327
  %7624 = vmatprep.subr.bf16.mxu0 %v7332
  %7625 = vmatpush1.bf16.msra.mxu0 %v7331
  %7626 = vmatprep.subr.bf16.mxu0 %v7336
  %7627 = vmatpush1.bf16.msra.mxu0 %v7335
  %7628 = vmatprep.subr.bf16.mxu0 %v7340
  %7629 = vmatpush1.bf16.msra.mxu0 %v7339
  %7630 = vmatprep.subr.bf16.mxu0 %v7344
  %7631 = vmatpush1.bf16.msra.mxu0 %v7343
  %7632 = vmatprep.subr.bf16.mxu0 %v7348
  %7633 = vmatpush1.bf16.msra.mxu0 %v7347
  %7634 = vmatprep.subr.bf16.mxu0 %v7352
  %7635 = vmatpush1.bf16.msra.mxu0 %v7351
  %7636 = vmatprep.mubr.bf16.mxu0 %v6690
  %7637 = vmatmul.mubr.bf16.gmra.mrb[0].mxu0 %v6689
  %v7638 = vpop.f32.mrb[0].mxu0
  %v7639 = vadd.f32 %v7598, %v7638
  %v7640 = vpop.f32.mrb[0].mxu0
  %v7641 = vadd.f32 %v7600, %v7640
  %v7642 = vpop.f32.mrb[0].mxu0
  %v7643 = vpop.f32.mrb[0].mxu0
  %7644 = vdwg.mxu0
  %v7645 = vmax.f32 %v7557, 0.0
  %v7646 = vmax.f32 %v7559, 0.0
  %v7647 = vmax.f32 %v7639, 0.0
  %v7648 = vmax.f32 %v7641, 0.0
  %v7649 = vpack.c.bf16 %v7645, %v7645
  %v7650 = vpack.c.bf16 %v7646, %v7646
  %v7651 = vpack.c.bf16 %v7647, %v7647
  %v7652 = vpack.c.bf16 %v7648, %v7648
  %v7653 = vld [vmem:[%s7] sm:$0xf]
  %v7654 = vld [vmem:[%s7 + $0x4] sm:$0xf]
  %v7655 = vld [vmem:[%s7 + $0x8] sm:$0xf]
  %v7656 = vld [vmem:[%s7 + $0xc] sm:$0xf]
  %v7657 = vld [vmem:[%s7 + $0x10] sm:$0xf]
  %v7658 = vld [vmem:[%s7 + $0x14] sm:$0xf]
  %v7659 = vld [vmem:[%s7 + $0x18] sm:$0xf]
  %v7660 = vld [vmem:[%s7 + $0x1c] sm:$0xf]
  %v7661 = vld [vmem:[%s7 + $0x20] sm:$0xf]
  %v7662 = vld [vmem:[%s7 + $0x24] sm:$0xf]
  %v7663 = vld [vmem:[%s7 + $0x28] sm:$0xf]
  %v7664 = vld [vmem:[%s7 + $0x2c] sm:$0xf]
  %v7665 = vld [vmem:[%s7 + $0x30] sm:$0xf]
  %v7666 = vld [vmem:[%s7 + $0x34] sm:$0xf]
  %v7667 = vld [vmem:[%s7 + $0x38] sm:$0xf]
  %v7668 = vld [vmem:[%s7 + $0x3c] sm:$0xf]
  %v7669 = vld [vmem:[%s7 + $0x40] sm:$0xf]
  %v7670 = vld [vmem:[%s7 + $0x44] sm:$0xf]
  %v7671 = vld [vmem:[%s7 + $0x48] sm:$0xf]
  %v7672 = vld [vmem:[%s7 + $0x4c] sm:$0xf]
  %v7673 = vld [vmem:[%s7 + $0x50] sm:$0xf]
  %v7674 = vld [vmem:[%s7 + $0x54] sm:$0xf]
  %v7675 = vld [vmem:[%s7 + $0x58] sm:$0xf]
  %v7676 = vld [vmem:[%s7 + $0x5c] sm:$0xf]
  %v7677 = vld [vmem:[%s7 + $0x60] sm:$0xf]
  %v7678 = vld [vmem:[%s7 + $0x64] sm:$0xf]
  %v7679 = vld [vmem:[%s7 + $0x68] sm:$0xf]
  %v7680 = vld [vmem:[%s7 + $0x6c] sm:$0xf]
  %v7681 = vld [vmem:[%s7 + $0x70] sm:$0xf]
  %v7682 = vld [vmem:[%s7 + $0x74] sm:$0xf]
  %v7683 = vld [vmem:[%s7 + $0x78] sm:$0xf]
  %v7684 = vld [vmem:[%s7 + $0x7c] sm:$0xf]
  %v7685 = vld [vmem:[%s7 + $0x80] sm:$0xf]
  %v7686 = vld [vmem:[%s7 + $0x84] sm:$0xf]
  %v7687 = vld [vmem:[%s7 + $0x88] sm:$0xf]
  %v7688 = vld [vmem:[%s7 + $0x8c] sm:$0xf]
  %v7689 = vld [vmem:[%s7 + $0x90] sm:$0xf]
  %v7690 = vld [vmem:[%s7 + $0x94] sm:$0xf]
  %v7691 = vld [vmem:[%s7 + $0x98] sm:$0xf]
  %v7692 = vld [vmem:[%s7 + $0x9c] sm:$0xf]
  %v7693 = vld [vmem:[%s7 + $0xa0] sm:$0xf]
  %v7694 = vld [vmem:[%s7 + $0xa4] sm:$0xf]
  %v7695 = vld [vmem:[%s7 + $0xa8] sm:$0xf]
  %v7696 = vld [vmem:[%s7 + $0xac] sm:$0xf]
  %v7697 = vld [vmem:[%s7 + $0xb0] sm:$0xf]
  %v7698 = vld [vmem:[%s7 + $0xb4] sm:$0xf]
  %v7699 = vld [vmem:[%s7 + $0xb8] sm:$0xf]
  %v7700 = vld [vmem:[%s7 + $0xbc] sm:$0xf]
  %v7701 = vld [vmem:[%s7 + $0xc0] sm:$0xf]
  %v7702 = vld [vmem:[%s7 + $0xc4] sm:$0xf]
  %v7703 = vld [vmem:[%s7 + $0xc8] sm:$0xf]
  %v7704 = vld [vmem:[%s7 + $0xcc] sm:$0xf]
  %v7705 = vld [vmem:[%s7 + $0xd0] sm:$0xf]
  %v7706 = vld [vmem:[%s7 + $0xd4] sm:$0xf]
  %v7707 = vld [vmem:[%s7 + $0xd8] sm:$0xf]
  %v7708 = vld [vmem:[%s7 + $0xdc] sm:$0xf]
  %v7709 = vld [vmem:[%s7 + $0xe0] sm:$0xf]
  %v7710 = vld [vmem:[%s7 + $0xe4] sm:$0xf]
  %v7711 = vld [vmem:[%s7 + $0xe8] sm:$0xf]
  %v7712 = vld [vmem:[%s7 + $0xec] sm:$0xf]
  %v7713 = vld [vmem:[%s7 + $0xf0] sm:$0xf]
  %v7714 = vld [vmem:[%s7 + $0xf4] sm:$0xf]
  %v7715 = vld [vmem:[%s7 + $0xf8] sm:$0xf]
  %v7716 = vld [vmem:[%s7 + $0xfc] sm:$0xf]
  %v7717 = vld [vmem:[%s8] sm:$0x1]
  %v7719 = vlaneseq
  %v7720 = vshrl.u32 %v7719, 7
  %v7721 = vsub.s32 0, %v7720
  %v7722 = vrot.slane %v7717, %v7721
  %v7788 = vunpack.c.l.b16 %v7653
  %v7789 = vunpack.c.l.b16 %v7654
  %v7790 = vunpack.c.l.b16 %v7655
  %v7791 = vunpack.c.l.b16 %v7656
  %v7792 = vunpack.c.l.b16 %v7657
  %v7793 = vunpack.c.l.b16 %v7658
  %v7794 = vunpack.c.l.b16 %v7659
  %v7795 = vunpack.c.l.b16 %v7660
  %v7796 = vunpack.c.l.b16 %v7661
  %v7797 = vunpack.c.l.b16 %v7662
  %v7798 = vunpack.c.l.b16 %v7663
  %v7799 = vunpack.c.l.b16 %v7664
  %v7800 = vunpack.c.l.b16 %v7665
  %v7801 = vunpack.c.l.b16 %v7666
  %v7802 = vunpack.c.l.b16 %v7667
  %v7803 = vunpack.c.l.b16 %v7668
  %v7804 = vunpack.c.l.b16 %v7669
  %v7805 = vunpack.c.l.b16 %v7670
  %v7806 = vunpack.c.l.b16 %v7671
  %v7807 = vunpack.c.l.b16 %v7672
  %v7808 = vunpack.c.l.b16 %v7673
  %v7809 = vunpack.c.l.b16 %v7674
  %v7810 = vunpack.c.l.b16 %v7675
  %v7811 = vunpack.c.l.b16 %v7676
  %v7812 = vunpack.c.l.b16 %v7677
  %v7813 = vunpack.c.l.b16 %v7678
  %v7814 = vunpack.c.l.b16 %v7679
  %v7815 = vunpack.c.l.b16 %v7680
  %v7816 = vunpack.c.l.b16 %v7681
  %v7817 = vunpack.c.l.b16 %v7682
  %v7818 = vunpack.c.l.b16 %v7683
  %v7819 = vunpack.c.l.b16 %v7684
  %v7820 = vunpack.c.l.b16 %v7685
  %v7821 = vunpack.c.l.b16 %v7686
  %v7822 = vunpack.c.l.b16 %v7687
  %v7823 = vunpack.c.l.b16 %v7688
  %v7824 = vunpack.c.l.b16 %v7689
  %v7825 = vunpack.c.l.b16 %v7690
  %v7826 = vunpack.c.l.b16 %v7691
  %v7827 = vunpack.c.l.b16 %v7692
  %v7828 = vunpack.c.l.b16 %v7693
  %v7829 = vunpack.c.l.b16 %v7694
  %v7830 = vunpack.c.l.b16 %v7695
  %v7831 = vunpack.c.l.b16 %v7696
  %v7832 = vunpack.c.l.b16 %v7697
  %v7833 = vunpack.c.l.b16 %v7698
  %v7834 = vunpack.c.l.b16 %v7699
  %v7835 = vunpack.c.l.b16 %v7700
  %v7836 = vunpack.c.l.b16 %v7701
  %v7837 = vunpack.c.l.b16 %v7702
  %v7838 = vunpack.c.l.b16 %v7703
  %v7839 = vunpack.c.l.b16 %v7704
  %v7840 = vunpack.c.l.b16 %v7705
  %v7841 = vunpack.c.l.b16 %v7706
  %v7842 = vunpack.c.l.b16 %v7707
  %v7843 = vunpack.c.l.b16 %v7708
  %v7844 = vunpack.c.l.b16 %v7709
  %v7845 = vunpack.c.l.b16 %v7710
  %v7846 = vunpack.c.l.b16 %v7711
  %v7847 = vunpack.c.l.b16 %v7712
  %v7848 = vunpack.c.l.b16 %v7713
  %v7849 = vunpack.c.l.b16 %v7714
  %v7850 = vunpack.c.l.b16 %v7715
  %v7851 = vunpack.c.l.b16 %v7716
  %v7852 = vpack.c.b16 %v7789, %v7788
  %v7853 = vpack.c.b16 %v7791, %v7790
  %v7854 = vpack.c.b16 %v7793, %v7792
  %v7855 = vpack.c.b16 %v7795, %v7794
  %v7856 = vpack.c.b16 %v7797, %v7796
  %v7857 = vpack.c.b16 %v7799, %v7798
  %v7858 = vpack.c.b16 %v7801, %v7800
  %v7859 = vpack.c.b16 %v7803, %v7802
  %v7860 = vpack.c.b16 %v7805, %v7804
  %v7861 = vpack.c.b16 %v7807, %v7806
  %v7862 = vpack.c.b16 %v7809, %v7808
  %v7863 = vpack.c.b16 %v7811, %v7810
  %v7864 = vpack.c.b16 %v7813, %v7812
  %v7865 = vpack.c.b16 %v7815, %v7814
  %v7866 = vpack.c.b16 %v7817, %v7816
  %v7867 = vpack.c.b16 %v7819, %v7818
  %v7868 = vpack.c.b16 %v7821, %v7820
  %v7869 = vpack.c.b16 %v7823, %v7822
  %v7870 = vpack.c.b16 %v7825, %v7824
  %v7871 = vpack.c.b16 %v7827, %v7826
  %v7872 = vpack.c.b16 %v7829, %v7828
  %v7873 = vpack.c.b16 %v7831, %v7830
  %v7874 = vpack.c.b16 %v7833, %v7832
  %v7875 = vpack.c.b16 %v7835, %v7834
  %v7876 = vpack.c.b16 %v7837, %v7836
  %v7877 = vpack.c.b16 %v7839, %v7838
  %v7878 = vpack.c.b16 %v7841, %v7840
  %v7879 = vpack.c.b16 %v7843, %v7842
  %v7880 = vpack.c.b16 %v7845, %v7844
  %v7881 = vpack.c.b16 %v7847, %v7846
  %v7882 = vpack.c.b16 %v7849, %v7848
  %v7883 = vpack.c.b16 %v7851, %v7850
  %7916 = vmatprep.subr.bf16.mxu0 0
  %7917 = vmatpush1.bf16.msra.mxu0 %v7852
  %7918 = vmatprep.subr.bf16.mxu0 0
  %7919 = vmatpush1.bf16.msra.mxu0 %v7853
  %7920 = vmatprep.subr.bf16.mxu0 0
  %7921 = vmatpush1.bf16.msra.mxu0 %v7854
  %7922 = vmatprep.subr.bf16.mxu0 0
  %7923 = vmatpush1.bf16.msra.mxu0 %v7855
  %7924 = vmatprep.subr.bf16.mxu0 0
  %7925 = vmatpush1.bf16.msra.mxu0 %v7856
  %7926 = vmatprep.subr.bf16.mxu0 0
  %7927 = vmatpush1.bf16.msra.mxu0 %v7857
  %7928 = vmatprep.subr.bf16.mxu0 0
  %7929 = vmatpush1.bf16.msra.mxu0 %v7858
  %7930 = vmatprep.subr.bf16.mxu0 0
  %7931 = vmatpush1.bf16.msra.mxu0 %v7859
  %7932 = vmatprep.subr.bf16.mxu0 0
  %7933 = vmatpush1.bf16.msra.mxu0 %v7860
  %7934 = vmatprep.subr.bf16.mxu0 0
  %7935 = vmatpush1.bf16.msra.mxu0 %v7861
  %7936 = vmatprep.subr.bf16.mxu0 0
  %7937 = vmatpush1.bf16.msra.mxu0 %v7862
  %7938 = vmatprep.subr.bf16.mxu0 0
  %7939 = vmatpush1.bf16.msra.mxu0 %v7863
  %7940 = vmatprep.subr.bf16.mxu0 0
  %7941 = vmatpush1.bf16.msra.mxu0 %v7864
  %7942 = vmatprep.subr.bf16.mxu0 0
  %7943 = vmatpush1.bf16.msra.mxu0 %v7865
  %7944 = vmatprep.subr.bf16.mxu0 0
  %7945 = vmatpush1.bf16.msra.mxu0 %v7866
  %7946 = vmatprep.subr.bf16.mxu0 0
  %7947 = vmatpush1.bf16.msra.mxu0 %v7867
  %7948 = vmatprep.mubr.bf16.mxu0 %v7650
  %7949 = vmatmul.mubr.bf16.gmra.mrb[0].mxu0 %v7649
  %v7950 = vpop.f32.mrb[0].mxu0
  %v7951 = vadd.f32 %v7722, %v7950
  %v7952 = vpop.f32.mrb[0].mxu0
  %v7953 = vpop.f32.mrb[0].mxu0
  %v7954 = vpop.f32.mrb[0].mxu0
  %7955 = vdwg.mxu0
  %7956 = vmatprep.subr.bf16.mxu0 0
  %7957 = vmatpush1.bf16.msra.mxu0 %v7868
  %7958 = vmatprep.subr.bf16.mxu0 0
  %7959 = vmatpush1.bf16.msra.mxu0 %v7869
  %7960 = vmatprep.subr.bf16.mxu0 0
  %7961 = vmatpush1.bf16.msra.mxu0 %v7870
  %7962 = vmatprep.subr.bf16.mxu0 0
  %7963 = vmatpush1.bf16.msra.mxu0 %v7871
  %7964 = vmatprep.subr.bf16.mxu0 0
  %7965 = vmatpush1.bf16.msra.mxu0 %v7872
  %7966 = vmatprep.subr.bf16.mxu0 0
  %7967 = vmatpush1.bf16.msra.mxu0 %v7873
  %7968 = vmatprep.subr.bf16.mxu0 0
  %7969 = vmatpush1.bf16.msra.mxu0 %v7874
  %7970 = vmatprep.subr.bf16.mxu0 0
  %7971 = vmatpush1.bf16.msra.mxu0 %v7875
  %7972 = vmatprep.subr.bf16.mxu0 0
  %7973 = vmatpush1.bf16.msra.mxu0 %v7876
  %7974 = vmatprep.subr.bf16.mxu0 0
  %7975 = vmatpush1.bf16.msra.mxu0 %v7877
  %7976 = vmatprep.subr.bf16.mxu0 0
  %7977 = vmatpush1.bf16.msra.mxu0 %v7878
  %7978 = vmatprep.subr.bf16.mxu0 0
  %7979 = vmatpush1.bf16.msra.mxu0 %v7879
  %7980 = vmatprep.subr.bf16.mxu0 0
  %7981 = vmatpush1.bf16.msra.mxu0 %v7880
  %7982 = vmatprep.subr.bf16.mxu0 0
  %7983 = vmatpush1.bf16.msra.mxu0 %v7881
  %7984 = vmatprep.subr.bf16.mxu0 0
  %7985 = vmatpush1.bf16.msra.mxu0 %v7882
  %7986 = vmatprep.subr.bf16.mxu0 0
  %7987 = vmatpush1.bf16.msra.mxu0 %v7883
  %7988 = vmatprep.mubr.bf16.mxu0 %v7652
  %7989 = vmatmul.mubr.bf16.gmra.mrb[0].mxu0 %v7651
  %v7990 = vpop.f32.mrb[0].mxu0
  %v7991 = vadd.f32 %v7951, %v7990
  %v7992 = vpop.f32.mrb[0].mxu0
  %v7993 = vpop.f32.mrb[0].mxu0
  %v7994 = vpop.f32.mrb[0].mxu0
  %7995 = vdwg.mxu0
  %vm7996 = vcmask 15360
  %7997 = vst.msk [vmem:[%s9] sm:$0xff] %vm7996, %v7991
  %7998 = vst [vmem:[%s10] sm:$0xff] %v6558
  %7999 = vst [vmem:[%s10 + $0x8] sm:$0xff] %v6560
  %8000 = vst [vmem:[%s10 + $0x10] sm:$0xff] %v6599
  %8001 = vst [vmem:[%s10 + $0x18] sm:$0xff] %v6601
  %8002 = vst [vmem:[%s11] sm:$0xff] %v6640
  %8003 = vst [vmem:[%s11 + $0x8] sm:$0xff] %v6642
  %8004 = vst [vmem:[%s11 + $0x10] sm:$0xff] %v6681
  %8005 = vst [vmem:[%s11 + $0x18] sm:$0xff] %v6683
  // Predicated region
  $region38: #{regressor_alex_corr.1} parent=0 // pred_check
    _
  $region39: #{regressor_alex_corr.1} parent=0 // pred_check_branch
    %8007 = sbr.rel (0) target = $region41
  $region40: #{regressor_alex_corr.1} parent=0 // pred_region
    _
  $region41: #{regressor_alex_corr.1} parent=0 // pred_fallthru
    _
  // Predicated region
  $region42: #{regressor_alex_corr.1} parent=0 // pred_check
    _
  $region43: #{regressor_alex_corr.1} parent=0 // pred_check_branch
    %8009 = sbr.rel (0) target = $region45
  $region44: #{regressor_alex_corr.1} parent=0 // pred_region
    _
  $region45: #{regressor_alex_corr.1} parent=0 // pred_fallthru
    _
  // Predicated region
  $region46: #{regressor_alex_corr.1} parent=0 // pred_check
    _
  $region47: #{regressor_alex_corr.1} parent=0 // pred_check_branch
    %8011 = sbr.rel (0) target = $region49
  $region48: #{regressor_alex_corr.1} parent=0 // pred_region
    _
  $region49: #{regressor_alex_corr.1} parent=0 // pred_fallthru
    _
  // Predicated region
  $region50: #{regressor_alex_corr.1} parent=0 // pred_check
    _
  $region51: #{regressor_alex_corr.1} parent=0 // pred_check_branch
    %8013 = sbr.rel (0) target = $region53
  $region52: #{regressor_alex_corr.1} parent=0 // pred_region
    _
  $region53: #{regressor_alex_corr.1} parent=0 // pred_fallthru
    _
  // Predicated region
  $region54: #{regressor_alex_corr.1} parent=0 // pred_check
    _
  $region55: #{regressor_alex_corr.1} parent=0 // pred_check_branch
    %8015 = sbr.rel (0) target = $region57
  $region56: #{regressor_alex_corr.1} parent=0 // pred_region
    _
  $region57: #{regressor_alex_corr.1} parent=0 // pred_fallthru
    _
  // Predicated region
  $region58: #{regressor_alex_corr.1} parent=0 // pred_check
    _
  $region59: #{regressor_alex_corr.1} parent=0 // pred_check_branch
    %8017 = sbr.rel (0) target = $region61
  $region60: #{regressor_alex_corr.1} parent=0 // pred_region
    _
  $region61: #{regressor_alex_corr.1} parent=0 // pred_fallthru
    _

</llo_original>
